<compile_context>
chip_gen: v7x
topology: tpu7x:2x2x1
jax: 0.10.0
libtpu: 0.0.40
codegen_flags: <defaults>
</compile_context>

<pallas_src>
import functools

import numpy as np
import jax
import jax.numpy as jnp
from jax.experimental import pallas as pl
from jax.experimental.pallas import tpu as pltpu


def _dot(a, b):
    # Default matmul precision (native MXU bf16 passes) with f32 accumulation.
    return jnp.dot(a, b, preferred_element_type=jnp.float32)


def _pick_tile(n):
    for cand in (2048, 1024, 512, 256, 128):
        if n % cand == 0:
            return cand
    return n


# ---------------------------------------------------------------------------
# Pointwise channel-mix kernels (lifting + fused projection MLP)
# Layout: x (B, Cin, N) pixel-last; weights stored (Cout, Cin).
# ---------------------------------------------------------------------------
def _cmix_kernel(x_ref, w_ref, b_ref, o_ref, *, apply_gelu):
    y = _dot(w_ref[...], x_ref[0]) + b_ref[...]          # (Cout, TN)
    if apply_gelu:
        y = jax.nn.gelu(y)
    o_ref[0] = y


def channel_mix(x, w, b, *, apply_gelu=False):
    B, Cin, N = x.shape
    Cout = w.shape[0]
    TN = _pick_tile(N)
    return pl.pallas_call(
        functools.partial(_cmix_kernel, apply_gelu=apply_gelu),
        out_shape=jax.ShapeDtypeStruct((B, Cout, N), jnp.float32),
        grid=(B, N // TN),
        in_specs=[
            pl.BlockSpec((1, Cin, TN), lambda i, j: (i, 0, j)),
            pl.BlockSpec((Cout, Cin), lambda i, j: (0, 0)),
            pl.BlockSpec((Cout, 1), lambda i, j: (0, 0)),
        ],
        out_specs=pl.BlockSpec((1, Cout, TN), lambda i, j: (i, 0, j)),
        compiler_params=pltpu.CompilerParams(
            dimension_semantics=("parallel", "parallel")),
    )(x, w, b.reshape(Cout, 1).astype(jnp.float32))


def _proj_kernel(x_ref, w1_ref, b1_ref, w2_ref, b2_ref, o_ref):
    h = jax.nn.gelu(_dot(w1_ref[...], x_ref[0]) + b1_ref[...])   # (Cmid, TN)
    o_ref[0] = _dot(w2_ref[...], h) + b2_ref[...]                # (Cout, TN)


def projection(x, w1, b1, w2, b2):
    B, Cin, N = x.shape
    Cmid, Cout = w1.shape[0], w2.shape[0]
    TN = _pick_tile(N)
    return pl.pallas_call(
        _proj_kernel,
        out_shape=jax.ShapeDtypeStruct((B, Cout, N), jnp.float32),
        grid=(B, N // TN),
        in_specs=[
            pl.BlockSpec((1, Cin, TN), lambda i, j: (i, 0, j)),
            pl.BlockSpec((Cmid, Cin), lambda i, j: (0, 0)),
            pl.BlockSpec((Cmid, 1), lambda i, j: (0, 0)),
            pl.BlockSpec((Cout, Cmid), lambda i, j: (0, 0)),
            pl.BlockSpec((Cout, 1), lambda i, j: (0, 0)),
        ],
        out_specs=pl.BlockSpec((1, Cout, TN), lambda i, j: (i, 0, j)),
        compiler_params=pltpu.CompilerParams(
            dimension_semantics=("parallel", "parallel")),
    )(x, w1, b1.reshape(Cmid, 1), w2, b2.reshape(Cout, 1))


# ---------------------------------------------------------------------------
# Fused FNO block kernel:
#   truncated rfft2 (fused 2-D DFT matmul) -> per-mode complex channel mix
#   -> irfft2 (fused 2-D inverse DFT matmul) + 1x1 skip conv + bias (+ GELU)
# one batch element per grid step; x block is (C, H*W), lane dim = H*W.
# ---------------------------------------------------------------------------
def _spectral_block_kernel(x_ref, d_re_ref, d_im_ref, wr_ref, wi_ref,
                           g_re_ref, g_im_ref, sw_ref, sb_ref, o_ref,
                           *, apply_gelu):
    x = x_ref[0]                                   # (C, HW)
    C = x.shape[0]
    O, MK = wr_ref.shape[1], wr_ref.shape[2]

    # forward truncated 2-D DFT: single matmul per re/im, contraction dim = H*W
    xf_re = _dot(x, d_re_ref[...])                 # (C, MK)
    xf_im = _dot(x, d_im_ref[...])                 # (C, MK)

    # per-mode complex channel mix: Y[o,q] = sum_c X[c,q] * W[c,o,q]
    # accumulate over C; only the (O, MK) accumulators stay live (no (C,O,MK) temps)
    y_re = jnp.zeros((O, MK), jnp.float32)
    y_im = jnp.zeros((O, MK), jnp.float32)
    for c in range(C):                             # static unroll, C is small
        xr = xf_re[c:c + 1, :]                     # (1, MK)
        xi = xf_im[c:c + 1, :]
        wr_c = wr_ref[c]                           # (O, MK)
        wi_c = wi_ref[c]
        y_re = y_re + xr * wr_c - xi * wi_c
        y_im = y_im + xr * wi_c + xi * wr_c

    # inverse truncated 2-D DFT (real part), lane-dense (O, HW) result
    out = _dot(y_re, g_re_ref[...]) - _dot(y_im, g_im_ref[...])
    # fused 1x1 skip conv + bias + activation
    out = out + _dot(sw_ref[...], x) + sb_ref[...]
    if apply_gelu:
        out = jax.nn.gelu(out)
    o_ref[0] = out


def spectral_block(v, w_re, w_im, skip_w, skip_b, dft, *, apply_gelu):
    """v: (B, C, H*W); w_re/w_im: (C, O, M, K); skip_w: (O, C) -> (B, O, H*W)."""
    B, C, HW = v.shape
    O = w_re.shape[1]
    MK = w_re.shape[2] * w_re.shape[3]
    wr = w_re.reshape(C, O, MK)
    wi = w_im.reshape(C, O, MK)

    def full2(shape):
        return pl.BlockSpec(shape, lambda b: (0, 0))

    return pl.pallas_call(
        functools.partial(_spectral_block_kernel, apply_gelu=apply_gelu),
        out_shape=jax.ShapeDtypeStruct((B, O, HW), jnp.float32),
        grid=(B,),
        in_specs=[
            pl.BlockSpec((1, C, HW), lambda b: (b, 0, 0)),
            full2((HW, MK)), full2((HW, MK)),
            pl.BlockSpec((C, O, MK), lambda b: (0, 0, 0)),
            pl.BlockSpec((C, O, MK), lambda b: (0, 0, 0)),
            full2((MK, HW)), full2((MK, HW)),
            full2((O, C)), full2((O, 1)),
        ],
        out_specs=pl.BlockSpec((1, O, HW), lambda b: (b, 0, 0)),
        compiler_params=pltpu.CompilerParams(dimension_semantics=("parallel",)),
    )(v, dft["D_re"], dft["D_im"], wr, wi, dft["G_re"], dft["G_im"],
      skip_w, skip_b.reshape(O, 1))


def make_dft_mats(H, W, m1, m2):
    """Fused truncated 2-D (r)DFT matrices restricted to the FNO-kept modes.

    Kept kh: [0..m1-1] U [H-m1..H-1]  (K = 2*m1),  kept kw: [0..m2-1]  (M = m2).
    Forward D (H*W, M*K): XF[q] = sum_p x[p] * exp(-2pi i (kh*h/H + kw*w/W)).
    Inverse G (M*K, H*W): real-part reconstruction matching jnp.fft.irfft2 on a
    spectrum that is zero outside the kept modes (factor 2 hermitian mirror for
    kw > 0, factor 1 for kw = 0).   Flat mode index q = kw*K + kh.
    """
    assert m1 <= H // 2 and m2 <= W // 2, "modes must not exceed Nyquist"
    K, M = 2 * m1, m2
    kh = jnp.concatenate([jnp.arange(m1), jnp.arange(H - m1, H)]).astype(jnp.float32)
    kw = jnp.arange(m2, dtype=jnp.float32)
    h = jnp.arange(H, dtype=jnp.float32)
    w = jnp.arange(W, dtype=jnp.float32)
    two_pi = 2.0 * jnp.pi
    ang_h = two_pi * jnp.outer(h, kh) / H                          # (H, K)
    ang_w = two_pi * jnp.outer(w, kw) / W                          # (W, M)

    # forward: row p = h*W + w, col q = kw*K + kh, exp(-i * angle)
    ang_f = (ang_h[:, None, None, :] + ang_w[None, :, :, None]).reshape(H * W, M * K)
    D_re, D_im = jnp.cos(ang_f), -jnp.sin(ang_f)

    # inverse: row q = kw*K + kh, col p = h*W + w, exp(+i * angle) * c_kw / (H*W)
    ang_i = ang_h.T[None, :, :, None] + ang_w.T[:, None, None, :]  # (M, K, H, W)
    c = jnp.where(kw == 0, 1.0, 2.0)[:, None, None, None]
    G_re = (c * jnp.cos(ang_i) / (H * W)).reshape(M * K, H * W)
    G_im = (c * jnp.sin(ang_i) / (H * W)).reshape(M * K, H * W)
    # kernel computes out = y_re @ G_re - y_im @ G_im
    return dict(D_re=D_re, D_im=D_im, G_re=G_re, G_im=G_im)


# ---------------------------------------------------------------------------
# Parameter init (deterministic) and full forward pass
# ---------------------------------------------------------------------------
def init_params(key, cfg):
    ci, ch, co = cfg["in_channels"], cfg["hidden_channels"], cfg["out_channels"]
    m1, m2 = cfg["n_modes"]
    L, cp = cfg["n_layers"], cfg["proj_channels"]
    K, M = 2 * m1, m2
    keys = jax.random.split(key, 4 + 4 * L)

    p = {"spec_re": [], "spec_im": [], "skip_w": [], "skip_b": []}
    # pointwise weights stored (Cout, Cin)
    p["lift_w"] = jax.random.normal(keys[0], (ch, ci), jnp.float32) / jnp.sqrt(ci)
    p["lift_b"] = jnp.zeros((ch,), jnp.float32)
    scale = 1.0 / (ch * ch)
    for l in range(L):
        p["spec_re"].append(scale * jax.random.uniform(keys[4 * l + 1], (ch, ch, M, K), jnp.float32))
        p["spec_im"].append(scale * jax.random.uniform(keys[4 * l + 2], (ch, ch, M, K), jnp.float32))
        p["skip_w"].append(jax.random.normal(keys[4 * l + 3], (ch, ch), jnp.float32) / jnp.sqrt(ch))
        p["skip_b"].append(jnp.zeros((ch,), jnp.float32))
    p["p1_w"] = jax.random.normal(keys[4 * L + 1], (cp, ch), jnp.float32) / jnp.sqrt(ch)
    p["p1_b"] = jnp.zeros((cp,), jnp.float32)
    p["p2_w"] = jax.random.normal(keys[4 * L + 2], (co, cp), jnp.float32) / jnp.sqrt(cp)
    p["p2_b"] = jnp.zeros((co,), jnp.float32)
    return p


def fno_forward(x, params, dft, cfg):
    """x: (B, in_channels, H, W)  ->  (B, out_channels, H, W)   (NCHW, like PyTorch)."""
    B, Cin, H, W = x.shape
    HW = H * W
    co, L = cfg["out_channels"], cfg["n_layers"]

    x3 = x.reshape(B, Cin, HW)                     # pure reshape (H, W contiguous)
    v = channel_mix(x3, params["lift_w"], params["lift_b"])          # lifting
    for l in range(L):                             # fused FNO blocks
        v = spectral_block(v, params["spec_re"][l], params["spec_im"][l],
                           params["skip_w"][l], params["skip_b"][l], dft,
                           apply_gelu=(l < L - 1))
    out3 = projection(v, params["p1_w"], params["p1_b"],
                      params["p2_w"], params["p2_b"])                # fused MLP
    return out3.reshape(B, co, H, W)


# ---------------------------------------------------------------------------
# Pure-JAX reference (uses jnp.fft.rfft2 / irfft2) for correctness checking
# ---------------------------------------------------------------------------
def fno_reference(x, params, cfg):
    with jax.default_matmul_precision("highest"):
        B, _, H, W = x.shape
        m1, m2 = cfg["n_modes"]
        L = cfg["n_layers"]

        def cmix(t, w, b):                      # t: (B,H,W,Cin), w: (Cout,Cin)
            return jnp.einsum("bhwc,dc->bhwd", t, w) + b

        def spectral_ref(v, wre, wim):
            wc = wre + 1j * wim                                  # (C, O, M, K)
            w1 = jnp.transpose(wc[..., :m1], (0, 1, 3, 2))       # (C, O, kh, kw)
            w2 = jnp.transpose(wc[..., m1:], (0, 1, 3, 2))
            xf = jnp.fft.rfft2(v, axes=(-2, -1))                 # (B, C, H, W//2+1)
            O = wre.shape[1]
            of = jnp.zeros((B, O, H, W // 2 + 1), dtype=xf.dtype)
            of = of.at[:, :, :m1, :m2].set(
                jnp.einsum("bikw,iokw->bokw", xf[:, :, :m1, :m2], w1))
            of = of.at[:, :, H - m1:, :m2].set(
                jnp.einsum("bikw,iokw->bokw", xf[:, :, H - m1:, :m2], w2))
            return jnp.fft.irfft2(of, s=(H, W), axes=(-2, -1))

        vcl = cmix(jnp.transpose(x, (0, 2, 3, 1)), params["lift_w"], params["lift_b"])
        v = jnp.transpose(vcl, (0, 3, 1, 2))
        for l in range(L):
            spec = spectral_ref(v, params["spec_re"][l], params["spec_im"][l])
            skip = cmix(jnp.transpose(v, (0, 2, 3, 1)), params["skip_w"][l], params["skip_b"][l])
            y = jnp.transpose(spec, (0, 2, 3, 1)) + skip
            if l < L - 1:
                y = jax.nn.gelu(y)
            v = jnp.transpose(y, (0, 3, 1, 2))
        hmid = jax.nn.gelu(cmix(jnp.transpose(v, (0, 2, 3, 1)), params["p1_w"], params["p1_b"]))
        out = cmix(hmid, params["p2_w"], params["p2_b"])
        return jnp.transpose(out, (0, 3, 1, 2))


if __name__ == "__main__":
    # Small config consistent with Model(cfg): n_modes, in/hidden/out channels.
    # TODO(synk): the reference snippet does not pin neuralop's FNO internals
    # (n_layers, lifting/projection channel ratios, positional embedding); a
    # classic 4-layer FNO2d (Li et al.) is implemented instead.
    # TODO(synk): jax.nn.gelu (tanh approximation) is used; PyTorch F.gelu is
    # exact-erf — switch to approximate=False if bit-level parity is required.
    cfg = dict(n_modes=(4, 4), in_channels=3, hidden_channels=16, out_channels=2,
               n_layers=4, proj_channels=32)
    B, H, W = 2, 16, 16

    key = jax.random.PRNGKey(0)
    kx, kp = jax.random.split(key)
    x = jax.random.normal(kx, (B, cfg["in_channels"], H, W), dtype=jnp.float32)

    params = init_params(kp, cfg)
    dft = make_dft_mats(H, W, *cfg["n_modes"])

    fwd = jax.jit(lambda inp: fno_forward(inp, params, dft, cfg))
    out = jax.block_until_ready(fwd(x))
    assert out.shape == (B, cfg["out_channels"], H, W)

    ref = jax.block_until_ready(fno_reference(x, params, cfg))
    out_np, ref_np = np.asarray(out), np.asarray(ref)

    # Tolerances account for default (bf16-pass) MXU precision in the kernels
    # versus the f32/FFT reference (HIGHEST precision was dropped for speed).
    rel_l2 = np.linalg.norm(out_np - ref_np) / np.linalg.norm(ref_np)
    assert rel_l2 < 3e-2, f"relative L2 error too large: {rel_l2}"
    np.testing.assert_allclose(out_np, ref_np, rtol=5e-2, atol=5e-2)

    print("KERNEL_OK")
</pallas_src>

<mosaic_0001>
module attributes {stable_mosaic.version = 11 : i64} {
  func.func @_spectral_block_kernel(%arg0: i32, %arg1: memref<1x16x256xf32, #tpu.memory_space<vmem>>, %arg2: memref<256x32xf32, #tpu.memory_space<vmem>>, %arg3: memref<256x32xf32, #tpu.memory_space<vmem>>, %arg4: memref<16x16x32xf32, #tpu.memory_space<vmem>>, %arg5: memref<16x16x32xf32, #tpu.memory_space<vmem>>, %arg6: memref<32x256xf32, #tpu.memory_space<vmem>>, %arg7: memref<32x256xf32, #tpu.memory_space<vmem>>, %arg8: memref<16x16xf32, #tpu.memory_space<vmem>>, %arg9: memref<16x1xf32, #tpu.memory_space<vmem>>, %arg10: memref<1x16x256xf32, #tpu.memory_space<vmem>>) attributes {dimension_semantics = [#tpu.dimension_semantics<parallel>], iteration_bounds = array<i64: 2>, scalar_prefetch = 0 : i64, scratch_operands = 0 : i64, tpu.core_type = #tpu.core_type<tc>, window_params = [{transform_indices = @transform_0, window_bounds = array<i64: 1, 16, 256>}, {pipeline_mode = #tpu.pipeline_mode<synchronous>, transform_indices = @transform_1, window_bounds = array<i64: 256, 32>}, {pipeline_mode = #tpu.pipeline_mode<synchronous>, transform_indices = @transform_2, window_bounds = array<i64: 256, 32>}, {pipeline_mode = #tpu.pipeline_mode<synchronous>, transform_indices = @transform_3, window_bounds = array<i64: 16, 16, 32>}, {pipeline_mode = #tpu.pipeline_mode<synchronous>, transform_indices = @transform_4, window_bounds = array<i64: 16, 16, 32>}, {pipeline_mode = #tpu.pipeline_mode<synchronous>, transform_indices = @transform_5, window_bounds = array<i64: 32, 256>}, {pipeline_mode = #tpu.pipeline_mode<synchronous>, transform_indices = @transform_6, window_bounds = array<i64: 32, 256>}, {pipeline_mode = #tpu.pipeline_mode<synchronous>, transform_indices = @transform_7, window_bounds = array<i64: 16, 16>}, {pipeline_mode = #tpu.pipeline_mode<synchronous>, transform_indices = @transform_8, window_bounds = array<i64: 16, 1>}, {transform_indices = @transform_9, window_bounds = array<i64: 1, 16, 256>}]} {
    %c0 = arith.constant 0 : index
    %c0_0 = arith.constant 0 : index
    %c0_1 = arith.constant 0 : index
    %0 = vector.load %arg1[%c0, %c0_0, %c0_1] : memref<1x16x256xf32, #tpu.memory_space<vmem>>, vector<1x16x256xf32>
    %1 = vector.shape_cast %0 : vector<1x16x256xf32> to vector<16x256xf32>
    %c0_2 = arith.constant 0 : index
    %c0_3 = arith.constant 0 : index
    %2 = vector.load %arg2[%c0_2, %c0_3] : memref<256x32xf32, #tpu.memory_space<vmem>>, vector<256x32xf32>
    %cst = arith.constant dense<0.000000e+00> : vector<16x32xf32>
    %3 = tpu.matmul %1, %2, %cst {dimension_numbers = #tpu.dot_dimension_numbers<[1], [0], [0], [1], [0, 0, 1, 1], [], []>} : vector<16x256xf32>, vector<256x32xf32>, vector<16x32xf32> -> vector<16x32xf32>
    %c0_4 = arith.constant 0 : index
    %c0_5 = arith.constant 0 : index
    %4 = vector.load %arg3[%c0_4, %c0_5] : memref<256x32xf32, #tpu.memory_space<vmem>>, vector<256x32xf32>
    %cst_6 = arith.constant dense<0.000000e+00> : vector<16x32xf32>
    %5 = tpu.matmul %1, %4, %cst_6 {dimension_numbers = #tpu.dot_dimension_numbers<[1], [0], [0], [1], [0, 0, 1, 1], [], []>} : vector<16x256xf32>, vector<256x32xf32>, vector<16x32xf32> -> vector<16x32xf32>
    %cst_7 = arith.constant 0.000000e+00 : f32
    %6 = vector.broadcast %cst_7 : f32 to vector<16x32xf32>
    %cst_8 = arith.constant 0.000000e+00 : f32
    %7 = vector.broadcast %cst_8 : f32 to vector<16x32xf32>
    %8 = vector.extract_strided_slice %3 {offsets = [0, 0], sizes = [1, 32], strides = [1, 1]} : vector<16x32xf32> to vector<1x32xf32>
    %9 = vector.extract_strided_slice %5 {offsets = [0, 0], sizes = [1, 32], strides = [1, 1]} : vector<16x32xf32> to vector<1x32xf32>
    %c0_9 = arith.constant 0 : index
    %c0_10 = arith.constant 0 : index
    %c0_11 = arith.constant 0 : index
    %10 = vector.load %arg4[%c0_9, %c0_10, %c0_11] : memref<16x16x32xf32, #tpu.memory_space<vmem>>, vector<1x16x32xf32>
    %11 = vector.shape_cast %10 : vector<1x16x32xf32> to vector<16x32xf32>
    %c0_12 = arith.constant 0 : index
    %c0_13 = arith.constant 0 : index
    %c0_14 = arith.constant 0 : index
    %12 = vector.load %arg5[%c0_12, %c0_13, %c0_14] : memref<16x16x32xf32, #tpu.memory_space<vmem>>, vector<1x16x32xf32>
    %13 = vector.shape_cast %12 : vector<1x16x32xf32> to vector<16x32xf32>
    %14 = vector.broadcast %8 : vector<1x32xf32> to vector<16x32xf32>
    %15 = arith.mulf %14, %11 : vector<16x32xf32>
    %16 = arith.addf %6, %15 : vector<16x32xf32>
    %17 = vector.broadcast %9 : vector<1x32xf32> to vector<16x32xf32>
    %18 = arith.mulf %17, %13 : vector<16x32xf32>
    %19 = arith.subf %16, %18 : vector<16x32xf32>
    %20 = vector.broadcast %8 : vector<1x32xf32> to vector<16x32xf32>
    %21 = arith.mulf %20, %13 : vector<16x32xf32>
    %22 = arith.addf %7, %21 : vector<16x32xf32>
    %23 = vector.broadcast %9 : vector<1x32xf32> to vector<16x32xf32>
    %24 = arith.mulf %23, %11 : vector<16x32xf32>
    %25 = arith.addf %22, %24 : vector<16x32xf32>
    %26 = vector.extract_strided_slice %3 {offsets = [1, 0], sizes = [1, 32], strides = [1, 1]} : vector<16x32xf32> to vector<1x32xf32>
    %27 = vector.extract_strided_slice %5 {offsets = [1, 0], sizes = [1, 32], strides = [1, 1]} : vector<16x32xf32> to vector<1x32xf32>
    %c1 = arith.constant 1 : index
    %c0_15 = arith.constant 0 : index
    %c0_16 = arith.constant 0 : index
    %28 = vector.load %arg4[%c1, %c0_15, %c0_16] : memref<16x16x32xf32, #tpu.memory_space<vmem>>, vector<1x16x32xf32>
    %29 = vector.shape_cast %28 : vector<1x16x32xf32> to vector<16x32xf32>
    %c1_17 = arith.constant 1 : index
    %c0_18 = arith.constant 0 : index
    %c0_19 = arith.constant 0 : index
    %30 = vector.load %arg5[%c1_17, %c0_18, %c0_19] : memref<16x16x32xf32, #tpu.memory_space<vmem>>, vector<1x16x32xf32>
    %31 = vector.shape_cast %30 : vector<1x16x32xf32> to vector<16x32xf32>
    %32 = vector.broadcast %26 : vector<1x32xf32> to vector<16x32xf32>
    %33 = arith.mulf %32, %29 : vector<16x32xf32>
    %34 = arith.addf %19, %33 : vector<16x32xf32>
    %35 = vector.broadcast %27 : vector<1x32xf32> to vector<16x32xf32>
    %36 = arith.mulf %35, %31 : vector<16x32xf32>
    %37 = arith.subf %34, %36 : vector<16x32xf32>
    %38 = vector.broadcast %26 : vector<1x32xf32> to vector<16x32xf32>
    %39 = arith.mulf %38, %31 : vector<16x32xf32>
    %40 = arith.addf %25, %39 : vector<16x32xf32>
    %41 = vector.broadcast %27 : vector<1x32xf32> to vector<16x32xf32>
    %42 = arith.mulf %41, %29 : vector<16x32xf32>
    %43 = arith.addf %40, %42 : vector<16x32xf32>
    %44 = vector.extract_strided_slice %3 {offsets = [2, 0], sizes = [1, 32], strides = [1, 1]} : vector<16x32xf32> to vector<1x32xf32>
    %45 = vector.extract_strided_slice %5 {offsets = [2, 0], sizes = [1, 32], strides = [1, 1]} : vector<16x32xf32> to vector<1x32xf32>
    %c2 = arith.constant 2 : index
    %c0_20 = arith.constant 0 : index
    %c0_21 = arith.constant 0 : index
    %46 = vector.load %arg4[%c2, %c0_20, %c0_21] : memref<16x16x32xf32, #tpu.memory_space<vmem>>, vector<1x16x32xf32>
    %47 = vector.shape_cast %46 : vector<1x16x32xf32> to vector<16x32xf32>
    %c2_22 = arith.constant 2 : index
    %c0_23 = arith.constant 0 : index
    %c0_24 = arith.constant 0 : index
    %48 = vector.load %arg5[%c2_22, %c0_23, %c0_24] : memref<16x16x32xf32, #tpu.memory_space<vmem>>, vector<1x16x32xf32>
    %49 = vector.shape_cast %48 : vector<1x16x32xf32> to vector<16x32xf32>
    %50 = vector.broadcast %44 : vector<1x32xf32> to vector<16x32xf32>
    %51 = arith.mulf %50, %47 : vector<16x32xf32>
    %52 = arith.addf %37, %51 : vector<16x32xf32>
    %53 = vector.broadcast %45 : vector<1x32xf32> to vector<16x32xf32>
    %54 = arith.mulf %53, %49 : vector<16x32xf32>
    %55 = arith.subf %52, %54 : vector<16x32xf32>
    %56 = vector.broadcast %44 : vector<1x32xf32> to vector<16x32xf32>
    %57 = arith.mulf %56, %49 : vector<16x32xf32>
    %58 = arith.addf %43, %57 : vector<16x32xf32>
    %59 = vector.broadcast %45 : vector<1x32xf32> to vector<16x32xf32>
    %60 = arith.mulf %59, %47 : vector<16x32xf32>
    %61 = arith.addf %58, %60 : vector<16x32xf32>
    %62 = vector.extract_strided_slice %3 {offsets = [3, 0], sizes = [1, 32], strides = [1, 1]} : vector<16x32xf32> to vector<1x32xf32>
    %63 = vector.extract_strided_slice %5 {offsets = [3, 0], sizes = [1, 32], strides = [1, 1]} : vector<16x32xf32> to vector<1x32xf32>
    %c3 = arith.constant 3 : index
    %c0_25 = arith.constant 0 : index
    %c0_26 = arith.constant 0 : index
    %64 = vector.load %arg4[%c3, %c0_25, %c0_26] : memref<16x16x32xf32, #tpu.memory_space<vmem>>, vector<1x16x32xf32>
    %65 = vector.shape_cast %64 : vector<1x16x32xf32> to vector<16x32xf32>
    %c3_27 = arith.constant 3 : index
    %c0_28 = arith.constant 0 : index
    %c0_29 = arith.constant 0 : index
    %66 = vector.load %arg5[%c3_27, %c0_28, %c0_29] : memref<16x16x32xf32, #tpu.memory_space<vmem>>, vector<1x16x32xf32>
    %67 = vector.shape_cast %66 : vector<1x16x32xf32> to vector<16x32xf32>
    %68 = vector.broadcast %62 : vector<1x32xf32> to vector<16x32xf32>
    %69 = arith.mulf %68, %65 : vector<16x32xf32>
    %70 = arith.addf %55, %69 : vector<16x32xf32>
    %71 = vector.broadcast %63 : vector<1x32xf32> to vector<16x32xf32>
    %72 = arith.mulf %71, %67 : vector<16x32xf32>
    %73 = arith.subf %70, %72 : vector<16x32xf32>
    %74 = vector.broadcast %62 : vector<1x32xf32> to vector<16x32xf32>
    %75 = arith.mulf %74, %67 : vector<16x32xf32>
    %76 = arith.addf %61, %75 : vector<16x32xf32>
    %77 = vector.broadcast %63 : vector<1x32xf32> to vector<16x32xf32>
    %78 = arith.mulf %77, %65 : vector<16x32xf32>
    %79 = arith.addf %76, %78 : vector<16x32xf32>
    %80 = vector.extract_strided_slice %3 {offsets = [4, 0], sizes = [1, 32], strides = [1, 1]} : vector<16x32xf32> to vector<1x32xf32>
    %81 = vector.extract_strided_slice %5 {offsets = [4, 0], sizes = [1, 32], strides = [1, 1]} : vector<16x32xf32> to vector<1x32xf32>
    %c4 = arith.constant 4 : index
    %c0_30 = arith.constant 0 : index
    %c0_31 = arith.constant 0 : index
    %82 = vector.load %arg4[%c4, %c0_30, %c0_31] : memref<16x16x32xf32, #tpu.memory_space<vmem>>, vector<1x16x32xf32>
    %83 = vector.shape_cast %82 : vector<1x16x32xf32> to vector<16x32xf32>
    %c4_32 = arith.constant 4 : index
    %c0_33 = arith.constant 0 : index
    %c0_34 = arith.constant 0 : index
    %84 = vector.load %arg5[%c4_32, %c0_33, %c0_34] : memref<16x16x32xf32, #tpu.memory_space<vmem>>, vector<1x16x32xf32>
    %85 = vector.shape_cast %84 : vector<1x16x32xf32> to vector<16x32xf32>
    %86 = vector.broadcast %80 : vector<1x32xf32> to vector<16x32xf32>
    %87 = arith.mulf %86, %83 : vector<16x32xf32>
    %88 = arith.addf %73, %87 : vector<16x32xf32>
    %89 = vector.broadcast %81 : vector<1x32xf32> to vector<16x32xf32>
    %90 = arith.mulf %89, %85 : vector<16x32xf32>
    %91 = arith.subf %88, %90 : vector<16x32xf32>
    %92 = vector.broadcast %80 : vector<1x32xf32> to vector<16x32xf32>
    %93 = arith.mulf %92, %85 : vector<16x32xf32>
    %94 = arith.addf %79, %93 : vector<16x32xf32>
    %95 = vector.broadcast %81 : vector<1x32xf32> to vector<16x32xf32>
    %96 = arith.mulf %95, %83 : vector<16x32xf32>
    %97 = arith.addf %94, %96 : vector<16x32xf32>
    %98 = vector.extract_strided_slice %3 {offsets = [5, 0], sizes = [1, 32], strides = [1, 1]} : vector<16x32xf32> to vector<1x32xf32>
    %99 = vector.extract_strided_slice %5 {offsets = [5, 0], sizes = [1, 32], strides = [1, 1]} : vector<16x32xf32> to vector<1x32xf32>
    %c5 = arith.constant 5 : index
    %c0_35 = arith.constant 0 : index
    %c0_36 = arith.constant 0 : index
    %100 = vector.load %arg4[%c5, %c0_35, %c0_36] : memref<16x16x32xf32, #tpu.memory_space<vmem>>, vector<1x16x32xf32>
    %101 = vector.shape_cast %100 : vector<1x16x32xf32> to vector<16x32xf32>
    %c5_37 = arith.constant 5 : index
    %c0_38 = arith.constant 0 : index
    %c0_39 = arith.constant 0 : index
    %102 = vector.load %arg5[%c5_37, %c0_38, %c0_39] : memref<16x16x32xf32, #tpu.memory_space<vmem>>, vector<1x16x32xf32>
    %103 = vector.shape_cast %102 : vector<1x16x32xf32> to vector<16x32xf32>
    %104 = vector.broadcast %98 : vector<1x32xf32> to vector<16x32xf32>
    %105 = arith.mulf %104, %101 : vector<16x32xf32>
    %106 = arith.addf %91, %105 : vector<16x32xf32>
    %107 = vector.broadcast %99 : vector<1x32xf32> to vector<16x32xf32>
    %108 = arith.mulf %107, %103 : vector<16x32xf32>
    %109 = arith.subf %106, %108 : vector<16x32xf32>
    %110 = vector.broadcast %98 : vector<1x32xf32> to vector<16x32xf32>
    %111 = arith.mulf %110, %103 : vector<16x32xf32>
    %112 = arith.addf %97, %111 : vector<16x32xf32>
    %113 = vector.broadcast %99 : vector<1x32xf32> to vector<16x32xf32>
    %114 = arith.mulf %113, %101 : vector<16x32xf32>
    %115 = arith.addf %112, %114 : vector<16x32xf32>
    %116 = vector.extract_strided_slice %3 {offsets = [6, 0], sizes = [1, 32], strides = [1, 1]} : vector<16x32xf32> to vector<1x32xf32>
    %117 = vector.extract_strided_slice %5 {offsets = [6, 0], sizes = [1, 32], strides = [1, 1]} : vector<16x32xf32> to vector<1x32xf32>
    %c6 = arith.constant 6 : index
    %c0_40 = arith.constant 0 : index
    %c0_41 = arith.constant 0 : index
    %118 = vector.load %arg4[%c6, %c0_40, %c0_41] : memref<16x16x32xf32, #tpu.memory_space<vmem>>, vector<1x16x32xf32>
    %119 = vector.shape_cast %118 : vector<1x16x32xf32> to vector<16x32xf32>
    %c6_42 = arith.constant 6 : index
    %c0_43 = arith.constant 0 : index
    %c0_44 = arith.constant 0 : index
    %120 = vector.load %arg5[%c6_42, %c0_43, %c0_44] : memref<16x16x32xf32, #tpu.memory_space<vmem>>, vector<1x16x32xf32>
    %121 = vector.shape_cast %120 : vector<1x16x32xf32> to vector<16x32xf32>
    %122 = vector.broadcast %116 : vector<1x32xf32> to vector<16x32xf32>
    %123 = arith.mulf %122, %119 : vector<16x32xf32>
    %124 = arith.addf %109, %123 : vector<16x32xf32>
    %125 = vector.broadcast %117 : vector<1x32xf32> to vector<16x32xf32>
    %126 = arith.mulf %125, %121 : vector<16x32xf32>
    %127 = arith.subf %124, %126 : vector<16x32xf32>
    %128 = vector.broadcast %116 : vector<1x32xf32> to vector<16x32xf32>
    %129 = arith.mulf %128, %121 : vector<16x32xf32>
    %130 = arith.addf %115, %129 : vector<16x32xf32>
    %131 = vector.broadcast %117 : vector<1x32xf32> to vector<16x32xf32>
    %132 = arith.mulf %131, %119 : vector<16x32xf32>
    %133 = arith.addf %130, %132 : vector<16x32xf32>
    %134 = vector.extract_strided_slice %3 {offsets = [7, 0], sizes = [1, 32], strides = [1, 1]} : vector<16x32xf32> to vector<1x32xf32>
    %135 = vector.extract_strided_slice %5 {offsets = [7, 0], sizes = [1, 32], strides = [1, 1]} : vector<16x32xf32> to vector<1x32xf32>
    %c7 = arith.constant 7 : index
    %c0_45 = arith.constant 0 : index
    %c0_46 = arith.constant 0 : index
    %136 = vector.load %arg4[%c7, %c0_45, %c0_46] : memref<16x16x32xf32, #tpu.memory_space<vmem>>, vector<1x16x32xf32>
    %137 = vector.shape_cast %136 : vector<1x16x32xf32> to vector<16x32xf32>
    %c7_47 = arith.constant 7 : index
    %c0_48 = arith.constant 0 : index
    %c0_49 = arith.constant 0 : index
    %138 = vector.load %arg5[%c7_47, %c0_48, %c0_49] : memref<16x16x32xf32, #tpu.memory_space<vmem>>, vector<1x16x32xf32>
    %139 = vector.shape_cast %138 : vector<1x16x32xf32> to vector<16x32xf32>
    %140 = vector.broadcast %134 : vector<1x32xf32> to vector<16x32xf32>
    %141 = arith.mulf %140, %137 : vector<16x32xf32>
    %142 = arith.addf %127, %141 : vector<16x32xf32>
    %143 = vector.broadcast %135 : vector<1x32xf32> to vector<16x32xf32>
    %144 = arith.mulf %143, %139 : vector<16x32xf32>
    %145 = arith.subf %142, %144 : vector<16x32xf32>
    %146 = vector.broadcast %134 : vector<1x32xf32> to vector<16x32xf32>
    %147 = arith.mulf %146, %139 : vector<16x32xf32>
    %148 = arith.addf %133, %147 : vector<16x32xf32>
    %149 = vector.broadcast %135 : vector<1x32xf32> to vector<16x32xf32>
    %150 = arith.mulf %149, %137 : vector<16x32xf32>
    %151 = arith.addf %148, %150 : vector<16x32xf32>
    %152 = vector.extract_strided_slice %3 {offsets = [8, 0], sizes = [1, 32], strides = [1, 1]} : vector<16x32xf32> to vector<1x32xf32>
    %153 = vector.extract_strided_slice %5 {offsets = [8, 0], sizes = [1, 32], strides = [1, 1]} : vector<16x32xf32> to vector<1x32xf32>
    %c8 = arith.constant 8 : index
    %c0_50 = arith.constant 0 : index
    %c0_51 = arith.constant 0 : index
    %154 = vector.load %arg4[%c8, %c0_50, %c0_51] : memref<16x16x32xf32, #tpu.memory_space<vmem>>, vector<1x16x32xf32>
    %155 = vector.shape_cast %154 : vector<1x16x32xf32> to vector<16x32xf32>
    %c8_52 = arith.constant 8 : index
    %c0_53 = arith.constant 0 : index
    %c0_54 = arith.constant 0 : index
    %156 = vector.load %arg5[%c8_52, %c0_53, %c0_54] : memref<16x16x32xf32, #tpu.memory_space<vmem>>, vector<1x16x32xf32>
    %157 = vector.shape_cast %156 : vector<1x16x32xf32> to vector<16x32xf32>
    %158 = vector.broadcast %152 : vector<1x32xf32> to vector<16x32xf32>
    %159 = arith.mulf %158, %155 : vector<16x32xf32>
    %160 = arith.addf %145, %159 : vector<16x32xf32>
    %161 = vector.broadcast %153 : vector<1x32xf32> to vector<16x32xf32>
    %162 = arith.mulf %161, %157 : vector<16x32xf32>
    %163 = arith.subf %160, %162 : vector<16x32xf32>
    %164 = vector.broadcast %152 : vector<1x32xf32> to vector<16x32xf32>
    %165 = arith.mulf %164, %157 : vector<16x32xf32>
    %166 = arith.addf %151, %165 : vector<16x32xf32>
    %167 = vector.broadcast %153 : vector<1x32xf32> to vector<16x32xf32>
    %168 = arith.mulf %167, %155 : vector<16x32xf32>
    %169 = arith.addf %166, %168 : vector<16x32xf32>
    %170 = vector.extract_strided_slice %3 {offsets = [9, 0], sizes = [1, 32], strides = [1, 1]} : vector<16x32xf32> to vector<1x32xf32>
    %171 = vector.extract_strided_slice %5 {offsets = [9, 0], sizes = [1, 32], strides = [1, 1]} : vector<16x32xf32> to vector<1x32xf32>
    %c9 = arith.constant 9 : index
    %c0_55 = arith.constant 0 : index
    %c0_56 = arith.constant 0 : index
    %172 = vector.load %arg4[%c9, %c0_55, %c0_56] : memref<16x16x32xf32, #tpu.memory_space<vmem>>, vector<1x16x32xf32>
    %173 = vector.shape_cast %172 : vector<1x16x32xf32> to vector<16x32xf32>
    %c9_57 = arith.constant 9 : index
    %c0_58 = arith.constant 0 : index
    %c0_59 = arith.constant 0 : index
    %174 = vector.load %arg5[%c9_57, %c0_58, %c0_59] : memref<16x16x32xf32, #tpu.memory_space<vmem>>, vector<1x16x32xf32>
    %175 = vector.shape_cast %174 : vector<1x16x32xf32> to vector<16x32xf32>
    %176 = vector.broadcast %170 : vector<1x32xf32> to vector<16x32xf32>
    %177 = arith.mulf %176, %173 : vector<16x32xf32>
    %178 = arith.addf %163, %177 : vector<16x32xf32>
    %179 = vector.broadcast %171 : vector<1x32xf32> to vector<16x32xf32>
    %180 = arith.mulf %179, %175 : vector<16x32xf32>
    %181 = arith.subf %178, %180 : vector<16x32xf32>
    %182 = vector.broadcast %170 : vector<1x32xf32> to vector<16x32xf32>
    %183 = arith.mulf %182, %175 : vector<16x32xf32>
    %184 = arith.addf %169, %183 : vector<16x32xf32>
    %185 = vector.broadcast %171 : vector<1x32xf32> to vector<16x32xf32>
    %186 = arith.mulf %185, %173 : vector<16x32xf32>
    %187 = arith.addf %184, %186 : vector<16x32xf32>
    %188 = vector.extract_strided_slice %3 {offsets = [10, 0], sizes = [1, 32], strides = [1, 1]} : vector<16x32xf32> to vector<1x32xf32>
    %189 = vector.extract_strided_slice %5 {offsets = [10, 0], sizes = [1, 32], strides = [1, 1]} : vector<16x32xf32> to vector<1x32xf32>
    %c10 = arith.constant 10 : index
    %c0_60 = arith.constant 0 : index
    %c0_61 = arith.constant 0 : index
    %190 = vector.load %arg4[%c10, %c0_60, %c0_61] : memref<16x16x32xf32, #tpu.memory_space<vmem>>, vector<1x16x32xf32>
    %191 = vector.shape_cast %190 : vector<1x16x32xf32> to vector<16x32xf32>
    %c10_62 = arith.constant 10 : index
    %c0_63 = arith.constant 0 : index
    %c0_64 = arith.constant 0 : index
    %192 = vector.load %arg5[%c10_62, %c0_63, %c0_64] : memref<16x16x32xf32, #tpu.memory_space<vmem>>, vector<1x16x32xf32>
    %193 = vector.shape_cast %192 : vector<1x16x32xf32> to vector<16x32xf32>
    %194 = vector.broadcast %188 : vector<1x32xf32> to vector<16x32xf32>
    %195 = arith.mulf %194, %191 : vector<16x32xf32>
    %196 = arith.addf %181, %195 : vector<16x32xf32>
    %197 = vector.broadcast %189 : vector<1x32xf32> to vector<16x32xf32>
    %198 = arith.mulf %197, %193 : vector<16x32xf32>
    %199 = arith.subf %196, %198 : vector<16x32xf32>
    %200 = vector.broadcast %188 : vector<1x32xf32> to vector<16x32xf32>
    %201 = arith.mulf %200, %193 : vector<16x32xf32>
    %202 = arith.addf %187, %201 : vector<16x32xf32>
    %203 = vector.broadcast %189 : vector<1x32xf32> to vector<16x32xf32>
    %204 = arith.mulf %203, %191 : vector<16x32xf32>
    %205 = arith.addf %202, %204 : vector<16x32xf32>
    %206 = vector.extract_strided_slice %3 {offsets = [11, 0], sizes = [1, 32], strides = [1, 1]} : vector<16x32xf32> to vector<1x32xf32>
    %207 = vector.extract_strided_slice %5 {offsets = [11, 0], sizes = [1, 32], strides = [1, 1]} : vector<16x32xf32> to vector<1x32xf32>
    %c11 = arith.constant 11 : index
    %c0_65 = arith.constant 0 : index
    %c0_66 = arith.constant 0 : index
    %208 = vector.load %arg4[%c11, %c0_65, %c0_66] : memref<16x16x32xf32, #tpu.memory_space<vmem>>, vector<1x16x32xf32>
    %209 = vector.shape_cast %208 : vector<1x16x32xf32> to vector<16x32xf32>
    %c11_67 = arith.constant 11 : index
    %c0_68 = arith.constant 0 : index
    %c0_69 = arith.constant 0 : index
    %210 = vector.load %arg5[%c11_67, %c0_68, %c0_69] : memref<16x16x32xf32, #tpu.memory_space<vmem>>, vector<1x16x32xf32>
    %211 = vector.shape_cast %210 : vector<1x16x32xf32> to vector<16x32xf32>
    %212 = vector.broadcast %206 : vector<1x32xf32> to vector<16x32xf32>
    %213 = arith.mulf %212, %209 : vector<16x32xf32>
    %214 = arith.addf %199, %213 : vector<16x32xf32>
    %215 = vector.broadcast %207 : vector<1x32xf32> to vector<16x32xf32>
    %216 = arith.mulf %215, %211 : vector<16x32xf32>
    %217 = arith.subf %214, %216 : vector<16x32xf32>
    %218 = vector.broadcast %206 : vector<1x32xf32> to vector<16x32xf32>
    %219 = arith.mulf %218, %211 : vector<16x32xf32>
    %220 = arith.addf %205, %219 : vector<16x32xf32>
    %221 = vector.broadcast %207 : vector<1x32xf32> to vector<16x32xf32>
    %222 = arith.mulf %221, %209 : vector<16x32xf32>
    %223 = arith.addf %220, %222 : vector<16x32xf32>
    %224 = vector.extract_strided_slice %3 {offsets = [12, 0], sizes = [1, 32], strides = [1, 1]} : vector<16x32xf32> to vector<1x32xf32>
    %225 = vector.extract_strided_slice %5 {offsets = [12, 0], sizes = [1, 32], strides = [1, 1]} : vector<16x32xf32> to vector<1x32xf32>
    %c12 = arith.constant 12 : index
    %c0_70 = arith.constant 0 : index
    %c0_71 = arith.constant 0 : index
    %226 = vector.load %arg4[%c12, %c0_70, %c0_71] : memref<16x16x32xf32, #tpu.memory_space<vmem>>, vector<1x16x32xf32>
    %227 = vector.shape_cast %226 : vector<1x16x32xf32> to vector<16x32xf32>
    %c12_72 = arith.constant 12 : index
    %c0_73 = arith.constant 0 : index
    %c0_74 = arith.constant 0 : index
    %228 = vector.load %arg5[%c12_72, %c0_73, %c0_74] : memref<16x16x32xf32, #tpu.memory_space<vmem>>, vector<1x16x32xf32>
    %229 = vector.shape_cast %228 : vector<1x16x32xf32> to vector<16x32xf32>
    %230 = vector.broadcast %224 : vector<1x32xf32> to vector<16x32xf32>
    %231 = arith.mulf %230, %227 : vector<16x32xf32>
    %232 = arith.addf %217, %231 : vector<16x32xf32>
    %233 = vector.broadcast %225 : vector<1x32xf32> to vector<16x32xf32>
    %234 = arith.mulf %233, %229 : vector<16x32xf32>
    %235 = arith.subf %232, %234 : vector<16x32xf32>
    %236 = vector.broadcast %224 : vector<1x32xf32> to vector<16x32xf32>
    %237 = arith.mulf %236, %229 : vector<16x32xf32>
    %238 = arith.addf %223, %237 : vector<16x32xf32>
    %239 = vector.broadcast %225 : vector<1x32xf32> to vector<16x32xf32>
    %240 = arith.mulf %239, %227 : vector<16x32xf32>
    %241 = arith.addf %238, %240 : vector<16x32xf32>
    %242 = vector.extract_strided_slice %3 {offsets = [13, 0], sizes = [1, 32], strides = [1, 1]} : vector<16x32xf32> to vector<1x32xf32>
    %243 = vector.extract_strided_slice %5 {offsets = [13, 0], sizes = [1, 32], strides = [1, 1]} : vector<16x32xf32> to vector<1x32xf32>
    %c13 = arith.constant 13 : index
    %c0_75 = arith.constant 0 : index
    %c0_76 = arith.constant 0 : index
    %244 = vector.load %arg4[%c13, %c0_75, %c0_76] : memref<16x16x32xf32, #tpu.memory_space<vmem>>, vector<1x16x32xf32>
    %245 = vector.shape_cast %244 : vector<1x16x32xf32> to vector<16x32xf32>
    %c13_77 = arith.constant 13 : index
    %c0_78 = arith.constant 0 : index
    %c0_79 = arith.constant 0 : index
    %246 = vector.load %arg5[%c13_77, %c0_78, %c0_79] : memref<16x16x32xf32, #tpu.memory_space<vmem>>, vector<1x16x32xf32>
    %247 = vector.shape_cast %246 : vector<1x16x32xf32> to vector<16x32xf32>
    %248 = vector.broadcast %242 : vector<1x32xf32> to vector<16x32xf32>
    %249 = arith.mulf %248, %245 : vector<16x32xf32>
    %250 = arith.addf %235, %249 : vector<16x32xf32>
    %251 = vector.broadcast %243 : vector<1x32xf32> to vector<16x32xf32>
    %252 = arith.mulf %251, %247 : vector<16x32xf32>
    %253 = arith.subf %250, %252 : vector<16x32xf32>
    %254 = vector.broadcast %242 : vector<1x32xf32> to vector<16x32xf32>
    %255 = arith.mulf %254, %247 : vector<16x32xf32>
    %256 = arith.addf %241, %255 : vector<16x32xf32>
    %257 = vector.broadcast %243 : vector<1x32xf32> to vector<16x32xf32>
    %258 = arith.mulf %257, %245 : vector<16x32xf32>
    %259 = arith.addf %256, %258 : vector<16x32xf32>
    %260 = vector.extract_strided_slice %3 {offsets = [14, 0], sizes = [1, 32], strides = [1, 1]} : vector<16x32xf32> to vector<1x32xf32>
    %261 = vector.extract_strided_slice %5 {offsets = [14, 0], sizes = [1, 32], strides = [1, 1]} : vector<16x32xf32> to vector<1x32xf32>
    %c14 = arith.constant 14 : index
    %c0_80 = arith.constant 0 : index
    %c0_81 = arith.constant 0 : index
    %262 = vector.load %arg4[%c14, %c0_80, %c0_81] : memref<16x16x32xf32, #tpu.memory_space<vmem>>, vector<1x16x32xf32>
    %263 = vector.shape_cast %262 : vector<1x16x32xf32> to vector<16x32xf32>
    %c14_82 = arith.constant 14 : index
    %c0_83 = arith.constant 0 : index
    %c0_84 = arith.constant 0 : index
    %264 = vector.load %arg5[%c14_82, %c0_83, %c0_84] : memref<16x16x32xf32, #tpu.memory_space<vmem>>, vector<1x16x32xf32>
    %265 = vector.shape_cast %264 : vector<1x16x32xf32> to vector<16x32xf32>
    %266 = vector.broadcast %260 : vector<1x32xf32> to vector<16x32xf32>
    %267 = arith.mulf %266, %263 : vector<16x32xf32>
    %268 = arith.addf %253, %267 : vector<16x32xf32>
    %269 = vector.broadcast %261 : vector<1x32xf32> to vector<16x32xf32>
    %270 = arith.mulf %269, %265 : vector<16x32xf32>
    %271 = arith.subf %268, %270 : vector<16x32xf32>
    %272 = vector.broadcast %260 : vector<1x32xf32> to vector<16x32xf32>
    %273 = arith.mulf %272, %265 : vector<16x32xf32>
    %274 = arith.addf %259, %273 : vector<16x32xf32>
    %275 = vector.broadcast %261 : vector<1x32xf32> to vector<16x32xf32>
    %276 = arith.mulf %275, %263 : vector<16x32xf32>
    %277 = arith.addf %274, %276 : vector<16x32xf32>
    %278 = vector.extract_strided_slice %3 {offsets = [15, 0], sizes = [1, 32], strides = [1, 1]} : vector<16x32xf32> to vector<1x32xf32>
    %279 = vector.extract_strided_slice %5 {offsets = [15, 0], sizes = [1, 32], strides = [1, 1]} : vector<16x32xf32> to vector<1x32xf32>
    %c15 = arith.constant 15 : index
    %c0_85 = arith.constant 0 : index
    %c0_86 = arith.constant 0 : index
    %280 = vector.load %arg4[%c15, %c0_85, %c0_86] : memref<16x16x32xf32, #tpu.memory_space<vmem>>, vector<1x16x32xf32>
    %281 = vector.shape_cast %280 : vector<1x16x32xf32> to vector<16x32xf32>
    %c15_87 = arith.constant 15 : index
    %c0_88 = arith.constant 0 : index
    %c0_89 = arith.constant 0 : index
    %282 = vector.load %arg5[%c15_87, %c0_88, %c0_89] : memref<16x16x32xf32, #tpu.memory_space<vmem>>, vector<1x16x32xf32>
    %283 = vector.shape_cast %282 : vector<1x16x32xf32> to vector<16x32xf32>
    %284 = vector.broadcast %278 : vector<1x32xf32> to vector<16x32xf32>
    %285 = arith.mulf %284, %281 : vector<16x32xf32>
    %286 = arith.addf %271, %285 : vector<16x32xf32>
    %287 = vector.broadcast %279 : vector<1x32xf32> to vector<16x32xf32>
    %288 = arith.mulf %287, %283 : vector<16x32xf32>
    %289 = arith.subf %286, %288 : vector<16x32xf32>
    %290 = vector.broadcast %278 : vector<1x32xf32> to vector<16x32xf32>
    %291 = arith.mulf %290, %283 : vector<16x32xf32>
    %292 = arith.addf %277, %291 : vector<16x32xf32>
    %293 = vector.broadcast %279 : vector<1x32xf32> to vector<16x32xf32>
    %294 = arith.mulf %293, %281 : vector<16x32xf32>
    %295 = arith.addf %292, %294 : vector<16x32xf32>
    %c0_90 = arith.constant 0 : index
    %c0_91 = arith.constant 0 : index
    %296 = vector.load %arg6[%c0_90, %c0_91] : memref<32x256xf32, #tpu.memory_space<vmem>>, vector<32x256xf32>
    %cst_92 = arith.constant dense<0.000000e+00> : vector<16x256xf32>
    %297 = tpu.matmul %289, %296, %cst_92 {dimension_numbers = #tpu.dot_dimension_numbers<[1], [0], [0], [1], [0, 0, 1, 1], [], []>} : vector<16x32xf32>, vector<32x256xf32>, vector<16x256xf32> -> vector<16x256xf32>
    %c0_93 = arith.constant 0 : index
    %c0_94 = arith.constant 0 : index
    %298 = vector.load %arg7[%c0_93, %c0_94] : memref<32x256xf32, #tpu.memory_space<vmem>>, vector<32x256xf32>
    %cst_95 = arith.constant dense<0.000000e+00> : vector<16x256xf32>
    %299 = tpu.matmul %295, %298, %cst_95 {dimension_numbers = #tpu.dot_dimension_numbers<[1], [0], [0], [1], [0, 0, 1, 1], [], []>} : vector<16x32xf32>, vector<32x256xf32>, vector<16x256xf32> -> vector<16x256xf32>
    %300 = arith.subf %297, %299 : vector<16x256xf32>
    %c0_96 = arith.constant 0 : index
    %c0_97 = arith.constant 0 : index
    %301 = vector.load %arg8[%c0_96, %c0_97] : memref<16x16xf32, #tpu.memory_space<vmem>>, vector<16x16xf32>
    %cst_98 = arith.constant dense<0.000000e+00> : vector<16x256xf32>
    %302 = tpu.matmul %301, %1, %cst_98 {dimension_numbers = #tpu.dot_dimension_numbers<[1], [0], [0], [1], [0, 0, 1, 1], [], []>} : vector<16x16xf32>, vector<16x256xf32>, vector<16x256xf32> -> vector<16x256xf32>
    %303 = arith.addf %300, %302 : vector<16x256xf32>
    %c0_99 = arith.constant 0 : index
    %c0_100 = arith.constant 0 : index
    %304 = vector.load %arg9[%c0_99, %c0_100] : memref<16x1xf32, #tpu.memory_space<vmem>>, vector<16x1xf32>
    %305 = vector.broadcast %304 : vector<16x1xf32> to vector<16x256xf32>
    %306 = arith.addf %303, %305 : vector<16x256xf32>
    %307 = arith.mulf %306, %306 : vector<16x256xf32>
    %308 = arith.mulf %306, %307 : vector<16x256xf32>
    %cst_101 = arith.constant 4.471500e-02 : f32
    %309 = vector.broadcast %cst_101 : f32 to vector<16x256xf32>
    %310 = arith.mulf %309, %308 : vector<16x256xf32>
    %311 = arith.addf %306, %310 : vector<16x256xf32>
    %cst_102 = arith.constant 0.797884583 : f32
    %312 = vector.broadcast %cst_102 : f32 to vector<16x256xf32>
    %313 = arith.mulf %312, %311 : vector<16x256xf32>
    %314 = math.tanh %313 : vector<16x256xf32>
    %cst_103 = arith.constant 1.000000e+00 : f32
    %315 = vector.broadcast %cst_103 : f32 to vector<16x256xf32>
    %316 = arith.addf %315, %314 : vector<16x256xf32>
    %cst_104 = arith.constant 5.000000e-01 : f32
    %317 = vector.broadcast %cst_104 : f32 to vector<16x256xf32>
    %318 = arith.mulf %317, %316 : vector<16x256xf32>
    %319 = arith.mulf %306, %318 : vector<16x256xf32>
    %c0_105 = arith.constant 0 : index
    %c0_106 = arith.constant 0 : index
    %c0_107 = arith.constant 0 : index
    %320 = vector.load %arg10[%c0_105, %c0_106, %c0_107] : memref<1x16x256xf32, #tpu.memory_space<vmem>>, vector<1x16x256xf32>
    %321 = vector.shape_cast %320 : vector<1x16x256xf32> to vector<16x256xf32>
    %322 = vector.shape_cast %319 : vector<16x256xf32> to vector<1x16x256xf32>
    tpu.vector_store %arg10[%c0_105, %c0_106, %c0_107], %322 {strides = array<i32>} : memref<1x16x256xf32, #tpu.memory_space<vmem>>, vector<1x16x256xf32>,
    return
  }
  func.func @transform_0(%arg0: i32) -> (i32, i32, i32) {
    %c0_i32 = arith.constant 0 : i32
    %c0_i32_0 = arith.constant 0 : i32
    %c0_i32_1 = arith.constant 0 : i32
    return %arg0, %c0_i32, %c0_i32_0 : i32, i32, i32
  }
  func.func @transform_1(%arg0: i32) -> (i32, i32) {
    %c0_i32 = arith.constant 0 : i32
    %c0_i32_0 = arith.constant 0 : i32
    %c0_i32_1 = arith.constant 0 : i32
    return %c0_i32, %c0_i32_0 : i32, i32
  }
  func.func @transform_2(%arg0: i32) -> (i32, i32) {
    %c0_i32 = arith.constant 0 : i32
    %c0_i32_0 = arith.constant 0 : i32
    %c0_i32_1 = arith.constant 0 : i32
    return %c0_i32, %c0_i32_0 : i32, i32
  }
  func.func @transform_3(%arg0: i32) -> (i32, i32, i32) {
    %c0_i32 = arith.constant 0 : i32
    %c0_i32_0 = arith.constant 0 : i32
    %c0_i32_1 = arith.constant 0 : i32
    %c0_i32_2 = arith.constant 0 : i32
    return %c0_i32, %c0_i32_0, %c0_i32_1 : i32, i32, i32
  }
  func.func @transform_4(%arg0: i32) -> (i32, i32, i32) {
    %c0_i32 = arith.constant 0 : i32
    %c0_i32_0 = arith.constant 0 : i32
    %c0_i32_1 = arith.constant 0 : i32
    %c0_i32_2 = arith.constant 0 : i32
    return %c0_i32, %c0_i32_0, %c0_i32_1 : i32, i32, i32
  }
  func.func @transform_5(%arg0: i32) -> (i32, i32) {
    %c0_i32 = arith.constant 0 : i32
    %c0_i32_0 = arith.constant 0 : i32
    %c0_i32_1 = arith.constant 0 : i32
    return %c0_i32, %c0_i32_0 : i32, i32
  }
  func.func @transform_6(%arg0: i32) -> (i32, i32) {
    %c0_i32 = arith.constant 0 : i32
    %c0_i32_0 = arith.constant 0 : i32
    %c0_i32_1 = arith.constant 0 : i32
    return %c0_i32, %c0_i32_0 : i32, i32
  }
  func.func @transform_7(%arg0: i32) -> (i32, i32) {
    %c0_i32 = arith.constant 0 : i32
    %c0_i32_0 = arith.constant 0 : i32
    %c0_i32_1 = arith.constant 0 : i32
    return %c0_i32, %c0_i32_0 : i32, i32
  }
  func.func @transform_8(%arg0: i32) -> (i32, i32) {
    %c0_i32 = arith.constant 0 : i32
    %c0_i32_0 = arith.constant 0 : i32
    %c0_i32_1 = arith.constant 0 : i32
    return %c0_i32, %c0_i32_0 : i32, i32
  }
  func.func @transform_9(%arg0: i32) -> (i32, i32, i32) {
    %c0_i32 = arith.constant 0 : i32
    %c0_i32_0 = arith.constant 0 : i32
    %c0_i32_1 = arith.constant 0 : i32
    return %arg0, %c0_i32, %c0_i32_0 : i32, i32, i32
  }
}

module attributes {stable_mosaic.version = 11 : i64} {
  func.func @_cmix_kernel(%arg0: i32, %arg1: i32, %arg2: memref<1x3x256xf32, #tpu.memory_space<vmem>>, %arg3: memref<16x3xf32, #tpu.memory_space<vmem>>, %arg4: memref<16x1xf32, #tpu.memory_space<vmem>>, %arg5: memref<1x16x256xf32, #tpu.memory_space<vmem>>) attributes {dimension_semantics = [#tpu.dimension_semantics<parallel>, #tpu.dimension_semantics<parallel>], iteration_bounds = array<i64: 2, 1>, scalar_prefetch = 0 : i64, scratch_operands = 0 : i64, tpu.core_type = #tpu.core_type<tc>, window_params = [{transform_indices = @transform_0, window_bounds = array<i64: 1, 3, 256>}, {pipeline_mode = #tpu.pipeline_mode<synchronous>, transform_indices = @transform_1, window_bounds = array<i64: 16, 3>}, {pipeline_mode = #tpu.pipeline_mode<synchronous>, transform_indices = @transform_2, window_bounds = array<i64: 16, 1>}, {transform_indices = @transform_3, window_bounds = array<i64: 1, 16, 256>}]} {
    %c0 = arith.constant 0 : index
    %c0_0 = arith.constant 0 : index
    %0 = vector.load %arg3[%c0, %c0_0] : memref<16x3xf32, #tpu.memory_space<vmem>>, vector<16x3xf32>
    %c0_1 = arith.constant 0 : index
    %c0_2 = arith.constant 0 : index
    %c0_3 = arith.constant 0 : index
    %1 = vector.load %arg2[%c0_1, %c0_2, %c0_3] : memref<1x3x256xf32, #tpu.memory_space<vmem>>, vector<1x3x256xf32>
    %2 = vector.shape_cast %1 : vector<1x3x256xf32> to vector<3x256xf32>
    %cst = arith.constant dense<0.000000e+00> : vector<16x256xf32>
    %3 = tpu.matmul %0, %2, %cst {dimension_numbers = #tpu.dot_dimension_numbers<[1], [0], [0], [1], [0, 0, 1, 1], [], []>} : vector<16x3xf32>, vector<3x256xf32>, vector<16x256xf32> -> vector<16x256xf32>
    %c0_4 = arith.constant 0 : index
    %c0_5 = arith.constant 0 : index
    %4 = vector.load %arg4[%c0_4, %c0_5] : memref<16x1xf32, #tpu.memory_space<vmem>>, vector<16x1xf32>
    %5 = vector.broadcast %4 : vector<16x1xf32> to vector<16x256xf32>
    %6 = arith.addf %3, %5 : vector<16x256xf32>
    %c0_6 = arith.constant 0 : index
    %c0_7 = arith.constant 0 : index
    %c0_8 = arith.constant 0 : index
    %7 = vector.load %arg5[%c0_6, %c0_7, %c0_8] : memref<1x16x256xf32, #tpu.memory_space<vmem>>, vector<1x16x256xf32>
    %8 = vector.shape_cast %7 : vector<1x16x256xf32> to vector<16x256xf32>
    %9 = vector.shape_cast %6 : vector<16x256xf32> to vector<1x16x256xf32>
    tpu.vector_store %arg5[%c0_6, %c0_7, %c0_8], %9 {strides = array<i32>} : memref<1x16x256xf32, #tpu.memory_space<vmem>>, vector<1x16x256xf32>,
    return
  }
  func.func @transform_0(%arg0: i32, %arg1: i32) -> (i32, i32, i32) {
    %c0_i32 = arith.constant 0 : i32
    %c0_i32_0 = arith.constant 0 : i32
    return %arg0, %c0_i32, %arg1 : i32, i32, i32
  }
  func.func @transform_1(%arg0: i32, %arg1: i32) -> (i32, i32) {
    %c0_i32 = arith.constant 0 : i32
    %c0_i32_0 = arith.constant 0 : i32
    %c0_i32_1 = arith.constant 0 : i32
    return %c0_i32, %c0_i32_0 : i32, i32
  }
  func.func @transform_2(%arg0: i32, %arg1: i32) -> (i32, i32) {
    %c0_i32 = arith.constant 0 : i32
    %c0_i32_0 = arith.constant 0 : i32
    %c0_i32_1 = arith.constant 0 : i32
    return %c0_i32, %c0_i32_0 : i32, i32
  }
  func.func @transform_3(%arg0: i32, %arg1: i32) -> (i32, i32, i32) {
    %c0_i32 = arith.constant 0 : i32
    %c0_i32_0 = arith.constant 0 : i32
    return %arg0, %c0_i32, %arg1 : i32, i32, i32
  }
}

module attributes {stable_mosaic.version = 11 : i64} {
  func.func @_spectral_block_kernel(%arg0: i32, %arg1: memref<1x16x256xf32, #tpu.memory_space<vmem>>, %arg2: memref<256x32xf32, #tpu.memory_space<vmem>>, %arg3: memref<256x32xf32, #tpu.memory_space<vmem>>, %arg4: memref<16x16x32xf32, #tpu.memory_space<vmem>>, %arg5: memref<16x16x32xf32, #tpu.memory_space<vmem>>, %arg6: memref<32x256xf32, #tpu.memory_space<vmem>>, %arg7: memref<32x256xf32, #tpu.memory_space<vmem>>, %arg8: memref<16x16xf32, #tpu.memory_space<vmem>>, %arg9: memref<16x1xf32, #tpu.memory_space<vmem>>, %arg10: memref<1x16x256xf32, #tpu.memory_space<vmem>>) attributes {dimension_semantics = [#tpu.dimension_semantics<parallel>], iteration_bounds = array<i64: 2>, scalar_prefetch = 0 : i64, scratch_operands = 0 : i64, tpu.core_type = #tpu.core_type<tc>, window_params = [{transform_indices = @transform_0, window_bounds = array<i64: 1, 16, 256>}, {pipeline_mode = #tpu.pipeline_mode<synchronous>, transform_indices = @transform_1, window_bounds = array<i64: 256, 32>}, {pipeline_mode = #tpu.pipeline_mode<synchronous>, transform_indices = @transform_2, window_bounds = array<i64: 256, 32>}, {pipeline_mode = #tpu.pipeline_mode<synchronous>, transform_indices = @transform_3, window_bounds = array<i64: 16, 16, 32>}, {pipeline_mode = #tpu.pipeline_mode<synchronous>, transform_indices = @transform_4, window_bounds = array<i64: 16, 16, 32>}, {pipeline_mode = #tpu.pipeline_mode<synchronous>, transform_indices = @transform_5, window_bounds = array<i64: 32, 256>}, {pipeline_mode = #tpu.pipeline_mode<synchronous>, transform_indices = @transform_6, window_bounds = array<i64: 32, 256>}, {pipeline_mode = #tpu.pipeline_mode<synchronous>, transform_indices = @transform_7, window_bounds = array<i64: 16, 16>}, {pipeline_mode = #tpu.pipeline_mode<synchronous>, transform_indices = @transform_8, window_bounds = array<i64: 16, 1>}, {transform_indices = @transform_9, window_bounds = array<i64: 1, 16, 256>}]} {
    %c0 = arith.constant 0 : index
    %c0_0 = arith.constant 0 : index
    %c0_1 = arith.constant 0 : index
    %0 = vector.load %arg1[%c0, %c0_0, %c0_1] : memref<1x16x256xf32, #tpu.memory_space<vmem>>, vector<1x16x256xf32>
    %1 = vector.shape_cast %0 : vector<1x16x256xf32> to vector<16x256xf32>
    %c0_2 = arith.constant 0 : index
    %c0_3 = arith.constant 0 : index
    %2 = vector.load %arg2[%c0_2, %c0_3] : memref<256x32xf32, #tpu.memory_space<vmem>>, vector<256x32xf32>
    %cst = arith.constant dense<0.000000e+00> : vector<16x32xf32>
    %3 = tpu.matmul %1, %2, %cst {dimension_numbers = #tpu.dot_dimension_numbers<[1], [0], [0], [1], [0, 0, 1, 1], [], []>} : vector<16x256xf32>, vector<256x32xf32>, vector<16x32xf32> -> vector<16x32xf32>
    %c0_4 = arith.constant 0 : index
    %c0_5 = arith.constant 0 : index
    %4 = vector.load %arg3[%c0_4, %c0_5] : memref<256x32xf32, #tpu.memory_space<vmem>>, vector<256x32xf32>
    %cst_6 = arith.constant dense<0.000000e+00> : vector<16x32xf32>
    %5 = tpu.matmul %1, %4, %cst_6 {dimension_numbers = #tpu.dot_dimension_numbers<[1], [0], [0], [1], [0, 0, 1, 1], [], []>} : vector<16x256xf32>, vector<256x32xf32>, vector<16x32xf32> -> vector<16x32xf32>
    %cst_7 = arith.constant 0.000000e+00 : f32
    %6 = vector.broadcast %cst_7 : f32 to vector<16x32xf32>
    %cst_8 = arith.constant 0.000000e+00 : f32
    %7 = vector.broadcast %cst_8 : f32 to vector<16x32xf32>
    %8 = vector.extract_strided_slice %3 {offsets = [0, 0], sizes = [1, 32], strides = [1, 1]} : vector<16x32xf32> to vector<1x32xf32>
    %9 = vector.extract_strided_slice %5 {offsets = [0, 0], sizes = [1, 32], strides = [1, 1]} : vector<16x32xf32> to vector<1x32xf32>
    %c0_9 = arith.constant 0 : index
    %c0_10 = arith.constant 0 : index
    %c0_11 = arith.constant 0 : index
    %10 = vector.load %arg4[%c0_9, %c0_10, %c0_11] : memref<16x16x32xf32, #tpu.memory_space<vmem>>, vector<1x16x32xf32>
    %11 = vector.shape_cast %10 : vector<1x16x32xf32> to vector<16x32xf32>
    %c0_12 = arith.constant 0 : index
    %c0_13 = arith.constant 0 : index
    %c0_14 = arith.constant 0 : index
    %12 = vector.load %arg5[%c0_12, %c0_13, %c0_14] : memref<16x16x32xf32, #tpu.memory_space<vmem>>, vector<1x16x32xf32>
    %13 = vector.shape_cast %12 : vector<1x16x32xf32> to vector<16x32xf32>
    %14 = vector.broadcast %8 : vector<1x32xf32> to vector<16x32xf32>
    %15 = arith.mulf %14, %11 : vector<16x32xf32>
    %16 = arith.addf %6, %15 : vector<16x32xf32>
    %17 = vector.broadcast %9 : vector<1x32xf32> to vector<16x32xf32>
    %18 = arith.mulf %17, %13 : vector<16x32xf32>
    %19 = arith.subf %16, %18 : vector<16x32xf32>
    %20 = vector.broadcast %8 : vector<1x32xf32> to vector<16x32xf32>
    %21 = arith.mulf %20, %13 : vector<16x32xf32>
    %22 = arith.addf %7, %21 : vector<16x32xf32>
    %23 = vector.broadcast %9 : vector<1x32xf32> to vector<16x32xf32>
    %24 = arith.mulf %23, %11 : vector<16x32xf32>
    %25 = arith.addf %22, %24 : vector<16x32xf32>
    %26 = vector.extract_strided_slice %3 {offsets = [1, 0], sizes = [1, 32], strides = [1, 1]} : vector<16x32xf32> to vector<1x32xf32>
    %27 = vector.extract_strided_slice %5 {offsets = [1, 0], sizes = [1, 32], strides = [1, 1]} : vector<16x32xf32> to vector<1x32xf32>
    %c1 = arith.constant 1 : index
    %c0_15 = arith.constant 0 : index
    %c0_16 = arith.constant 0 : index
    %28 = vector.load %arg4[%c1, %c0_15, %c0_16] : memref<16x16x32xf32, #tpu.memory_space<vmem>>, vector<1x16x32xf32>
    %29 = vector.shape_cast %28 : vector<1x16x32xf32> to vector<16x32xf32>
    %c1_17 = arith.constant 1 : index
    %c0_18 = arith.constant 0 : index
    %c0_19 = arith.constant 0 : index
    %30 = vector.load %arg5[%c1_17, %c0_18, %c0_19] : memref<16x16x32xf32, #tpu.memory_space<vmem>>, vector<1x16x32xf32>
    %31 = vector.shape_cast %30 : vector<1x16x32xf32> to vector<16x32xf32>
    %32 = vector.broadcast %26 : vector<1x32xf32> to vector<16x32xf32>
    %33 = arith.mulf %32, %29 : vector<16x32xf32>
    %34 = arith.addf %19, %33 : vector<16x32xf32>
    %35 = vector.broadcast %27 : vector<1x32xf32> to vector<16x32xf32>
    %36 = arith.mulf %35, %31 : vector<16x32xf32>
    %37 = arith.subf %34, %36 : vector<16x32xf32>
    %38 = vector.broadcast %26 : vector<1x32xf32> to vector<16x32xf32>
    %39 = arith.mulf %38, %31 : vector<16x32xf32>
    %40 = arith.addf %25, %39 : vector<16x32xf32>
    %41 = vector.broadcast %27 : vector<1x32xf32> to vector<16x32xf32>
    %42 = arith.mulf %41, %29 : vector<16x32xf32>
    %43 = arith.addf %40, %42 : vector<16x32xf32>
    %44 = vector.extract_strided_slice %3 {offsets = [2, 0], sizes = [1, 32], strides = [1, 1]} : vector<16x32xf32> to vector<1x32xf32>
    %45 = vector.extract_strided_slice %5 {offsets = [2, 0], sizes = [1, 32], strides = [1, 1]} : vector<16x32xf32> to vector<1x32xf32>
    %c2 = arith.constant 2 : index
    %c0_20 = arith.constant 0 : index
    %c0_21 = arith.constant 0 : index
    %46 = vector.load %arg4[%c2, %c0_20, %c0_21] : memref<16x16x32xf32, #tpu.memory_space<vmem>>, vector<1x16x32xf32>
    %47 = vector.shape_cast %46 : vector<1x16x32xf32> to vector<16x32xf32>
    %c2_22 = arith.constant 2 : index
    %c0_23 = arith.constant 0 : index
    %c0_24 = arith.constant 0 : index
    %48 = vector.load %arg5[%c2_22, %c0_23, %c0_24] : memref<16x16x32xf32, #tpu.memory_space<vmem>>, vector<1x16x32xf32>
    %49 = vector.shape_cast %48 : vector<1x16x32xf32> to vector<16x32xf32>
    %50 = vector.broadcast %44 : vector<1x32xf32> to vector<16x32xf32>
    %51 = arith.mulf %50, %47 : vector<16x32xf32>
    %52 = arith.addf %37, %51 : vector<16x32xf32>
    %53 = vector.broadcast %45 : vector<1x32xf32> to vector<16x32xf32>
    %54 = arith.mulf %53, %49 : vector<16x32xf32>
    %55 = arith.subf %52, %54 : vector<16x32xf32>
    %56 = vector.broadcast %44 : vector<1x32xf32> to vector<16x32xf32>
    %57 = arith.mulf %56, %49 : vector<16x32xf32>
    %58 = arith.addf %43, %57 : vector<16x32xf32>
    %59 = vector.broadcast %45 : vector<1x32xf32> to vector<16x32xf32>
    %60 = arith.mulf %59, %47 : vector<16x32xf32>
    %61 = arith.addf %58, %60 : vector<16x32xf32>
    %62 = vector.extract_strided_slice %3 {offsets = [3, 0], sizes = [1, 32], strides = [1, 1]} : vector<16x32xf32> to vector<1x32xf32>
    %63 = vector.extract_strided_slice %5 {offsets = [3, 0], sizes = [1, 32], strides = [1, 1]} : vector<16x32xf32> to vector<1x32xf32>
    %c3 = arith.constant 3 : index
    %c0_25 = arith.constant 0 : index
    %c0_26 = arith.constant 0 : index
    %64 = vector.load %arg4[%c3, %c0_25, %c0_26] : memref<16x16x32xf32, #tpu.memory_space<vmem>>, vector<1x16x32xf32>
    %65 = vector.shape_cast %64 : vector<1x16x32xf32> to vector<16x32xf32>
    %c3_27 = arith.constant 3 : index
    %c0_28 = arith.constant 0 : index
    %c0_29 = arith.constant 0 : index
    %66 = vector.load %arg5[%c3_27, %c0_28, %c0_29] : memref<16x16x32xf32, #tpu.memory_space<vmem>>, vector<1x16x32xf32>
    %67 = vector.shape_cast %66 : vector<1x16x32xf32> to vector<16x32xf32>
    %68 = vector.broadcast %62 : vector<1x32xf32> to vector<16x32xf32>
    %69 = arith.mulf %68, %65 : vector<16x32xf32>
    %70 = arith.addf %55, %69 : vector<16x32xf32>
    %71 = vector.broadcast %63 : vector<1x32xf32> to vector<16x32xf32>
    %72 = arith.mulf %71, %67 : vector<16x32xf32>
    %73 = arith.subf %70, %72 : vector<16x32xf32>
    %74 = vector.broadcast %62 : vector<1x32xf32> to vector<16x32xf32>
    %75 = arith.mulf %74, %67 : vector<16x32xf32>
    %76 = arith.addf %61, %75 : vector<16x32xf32>
    %77 = vector.broadcast %63 : vector<1x32xf32> to vector<16x32xf32>
    %78 = arith.mulf %77, %65 : vector<16x32xf32>
    %79 = arith.addf %76, %78 : vector<16x32xf32>
    %80 = vector.extract_strided_slice %3 {offsets = [4, 0], sizes = [1, 32], strides = [1, 1]} : vector<16x32xf32> to vector<1x32xf32>
    %81 = vector.extract_strided_slice %5 {offsets = [4, 0], sizes = [1, 32], strides = [1, 1]} : vector<16x32xf32> to vector<1x32xf32>
    %c4 = arith.constant 4 : index
    %c0_30 = arith.constant 0 : index
    %c0_31 = arith.constant 0 : index
    %82 = vector.load %arg4[%c4, %c0_30, %c0_31] : memref<16x16x32xf32, #tpu.memory_space<vmem>>, vector<1x16x32xf32>
    %83 = vector.shape_cast %82 : vector<1x16x32xf32> to vector<16x32xf32>
    %c4_32 = arith.constant 4 : index
    %c0_33 = arith.constant 0 : index
    %c0_34 = arith.constant 0 : index
    %84 = vector.load %arg5[%c4_32, %c0_33, %c0_34] : memref<16x16x32xf32, #tpu.memory_space<vmem>>, vector<1x16x32xf32>
    %85 = vector.shape_cast %84 : vector<1x16x32xf32> to vector<16x32xf32>
    %86 = vector.broadcast %80 : vector<1x32xf32> to vector<16x32xf32>
    %87 = arith.mulf %86, %83 : vector<16x32xf32>
    %88 = arith.addf %73, %87 : vector<16x32xf32>
    %89 = vector.broadcast %81 : vector<1x32xf32> to vector<16x32xf32>
    %90 = arith.mulf %89, %85 : vector<16x32xf32>
    %91 = arith.subf %88, %90 : vector<16x32xf32>
    %92 = vector.broadcast %80 : vector<1x32xf32> to vector<16x32xf32>
    %93 = arith.mulf %92, %85 : vector<16x32xf32>
    %94 = arith.addf %79, %93 : vector<16x32xf32>
    %95 = vector.broadcast %81 : vector<1x32xf32> to vector<16x32xf32>
    %96 = arith.mulf %95, %83 : vector<16x32xf32>
    %97 = arith.addf %94, %96 : vector<16x32xf32>
    %98 = vector.extract_strided_slice %3 {offsets = [5, 0], sizes = [1, 32], strides = [1, 1]} : vector<16x32xf32> to vector<1x32xf32>
    %99 = vector.extract_strided_slice %5 {offsets = [5, 0], sizes = [1, 32], strides = [1, 1]} : vector<16x32xf32> to vector<1x32xf32>
    %c5 = arith.constant 5 : index
    %c0_35 = arith.constant 0 : index
    %c0_36 = arith.constant 0 : index
    %100 = vector.load %arg4[%c5, %c0_35, %c0_36] : memref<16x16x32xf32, #tpu.memory_space<vmem>>, vector<1x16x32xf32>
    %101 = vector.shape_cast %100 : vector<1x16x32xf32> to vector<16x32xf32>
    %c5_37 = arith.constant 5 : index
    %c0_38 = arith.constant 0 : index
    %c0_39 = arith.constant 0 : index
    %102 = vector.load %arg5[%c5_37, %c0_38, %c0_39] : memref<16x16x32xf32, #tpu.memory_space<vmem>>, vector<1x16x32xf32>
    %103 = vector.shape_cast %102 : vector<1x16x32xf32> to vector<16x32xf32>
    %104 = vector.broadcast %98 : vector<1x32xf32> to vector<16x32xf32>
    %105 = arith.mulf %104, %101 : vector<16x32xf32>
    %106 = arith.addf %91, %105 : vector<16x32xf32>
    %107 = vector.broadcast %99 : vector<1x32xf32> to vector<16x32xf32>
    %108 = arith.mulf %107, %103 : vector<16x32xf32>
    %109 = arith.subf %106, %108 : vector<16x32xf32>
    %110 = vector.broadcast %98 : vector<1x32xf32> to vector<16x32xf32>
    %111 = arith.mulf %110, %103 : vector<16x32xf32>
    %112 = arith.addf %97, %111 : vector<16x32xf32>
    %113 = vector.broadcast %99 : vector<1x32xf32> to vector<16x32xf32>
    %114 = arith.mulf %113, %101 : vector<16x32xf32>
    %115 = arith.addf %112, %114 : vector<16x32xf32>
    %116 = vector.extract_strided_slice %3 {offsets = [6, 0], sizes = [1, 32], strides = [1, 1]} : vector<16x32xf32> to vector<1x32xf32>
    %117 = vector.extract_strided_slice %5 {offsets = [6, 0], sizes = [1, 32], strides = [1, 1]} : vector<16x32xf32> to vector<1x32xf32>
    %c6 = arith.constant 6 : index
    %c0_40 = arith.constant 0 : index
    %c0_41 = arith.constant 0 : index
    %118 = vector.load %arg4[%c6, %c0_40, %c0_41] : memref<16x16x32xf32, #tpu.memory_space<vmem>>, vector<1x16x32xf32>
    %119 = vector.shape_cast %118 : vector<1x16x32xf32> to vector<16x32xf32>
    %c6_42 = arith.constant 6 : index
    %c0_43 = arith.constant 0 : index
    %c0_44 = arith.constant 0 : index
    %120 = vector.load %arg5[%c6_42, %c0_43, %c0_44] : memref<16x16x32xf32, #tpu.memory_space<vmem>>, vector<1x16x32xf32>
    %121 = vector.shape_cast %120 : vector<1x16x32xf32> to vector<16x32xf32>
    %122 = vector.broadcast %116 : vector<1x32xf32> to vector<16x32xf32>
    %123 = arith.mulf %122, %119 : vector<16x32xf32>
    %124 = arith.addf %109, %123 : vector<16x32xf32>
    %125 = vector.broadcast %117 : vector<1x32xf32> to vector<16x32xf32>
    %126 = arith.mulf %125, %121 : vector<16x32xf32>
    %127 = arith.subf %124, %126 : vector<16x32xf32>
    %128 = vector.broadcast %116 : vector<1x32xf32> to vector<16x32xf32>
    %129 = arith.mulf %128, %121 : vector<16x32xf32>
    %130 = arith.addf %115, %129 : vector<16x32xf32>
    %131 = vector.broadcast %117 : vector<1x32xf32> to vector<16x32xf32>
    %132 = arith.mulf %131, %119 : vector<16x32xf32>
    %133 = arith.addf %130, %132 : vector<16x32xf32>
    %134 = vector.extract_strided_slice %3 {offsets = [7, 0], sizes = [1, 32], strides = [1, 1]} : vector<16x32xf32> to vector<1x32xf32>
    %135 = vector.extract_strided_slice %5 {offsets = [7, 0], sizes = [1, 32], strides = [1, 1]} : vector<16x32xf32> to vector<1x32xf32>
    %c7 = arith.constant 7 : index
    %c0_45 = arith.constant 0 : index
    %c0_46 = arith.constant 0 : index
    %136 = vector.load %arg4[%c7, %c0_45, %c0_46] : memref<16x16x32xf32, #tpu.memory_space<vmem>>, vector<1x16x32xf32>
    %137 = vector.shape_cast %136 : vector<1x16x32xf32> to vector<16x32xf32>
    %c7_47 = arith.constant 7 : index
    %c0_48 = arith.constant 0 : index
    %c0_49 = arith.constant 0 : index
    %138 = vector.load %arg5[%c7_47, %c0_48, %c0_49] : memref<16x16x32xf32, #tpu.memory_space<vmem>>, vector<1x16x32xf32>
    %139 = vector.shape_cast %138 : vector<1x16x32xf32> to vector<16x32xf32>
    %140 = vector.broadcast %134 : vector<1x32xf32> to vector<16x32xf32>
    %141 = arith.mulf %140, %137 : vector<16x32xf32>
    %142 = arith.addf %127, %141 : vector<16x32xf32>
    %143 = vector.broadcast %135 : vector<1x32xf32> to vector<16x32xf32>
    %144 = arith.mulf %143, %139 : vector<16x32xf32>
    %145 = arith.subf %142, %144 : vector<16x32xf32>
    %146 = vector.broadcast %134 : vector<1x32xf32> to vector<16x32xf32>
    %147 = arith.mulf %146, %139 : vector<16x32xf32>
    %148 = arith.addf %133, %147 : vector<16x32xf32>
    %149 = vector.broadcast %135 : vector<1x32xf32> to vector<16x32xf32>
    %150 = arith.mulf %149, %137 : vector<16x32xf32>
    %151 = arith.addf %148, %150 : vector<16x32xf32>
    %152 = vector.extract_strided_slice %3 {offsets = [8, 0], sizes = [1, 32], strides = [1, 1]} : vector<16x32xf32> to vector<1x32xf32>
    %153 = vector.extract_strided_slice %5 {offsets = [8, 0], sizes = [1, 32], strides = [1, 1]} : vector<16x32xf32> to vector<1x32xf32>
    %c8 = arith.constant 8 : index
    %c0_50 = arith.constant 0 : index
    %c0_51 = arith.constant 0 : index
    %154 = vector.load %arg4[%c8, %c0_50, %c0_51] : memref<16x16x32xf32, #tpu.memory_space<vmem>>, vector<1x16x32xf32>
    %155 = vector.shape_cast %154 : vector<1x16x32xf32> to vector<16x32xf32>
    %c8_52 = arith.constant 8 : index
    %c0_53 = arith.constant 0 : index
    %c0_54 = arith.constant 0 : index
    %156 = vector.load %arg5[%c8_52, %c0_53, %c0_54] : memref<16x16x32xf32, #tpu.memory_space<vmem>>, vector<1x16x32xf32>
    %157 = vector.shape_cast %156 : vector<1x16x32xf32> to vector<16x32xf32>
    %158 = vector.broadcast %152 : vector<1x32xf32> to vector<16x32xf32>
    %159 = arith.mulf %158, %155 : vector<16x32xf32>
    %160 = arith.addf %145, %159 : vector<16x32xf32>
    %161 = vector.broadcast %153 : vector<1x32xf32> to vector<16x32xf32>
    %162 = arith.mulf %161, %157 : vector<16x32xf32>
    %163 = arith.subf %160, %162 : vector<16x32xf32>
    %164 = vector.broadcast %152 : vector<1x32xf32> to vector<16x32xf32>
    %165 = arith.mulf %164, %157 : vector<16x32xf32>
    %166 = arith.addf %151, %165 : vector<16x32xf32>
    %167 = vector.broadcast %153 : vector<1x32xf32> to vector<16x32xf32>
    %168 = arith.mulf %167, %155 : vector<16x32xf32>
    %169 = arith.addf %166, %168 : vector<16x32xf32>
    %170 = vector.extract_strided_slice %3 {offsets = [9, 0], sizes = [1, 32], strides = [1, 1]} : vector<16x32xf32> to vector<1x32xf32>
    %171 = vector.extract_strided_slice %5 {offsets = [9, 0], sizes = [1, 32], strides = [1, 1]} : vector<16x32xf32> to vector<1x32xf32>
    %c9 = arith.constant 9 : index
    %c0_55 = arith.constant 0 : index
    %c0_56 = arith.constant 0 : index
    %172 = vector.load %arg4[%c9, %c0_55, %c0_56] : memref<16x16x32xf32, #tpu.memory_space<vmem>>, vector<1x16x32xf32>
    %173 = vector.shape_cast %172 : vector<1x16x32xf32> to vector<16x32xf32>
    %c9_57 = arith.constant 9 : index
    %c0_58 = arith.constant 0 : index
    %c0_59 = arith.constant 0 : index
    %174 = vector.load %arg5[%c9_57, %c0_58, %c0_59] : memref<16x16x32xf32, #tpu.memory_space<vmem>>, vector<1x16x32xf32>
    %175 = vector.shape_cast %174 : vector<1x16x32xf32> to vector<16x32xf32>
    %176 = vector.broadcast %170 : vector<1x32xf32> to vector<16x32xf32>
    %177 = arith.mulf %176, %173 : vector<16x32xf32>
    %178 = arith.addf %163, %177 : vector<16x32xf32>
    %179 = vector.broadcast %171 : vector<1x32xf32> to vector<16x32xf32>
    %180 = arith.mulf %179, %175 : vector<16x32xf32>
    %181 = arith.subf %178, %180 : vector<16x32xf32>
    %182 = vector.broadcast %170 : vector<1x32xf32> to vector<16x32xf32>
    %183 = arith.mulf %182, %175 : vector<16x32xf32>
    %184 = arith.addf %169, %183 : vector<16x32xf32>
    %185 = vector.broadcast %171 : vector<1x32xf32> to vector<16x32xf32>
    %186 = arith.mulf %185, %173 : vector<16x32xf32>
    %187 = arith.addf %184, %186 : vector<16x32xf32>
    %188 = vector.extract_strided_slice %3 {offsets = [10, 0], sizes = [1, 32], strides = [1, 1]} : vector<16x32xf32> to vector<1x32xf32>
    %189 = vector.extract_strided_slice %5 {offsets = [10, 0], sizes = [1, 32], strides = [1, 1]} : vector<16x32xf32> to vector<1x32xf32>
    %c10 = arith.constant 10 : index
    %c0_60 = arith.constant 0 : index
    %c0_61 = arith.constant 0 : index
    %190 = vector.load %arg4[%c10, %c0_60, %c0_61] : memref<16x16x32xf32, #tpu.memory_space<vmem>>, vector<1x16x32xf32>
    %191 = vector.shape_cast %190 : vector<1x16x32xf32> to vector<16x32xf32>
    %c10_62 = arith.constant 10 : index
    %c0_63 = arith.constant 0 : index
    %c0_64 = arith.constant 0 : index
    %192 = vector.load %arg5[%c10_62, %c0_63, %c0_64] : memref<16x16x32xf32, #tpu.memory_space<vmem>>, vector<1x16x32xf32>
    %193 = vector.shape_cast %192 : vector<1x16x32xf32> to vector<16x32xf32>
    %194 = vector.broadcast %188 : vector<1x32xf32> to vector<16x32xf32>
    %195 = arith.mulf %194, %191 : vector<16x32xf32>
    %196 = arith.addf %181, %195 : vector<16x32xf32>
    %197 = vector.broadcast %189 : vector<1x32xf32> to vector<16x32xf32>
    %198 = arith.mulf %197, %193 : vector<16x32xf32>
    %199 = arith.subf %196, %198 : vector<16x32xf32>
    %200 = vector.broadcast %188 : vector<1x32xf32> to vector<16x32xf32>
    %201 = arith.mulf %200, %193 : vector<16x32xf32>
    %202 = arith.addf %187, %201 : vector<16x32xf32>
    %203 = vector.broadcast %189 : vector<1x32xf32> to vector<16x32xf32>
    %204 = arith.mulf %203, %191 : vector<16x32xf32>
    %205 = arith.addf %202, %204 : vector<16x32xf32>
    %206 = vector.extract_strided_slice %3 {offsets = [11, 0], sizes = [1, 32], strides = [1, 1]} : vector<16x32xf32> to vector<1x32xf32>
    %207 = vector.extract_strided_slice %5 {offsets = [11, 0], sizes = [1, 32], strides = [1, 1]} : vector<16x32xf32> to vector<1x32xf32>
    %c11 = arith.constant 11 : index
    %c0_65 = arith.constant 0 : index
    %c0_66 = arith.constant 0 : index
    %208 = vector.load %arg4[%c11, %c0_65, %c0_66] : memref<16x16x32xf32, #tpu.memory_space<vmem>>, vector<1x16x32xf32>
    %209 = vector.shape_cast %208 : vector<1x16x32xf32> to vector<16x32xf32>
    %c11_67 = arith.constant 11 : index
    %c0_68 = arith.constant 0 : index
    %c0_69 = arith.constant 0 : index
    %210 = vector.load %arg5[%c11_67, %c0_68, %c0_69] : memref<16x16x32xf32, #tpu.memory_space<vmem>>, vector<1x16x32xf32>
    %211 = vector.shape_cast %210 : vector<1x16x32xf32> to vector<16x32xf32>
    %212 = vector.broadcast %206 : vector<1x32xf32> to vector<16x32xf32>
    %213 = arith.mulf %212, %209 : vector<16x32xf32>
    %214 = arith.addf %199, %213 : vector<16x32xf32>
    %215 = vector.broadcast %207 : vector<1x32xf32> to vector<16x32xf32>
    %216 = arith.mulf %215, %211 : vector<16x32xf32>
    %217 = arith.subf %214, %216 : vector<16x32xf32>
    %218 = vector.broadcast %206 : vector<1x32xf32> to vector<16x32xf32>
    %219 = arith.mulf %218, %211 : vector<16x32xf32>
    %220 = arith.addf %205, %219 : vector<16x32xf32>
    %221 = vector.broadcast %207 : vector<1x32xf32> to vector<16x32xf32>
    %222 = arith.mulf %221, %209 : vector<16x32xf32>
    %223 = arith.addf %220, %222 : vector<16x32xf32>
    %224 = vector.extract_strided_slice %3 {offsets = [12, 0], sizes = [1, 32], strides = [1, 1]} : vector<16x32xf32> to vector<1x32xf32>
    %225 = vector.extract_strided_slice %5 {offsets = [12, 0], sizes = [1, 32], strides = [1, 1]} : vector<16x32xf32> to vector<1x32xf32>
    %c12 = arith.constant 12 : index
    %c0_70 = arith.constant 0 : index
    %c0_71 = arith.constant 0 : index
    %226 = vector.load %arg4[%c12, %c0_70, %c0_71] : memref<16x16x32xf32, #tpu.memory_space<vmem>>, vector<1x16x32xf32>
    %227 = vector.shape_cast %226 : vector<1x16x32xf32> to vector<16x32xf32>
    %c12_72 = arith.constant 12 : index
    %c0_73 = arith.constant 0 : index
    %c0_74 = arith.constant 0 : index
    %228 = vector.load %arg5[%c12_72, %c0_73, %c0_74] : memref<16x16x32xf32, #tpu.memory_space<vmem>>, vector<1x16x32xf32>
    %229 = vector.shape_cast %228 : vector<1x16x32xf32> to vector<16x32xf32>
    %230 = vector.broadcast %224 : vector<1x32xf32> to vector<16x32xf32>
    %231 = arith.mulf %230, %227 : vector<16x32xf32>
    %232 = arith.addf %217, %231 : vector<16x32xf32>
    %233 = vector.broadcast %225 : vector<1x32xf32> to vector<16x32xf32>
    %234 = arith.mulf %233, %229 : vector<16x32xf32>
    %235 = arith.subf %232, %234 : vector<16x32xf32>
    %236 = vector.broadcast %224 : vector<1x32xf32> to vector<16x32xf32>
    %237 = arith.mulf %236, %229 : vector<16x32xf32>
    %238 = arith.addf %223, %237 : vector<16x32xf32>
    %239 = vector.broadcast %225 : vector<1x32xf32> to vector<16x32xf32>
    %240 = arith.mulf %239, %227 : vector<16x32xf32>
    %241 = arith.addf %238, %240 : vector<16x32xf32>
    %242 = vector.extract_strided_slice %3 {offsets = [13, 0], sizes = [1, 32], strides = [1, 1]} : vector<16x32xf32> to vector<1x32xf32>
    %243 = vector.extract_strided_slice %5 {offsets = [13, 0], sizes = [1, 32], strides = [1, 1]} : vector<16x32xf32> to vector<1x32xf32>
    %c13 = arith.constant 13 : index
    %c0_75 = arith.constant 0 : index
    %c0_76 = arith.constant 0 : index
    %244 = vector.load %arg4[%c13, %c0_75, %c0_76] : memref<16x16x32xf32, #tpu.memory_space<vmem>>, vector<1x16x32xf32>
    %245 = vector.shape_cast %244 : vector<1x16x32xf32> to vector<16x32xf32>
    %c13_77 = arith.constant 13 : index
    %c0_78 = arith.constant 0 : index
    %c0_79 = arith.constant 0 : index
    %246 = vector.load %arg5[%c13_77, %c0_78, %c0_79] : memref<16x16x32xf32, #tpu.memory_space<vmem>>, vector<1x16x32xf32>
    %247 = vector.shape_cast %246 : vector<1x16x32xf32> to vector<16x32xf32>
    %248 = vector.broadcast %242 : vector<1x32xf32> to vector<16x32xf32>
    %249 = arith.mulf %248, %245 : vector<16x32xf32>
    %250 = arith.addf %235, %249 : vector<16x32xf32>
    %251 = vector.broadcast %243 : vector<1x32xf32> to vector<16x32xf32>
    %252 = arith.mulf %251, %247 : vector<16x32xf32>
    %253 = arith.subf %250, %252 : vector<16x32xf32>
    %254 = vector.broadcast %242 : vector<1x32xf32> to vector<16x32xf32>
    %255 = arith.mulf %254, %247 : vector<16x32xf32>
    %256 = arith.addf %241, %255 : vector<16x32xf32>
    %257 = vector.broadcast %243 : vector<1x32xf32> to vector<16x32xf32>
    %258 = arith.mulf %257, %245 : vector<16x32xf32>
    %259 = arith.addf %256, %258 : vector<16x32xf32>
    %260 = vector.extract_strided_slice %3 {offsets = [14, 0], sizes = [1, 32], strides = [1, 1]} : vector<16x32xf32> to vector<1x32xf32>
    %261 = vector.extract_strided_slice %5 {offsets = [14, 0], sizes = [1, 32], strides = [1, 1]} : vector<16x32xf32> to vector<1x32xf32>
    %c14 = arith.constant 14 : index
    %c0_80 = arith.constant 0 : index
    %c0_81 = arith.constant 0 : index
    %262 = vector.load %arg4[%c14, %c0_80, %c0_81] : memref<16x16x32xf32, #tpu.memory_space<vmem>>, vector<1x16x32xf32>
    %263 = vector.shape_cast %262 : vector<1x16x32xf32> to vector<16x32xf32>
    %c14_82 = arith.constant 14 : index
    %c0_83 = arith.constant 0 : index
    %c0_84 = arith.constant 0 : index
    %264 = vector.load %arg5[%c14_82, %c0_83, %c0_84] : memref<16x16x32xf32, #tpu.memory_space<vmem>>, vector<1x16x32xf32>
    %265 = vector.shape_cast %264 : vector<1x16x32xf32> to vector<16x32xf32>
    %266 = vector.broadcast %260 : vector<1x32xf32> to vector<16x32xf32>
    %267 = arith.mulf %266, %263 : vector<16x32xf32>
    %268 = arith.addf %253, %267 : vector<16x32xf32>
    %269 = vector.broadcast %261 : vector<1x32xf32> to vector<16x32xf32>
    %270 = arith.mulf %269, %265 : vector<16x32xf32>
    %271 = arith.subf %268, %270 : vector<16x32xf32>
    %272 = vector.broadcast %260 : vector<1x32xf32> to vector<16x32xf32>
    %273 = arith.mulf %272, %265 : vector<16x32xf32>
    %274 = arith.addf %259, %273 : vector<16x32xf32>
    %275 = vector.broadcast %261 : vector<1x32xf32> to vector<16x32xf32>
    %276 = arith.mulf %275, %263 : vector<16x32xf32>
    %277 = arith.addf %274, %276 : vector<16x32xf32>
    %278 = vector.extract_strided_slice %3 {offsets = [15, 0], sizes = [1, 32], strides = [1, 1]} : vector<16x32xf32> to vector<1x32xf32>
    %279 = vector.extract_strided_slice %5 {offsets = [15, 0], sizes = [1, 32], strides = [1, 1]} : vector<16x32xf32> to vector<1x32xf32>
    %c15 = arith.constant 15 : index
    %c0_85 = arith.constant 0 : index
    %c0_86 = arith.constant 0 : index
    %280 = vector.load %arg4[%c15, %c0_85, %c0_86] : memref<16x16x32xf32, #tpu.memory_space<vmem>>, vector<1x16x32xf32>
    %281 = vector.shape_cast %280 : vector<1x16x32xf32> to vector<16x32xf32>
    %c15_87 = arith.constant 15 : index
    %c0_88 = arith.constant 0 : index
    %c0_89 = arith.constant 0 : index
    %282 = vector.load %arg5[%c15_87, %c0_88, %c0_89] : memref<16x16x32xf32, #tpu.memory_space<vmem>>, vector<1x16x32xf32>
    %283 = vector.shape_cast %282 : vector<1x16x32xf32> to vector<16x32xf32>
    %284 = vector.broadcast %278 : vector<1x32xf32> to vector<16x32xf32>
    %285 = arith.mulf %284, %281 : vector<16x32xf32>
    %286 = arith.addf %271, %285 : vector<16x32xf32>
    %287 = vector.broadcast %279 : vector<1x32xf32> to vector<16x32xf32>
    %288 = arith.mulf %287, %283 : vector<16x32xf32>
    %289 = arith.subf %286, %288 : vector<16x32xf32>
    %290 = vector.broadcast %278 : vector<1x32xf32> to vector<16x32xf32>
    %291 = arith.mulf %290, %283 : vector<16x32xf32>
    %292 = arith.addf %277, %291 : vector<16x32xf32>
    %293 = vector.broadcast %279 : vector<1x32xf32> to vector<16x32xf32>
    %294 = arith.mulf %293, %281 : vector<16x32xf32>
    %295 = arith.addf %292, %294 : vector<16x32xf32>
    %c0_90 = arith.constant 0 : index
    %c0_91 = arith.constant 0 : index
    %296 = vector.load %arg6[%c0_90, %c0_91] : memref<32x256xf32, #tpu.memory_space<vmem>>, vector<32x256xf32>
    %cst_92 = arith.constant dense<0.000000e+00> : vector<16x256xf32>
    %297 = tpu.matmul %289, %296, %cst_92 {dimension_numbers = #tpu.dot_dimension_numbers<[1], [0], [0], [1], [0, 0, 1, 1], [], []>} : vector<16x32xf32>, vector<32x256xf32>, vector<16x256xf32> -> vector<16x256xf32>
    %c0_93 = arith.constant 0 : index
    %c0_94 = arith.constant 0 : index
    %298 = vector.load %arg7[%c0_93, %c0_94] : memref<32x256xf32, #tpu.memory_space<vmem>>, vector<32x256xf32>
    %cst_95 = arith.constant dense<0.000000e+00> : vector<16x256xf32>
    %299 = tpu.matmul %295, %298, %cst_95 {dimension_numbers = #tpu.dot_dimension_numbers<[1], [0], [0], [1], [0, 0, 1, 1], [], []>} : vector<16x32xf32>, vector<32x256xf32>, vector<16x256xf32> -> vector<16x256xf32>
    %300 = arith.subf %297, %299 : vector<16x256xf32>
    %c0_96 = arith.constant 0 : index
    %c0_97 = arith.constant 0 : index
    %301 = vector.load %arg8[%c0_96, %c0_97] : memref<16x16xf32, #tpu.memory_space<vmem>>, vector<16x16xf32>
    %cst_98 = arith.constant dense<0.000000e+00> : vector<16x256xf32>
    %302 = tpu.matmul %301, %1, %cst_98 {dimension_numbers = #tpu.dot_dimension_numbers<[1], [0], [0], [1], [0, 0, 1, 1], [], []>} : vector<16x16xf32>, vector<16x256xf32>, vector<16x256xf32> -> vector<16x256xf32>
    %303 = arith.addf %300, %302 : vector<16x256xf32>
    %c0_99 = arith.constant 0 : index
    %c0_100 = arith.constant 0 : index
    %304 = vector.load %arg9[%c0_99, %c0_100] : memref<16x1xf32, #tpu.memory_space<vmem>>, vector<16x1xf32>
    %305 = vector.broadcast %304 : vector<16x1xf32> to vector<16x256xf32>
    %306 = arith.addf %303, %305 : vector<16x256xf32>
    %307 = arith.mulf %306, %306 : vector<16x256xf32>
    %308 = arith.mulf %306, %307 : vector<16x256xf32>
    %cst_101 = arith.constant 4.471500e-02 : f32
    %309 = vector.broadcast %cst_101 : f32 to vector<16x256xf32>
    %310 = arith.mulf %309, %308 : vector<16x256xf32>
    %311 = arith.addf %306, %310 : vector<16x256xf32>
    %cst_102 = arith.constant 0.797884583 : f32
    %312 = vector.broadcast %cst_102 : f32 to vector<16x256xf32>
    %313 = arith.mulf %312, %311 : vector<16x256xf32>
    %314 = math.tanh %313 : vector<16x256xf32>
    %cst_103 = arith.constant 1.000000e+00 : f32
    %315 = vector.broadcast %cst_103 : f32 to vector<16x256xf32>
    %316 = arith.addf %315, %314 : vector<16x256xf32>
    %cst_104 = arith.constant 5.000000e-01 : f32
    %317 = vector.broadcast %cst_104 : f32 to vector<16x256xf32>
    %318 = arith.mulf %317, %316 : vector<16x256xf32>
    %319 = arith.mulf %306, %318 : vector<16x256xf32>
    %c0_105 = arith.constant 0 : index
    %c0_106 = arith.constant 0 : index
    %c0_107 = arith.constant 0 : index
    %320 = vector.load %arg10[%c0_105, %c0_106, %c0_107] : memref<1x16x256xf32, #tpu.memory_space<vmem>>, vector<1x16x256xf32>
    %321 = vector.shape_cast %320 : vector<1x16x256xf32> to vector<16x256xf32>
    %322 = vector.shape_cast %319 : vector<16x256xf32> to vector<1x16x256xf32>
    tpu.vector_store %arg10[%c0_105, %c0_106, %c0_107], %322 {strides = array<i32>} : memref<1x16x256xf32, #tpu.memory_space<vmem>>, vector<1x16x256xf32>,
    return
  }
  func.func @transform_0(%arg0: i32) -> (i32, i32, i32) {
    %c0_i32 = arith.constant 0 : i32
    %c0_i32_0 = arith.constant 0 : i32
    %c0_i32_1 = arith.constant 0 : i32
    return %arg0, %c0_i32, %c0_i32_0 : i32, i32, i32
  }
  func.func @transform_1(%arg0: i32) -> (i32, i32) {
    %c0_i32 = arith.constant 0 : i32
    %c0_i32_0 = arith.constant 0 : i32
    %c0_i32_1 = arith.constant 0 : i32
    return %c0_i32, %c0_i32_0 : i32, i32
  }
  func.func @transform_2(%arg0: i32) -> (i32, i32) {
    %c0_i32 = arith.constant 0 : i32
    %c0_i32_0 = arith.constant 0 : i32
    %c0_i32_1 = arith.constant 0 : i32
    return %c0_i32, %c0_i32_0 : i32, i32
  }
  func.func @transform_3(%arg0: i32) -> (i32, i32, i32) {
    %c0_i32 = arith.constant 0 : i32
    %c0_i32_0 = arith.constant 0 : i32
    %c0_i32_1 = arith.constant 0 : i32
    %c0_i32_2 = arith.constant 0 : i32
    return %c0_i32, %c0_i32_0, %c0_i32_1 : i32, i32, i32
  }
  func.func @transform_4(%arg0: i32) -> (i32, i32, i32) {
    %c0_i32 = arith.constant 0 : i32
    %c0_i32_0 = arith.constant 0 : i32
    %c0_i32_1 = arith.constant 0 : i32
    %c0_i32_2 = arith.constant 0 : i32
    return %c0_i32, %c0_i32_0, %c0_i32_1 : i32, i32, i32
  }
  func.func @transform_5(%arg0: i32) -> (i32, i32) {
    %c0_i32 = arith.constant 0 : i32
    %c0_i32_0 = arith.constant 0 : i32
    %c0_i32_1 = arith.constant 0 : i32
    return %c0_i32, %c0_i32_0 : i32, i32
  }
  func.func @transform_6(%arg0: i32) -> (i32, i32) {
    %c0_i32 = arith.constant 0 : i32
    %c0_i32_0 = arith.constant 0 : i32
    %c0_i32_1 = arith.constant 0 : i32
    return %c0_i32, %c0_i32_0 : i32, i32
  }
  func.func @transform_7(%arg0: i32) -> (i32, i32) {
    %c0_i32 = arith.constant 0 : i32
    %c0_i32_0 = arith.constant 0 : i32
    %c0_i32_1 = arith.constant 0 : i32
    return %c0_i32, %c0_i32_0 : i32, i32
  }
  func.func @transform_8(%arg0: i32) -> (i32, i32) {
    %c0_i32 = arith.constant 0 : i32
    %c0_i32_0 = arith.constant 0 : i32
    %c0_i32_1 = arith.constant 0 : i32
    return %c0_i32, %c0_i32_0 : i32, i32
  }
  func.func @transform_9(%arg0: i32) -> (i32, i32, i32) {
    %c0_i32 = arith.constant 0 : i32
    %c0_i32_0 = arith.constant 0 : i32
    %c0_i32_1 = arith.constant 0 : i32
    return %arg0, %c0_i32, %c0_i32_0 : i32, i32, i32
  }
}

module attributes {stable_mosaic.version = 11 : i64} {
  func.func @_spectral_block_kernel(%arg0: i32, %arg1: memref<1x16x256xf32, #tpu.memory_space<vmem>>, %arg2: memref<256x32xf32, #tpu.memory_space<vmem>>, %arg3: memref<256x32xf32, #tpu.memory_space<vmem>>, %arg4: memref<16x16x32xf32, #tpu.memory_space<vmem>>, %arg5: memref<16x16x32xf32, #tpu.memory_space<vmem>>, %arg6: memref<32x256xf32, #tpu.memory_space<vmem>>, %arg7: memref<32x256xf32, #tpu.memory_space<vmem>>, %arg8: memref<16x16xf32, #tpu.memory_space<vmem>>, %arg9: memref<16x1xf32, #tpu.memory_space<vmem>>, %arg10: memref<1x16x256xf32, #tpu.memory_space<vmem>>) attributes {dimension_semantics = [#tpu.dimension_semantics<parallel>], iteration_bounds = array<i64: 2>, scalar_prefetch = 0 : i64, scratch_operands = 0 : i64, tpu.core_type = #tpu.core_type<tc>, window_params = [{transform_indices = @transform_0, window_bounds = array<i64: 1, 16, 256>}, {pipeline_mode = #tpu.pipeline_mode<synchronous>, transform_indices = @transform_1, window_bounds = array<i64: 256, 32>}, {pipeline_mode = #tpu.pipeline_mode<synchronous>, transform_indices = @transform_2, window_bounds = array<i64: 256, 32>}, {pipeline_mode = #tpu.pipeline_mode<synchronous>, transform_indices = @transform_3, window_bounds = array<i64: 16, 16, 32>}, {pipeline_mode = #tpu.pipeline_mode<synchronous>, transform_indices = @transform_4, window_bounds = array<i64: 16, 16, 32>}, {pipeline_mode = #tpu.pipeline_mode<synchronous>, transform_indices = @transform_5, window_bounds = array<i64: 32, 256>}, {pipeline_mode = #tpu.pipeline_mode<synchronous>, transform_indices = @transform_6, window_bounds = array<i64: 32, 256>}, {pipeline_mode = #tpu.pipeline_mode<synchronous>, transform_indices = @transform_7, window_bounds = array<i64: 16, 16>}, {pipeline_mode = #tpu.pipeline_mode<synchronous>, transform_indices = @transform_8, window_bounds = array<i64: 16, 1>}, {transform_indices = @transform_9, window_bounds = array<i64: 1, 16, 256>}]} {
    %c0 = arith.constant 0 : index
    %c0_0 = arith.constant 0 : index
    %c0_1 = arith.constant 0 : index
    %0 = vector.load %arg1[%c0, %c0_0, %c0_1] : memref<1x16x256xf32, #tpu.memory_space<vmem>>, vector<1x16x256xf32>
    %1 = vector.shape_cast %0 : vector<1x16x256xf32> to vector<16x256xf32>
    %c0_2 = arith.constant 0 : index
    %c0_3 = arith.constant 0 : index
    %2 = vector.load %arg2[%c0_2, %c0_3] : memref<256x32xf32, #tpu.memory_space<vmem>>, vector<256x32xf32>
    %cst = arith.constant dense<0.000000e+00> : vector<16x32xf32>
    %3 = tpu.matmul %1, %2, %cst {dimension_numbers = #tpu.dot_dimension_numbers<[1], [0], [0], [1], [0, 0, 1, 1], [], []>} : vector<16x256xf32>, vector<256x32xf32>, vector<16x32xf32> -> vector<16x32xf32>
    %c0_4 = arith.constant 0 : index
    %c0_5 = arith.constant 0 : index
    %4 = vector.load %arg3[%c0_4, %c0_5] : memref<256x32xf32, #tpu.memory_space<vmem>>, vector<256x32xf32>
    %cst_6 = arith.constant dense<0.000000e+00> : vector<16x32xf32>
    %5 = tpu.matmul %1, %4, %cst_6 {dimension_numbers = #tpu.dot_dimension_numbers<[1], [0], [0], [1], [0, 0, 1, 1], [], []>} : vector<16x256xf32>, vector<256x32xf32>, vector<16x32xf32> -> vector<16x32xf32>
    %cst_7 = arith.constant 0.000000e+00 : f32
    %6 = vector.broadcast %cst_7 : f32 to vector<16x32xf32>
    %cst_8 = arith.constant 0.000000e+00 : f32
    %7 = vector.broadcast %cst_8 : f32 to vector<16x32xf32>
    %8 = vector.extract_strided_slice %3 {offsets = [0, 0], sizes = [1, 32], strides = [1, 1]} : vector<16x32xf32> to vector<1x32xf32>
    %9 = vector.extract_strided_slice %5 {offsets = [0, 0], sizes = [1, 32], strides = [1, 1]} : vector<16x32xf32> to vector<1x32xf32>
    %c0_9 = arith.constant 0 : index
    %c0_10 = arith.constant 0 : index
    %c0_11 = arith.constant 0 : index
    %10 = vector.load %arg4[%c0_9, %c0_10, %c0_11] : memref<16x16x32xf32, #tpu.memory_space<vmem>>, vector<1x16x32xf32>
    %11 = vector.shape_cast %10 : vector<1x16x32xf32> to vector<16x32xf32>
    %c0_12 = arith.constant 0 : index
    %c0_13 = arith.constant 0 : index
    %c0_14 = arith.constant 0 : index
    %12 = vector.load %arg5[%c0_12, %c0_13, %c0_14] : memref<16x16x32xf32, #tpu.memory_space<vmem>>, vector<1x16x32xf32>
    %13 = vector.shape_cast %12 : vector<1x16x32xf32> to vector<16x32xf32>
    %14 = vector.broadcast %8 : vector<1x32xf32> to vector<16x32xf32>
    %15 = arith.mulf %14, %11 : vector<16x32xf32>
    %16 = arith.addf %6, %15 : vector<16x32xf32>
    %17 = vector.broadcast %9 : vector<1x32xf32> to vector<16x32xf32>
    %18 = arith.mulf %17, %13 : vector<16x32xf32>
    %19 = arith.subf %16, %18 : vector<16x32xf32>
    %20 = vector.broadcast %8 : vector<1x32xf32> to vector<16x32xf32>
    %21 = arith.mulf %20, %13 : vector<16x32xf32>
    %22 = arith.addf %7, %21 : vector<16x32xf32>
    %23 = vector.broadcast %9 : vector<1x32xf32> to vector<16x32xf32>
    %24 = arith.mulf %23, %11 : vector<16x32xf32>
    %25 = arith.addf %22, %24 : vector<16x32xf32>
    %26 = vector.extract_strided_slice %3 {offsets = [1, 0], sizes = [1, 32], strides = [1, 1]} : vector<16x32xf32> to vector<1x32xf32>
    %27 = vector.extract_strided_slice %5 {offsets = [1, 0], sizes = [1, 32], strides = [1, 1]} : vector<16x32xf32> to vector<1x32xf32>
    %c1 = arith.constant 1 : index
    %c0_15 = arith.constant 0 : index
    %c0_16 = arith.constant 0 : index
    %28 = vector.load %arg4[%c1, %c0_15, %c0_16] : memref<16x16x32xf32, #tpu.memory_space<vmem>>, vector<1x16x32xf32>
    %29 = vector.shape_cast %28 : vector<1x16x32xf32> to vector<16x32xf32>
    %c1_17 = arith.constant 1 : index
    %c0_18 = arith.constant 0 : index
    %c0_19 = arith.constant 0 : index
    %30 = vector.load %arg5[%c1_17, %c0_18, %c0_19] : memref<16x16x32xf32, #tpu.memory_space<vmem>>, vector<1x16x32xf32>
    %31 = vector.shape_cast %30 : vector<1x16x32xf32> to vector<16x32xf32>
    %32 = vector.broadcast %26 : vector<1x32xf32> to vector<16x32xf32>
    %33 = arith.mulf %32, %29 : vector<16x32xf32>
    %34 = arith.addf %19, %33 : vector<16x32xf32>
    %35 = vector.broadcast %27 : vector<1x32xf32> to vector<16x32xf32>
    %36 = arith.mulf %35, %31 : vector<16x32xf32>
    %37 = arith.subf %34, %36 : vector<16x32xf32>
    %38 = vector.broadcast %26 : vector<1x32xf32> to vector<16x32xf32>
    %39 = arith.mulf %38, %31 : vector<16x32xf32>
    %40 = arith.addf %25, %39 : vector<16x32xf32>
    %41 = vector.broadcast %27 : vector<1x32xf32> to vector<16x32xf32>
    %42 = arith.mulf %41, %29 : vector<16x32xf32>
    %43 = arith.addf %40, %42 : vector<16x32xf32>
    %44 = vector.extract_strided_slice %3 {offsets = [2, 0], sizes = [1, 32], strides = [1, 1]} : vector<16x32xf32> to vector<1x32xf32>
    %45 = vector.extract_strided_slice %5 {offsets = [2, 0], sizes = [1, 32], strides = [1, 1]} : vector<16x32xf32> to vector<1x32xf32>
    %c2 = arith.constant 2 : index
    %c0_20 = arith.constant 0 : index
    %c0_21 = arith.constant 0 : index
    %46 = vector.load %arg4[%c2, %c0_20, %c0_21] : memref<16x16x32xf32, #tpu.memory_space<vmem>>, vector<1x16x32xf32>
    %47 = vector.shape_cast %46 : vector<1x16x32xf32> to vector<16x32xf32>
    %c2_22 = arith.constant 2 : index
    %c0_23 = arith.constant 0 : index
    %c0_24 = arith.constant 0 : index
    %48 = vector.load %arg5[%c2_22, %c0_23, %c0_24] : memref<16x16x32xf32, #tpu.memory_space<vmem>>, vector<1x16x32xf32>
    %49 = vector.shape_cast %48 : vector<1x16x32xf32> to vector<16x32xf32>
    %50 = vector.broadcast %44 : vector<1x32xf32> to vector<16x32xf32>
    %51 = arith.mulf %50, %47 : vector<16x32xf32>
    %52 = arith.addf %37, %51 : vector<16x32xf32>
    %53 = vector.broadcast %45 : vector<1x32xf32> to vector<16x32xf32>
    %54 = arith.mulf %53, %49 : vector<16x32xf32>
    %55 = arith.subf %52, %54 : vector<16x32xf32>
    %56 = vector.broadcast %44 : vector<1x32xf32> to vector<16x32xf32>
    %57 = arith.mulf %56, %49 : vector<16x32xf32>
    %58 = arith.addf %43, %57 : vector<16x32xf32>
    %59 = vector.broadcast %45 : vector<1x32xf32> to vector<16x32xf32>
    %60 = arith.mulf %59, %47 : vector<16x32xf32>
    %61 = arith.addf %58, %60 : vector<16x32xf32>
    %62 = vector.extract_strided_slice %3 {offsets = [3, 0], sizes = [1, 32], strides = [1, 1]} : vector<16x32xf32> to vector<1x32xf32>
    %63 = vector.extract_strided_slice %5 {offsets = [3, 0], sizes = [1, 32], strides = [1, 1]} : vector<16x32xf32> to vector<1x32xf32>
    %c3 = arith.constant 3 : index
    %c0_25 = arith.constant 0 : index
    %c0_26 = arith.constant 0 : index
    %64 = vector.load %arg4[%c3, %c0_25, %c0_26] : memref<16x16x32xf32, #tpu.memory_space<vmem>>, vector<1x16x32xf32>
    %65 = vector.shape_cast %64 : vector<1x16x32xf32> to vector<16x32xf32>
    %c3_27 = arith.constant 3 : index
    %c0_28 = arith.constant 0 : index
    %c0_29 = arith.constant 0 : index
    %66 = vector.load %arg5[%c3_27, %c0_28, %c0_29] : memref<16x16x32xf32, #tpu.memory_space<vmem>>, vector<1x16x32xf32>
    %67 = vector.shape_cast %66 : vector<1x16x32xf32> to vector<16x32xf32>
    %68 = vector.broadcast %62 : vector<1x32xf32> to vector<16x32xf32>
    %69 = arith.mulf %68, %65 : vector<16x32xf32>
    %70 = arith.addf %55, %69 : vector<16x32xf32>
    %71 = vector.broadcast %63 : vector<1x32xf32> to vector<16x32xf32>
    %72 = arith.mulf %71, %67 : vector<16x32xf32>
    %73 = arith.subf %70, %72 : vector<16x32xf32>
    %74 = vector.broadcast %62 : vector<1x32xf32> to vector<16x32xf32>
    %75 = arith.mulf %74, %67 : vector<16x32xf32>
    %76 = arith.addf %61, %75 : vector<16x32xf32>
    %77 = vector.broadcast %63 : vector<1x32xf32> to vector<16x32xf32>
    %78 = arith.mulf %77, %65 : vector<16x32xf32>
    %79 = arith.addf %76, %78 : vector<16x32xf32>
    %80 = vector.extract_strided_slice %3 {offsets = [4, 0], sizes = [1, 32], strides = [1, 1]} : vector<16x32xf32> to vector<1x32xf32>
    %81 = vector.extract_strided_slice %5 {offsets = [4, 0], sizes = [1, 32], strides = [1, 1]} : vector<16x32xf32> to vector<1x32xf32>
    %c4 = arith.constant 4 : index
    %c0_30 = arith.constant 0 : index
    %c0_31 = arith.constant 0 : index
    %82 = vector.load %arg4[%c4, %c0_30, %c0_31] : memref<16x16x32xf32, #tpu.memory_space<vmem>>, vector<1x16x32xf32>
    %83 = vector.shape_cast %82 : vector<1x16x32xf32> to vector<16x32xf32>
    %c4_32 = arith.constant 4 : index
    %c0_33 = arith.constant 0 : index
    %c0_34 = arith.constant 0 : index
    %84 = vector.load %arg5[%c4_32, %c0_33, %c0_34] : memref<16x16x32xf32, #tpu.memory_space<vmem>>, vector<1x16x32xf32>
    %85 = vector.shape_cast %84 : vector<1x16x32xf32> to vector<16x32xf32>
    %86 = vector.broadcast %80 : vector<1x32xf32> to vector<16x32xf32>
    %87 = arith.mulf %86, %83 : vector<16x32xf32>
    %88 = arith.addf %73, %87 : vector<16x32xf32>
    %89 = vector.broadcast %81 : vector<1x32xf32> to vector<16x32xf32>
    %90 = arith.mulf %89, %85 : vector<16x32xf32>
    %91 = arith.subf %88, %90 : vector<16x32xf32>
    %92 = vector.broadcast %80 : vector<1x32xf32> to vector<16x32xf32>
    %93 = arith.mulf %92, %85 : vector<16x32xf32>
    %94 = arith.addf %79, %93 : vector<16x32xf32>
    %95 = vector.broadcast %81 : vector<1x32xf32> to vector<16x32xf32>
    %96 = arith.mulf %95, %83 : vector<16x32xf32>
    %97 = arith.addf %94, %96 : vector<16x32xf32>
    %98 = vector.extract_strided_slice %3 {offsets = [5, 0], sizes = [1, 32], strides = [1, 1]} : vector<16x32xf32> to vector<1x32xf32>
    %99 = vector.extract_strided_slice %5 {offsets = [5, 0], sizes = [1, 32], strides = [1, 1]} : vector<16x32xf32> to vector<1x32xf32>
    %c5 = arith.constant 5 : index
    %c0_35 = arith.constant 0 : index
    %c0_36 = arith.constant 0 : index
    %100 = vector.load %arg4[%c5, %c0_35, %c0_36] : memref<16x16x32xf32, #tpu.memory_space<vmem>>, vector<1x16x32xf32>
    %101 = vector.shape_cast %100 : vector<1x16x32xf32> to vector<16x32xf32>
    %c5_37 = arith.constant 5 : index
    %c0_38 = arith.constant 0 : index
    %c0_39 = arith.constant 0 : index
    %102 = vector.load %arg5[%c5_37, %c0_38, %c0_39] : memref<16x16x32xf32, #tpu.memory_space<vmem>>, vector<1x16x32xf32>
    %103 = vector.shape_cast %102 : vector<1x16x32xf32> to vector<16x32xf32>
    %104 = vector.broadcast %98 : vector<1x32xf32> to vector<16x32xf32>
    %105 = arith.mulf %104, %101 : vector<16x32xf32>
    %106 = arith.addf %91, %105 : vector<16x32xf32>
    %107 = vector.broadcast %99 : vector<1x32xf32> to vector<16x32xf32>
    %108 = arith.mulf %107, %103 : vector<16x32xf32>
    %109 = arith.subf %106, %108 : vector<16x32xf32>
    %110 = vector.broadcast %98 : vector<1x32xf32> to vector<16x32xf32>
    %111 = arith.mulf %110, %103 : vector<16x32xf32>
    %112 = arith.addf %97, %111 : vector<16x32xf32>
    %113 = vector.broadcast %99 : vector<1x32xf32> to vector<16x32xf32>
    %114 = arith.mulf %113, %101 : vector<16x32xf32>
    %115 = arith.addf %112, %114 : vector<16x32xf32>
    %116 = vector.extract_strided_slice %3 {offsets = [6, 0], sizes = [1, 32], strides = [1, 1]} : vector<16x32xf32> to vector<1x32xf32>
    %117 = vector.extract_strided_slice %5 {offsets = [6, 0], sizes = [1, 32], strides = [1, 1]} : vector<16x32xf32> to vector<1x32xf32>
    %c6 = arith.constant 6 : index
    %c0_40 = arith.constant 0 : index
    %c0_41 = arith.constant 0 : index
    %118 = vector.load %arg4[%c6, %c0_40, %c0_41] : memref<16x16x32xf32, #tpu.memory_space<vmem>>, vector<1x16x32xf32>
    %119 = vector.shape_cast %118 : vector<1x16x32xf32> to vector<16x32xf32>
    %c6_42 = arith.constant 6 : index
    %c0_43 = arith.constant 0 : index
    %c0_44 = arith.constant 0 : index
    %120 = vector.load %arg5[%c6_42, %c0_43, %c0_44] : memref<16x16x32xf32, #tpu.memory_space<vmem>>, vector<1x16x32xf32>
    %121 = vector.shape_cast %120 : vector<1x16x32xf32> to vector<16x32xf32>
    %122 = vector.broadcast %116 : vector<1x32xf32> to vector<16x32xf32>
    %123 = arith.mulf %122, %119 : vector<16x32xf32>
    %124 = arith.addf %109, %123 : vector<16x32xf32>
    %125 = vector.broadcast %117 : vector<1x32xf32> to vector<16x32xf32>
    %126 = arith.mulf %125, %121 : vector<16x32xf32>
    %127 = arith.subf %124, %126 : vector<16x32xf32>
    %128 = vector.broadcast %116 : vector<1x32xf32> to vector<16x32xf32>
    %129 = arith.mulf %128, %121 : vector<16x32xf32>
    %130 = arith.addf %115, %129 : vector<16x32xf32>
    %131 = vector.broadcast %117 : vector<1x32xf32> to vector<16x32xf32>
    %132 = arith.mulf %131, %119 : vector<16x32xf32>
    %133 = arith.addf %130, %132 : vector<16x32xf32>
    %134 = vector.extract_strided_slice %3 {offsets = [7, 0], sizes = [1, 32], strides = [1, 1]} : vector<16x32xf32> to vector<1x32xf32>
    %135 = vector.extract_strided_slice %5 {offsets = [7, 0], sizes = [1, 32], strides = [1, 1]} : vector<16x32xf32> to vector<1x32xf32>
    %c7 = arith.constant 7 : index
    %c0_45 = arith.constant 0 : index
    %c0_46 = arith.constant 0 : index
    %136 = vector.load %arg4[%c7, %c0_45, %c0_46] : memref<16x16x32xf32, #tpu.memory_space<vmem>>, vector<1x16x32xf32>
    %137 = vector.shape_cast %136 : vector<1x16x32xf32> to vector<16x32xf32>
    %c7_47 = arith.constant 7 : index
    %c0_48 = arith.constant 0 : index
    %c0_49 = arith.constant 0 : index
    %138 = vector.load %arg5[%c7_47, %c0_48, %c0_49] : memref<16x16x32xf32, #tpu.memory_space<vmem>>, vector<1x16x32xf32>
    %139 = vector.shape_cast %138 : vector<1x16x32xf32> to vector<16x32xf32>
    %140 = vector.broadcast %134 : vector<1x32xf32> to vector<16x32xf32>
    %141 = arith.mulf %140, %137 : vector<16x32xf32>
    %142 = arith.addf %127, %141 : vector<16x32xf32>
    %143 = vector.broadcast %135 : vector<1x32xf32> to vector<16x32xf32>
    %144 = arith.mulf %143, %139 : vector<16x32xf32>
    %145 = arith.subf %142, %144 : vector<16x32xf32>
    %146 = vector.broadcast %134 : vector<1x32xf32> to vector<16x32xf32>
    %147 = arith.mulf %146, %139 : vector<16x32xf32>
    %148 = arith.addf %133, %147 : vector<16x32xf32>
    %149 = vector.broadcast %135 : vector<1x32xf32> to vector<16x32xf32>
    %150 = arith.mulf %149, %137 : vector<16x32xf32>
    %151 = arith.addf %148, %150 : vector<16x32xf32>
    %152 = vector.extract_strided_slice %3 {offsets = [8, 0], sizes = [1, 32], strides = [1, 1]} : vector<16x32xf32> to vector<1x32xf32>
    %153 = vector.extract_strided_slice %5 {offsets = [8, 0], sizes = [1, 32], strides = [1, 1]} : vector<16x32xf32> to vector<1x32xf32>
    %c8 = arith.constant 8 : index
    %c0_50 = arith.constant 0 : index
    %c0_51 = arith.constant 0 : index
    %154 = vector.load %arg4[%c8, %c0_50, %c0_51] : memref<16x16x32xf32, #tpu.memory_space<vmem>>, vector<1x16x32xf32>
    %155 = vector.shape_cast %154 : vector<1x16x32xf32> to vector<16x32xf32>
    %c8_52 = arith.constant 8 : index
    %c0_53 = arith.constant 0 : index
    %c0_54 = arith.constant 0 : index
    %156 = vector.load %arg5[%c8_52, %c0_53, %c0_54] : memref<16x16x32xf32, #tpu.memory_space<vmem>>, vector<1x16x32xf32>
    %157 = vector.shape_cast %156 : vector<1x16x32xf32> to vector<16x32xf32>
    %158 = vector.broadcast %152 : vector<1x32xf32> to vector<16x32xf32>
    %159 = arith.mulf %158, %155 : vector<16x32xf32>
    %160 = arith.addf %145, %159 : vector<16x32xf32>
    %161 = vector.broadcast %153 : vector<1x32xf32> to vector<16x32xf32>
    %162 = arith.mulf %161, %157 : vector<16x32xf32>
    %163 = arith.subf %160, %162 : vector<16x32xf32>
    %164 = vector.broadcast %152 : vector<1x32xf32> to vector<16x32xf32>
    %165 = arith.mulf %164, %157 : vector<16x32xf32>
    %166 = arith.addf %151, %165 : vector<16x32xf32>
    %167 = vector.broadcast %153 : vector<1x32xf32> to vector<16x32xf32>
    %168 = arith.mulf %167, %155 : vector<16x32xf32>
    %169 = arith.addf %166, %168 : vector<16x32xf32>
    %170 = vector.extract_strided_slice %3 {offsets = [9, 0], sizes = [1, 32], strides = [1, 1]} : vector<16x32xf32> to vector<1x32xf32>
    %171 = vector.extract_strided_slice %5 {offsets = [9, 0], sizes = [1, 32], strides = [1, 1]} : vector<16x32xf32> to vector<1x32xf32>
    %c9 = arith.constant 9 : index
    %c0_55 = arith.constant 0 : index
    %c0_56 = arith.constant 0 : index
    %172 = vector.load %arg4[%c9, %c0_55, %c0_56] : memref<16x16x32xf32, #tpu.memory_space<vmem>>, vector<1x16x32xf32>
    %173 = vector.shape_cast %172 : vector<1x16x32xf32> to vector<16x32xf32>
    %c9_57 = arith.constant 9 : index
    %c0_58 = arith.constant 0 : index
    %c0_59 = arith.constant 0 : index
    %174 = vector.load %arg5[%c9_57, %c0_58, %c0_59] : memref<16x16x32xf32, #tpu.memory_space<vmem>>, vector<1x16x32xf32>
    %175 = vector.shape_cast %174 : vector<1x16x32xf32> to vector<16x32xf32>
    %176 = vector.broadcast %170 : vector<1x32xf32> to vector<16x32xf32>
    %177 = arith.mulf %176, %173 : vector<16x32xf32>
    %178 = arith.addf %163, %177 : vector<16x32xf32>
    %179 = vector.broadcast %171 : vector<1x32xf32> to vector<16x32xf32>
    %180 = arith.mulf %179, %175 : vector<16x32xf32>
    %181 = arith.subf %178, %180 : vector<16x32xf32>
    %182 = vector.broadcast %170 : vector<1x32xf32> to vector<16x32xf32>
    %183 = arith.mulf %182, %175 : vector<16x32xf32>
    %184 = arith.addf %169, %183 : vector<16x32xf32>
    %185 = vector.broadcast %171 : vector<1x32xf32> to vector<16x32xf32>
    %186 = arith.mulf %185, %173 : vector<16x32xf32>
    %187 = arith.addf %184, %186 : vector<16x32xf32>
    %188 = vector.extract_strided_slice %3 {offsets = [10, 0], sizes = [1, 32], strides = [1, 1]} : vector<16x32xf32> to vector<1x32xf32>
    %189 = vector.extract_strided_slice %5 {offsets = [10, 0], sizes = [1, 32], strides = [1, 1]} : vector<16x32xf32> to vector<1x32xf32>
    %c10 = arith.constant 10 : index
    %c0_60 = arith.constant 0 : index
    %c0_61 = arith.constant 0 : index
    %190 = vector.load %arg4[%c10, %c0_60, %c0_61] : memref<16x16x32xf32, #tpu.memory_space<vmem>>, vector<1x16x32xf32>
    %191 = vector.shape_cast %190 : vector<1x16x32xf32> to vector<16x32xf32>
    %c10_62 = arith.constant 10 : index
    %c0_63 = arith.constant 0 : index
    %c0_64 = arith.constant 0 : index
    %192 = vector.load %arg5[%c10_62, %c0_63, %c0_64] : memref<16x16x32xf32, #tpu.memory_space<vmem>>, vector<1x16x32xf32>
    %193 = vector.shape_cast %192 : vector<1x16x32xf32> to vector<16x32xf32>
    %194 = vector.broadcast %188 : vector<1x32xf32> to vector<16x32xf32>
    %195 = arith.mulf %194, %191 : vector<16x32xf32>
    %196 = arith.addf %181, %195 : vector<16x32xf32>
    %197 = vector.broadcast %189 : vector<1x32xf32> to vector<16x32xf32>
    %198 = arith.mulf %197, %193 : vector<16x32xf32>
    %199 = arith.subf %196, %198 : vector<16x32xf32>
    %200 = vector.broadcast %188 : vector<1x32xf32> to vector<16x32xf32>
    %201 = arith.mulf %200, %193 : vector<16x32xf32>
    %202 = arith.addf %187, %201 : vector<16x32xf32>
    %203 = vector.broadcast %189 : vector<1x32xf32> to vector<16x32xf32>
    %204 = arith.mulf %203, %191 : vector<16x32xf32>
    %205 = arith.addf %202, %204 : vector<16x32xf32>
    %206 = vector.extract_strided_slice %3 {offsets = [11, 0], sizes = [1, 32], strides = [1, 1]} : vector<16x32xf32> to vector<1x32xf32>
    %207 = vector.extract_strided_slice %5 {offsets = [11, 0], sizes = [1, 32], strides = [1, 1]} : vector<16x32xf32> to vector<1x32xf32>
    %c11 = arith.constant 11 : index
    %c0_65 = arith.constant 0 : index
    %c0_66 = arith.constant 0 : index
    %208 = vector.load %arg4[%c11, %c0_65, %c0_66] : memref<16x16x32xf32, #tpu.memory_space<vmem>>, vector<1x16x32xf32>
    %209 = vector.shape_cast %208 : vector<1x16x32xf32> to vector<16x32xf32>
    %c11_67 = arith.constant 11 : index
    %c0_68 = arith.constant 0 : index
    %c0_69 = arith.constant 0 : index
    %210 = vector.load %arg5[%c11_67, %c0_68, %c0_69] : memref<16x16x32xf32, #tpu.memory_space<vmem>>, vector<1x16x32xf32>
    %211 = vector.shape_cast %210 : vector<1x16x32xf32> to vector<16x32xf32>
    %212 = vector.broadcast %206 : vector<1x32xf32> to vector<16x32xf32>
    %213 = arith.mulf %212, %209 : vector<16x32xf32>
    %214 = arith.addf %199, %213 : vector<16x32xf32>
    %215 = vector.broadcast %207 : vector<1x32xf32> to vector<16x32xf32>
    %216 = arith.mulf %215, %211 : vector<16x32xf32>
    %217 = arith.subf %214, %216 : vector<16x32xf32>
    %218 = vector.broadcast %206 : vector<1x32xf32> to vector<16x32xf32>
    %219 = arith.mulf %218, %211 : vector<16x32xf32>
    %220 = arith.addf %205, %219 : vector<16x32xf32>
    %221 = vector.broadcast %207 : vector<1x32xf32> to vector<16x32xf32>
    %222 = arith.mulf %221, %209 : vector<16x32xf32>
    %223 = arith.addf %220, %222 : vector<16x32xf32>
    %224 = vector.extract_strided_slice %3 {offsets = [12, 0], sizes = [1, 32], strides = [1, 1]} : vector<16x32xf32> to vector<1x32xf32>
    %225 = vector.extract_strided_slice %5 {offsets = [12, 0], sizes = [1, 32], strides = [1, 1]} : vector<16x32xf32> to vector<1x32xf32>
    %c12 = arith.constant 12 : index
    %c0_70 = arith.constant 0 : index
    %c0_71 = arith.constant 0 : index
    %226 = vector.load %arg4[%c12, %c0_70, %c0_71] : memref<16x16x32xf32, #tpu.memory_space<vmem>>, vector<1x16x32xf32>
    %227 = vector.shape_cast %226 : vector<1x16x32xf32> to vector<16x32xf32>
    %c12_72 = arith.constant 12 : index
    %c0_73 = arith.constant 0 : index
    %c0_74 = arith.constant 0 : index
    %228 = vector.load %arg5[%c12_72, %c0_73, %c0_74] : memref<16x16x32xf32, #tpu.memory_space<vmem>>, vector<1x16x32xf32>
    %229 = vector.shape_cast %228 : vector<1x16x32xf32> to vector<16x32xf32>
    %230 = vector.broadcast %224 : vector<1x32xf32> to vector<16x32xf32>
    %231 = arith.mulf %230, %227 : vector<16x32xf32>
    %232 = arith.addf %217, %231 : vector<16x32xf32>
    %233 = vector.broadcast %225 : vector<1x32xf32> to vector<16x32xf32>
    %234 = arith.mulf %233, %229 : vector<16x32xf32>
    %235 = arith.subf %232, %234 : vector<16x32xf32>
    %236 = vector.broadcast %224 : vector<1x32xf32> to vector<16x32xf32>
    %237 = arith.mulf %236, %229 : vector<16x32xf32>
    %238 = arith.addf %223, %237 : vector<16x32xf32>
    %239 = vector.broadcast %225 : vector<1x32xf32> to vector<16x32xf32>
    %240 = arith.mulf %239, %227 : vector<16x32xf32>
    %241 = arith.addf %238, %240 : vector<16x32xf32>
    %242 = vector.extract_strided_slice %3 {offsets = [13, 0], sizes = [1, 32], strides = [1, 1]} : vector<16x32xf32> to vector<1x32xf32>
    %243 = vector.extract_strided_slice %5 {offsets = [13, 0], sizes = [1, 32], strides = [1, 1]} : vector<16x32xf32> to vector<1x32xf32>
    %c13 = arith.constant 13 : index
    %c0_75 = arith.constant 0 : index
    %c0_76 = arith.constant 0 : index
    %244 = vector.load %arg4[%c13, %c0_75, %c0_76] : memref<16x16x32xf32, #tpu.memory_space<vmem>>, vector<1x16x32xf32>
    %245 = vector.shape_cast %244 : vector<1x16x32xf32> to vector<16x32xf32>
    %c13_77 = arith.constant 13 : index
    %c0_78 = arith.constant 0 : index
    %c0_79 = arith.constant 0 : index
    %246 = vector.load %arg5[%c13_77, %c0_78, %c0_79] : memref<16x16x32xf32, #tpu.memory_space<vmem>>, vector<1x16x32xf32>
    %247 = vector.shape_cast %246 : vector<1x16x32xf32> to vector<16x32xf32>
    %248 = vector.broadcast %242 : vector<1x32xf32> to vector<16x32xf32>
    %249 = arith.mulf %248, %245 : vector<16x32xf32>
    %250 = arith.addf %235, %249 : vector<16x32xf32>
    %251 = vector.broadcast %243 : vector<1x32xf32> to vector<16x32xf32>
    %252 = arith.mulf %251, %247 : vector<16x32xf32>
    %253 = arith.subf %250, %252 : vector<16x32xf32>
    %254 = vector.broadcast %242 : vector<1x32xf32> to vector<16x32xf32>
    %255 = arith.mulf %254, %247 : vector<16x32xf32>
    %256 = arith.addf %241, %255 : vector<16x32xf32>
    %257 = vector.broadcast %243 : vector<1x32xf32> to vector<16x32xf32>
    %258 = arith.mulf %257, %245 : vector<16x32xf32>
    %259 = arith.addf %256, %258 : vector<16x32xf32>
    %260 = vector.extract_strided_slice %3 {offsets = [14, 0], sizes = [1, 32], strides = [1, 1]} : vector<16x32xf32> to vector<1x32xf32>
    %261 = vector.extract_strided_slice %5 {offsets = [14, 0], sizes = [1, 32], strides = [1, 1]} : vector<16x32xf32> to vector<1x32xf32>
    %c14 = arith.constant 14 : index
    %c0_80 = arith.constant 0 : index
    %c0_81 = arith.constant 0 : index
    %262 = vector.load %arg4[%c14, %c0_80, %c0_81] : memref<16x16x32xf32, #tpu.memory_space<vmem>>, vector<1x16x32xf32>
    %263 = vector.shape_cast %262 : vector<1x16x32xf32> to vector<16x32xf32>
    %c14_82 = arith.constant 14 : index
    %c0_83 = arith.constant 0 : index
    %c0_84 = arith.constant 0 : index
    %264 = vector.load %arg5[%c14_82, %c0_83, %c0_84] : memref<16x16x32xf32, #tpu.memory_space<vmem>>, vector<1x16x32xf32>
    %265 = vector.shape_cast %264 : vector<1x16x32xf32> to vector<16x32xf32>
    %266 = vector.broadcast %260 : vector<1x32xf32> to vector<16x32xf32>
    %267 = arith.mulf %266, %263 : vector<16x32xf32>
    %268 = arith.addf %253, %267 : vector<16x32xf32>
    %269 = vector.broadcast %261 : vector<1x32xf32> to vector<16x32xf32>
    %270 = arith.mulf %269, %265 : vector<16x32xf32>
    %271 = arith.subf %268, %270 : vector<16x32xf32>
    %272 = vector.broadcast %260 : vector<1x32xf32> to vector<16x32xf32>
    %273 = arith.mulf %272, %265 : vector<16x32xf32>
    %274 = arith.addf %259, %273 : vector<16x32xf32>
    %275 = vector.broadcast %261 : vector<1x32xf32> to vector<16x32xf32>
    %276 = arith.mulf %275, %263 : vector<16x32xf32>
    %277 = arith.addf %274, %276 : vector<16x32xf32>
    %278 = vector.extract_strided_slice %3 {offsets = [15, 0], sizes = [1, 32], strides = [1, 1]} : vector<16x32xf32> to vector<1x32xf32>
    %279 = vector.extract_strided_slice %5 {offsets = [15, 0], sizes = [1, 32], strides = [1, 1]} : vector<16x32xf32> to vector<1x32xf32>
    %c15 = arith.constant 15 : index
    %c0_85 = arith.constant 0 : index
    %c0_86 = arith.constant 0 : index
    %280 = vector.load %arg4[%c15, %c0_85, %c0_86] : memref<16x16x32xf32, #tpu.memory_space<vmem>>, vector<1x16x32xf32>
    %281 = vector.shape_cast %280 : vector<1x16x32xf32> to vector<16x32xf32>
    %c15_87 = arith.constant 15 : index
    %c0_88 = arith.constant 0 : index
    %c0_89 = arith.constant 0 : index
    %282 = vector.load %arg5[%c15_87, %c0_88, %c0_89] : memref<16x16x32xf32, #tpu.memory_space<vmem>>, vector<1x16x32xf32>
    %283 = vector.shape_cast %282 : vector<1x16x32xf32> to vector<16x32xf32>
    %284 = vector.broadcast %278 : vector<1x32xf32> to vector<16x32xf32>
    %285 = arith.mulf %284, %281 : vector<16x32xf32>
    %286 = arith.addf %271, %285 : vector<16x32xf32>
    %287 = vector.broadcast %279 : vector<1x32xf32> to vector<16x32xf32>
    %288 = arith.mulf %287, %283 : vector<16x32xf32>
    %289 = arith.subf %286, %288 : vector<16x32xf32>
    %290 = vector.broadcast %278 : vector<1x32xf32> to vector<16x32xf32>
    %291 = arith.mulf %290, %283 : vector<16x32xf32>
    %292 = arith.addf %277, %291 : vector<16x32xf32>
    %293 = vector.broadcast %279 : vector<1x32xf32> to vector<16x32xf32>
    %294 = arith.mulf %293, %281 : vector<16x32xf32>
    %295 = arith.addf %292, %294 : vector<16x32xf32>
    %c0_90 = arith.constant 0 : index
    %c0_91 = arith.constant 0 : index
    %296 = vector.load %arg6[%c0_90, %c0_91] : memref<32x256xf32, #tpu.memory_space<vmem>>, vector<32x256xf32>
    %cst_92 = arith.constant dense<0.000000e+00> : vector<16x256xf32>
    %297 = tpu.matmul %289, %296, %cst_92 {dimension_numbers = #tpu.dot_dimension_numbers<[1], [0], [0], [1], [0, 0, 1, 1], [], []>} : vector<16x32xf32>, vector<32x256xf32>, vector<16x256xf32> -> vector<16x256xf32>
    %c0_93 = arith.constant 0 : index
    %c0_94 = arith.constant 0 : index
    %298 = vector.load %arg7[%c0_93, %c0_94] : memref<32x256xf32, #tpu.memory_space<vmem>>, vector<32x256xf32>
    %cst_95 = arith.constant dense<0.000000e+00> : vector<16x256xf32>
    %299 = tpu.matmul %295, %298, %cst_95 {dimension_numbers = #tpu.dot_dimension_numbers<[1], [0], [0], [1], [0, 0, 1, 1], [], []>} : vector<16x32xf32>, vector<32x256xf32>, vector<16x256xf32> -> vector<16x256xf32>
    %300 = arith.subf %297, %299 : vector<16x256xf32>
    %c0_96 = arith.constant 0 : index
    %c0_97 = arith.constant 0 : index
    %301 = vector.load %arg8[%c0_96, %c0_97] : memref<16x16xf32, #tpu.memory_space<vmem>>, vector<16x16xf32>
    %cst_98 = arith.constant dense<0.000000e+00> : vector<16x256xf32>
    %302 = tpu.matmul %301, %1, %cst_98 {dimension_numbers = #tpu.dot_dimension_numbers<[1], [0], [0], [1], [0, 0, 1, 1], [], []>} : vector<16x16xf32>, vector<16x256xf32>, vector<16x256xf32> -> vector<16x256xf32>
    %303 = arith.addf %300, %302 : vector<16x256xf32>
    %c0_99 = arith.constant 0 : index
    %c0_100 = arith.constant 0 : index
    %304 = vector.load %arg9[%c0_99, %c0_100] : memref<16x1xf32, #tpu.memory_space<vmem>>, vector<16x1xf32>
    %305 = vector.broadcast %304 : vector<16x1xf32> to vector<16x256xf32>
    %306 = arith.addf %303, %305 : vector<16x256xf32>
    %c0_101 = arith.constant 0 : index
    %c0_102 = arith.constant 0 : index
    %c0_103 = arith.constant 0 : index
    %307 = vector.load %arg10[%c0_101, %c0_102, %c0_103] : memref<1x16x256xf32, #tpu.memory_space<vmem>>, vector<1x16x256xf32>
    %308 = vector.shape_cast %307 : vector<1x16x256xf32> to vector<16x256xf32>
    %309 = vector.shape_cast %306 : vector<16x256xf32> to vector<1x16x256xf32>
    tpu.vector_store %arg10[%c0_101, %c0_102, %c0_103], %309 {strides = array<i32>} : memref<1x16x256xf32, #tpu.memory_space<vmem>>, vector<1x16x256xf32>,
    return
  }
  func.func @transform_0(%arg0: i32) -> (i32, i32, i32) {
    %c0_i32 = arith.constant 0 : i32
    %c0_i32_0 = arith.constant 0 : i32
    %c0_i32_1 = arith.constant 0 : i32
    return %arg0, %c0_i32, %c0_i32_0 : i32, i32, i32
  }
  func.func @transform_1(%arg0: i32) -> (i32, i32) {
    %c0_i32 = arith.constant 0 : i32
    %c0_i32_0 = arith.constant 0 : i32
    %c0_i32_1 = arith.constant 0 : i32
    return %c0_i32, %c0_i32_0 : i32, i32
  }
  func.func @transform_2(%arg0: i32) -> (i32, i32) {
    %c0_i32 = arith.constant 0 : i32
    %c0_i32_0 = arith.constant 0 : i32
    %c0_i32_1 = arith.constant 0 : i32
    return %c0_i32, %c0_i32_0 : i32, i32
  }
  func.func @transform_3(%arg0: i32) -> (i32, i32, i32) {
    %c0_i32 = arith.constant 0 : i32
    %c0_i32_0 = arith.constant 0 : i32
    %c0_i32_1 = arith.constant 0 : i32
    %c0_i32_2 = arith.constant 0 : i32
    return %c0_i32, %c0_i32_0, %c0_i32_1 : i32, i32, i32
  }
  func.func @transform_4(%arg0: i32) -> (i32, i32, i32) {
    %c0_i32 = arith.constant 0 : i32
    %c0_i32_0 = arith.constant 0 : i32
    %c0_i32_1 = arith.constant 0 : i32
    %c0_i32_2 = arith.constant 0 : i32
    return %c0_i32, %c0_i32_0, %c0_i32_1 : i32, i32, i32
  }
  func.func @transform_5(%arg0: i32) -> (i32, i32) {
    %c0_i32 = arith.constant 0 : i32
    %c0_i32_0 = arith.constant 0 : i32
    %c0_i32_1 = arith.constant 0 : i32
    return %c0_i32, %c0_i32_0 : i32, i32
  }
  func.func @transform_6(%arg0: i32) -> (i32, i32) {
    %c0_i32 = arith.constant 0 : i32
    %c0_i32_0 = arith.constant 0 : i32
    %c0_i32_1 = arith.constant 0 : i32
    return %c0_i32, %c0_i32_0 : i32, i32
  }
  func.func @transform_7(%arg0: i32) -> (i32, i32) {
    %c0_i32 = arith.constant 0 : i32
    %c0_i32_0 = arith.constant 0 : i32
    %c0_i32_1 = arith.constant 0 : i32
    return %c0_i32, %c0_i32_0 : i32, i32
  }
  func.func @transform_8(%arg0: i32) -> (i32, i32) {
    %c0_i32 = arith.constant 0 : i32
    %c0_i32_0 = arith.constant 0 : i32
    %c0_i32_1 = arith.constant 0 : i32
    return %c0_i32, %c0_i32_0 : i32, i32
  }
  func.func @transform_9(%arg0: i32) -> (i32, i32, i32) {
    %c0_i32 = arith.constant 0 : i32
    %c0_i32_0 = arith.constant 0 : i32
    %c0_i32_1 = arith.constant 0 : i32
    return %arg0, %c0_i32, %c0_i32_0 : i32, i32, i32
  }
}

module attributes {stable_mosaic.version = 11 : i64} {
  func.func @_proj_kernel(%arg0: i32, %arg1: i32, %arg2: memref<1x16x256xf32, #tpu.memory_space<vmem>>, %arg3: memref<32x16xf32, #tpu.memory_space<vmem>>, %arg4: memref<32x1xf32, #tpu.memory_space<vmem>>, %arg5: memref<2x32xf32, #tpu.memory_space<vmem>>, %arg6: memref<2x1xf32, #tpu.memory_space<vmem>>, %arg7: memref<1x2x256xf32, #tpu.memory_space<vmem>>) attributes {dimension_semantics = [#tpu.dimension_semantics<parallel>, #tpu.dimension_semantics<parallel>], iteration_bounds = array<i64: 2, 1>, scalar_prefetch = 0 : i64, scratch_operands = 0 : i64, tpu.core_type = #tpu.core_type<tc>, window_params = [{transform_indices = @transform_0, window_bounds = array<i64: 1, 16, 256>}, {pipeline_mode = #tpu.pipeline_mode<synchronous>, transform_indices = @transform_1, window_bounds = array<i64: 32, 16>}, {pipeline_mode = #tpu.pipeline_mode<synchronous>, transform_indices = @transform_2, window_bounds = array<i64: 32, 1>}, {pipeline_mode = #tpu.pipeline_mode<synchronous>, transform_indices = @transform_3, window_bounds = array<i64: 2, 32>}, {pipeline_mode = #tpu.pipeline_mode<synchronous>, transform_indices = @transform_4, window_bounds = array<i64: 2, 1>}, {transform_indices = @transform_5, window_bounds = array<i64: 1, 2, 256>}]} {
    %c0 = arith.constant 0 : index
    %c0_0 = arith.constant 0 : index
    %0 = vector.load %arg3[%c0, %c0_0] : memref<32x16xf32, #tpu.memory_space<vmem>>, vector<32x16xf32>
    %c0_1 = arith.constant 0 : index
    %c0_2 = arith.constant 0 : index
    %c0_3 = arith.constant 0 : index
    %1 = vector.load %arg2[%c0_1, %c0_2, %c0_3] : memref<1x16x256xf32, #tpu.memory_space<vmem>>, vector<1x16x256xf32>
    %2 = vector.shape_cast %1 : vector<1x16x256xf32> to vector<16x256xf32>
    %cst = arith.constant dense<0.000000e+00> : vector<32x256xf32>
    %3 = tpu.matmul %0, %2, %cst {dimension_numbers = #tpu.dot_dimension_numbers<[1], [0], [0], [1], [0, 0, 1, 1], [], []>} : vector<32x16xf32>, vector<16x256xf32>, vector<32x256xf32> -> vector<32x256xf32>
    %c0_4 = arith.constant 0 : index
    %c0_5 = arith.constant 0 : index
    %4 = vector.load %arg4[%c0_4, %c0_5] : memref<32x1xf32, #tpu.memory_space<vmem>>, vector<32x1xf32>
    %5 = vector.broadcast %4 : vector<32x1xf32> to vector<32x256xf32>
    %6 = arith.addf %3, %5 : vector<32x256xf32>
    %7 = arith.mulf %6, %6 : vector<32x256xf32>
    %8 = arith.mulf %6, %7 : vector<32x256xf32>
    %cst_6 = arith.constant 4.471500e-02 : f32
    %9 = vector.broadcast %cst_6 : f32 to vector<32x256xf32>
    %10 = arith.mulf %9, %8 : vector<32x256xf32>
    %11 = arith.addf %6, %10 : vector<32x256xf32>
    %cst_7 = arith.constant 0.797884583 : f32
    %12 = vector.broadcast %cst_7 : f32 to vector<32x256xf32>
    %13 = arith.mulf %12, %11 : vector<32x256xf32>
    %14 = math.tanh %13 : vector<32x256xf32>
    %cst_8 = arith.constant 1.000000e+00 : f32
    %15 = vector.broadcast %cst_8 : f32 to vector<32x256xf32>
    %16 = arith.addf %15, %14 : vector<32x256xf32>
    %cst_9 = arith.constant 5.000000e-01 : f32
    %17 = vector.broadcast %cst_9 : f32 to vector<32x256xf32>
    %18 = arith.mulf %17, %16 : vector<32x256xf32>
    %19 = arith.mulf %6, %18 : vector<32x256xf32>
    %c0_10 = arith.constant 0 : index
    %c0_11 = arith.constant 0 : index
    %20 = vector.load %arg5[%c0_10, %c0_11] : memref<2x32xf32, #tpu.memory_space<vmem>>, vector<2x32xf32>
    %cst_12 = arith.constant dense<0.000000e+00> : vector<2x256xf32>
    %21 = tpu.matmul %20, %19, %cst_12 {dimension_numbers = #tpu.dot_dimension_numbers<[1], [0], [0], [1], [0, 0, 1, 1], [], []>} : vector<2x32xf32>, vector<32x256xf32>, vector<2x256xf32> -> vector<2x256xf32>
    %c0_13 = arith.constant 0 : index
    %c0_14 = arith.constant 0 : index
    %22 = vector.load %arg6[%c0_13, %c0_14] : memref<2x1xf32, #tpu.memory_space<vmem>>, vector<2x1xf32>
    %23 = vector.broadcast %22 : vector<2x1xf32> to vector<2x256xf32>
    %24 = arith.addf %21, %23 : vector<2x256xf32>
    %c0_15 = arith.constant 0 : index
    %c0_16 = arith.constant 0 : index
    %c0_17 = arith.constant 0 : index
    %25 = vector.load %arg7[%c0_15, %c0_16, %c0_17] : memref<1x2x256xf32, #tpu.memory_space<vmem>>, vector<1x2x256xf32>
    %26 = vector.shape_cast %25 : vector<1x2x256xf32> to vector<2x256xf32>
    %27 = vector.shape_cast %24 : vector<2x256xf32> to vector<1x2x256xf32>
    tpu.vector_store %arg7[%c0_15, %c0_16, %c0_17], %27 {strides = array<i32>} : memref<1x2x256xf32, #tpu.memory_space<vmem>>, vector<1x2x256xf32>,
    return
  }
  func.func @transform_0(%arg0: i32, %arg1: i32) -> (i32, i32, i32) {
    %c0_i32 = arith.constant 0 : i32
    %c0_i32_0 = arith.constant 0 : i32
    return %arg0, %c0_i32, %arg1 : i32, i32, i32
  }
  func.func @transform_1(%arg0: i32, %arg1: i32) -> (i32, i32) {
    %c0_i32 = arith.constant 0 : i32
    %c0_i32_0 = arith.constant 0 : i32
    %c0_i32_1 = arith.constant 0 : i32
    return %c0_i32, %c0_i32_0 : i32, i32
  }
  func.func @transform_2(%arg0: i32, %arg1: i32) -> (i32, i32) {
    %c0_i32 = arith.constant 0 : i32
    %c0_i32_0 = arith.constant 0 : i32
    %c0_i32_1 = arith.constant 0 : i32
    return %c0_i32, %c0_i32_0 : i32, i32
  }
  func.func @transform_3(%arg0: i32, %arg1: i32) -> (i32, i32) {
    %c0_i32 = arith.constant 0 : i32
    %c0_i32_0 = arith.constant 0 : i32
    %c0_i32_1 = arith.constant 0 : i32
    return %c0_i32, %c0_i32_0 : i32, i32
  }
  func.func @transform_4(%arg0: i32, %arg1: i32) -> (i32, i32) {
    %c0_i32 = arith.constant 0 : i32
    %c0_i32_0 = arith.constant 0 : i32
    %c0_i32_1 = arith.constant 0 : i32
    return %c0_i32, %c0_i32_0 : i32, i32
  }
  func.func @transform_5(%arg0: i32, %arg1: i32) -> (i32, i32, i32) {
    %c0_i32 = arith.constant 0 : i32
    %c0_i32_0 = arith.constant 0 : i32
    return %arg0, %c0_i32, %arg1 : i32, i32, i32
  }
}

</mosaic_0001>

<llo_original>
// kernel: _lambda_.6
$region0: #{_lambda_.6}
  #allocation0 [shape = 'u32[]', space=smem, size = 0x4, offset = 0x4, fixed_abs, tag = 'smem constant byte address 0x4 - core index']
  #allocation1 [shape = 'u32[144,128]{1,0:T(1,128)}', space=vmem, size = 0x12000, scoped, tag = 'internal scratch']
  %s0 = inlined_call_operand.vmem [shape: f32[2,3,256], index: 0, kind: input, shape index: {}]
  %s1 = inlined_call_operand.vmem [shape: f32[16,3], index: 1, kind: input, shape index: {}]
  %s2 = inlined_call_operand.vmem [shape: f32[16,1], index: 2, kind: input, shape index: {}]
  %s3 = inlined_call_operand.vmem [shape: f32[2,16,256], index: 3, kind: output, shape index: {}]
  %s4 = sld [smem:[#allocation0]]
  $region45: #{_lambda_.6} parent=0
    _
  %s6 = ssub.s32 1, %s4
  %s7 = scalar_select 0, %s6, %s4
  loop: start=0, step=1, limit=4
  $region2: #{_lambda_.6} parent=0 // loop_pre_header
    _
  $region3: #{_lambda_.6} parent=0 // loop_header
    %s9 = sphi 0, %s13
    %p10 = scmp.ge.s32.totalorder %s9, 4
    %s16 = sphi 0, %s28
    %s17 = sphi 0, %s24
    %s18 = sphi 0, %s16
    %s19 = sphi 0, %s17
    %s20 = sphi 0, %s18
    %s21 = sphi 0, %s19
    %s33 = sphi 0, %s35
    %s36 = sphi 0, %s33
    %s37 = sphi 0, %s36
    %s53 = sphi 0, %s37
    %s57 = sphi 0, %s57
    %s59 = sphi 0, %s57
    %s60 = sphi 0, %s59
    %s74 = sphi 0, %s60
    %s78 = sphi 0, %s78
    %s80 = sphi 0, %s78
    %s81 = sphi 0, %s80
    %s95 = sphi 0, %s81
    %s103 = sphi 0, %s105
    %s106 = sphi 0, %s103
    %s107 = sphi 0, %s106
    %s123 = sphi 0, %s107
  $region4: #{_lambda_.6} parent=0 // loop_header_branch
    %12 = sbr.rel (%p10) target = $region8
  $region5: #{_lambda_.6} parent=0 // loop_body
    %s14 = ssub.s32 %s9, 1
    %s15 = ssub.s32 %s9, 2
    %s22 = sadd.s32 1, %s17
    %p23 = scmp.ge.s32.totalorder %s22, 1
    %s24 = scalar_select %p23, 0, %s22
    %s25 = sadd.s32 1, %s16
    %s26 = scalar_select %p23, %s25, %s16
    %p27 = scmp.ge.s32.totalorder %s26, 2
    %s28 = scalar_select %p27, 0, %s26
    %s29 = ssub.s32 %s16, %s28
    %s30 = ssub.s32 %s17, %s24
    %s31 = sor.u32 %s29, %s30
    %p32 = scmp.eq.s32.totalorder %s31, 0
    %s34 = sadd.s32 %s33, 1
    %s35 = scalar_select %p32, %s33, %s34
    %p38 = pneg %p32
    %p39 = scmp.eq.s32.totalorder %s9, 1
    %p40 = por %p38, %p39
    %p41 = scmp.ne.s32.totalorder %s33, %s36
    %p42 = scmp.eq.s32.totalorder %s9, 0
    %p43 = por %p41, %p42
    %p44 = scmp.ne.s32.totalorder %s33, %s36
    %p45 = scmp.eq.s32.totalorder %s14, 1
    %p46 = por %p44, %p45
    %p47 = scmp.ne.s32.totalorder %s36, %s37
    %p48 = scmp.eq.s32.totalorder %s14, 0
    %p49 = por %p47, %p48
    %p50 = scmp.ne.s32.totalorder %s36, %s37
    %p51 = scmp.eq.s32.totalorder %s15, 1
    %p52 = por %p50, %p51
    %p54 = scmp.ne.s32.totalorder %s37, %s53
    %p55 = scmp.eq.s32.totalorder %s15, 0
    %p56 = por %p54, %p55
    %s58 = sadd.s32 %s57, 1
    %p61 = scmp.eq.s32.totalorder %s9, 1
    %p62 = scmp.ne.s32.totalorder %s57, %s59
    %p63 = scmp.eq.s32.totalorder %s9, 0
    %p64 = por %p62, %p63
    %p65 = scmp.ne.s32.totalorder %s57, %s59
    %p66 = scmp.eq.s32.totalorder %s14, 1
    %p67 = por %p65, %p66
    %p68 = scmp.ne.s32.totalorder %s59, %s60
    %p69 = scmp.eq.s32.totalorder %s14, 0
    %p70 = por %p68, %p69
    %p71 = scmp.ne.s32.totalorder %s59, %s60
    %p72 = scmp.eq.s32.totalorder %s15, 1
    %p73 = por %p71, %p72
    %p75 = scmp.ne.s32.totalorder %s60, %s74
    %p76 = scmp.eq.s32.totalorder %s15, 0
    %p77 = por %p75, %p76
    %s79 = sadd.s32 %s78, 1
    %p82 = scmp.eq.s32.totalorder %s9, 1
    %p83 = scmp.ne.s32.totalorder %s78, %s80
    %p84 = scmp.eq.s32.totalorder %s9, 0
    %p85 = por %p83, %p84
    %p86 = scmp.ne.s32.totalorder %s78, %s80
    %p87 = scmp.eq.s32.totalorder %s14, 1
    %p88 = por %p86, %p87
    %p89 = scmp.ne.s32.totalorder %s80, %s81
    %p90 = scmp.eq.s32.totalorder %s14, 0
    %p91 = por %p89, %p90
    %p92 = scmp.ne.s32.totalorder %s80, %s81
    %p93 = scmp.eq.s32.totalorder %s15, 1
    %p94 = por %p92, %p93
    %p96 = scmp.ne.s32.totalorder %s81, %s95
    %p97 = scmp.eq.s32.totalorder %s15, 0
    %p98 = por %p96, %p97
    %s99 = ssub.s32 %s16, %s28
    %s100 = ssub.s32 %s17, %s24
    %s101 = sor.u32 %s99, %s100
    %p102 = scmp.eq.s32.totalorder %s101, 0
    %s104 = sadd.s32 %s103, 1
    %s105 = scalar_select %p102, %s103, %s104
    %p108 = pneg %p102
    %p109 = scmp.eq.s32.totalorder %s9, 1
    %p110 = por %p108, %p109
    %p111 = scmp.ne.s32.totalorder %s103, %s106
    %p112 = scmp.eq.s32.totalorder %s9, 0
    %p113 = por %p111, %p112
    %p114 = scmp.ne.s32.totalorder %s103, %s106
    %p115 = scmp.eq.s32.totalorder %s14, 1
    %p116 = por %p114, %p115
    %p117 = scmp.ne.s32.totalorder %s106, %s107
    %p118 = scmp.eq.s32.totalorder %s14, 0
    %p119 = por %p117, %p118
    %p120 = scmp.ne.s32.totalorder %s106, %s107
    %p121 = scmp.eq.s32.totalorder %s15, 1
    %p122 = por %p120, %p121
    %p124 = scmp.ne.s32.totalorder %s107, %s123
    %p125 = scmp.eq.s32.totalorder %s15, 0
    %p126 = por %p124, %p125
    %p127 = scmp.le.s32.totalorder 1, %s9
    %p128 = scmp.lt.s32.totalorder %s9, 3
    %p129 = pnand %p127, %p128
    %p130 = pneg %p129
    // Predicated region
    $region9: #{_lambda_.6} parent=5 // pred_check
      _
    $region10: #{_lambda_.6} parent=5 // pred_check_branch
      %132 = sbr.rel (%p129) target = $region12
    $region11: #{_lambda_.6} parent=5 // pred_region
      %s133 = ssub.s32 %s9, 1
      // Predicated region
      $region13: #{_lambda_.6} parent=11 // pred_check
        %p134 = pneg %p70
      $region14: #{_lambda_.6} parent=11 // pred_check_branch
        %136 = sbr.rel (%p134) target = $region16
      $region15: #{_lambda_.6} parent=11 // pred_region
        _
      $region16: #{_lambda_.6} parent=11 // pred_fallthru
        _
      // Predicated region
      $region17: #{_lambda_.6} parent=11 // pred_check
        %p137 = pneg %p91
      $region18: #{_lambda_.6} parent=11 // pred_check_branch
        %139 = sbr.rel (%p137) target = $region20
      $region19: #{_lambda_.6} parent=11 // pred_region
        _
      $region20: #{_lambda_.6} parent=11 // pred_fallthru
        _
    $region12: #{_lambda_.6} parent=5 // pred_fallthru
      _
    %p140 = scmp.lt.s32.totalorder %s9, 2
    // Predicated region
    $region21: #{_lambda_.6} parent=5 // pred_check
      %p141 = pneg %p140
    $region22: #{_lambda_.6} parent=5 // pred_check_branch
      %143 = sbr.rel (%p141) target = $region24
    $region23: #{_lambda_.6} parent=5 // pred_region
      // Predicated region
      $region25: #{_lambda_.6} parent=23 // pred_check
        %p144 = pneg %p43
      $region26: #{_lambda_.6} parent=23 // pred_check_branch
        %146 = sbr.rel (%p144) target = $region28
      $region27: #{_lambda_.6} parent=23 // pred_region
        %s147 = smul.u32 2, %s17
        %p148 = scmp.lt.s32.totalorder %s16, 1
        %s149 = scalar_select %p148, %s16, 1
        %p150 = scmp.lt.s32.totalorder %s147, 1
        %s151 = scalar_select %p150, %s147, 1
        %s152 = smul.addr %s149, 2
        %s153 = sadd.s32 %s151, %s152
        %s154 = smul.addr %s153, 4
        %s155 = scalar_lea.vmem %s0, %s154
        %s156 = smul.u32 2, %s17
      $region28: #{_lambda_.6} parent=23 // pred_fallthru
        _
    $region24: #{_lambda_.6} parent=5 // pred_fallthru
      _
    %p157 = scmp.le.s32.totalorder 1, %s9
    %p158 = scmp.lt.s32.totalorder %s9, 3
    %p159 = pnand %p157, %p158
    %p160 = pneg %p159
    // Predicated region
    $region29: #{_lambda_.6} parent=5 // pred_check
      _
    $region30: #{_lambda_.6} parent=5 // pred_check_branch
      %162 = sbr.rel (%p159) target = $region32
    $region31: #{_lambda_.6} parent=5 // pred_region
      %s163 = ssub.s32 %s9, 1
      %s164 = smul.u32 2, %s19
      %p165 = scmp.lt.s32.totalorder %s18, 1
      %s166 = scalar_select %p165, %s18, 1
      %p167 = scmp.lt.s32.totalorder %s164, 1
      %s168 = scalar_select %p167, %s164, 1
      %s169 = smul.addr %s166, 2
      %s170 = sadd.s32 %s168, %s169
      %s171 = smul.addr %s170, 4
      %s172 = scalar_lea.vmem %s0, %s171
      %p173 = pneg %p49
      %p174 = pneg %p46
      %p175 = pneg %p70
      %p176 = pneg %p67
      %p177 = pneg %p91
      %p178 = pneg %p88
      %p179 = pneg %p119
      %p180 = pneg %p116
      %s181 = smul.u32 2, %s19
      %p182 = scmp.lt.s32.totalorder %s18, 1
      %s183 = scalar_select %p182, %s18, 1
      %p184 = scmp.lt.s32.totalorder %s181, 1
      %s185 = scalar_select %p184, %s181, 1
      %s186 = smul.addr %s183, 4
      %s187 = sadd.s32 %s185, %s186
      %s188 = smul.addr %s187, 8
      %s189 = scalar_lea.vmem %s3, %s188
      %s190 = smul.u32 2, %s19
      %p191 = scmp.lt.s32.totalorder %s18, 1
      %s192 = scalar_select %p191, %s18, 1
      %p193 = scmp.lt.s32.totalorder %s190, 1
      %s194 = scalar_select %p193, %s190, 1
      %s195 = smul.addr %s192, 2
      %s196 = sadd.s32 %s194, %s195
      %s197 = smul.addr %s196, 4
      %s198 = scalar_lea.vmem %s0, %s197
      %s199 = smul.u32 2, %s19
      %s200 = smul.u32 2, %s19
      %p201 = scmp.lt.s32.totalorder %s18, 1
      %s202 = scalar_select %p201, %s18, 1
      %p203 = scmp.lt.s32.totalorder %s200, 1
      %s204 = scalar_select %p203, %s200, 1
      %s205 = smul.addr %s202, 4
      %s206 = sadd.s32 %s204, %s205
      %s207 = smul.addr %s206, 8
      %s208 = scalar_lea.vmem %s3, %s207
      %s209 = smul.u32 2, %s19
      %v210 = vld [vmem:[%s1] sm:$0xff]
      %v211 = vld [vmem:[%s1 + $0x8] sm:$0xff]
      %v212 = vld [vmem:[%s198] sm:$0x77]
      %v213 = vld [vmem:[%s2] sm:$0xff]
      %v214 = vld [vmem:[%s2 + $0x8] sm:$0xff]
      %216 = vset.pattern.permute.xlu0 0
      %217 = vperm.xlu0 %216, %v213
      %v218 = vpop.permute.xlu0 %217
      %221 = vset.pattern.permute.xlu0 0
      %222 = vperm.xlu0 %221, %v214
      %v223 = vpop.permute.xlu0 %222
      %v226 = vcombine.high %v212, %v212
      %vm227 = vcmask 23552
      %v229 = vsel %vm227, %v210, 0
      %v232 = vsel %vm227, %v211, 0
      %vm234 = vcmask 1042432
      %v235 = vsel %vm234, %v212, 0
      %v237 = vsel %vm234, %v226, 0
      %239 = vmatprep.subr.mxu0 %v237
      %240 = vmatpush1.msra.mxu0 %v235
      %241 = vmatprep.subr.mxu0 0.0
      %242 = vmatpush1.msra.mxu0 0.0
      %243 = vmatprep.subr.mxu0 0.0
      %244 = vmatpush1.msra.mxu0 0.0
      %245 = vmatprep.subr.mxu0 0.0
      %246 = vmatpush1.msra.mxu0 0.0
      %247 = vmatprep.subr.mxu0 0.0
      %248 = vmatpush1.msra.mxu0 0.0
      %249 = vmatprep.subr.mxu0 0.0
      %250 = vmatpush1.msra.mxu0 0.0
      %251 = vmatprep.subr.mxu0 0.0
      %252 = vmatpush1.msra.mxu0 0.0
      %253 = vmatprep.subr.mxu0 0.0
      %254 = vmatpush1.msra.mxu0 0.0
      %255 = vmatprep.subr.mxu0 0.0
      %256 = vmatpush1.msra.mxu0 0.0
      %257 = vmatprep.subr.mxu0 0.0
      %258 = vmatpush1.msra.mxu0 0.0
      %259 = vmatprep.subr.mxu0 0.0
      %260 = vmatpush1.msra.mxu0 0.0
      %261 = vmatprep.subr.mxu0 0.0
      %262 = vmatpush1.msra.mxu0 0.0
      %263 = vmatprep.subr.mxu0 0.0
      %264 = vmatpush1.msra.mxu0 0.0
      %265 = vmatprep.subr.mxu0 0.0
      %266 = vmatpush1.msra.mxu0 0.0
      %267 = vmatprep.subr.mxu0 0.0
      %268 = vmatpush1.msra.mxu0 0.0
      %269 = vmatprep.subr.mxu0 0.0
      %270 = vmatpush1.msra.mxu0 0.0
      %271 = vmatprep.subr.mxu0 0.0
      %272 = vmatpush1.msra.mxu0 0.0
      %273 = vmatprep.subr.mxu0 0.0
      %274 = vmatpush1.msra.mxu0 0.0
      %275 = vmatprep.subr.mxu0 0.0
      %276 = vmatpush1.msra.mxu0 0.0
      %277 = vmatprep.subr.mxu0 0.0
      %278 = vmatpush1.msra.mxu0 0.0
      %279 = vmatprep.subr.mxu0 0.0
      %280 = vmatpush1.msra.mxu0 0.0
      %281 = vmatprep.subr.mxu0 0.0
      %282 = vmatpush1.msra.mxu0 0.0
      %283 = vmatprep.subr.mxu0 0.0
      %284 = vmatpush1.msra.mxu0 0.0
      %285 = vmatprep.subr.mxu0 0.0
      %286 = vmatpush1.msra.mxu0 0.0
      %287 = vmatprep.subr.mxu0 0.0
      %288 = vmatpush1.msra.mxu0 0.0
      %289 = vmatprep.subr.mxu0 0.0
      %290 = vmatpush1.msra.mxu0 0.0
      %291 = vmatprep.subr.mxu0 0.0
      %292 = vmatpush1.msra.mxu0 0.0
      %293 = vmatprep.subr.mxu0 0.0
      %294 = vmatpush1.msra.mxu0 0.0
      %295 = vmatprep.subr.mxu0 0.0
      %296 = vmatpush1.msra.mxu0 0.0
      %297 = vmatprep.subr.mxu0 0.0
      %298 = vmatpush1.msra.mxu0 0.0
      %299 = vmatprep.subr.mxu0 0.0
      %300 = vmatpush1.msra.mxu0 0.0
      %301 = vmatprep.subr.mxu0 0.0
      %302 = vmatpush1.msra.mxu0 0.0
      %303 = vmatprep.mubr.f32.mxu0 0.0
      %304 = vmatmul.mubr.f32.gmra.mrb[0].mxu0 %v229
      %v305 = vpop.f32.mrb[0].mxu0
      %v306 = vadd.f32 %v218, %v305
      %v307 = vpop.f32.mrb[0].mxu0
      %v308 = vadd.f32 %v218, %v307
      %309 = vmatprep.mubr.f32.mxu0 0.0
      %310 = vmatmul.mubr.f32.gmra.mrb[0].mxu0 %v232
      %v311 = vpop.f32.mrb[0].mxu0
      %v312 = vadd.f32 %v223, %v311
      %v313 = vpop.f32.mrb[0].mxu0
      %v314 = vadd.f32 %v223, %v313
      %315 = vdwg.mxu0
      %316 = vst [vmem:[%s208] sm:$0xff] %v306
      %317 = vst [vmem:[%s208 + $0x8] sm:$0xff] %v308
      %318 = vst [vmem:[%s208 + $0x10] sm:$0xff] %v312
      %319 = vst [vmem:[%s208 + $0x18] sm:$0xff] %v314
      %s320 = smul.u32 2, %s19
      %p321 = scmp.lt.s32.totalorder %s18, 1
      %s322 = scalar_select %p321, %s18, 1
      %p323 = scmp.lt.s32.totalorder %s320, 1
      %s324 = scalar_select %p323, %s320, 1
      %s325 = smul.addr %s322, 4
      %s326 = sadd.s32 %s324, %s325
      %s327 = smul.addr %s326, 8
      %s328 = scalar_lea.vmem %s3, %s327
      // Predicated region
      $region33: #{_lambda_.6} parent=31 // pred_check
        %p329 = pneg %p116
      $region34: #{_lambda_.6} parent=31 // pred_check_branch
        %331 = sbr.rel (%p329) target = $region36
      $region35: #{_lambda_.6} parent=31 // pred_region
        %s332 = smul.u32 2, %s19
      $region36: #{_lambda_.6} parent=31 // pred_fallthru
        _
    $region32: #{_lambda_.6} parent=5 // pred_fallthru
      _
    %p333 = scmp.le.s32.totalorder 2, %s9
    // Predicated region
    $region37: #{_lambda_.6} parent=5 // pred_check
      %p334 = pneg %p333
    $region38: #{_lambda_.6} parent=5 // pred_check_branch
      %336 = sbr.rel (%p334) target = $region40
    $region39: #{_lambda_.6} parent=5 // pred_region
      %s337 = ssub.s32 %s9, 2
      // Predicated region
      $region41: #{_lambda_.6} parent=39 // pred_check
        %p338 = pneg %p122
      $region42: #{_lambda_.6} parent=39 // pred_check_branch
        %340 = sbr.rel (%p338) target = $region44
      $region43: #{_lambda_.6} parent=39 // pred_region
        %s341 = smul.u32 2, %s21
        %p342 = scmp.lt.s32.totalorder %s20, 1
        %s343 = scalar_select %p342, %s20, 1
        %p344 = scmp.lt.s32.totalorder %s341, 1
        %s345 = scalar_select %p344, %s341, 1
        %s346 = smul.addr %s343, 4
        %s347 = sadd.s32 %s345, %s346
        %s348 = smul.addr %s347, 8
        %s349 = scalar_lea.vmem %s3, %s348
      $region44: #{_lambda_.6} parent=39 // pred_fallthru
        _
    $region40: #{_lambda_.6} parent=5 // pred_fallthru
      _
  $region6: #{_lambda_.6} parent=0 // loop_footer
    %s13 = sadd.s32 1, %s9
  $region7: #{_lambda_.6} parent=0 // loop_footer_branch
    %8 = sbr.rel target = $region3
  $region8: #{_lambda_.6} parent=0 // loop_exit
    _

// kernel: _lambda_.7
$region0: #{_lambda_.7}
  #allocation0 [shape = 'u32[]', space=smem, size = 0x4, offset = 0x4, fixed_abs, tag = 'smem constant byte address 0x4 - core index']
  #allocation1 [shape = 'u32[144,128]{1,0:T(1,128)}', space=vmem, size = 0x12000, scoped, tag = 'internal scratch']
  %s0 = inlined_call_operand.vmem [shape: f32[2,16,256], index: 0, kind: input, shape index: {}]
  %s1 = inlined_call_operand.vmem [shape: f32[256,32], index: 1, kind: input, shape index: {}]
  %s2 = inlined_call_operand.hbm [shape: f32[256,32], index: 2, kind: input, shape index: {}]
  %s3 = inlined_call_operand.hbm [shape: f32[16,16,32], index: 3, kind: input, shape index: {}]
  %s4 = inlined_call_operand.hbm [shape: f32[16,16,32], index: 4, kind: input, shape index: {}]
  %s5 = inlined_call_operand.hbm [shape: f32[32,256], index: 5, kind: input, shape index: {}]
  %s6 = inlined_call_operand.hbm [shape: f32[32,256], index: 6, kind: input, shape index: {}]
  %s7 = inlined_call_operand.vmem [shape: f32[16,16], index: 7, kind: input, shape index: {}]
  %s8 = inlined_call_operand.vmem [shape: f32[16,1], index: 8, kind: input, shape index: {}]
  %s9 = inlined_call_operand.vmem [shape: f32[2,16,256], index: 9, kind: output, shape index: {}]
  %s10 = sld [smem:[#allocation0]]
  $region89: #{_lambda_.7} parent=0
    _
  %s12 = ssub.s32 1, %s10
  %s13 = scalar_select 0, %s12, %s10
  $region1: #{_lambda_.7} parent=0
    #allocation2 [shape = 'u8[131072]{0}', space=vmem, size = 0x20000, scoped, tag = 'input window, operand 2, single buffered']
    #allocation3 [shape = 's32[2]{0}', space=sflag, size = 0x8, scoped, tag = 'scoped memory for _lambda_.7']
    #allocation4 [shape = 'u8[131072]{0}', space=vmem, size = 0x20000, scoped, tag = 'input window, operand 3, single buffered']
    #allocation5 [shape = 's32[1]{0}', space=sflag, size = 0x4, scoped, tag = 'scoped memory for _lambda_.7']
    #allocation6 [shape = 'u8[131072]{0}', space=vmem, size = 0x20000, scoped, tag = 'input window, operand 4, single buffered']
    #allocation7 [shape = 'u8[32768]{0}', space=vmem, size = 0x8000, scoped, tag = 'input window, operand 5, single buffered']
    #allocation8 [shape = 's32[1]{0}', space=sflag, size = 0x4, scoped, tag = 'scoped memory for _lambda_.7']
    #allocation9 [shape = 'u8[32768]{0}', space=vmem, size = 0x8000, scoped, tag = 'input window, operand 6, single buffered']
    %14 = vsyncpa [#allocation3], 0
    %15 = vsyncpa [#allocation5], 0
    %16 = vsyncpa [#allocation8], 0
    loop: start=0, step=1, limit=4
    $region2: #{_lambda_.7} parent=1 // loop_pre_header
      _
    $region3: #{_lambda_.7} parent=1 // loop_header
      %s18 = sphi 0, %s22
      %p19 = scmp.ge.s32.totalorder %s18, 4
      %s28 = sphi 0, %s30
      %s31 = sphi 0, %s28
      %s32 = sphi 0, %s31
      %s48 = sphi 0, %s32
      %s52 = sphi 0, %s52
      %s54 = sphi 0, %s52
      %s55 = sphi 0, %s54
      %s69 = sphi 0, %s55
      %s73 = sphi 0, %s73
      %s75 = sphi 0, %s73
      %s76 = sphi 0, %s75
      %s90 = sphi 0, %s76
      %s94 = sphi 0, %s94
      %s96 = sphi 0, %s94
      %s97 = sphi 0, %s96
      %s111 = sphi 0, %s97
      %s115 = sphi 0, %s115
      %s117 = sphi 0, %s115
      %s118 = sphi 0, %s117
      %s132 = sphi 0, %s118
      %s136 = sphi 0, %s136
      %s138 = sphi 0, %s136
      %s139 = sphi 0, %s138
      %s153 = sphi 0, %s139
      %s157 = sphi 0, %s157
      %s159 = sphi 0, %s157
      %s160 = sphi 0, %s159
      %s174 = sphi 0, %s160
      %s178 = sphi 0, %s178
      %s180 = sphi 0, %s178
      %s181 = sphi 0, %s180
      %s195 = sphi 0, %s181
      %s199 = sphi 0, %s199
      %s201 = sphi 0, %s199
      %s202 = sphi 0, %s201
      %s216 = sphi 0, %s202
      %s222 = sphi 0, %s224
      %s225 = sphi 0, %s222
      %s226 = sphi 0, %s225
      %s242 = sphi 0, %s226
    $region4: #{_lambda_.7} parent=1 // loop_header_branch
      %21 = sbr.rel (%p19) target = $region8
    $region5: #{_lambda_.7} parent=1 // loop_body
      %s23 = ssub.s32 %s18, 1
      %s24 = ssub.s32 %s18, 2
      %s25 = sadd.s32 %s18, 1
      %s26 = ssub.s32 %s18, %s25
      %p27 = scmp.eq.s32.totalorder %s26, 0
      %s29 = sadd.s32 %s28, 1
      %s30 = scalar_select %p27, %s28, %s29
      %p33 = pneg %p27
      %p34 = scmp.eq.s32.totalorder %s18, 1
      %p35 = por %p33, %p34
      %p36 = scmp.ne.s32.totalorder %s28, %s31
      %p37 = scmp.eq.s32.totalorder %s18, 0
      %p38 = por %p36, %p37
      %p39 = scmp.ne.s32.totalorder %s28, %s31
      %p40 = scmp.eq.s32.totalorder %s23, 1
      %p41 = por %p39, %p40
      %p42 = scmp.ne.s32.totalorder %s31, %s32
      %p43 = scmp.eq.s32.totalorder %s23, 0
      %p44 = por %p42, %p43
      %p45 = scmp.ne.s32.totalorder %s31, %s32
      %p46 = scmp.eq.s32.totalorder %s24, 1
      %p47 = por %p45, %p46
      %p49 = scmp.ne.s32.totalorder %s32, %s48
      %p50 = scmp.eq.s32.totalorder %s24, 0
      %p51 = por %p49, %p50
      %s53 = sadd.s32 %s52, 1
      %p56 = scmp.eq.s32.totalorder %s18, 1
      %p57 = scmp.ne.s32.totalorder %s52, %s54
      %p58 = scmp.eq.s32.totalorder %s18, 0
      %p59 = por %p57, %p58
      %p60 = scmp.ne.s32.totalorder %s52, %s54
      %p61 = scmp.eq.s32.totalorder %s23, 1
      %p62 = por %p60, %p61
      %p63 = scmp.ne.s32.totalorder %s54, %s55
      %p64 = scmp.eq.s32.totalorder %s23, 0
      %p65 = por %p63, %p64
      %p66 = scmp.ne.s32.totalorder %s54, %s55
      %p67 = scmp.eq.s32.totalorder %s24, 1
      %p68 = por %p66, %p67
      %p70 = scmp.ne.s32.totalorder %s55, %s69
      %p71 = scmp.eq.s32.totalorder %s24, 0
      %p72 = por %p70, %p71
      %s74 = sadd.s32 %s73, 1
      %p77 = scmp.eq.s32.totalorder %s18, 1
      %p78 = scmp.ne.s32.totalorder %s73, %s75
      %p79 = scmp.eq.s32.totalorder %s18, 0
      %p80 = por %p78, %p79
      %p81 = scmp.ne.s32.totalorder %s73, %s75
      %p82 = scmp.eq.s32.totalorder %s23, 1
      %p83 = por %p81, %p82
      %p84 = scmp.ne.s32.totalorder %s75, %s76
      %p85 = scmp.eq.s32.totalorder %s23, 0
      %p86 = por %p84, %p85
      %p87 = scmp.ne.s32.totalorder %s75, %s76
      %p88 = scmp.eq.s32.totalorder %s24, 1
      %p89 = por %p87, %p88
      %p91 = scmp.ne.s32.totalorder %s76, %s90
      %p92 = scmp.eq.s32.totalorder %s24, 0
      %p93 = por %p91, %p92
      %s95 = sadd.s32 %s94, 1
      %p98 = scmp.eq.s32.totalorder %s18, 1
      %p99 = scmp.ne.s32.totalorder %s94, %s96
      %p100 = scmp.eq.s32.totalorder %s18, 0
      %p101 = por %p99, %p100
      %p102 = scmp.ne.s32.totalorder %s94, %s96
      %p103 = scmp.eq.s32.totalorder %s23, 1
      %p104 = por %p102, %p103
      %p105 = scmp.ne.s32.totalorder %s96, %s97
      %p106 = scmp.eq.s32.totalorder %s23, 0
      %p107 = por %p105, %p106
      %p108 = scmp.ne.s32.totalorder %s96, %s97
      %p109 = scmp.eq.s32.totalorder %s24, 1
      %p110 = por %p108, %p109
      %p112 = scmp.ne.s32.totalorder %s97, %s111
      %p113 = scmp.eq.s32.totalorder %s24, 0
      %p114 = por %p112, %p113
      %s116 = sadd.s32 %s115, 1
      %p119 = scmp.eq.s32.totalorder %s18, 1
      %p120 = scmp.ne.s32.totalorder %s115, %s117
      %p121 = scmp.eq.s32.totalorder %s18, 0
      %p122 = por %p120, %p121
      %p123 = scmp.ne.s32.totalorder %s115, %s117
      %p124 = scmp.eq.s32.totalorder %s23, 1
      %p125 = por %p123, %p124
      %p126 = scmp.ne.s32.totalorder %s117, %s118
      %p127 = scmp.eq.s32.totalorder %s23, 0
      %p128 = por %p126, %p127
      %p129 = scmp.ne.s32.totalorder %s117, %s118
      %p130 = scmp.eq.s32.totalorder %s24, 1
      %p131 = por %p129, %p130
      %p133 = scmp.ne.s32.totalorder %s118, %s132
      %p134 = scmp.eq.s32.totalorder %s24, 0
      %p135 = por %p133, %p134
      %s137 = sadd.s32 %s136, 1
      %p140 = scmp.eq.s32.totalorder %s18, 1
      %p141 = scmp.ne.s32.totalorder %s136, %s138
      %p142 = scmp.eq.s32.totalorder %s18, 0
      %p143 = por %p141, %p142
      %p144 = scmp.ne.s32.totalorder %s136, %s138
      %p145 = scmp.eq.s32.totalorder %s23, 1
      %p146 = por %p144, %p145
      %p147 = scmp.ne.s32.totalorder %s138, %s139
      %p148 = scmp.eq.s32.totalorder %s23, 0
      %p149 = por %p147, %p148
      %p150 = scmp.ne.s32.totalorder %s138, %s139
      %p151 = scmp.eq.s32.totalorder %s24, 1
      %p152 = por %p150, %p151
      %p154 = scmp.ne.s32.totalorder %s139, %s153
      %p155 = scmp.eq.s32.totalorder %s24, 0
      %p156 = por %p154, %p155
      %s158 = sadd.s32 %s157, 1
      %p161 = scmp.eq.s32.totalorder %s18, 1
      %p162 = scmp.ne.s32.totalorder %s157, %s159
      %p163 = scmp.eq.s32.totalorder %s18, 0
      %p164 = por %p162, %p163
      %p165 = scmp.ne.s32.totalorder %s157, %s159
      %p166 = scmp.eq.s32.totalorder %s23, 1
      %p167 = por %p165, %p166
      %p168 = scmp.ne.s32.totalorder %s159, %s160
      %p169 = scmp.eq.s32.totalorder %s23, 0
      %p170 = por %p168, %p169
      %p171 = scmp.ne.s32.totalorder %s159, %s160
      %p172 = scmp.eq.s32.totalorder %s24, 1
      %p173 = por %p171, %p172
      %p175 = scmp.ne.s32.totalorder %s160, %s174
      %p176 = scmp.eq.s32.totalorder %s24, 0
      %p177 = por %p175, %p176
      %s179 = sadd.s32 %s178, 1
      %p182 = scmp.eq.s32.totalorder %s18, 1
      %p183 = scmp.ne.s32.totalorder %s178, %s180
      %p184 = scmp.eq.s32.totalorder %s18, 0
      %p185 = por %p183, %p184
      %p186 = scmp.ne.s32.totalorder %s178, %s180
      %p187 = scmp.eq.s32.totalorder %s23, 1
      %p188 = por %p186, %p187
      %p189 = scmp.ne.s32.totalorder %s180, %s181
      %p190 = scmp.eq.s32.totalorder %s23, 0
      %p191 = por %p189, %p190
      %p192 = scmp.ne.s32.totalorder %s180, %s181
      %p193 = scmp.eq.s32.totalorder %s24, 1
      %p194 = por %p192, %p193
      %p196 = scmp.ne.s32.totalorder %s181, %s195
      %p197 = scmp.eq.s32.totalorder %s24, 0
      %p198 = por %p196, %p197
      %s200 = sadd.s32 %s199, 1
      %p203 = scmp.eq.s32.totalorder %s18, 1
      %p204 = scmp.ne.s32.totalorder %s199, %s201
      %p205 = scmp.eq.s32.totalorder %s18, 0
      %p206 = por %p204, %p205
      %p207 = scmp.ne.s32.totalorder %s199, %s201
      %p208 = scmp.eq.s32.totalorder %s23, 1
      %p209 = por %p207, %p208
      %p210 = scmp.ne.s32.totalorder %s201, %s202
      %p211 = scmp.eq.s32.totalorder %s23, 0
      %p212 = por %p210, %p211
      %p213 = scmp.ne.s32.totalorder %s201, %s202
      %p214 = scmp.eq.s32.totalorder %s24, 1
      %p215 = por %p213, %p214
      %p217 = scmp.ne.s32.totalorder %s202, %s216
      %p218 = scmp.eq.s32.totalorder %s24, 0
      %p219 = por %p217, %p218
      %s220 = ssub.s32 %s18, %s25
      %p221 = scmp.eq.s32.totalorder %s220, 0
      %s223 = sadd.s32 %s222, 1
      %s224 = scalar_select %p221, %s222, %s223
      %p227 = pneg %p221
      %p228 = scmp.eq.s32.totalorder %s18, 1
      %p229 = por %p227, %p228
      %p230 = scmp.ne.s32.totalorder %s222, %s225
      %p231 = scmp.eq.s32.totalorder %s18, 0
      %p232 = por %p230, %p231
      %p233 = scmp.ne.s32.totalorder %s222, %s225
      %p234 = scmp.eq.s32.totalorder %s23, 1
      %p235 = por %p233, %p234
      %p236 = scmp.ne.s32.totalorder %s225, %s226
      %p237 = scmp.eq.s32.totalorder %s23, 0
      %p238 = por %p236, %p237
      %p239 = scmp.ne.s32.totalorder %s225, %s226
      %p240 = scmp.eq.s32.totalorder %s24, 1
      %p241 = por %p239, %p240
      %p243 = scmp.ne.s32.totalorder %s226, %s242
      %p244 = scmp.eq.s32.totalorder %s24, 0
      %p245 = por %p243, %p244
      %p246 = scmp.le.s32.totalorder 1, %s18
      %p247 = scmp.lt.s32.totalorder %s18, 3
      %p248 = pnand %p246, %p247
      %p249 = pneg %p248
      // Predicated region
      $region9: #{_lambda_.7} parent=5 // pred_check
        _
      $region10: #{_lambda_.7} parent=5 // pred_check_branch
        %251 = sbr.rel (%p248) target = $region12
      $region11: #{_lambda_.7} parent=5 // pred_region
        %s252 = ssub.s32 %s18, 1
        // Predicated region
        $region13: #{_lambda_.7} parent=11 // pred_check
          %p253 = pneg %p65
        $region14: #{_lambda_.7} parent=11 // pred_check_branch
          %255 = sbr.rel (%p253) target = $region16
        $region15: #{_lambda_.7} parent=11 // pred_region
          _
        $region16: #{_lambda_.7} parent=11 // pred_fallthru
          _
        // Predicated region
        $region17: #{_lambda_.7} parent=11 // pred_check
          %p256 = pneg %p86
        $region18: #{_lambda_.7} parent=11 // pred_check_branch
          %258 = sbr.rel (%p256) target = $region20
        $region19: #{_lambda_.7} parent=11 // pred_region
          %s260 = ssub.s32 4096, 4096
          %261 = vsyncadd [#allocation3], %s260
          %s262 = sshll.u32 [#allocation2], 4
          %s263 = int_to_ptr.vmem [resolvable:$true] %s262
          %268 = dma.hbm_to_vmem [thread:$0]  %s2, 4096, %s263, [#allocation3], 128, 128, 8
        $region20: #{_lambda_.7} parent=11 // pred_fallthru
          _
        // Predicated region
        $region21: #{_lambda_.7} parent=11 // pred_check
          %p269 = pneg %p107
        $region22: #{_lambda_.7} parent=11 // pred_check_branch
          %271 = sbr.rel (%p269) target = $region24
        $region23: #{_lambda_.7} parent=11 // pred_region
          %s273 = ssub.s32 4096, 4096
          %274 = vsyncadd [#allocation5], %s273
          %s275 = sshll.u32 [#allocation4], 4
          %s276 = int_to_ptr.vmem [resolvable:$true] %s275
          %281 = dma.hbm_to_vmem [thread:$0]  %s3, 4096, %s276, [#allocation5], 128, 128, 8
        $region24: #{_lambda_.7} parent=11 // pred_fallthru
          _
        // Predicated region
        $region25: #{_lambda_.7} parent=11 // pred_check
          %p282 = pneg %p128
        $region26: #{_lambda_.7} parent=11 // pred_check_branch
          %284 = sbr.rel (%p282) target = $region28
        $region27: #{_lambda_.7} parent=11 // pred_region
          %s286 = ssub.s32 4096, 4096
          %287 = vsyncadd [#allocation5], %s286
          %s288 = sshll.u32 [#allocation6], 4
          %s289 = int_to_ptr.vmem [resolvable:$true] %s288
          %294 = dma.hbm_to_vmem [thread:$0]  %s4, 4096, %s289, [#allocation5], 128, 128, 8
        $region28: #{_lambda_.7} parent=11 // pred_fallthru
          _
        // Predicated region
        $region29: #{_lambda_.7} parent=11 // pred_check
          %p295 = pneg %p149
        $region30: #{_lambda_.7} parent=11 // pred_check_branch
          %297 = sbr.rel (%p295) target = $region32
        $region31: #{_lambda_.7} parent=11 // pred_region
          %s299 = ssub.s32 1024, 1024
          %300 = vsyncadd [#allocation8], %s299
          %s301 = sshll.u32 [#allocation7], 4
          %s302 = int_to_ptr.vmem [resolvable:$true] %s301
          %307 = dma.hbm_to_vmem [thread:$0]  %s5, 1024, %s302, [#allocation8], 256, 256, 16
        $region32: #{_lambda_.7} parent=11 // pred_fallthru
          _
        // Predicated region
        $region33: #{_lambda_.7} parent=11 // pred_check
          %p308 = pneg %p170
        $region34: #{_lambda_.7} parent=11 // pred_check_branch
          %310 = sbr.rel (%p308) target = $region36
        $region35: #{_lambda_.7} parent=11 // pred_region
          %s312 = ssub.s32 1024, 1024
          %313 = vsyncadd [#allocation8], %s312
          %s314 = sshll.u32 [#allocation9], 4
          %s315 = int_to_ptr.vmem [resolvable:$true] %s314
          %320 = dma.hbm_to_vmem [thread:$0]  %s6, 1024, %s315, [#allocation8], 256, 256, 16
        $region36: #{_lambda_.7} parent=11 // pred_fallthru
          _
        // Predicated region
        $region37: #{_lambda_.7} parent=11 // pred_check
          %p321 = pneg %p191
        $region38: #{_lambda_.7} parent=11 // pred_check_branch
          %323 = sbr.rel (%p321) target = $region40
        $region39: #{_lambda_.7} parent=11 // pred_region
          _
        $region40: #{_lambda_.7} parent=11 // pred_fallthru
          _
        // Predicated region
        $region41: #{_lambda_.7} parent=11 // pred_check
          %p324 = pneg %p212
        $region42: #{_lambda_.7} parent=11 // pred_check_branch
          %326 = sbr.rel (%p324) target = $region44
        $region43: #{_lambda_.7} parent=11 // pred_region
          _
        $region44: #{_lambda_.7} parent=11 // pred_fallthru
          _
      $region12: #{_lambda_.7} parent=5 // pred_fallthru
        _
      %p327 = scmp.lt.s32.totalorder %s18, 2
      // Predicated region
      $region45: #{_lambda_.7} parent=5 // pred_check
        %p328 = pneg %p327
      $region46: #{_lambda_.7} parent=5 // pred_check_branch
        %330 = sbr.rel (%p328) target = $region48
      $region47: #{_lambda_.7} parent=5 // pred_region
        // Predicated region
        $region49: #{_lambda_.7} parent=47 // pred_check
          %p331 = pneg %p38
        $region50: #{_lambda_.7} parent=47 // pred_check_branch
          %333 = sbr.rel (%p331) target = $region52
        $region51: #{_lambda_.7} parent=47 // pred_region
          %p334 = scmp.lt.s32.totalorder %s18, 1
          %s335 = scalar_select %p334, %s18, 1
          %s336 = smul.addr %s335, 4
          %s337 = smul.addr %s336, 8
          %s338 = scalar_lea.vmem %s0, %s337
        $region52: #{_lambda_.7} parent=47 // pred_fallthru
          _
      $region48: #{_lambda_.7} parent=5 // pred_fallthru
        _
      %p339 = scmp.le.s32.totalorder 1, %s18
      %p340 = scmp.lt.s32.totalorder %s18, 3
      %p341 = pnand %p339, %p340
      %p342 = pneg %p341
      // Predicated region
      $region53: #{_lambda_.7} parent=5 // pred_check
        _
      $region54: #{_lambda_.7} parent=5 // pred_check_branch
        %344 = sbr.rel (%p341) target = $region56
      $region55: #{_lambda_.7} parent=5 // pred_region
        %s345 = ssub.s32 %s18, 1
        // Predicated region
        $region57: #{_lambda_.7} parent=55 // pred_check
          %p346 = pneg %p86
        $region58: #{_lambda_.7} parent=55 // pred_check_branch
          %348 = sbr.rel (%p346) target = $region60
        $region59: #{_lambda_.7} parent=55 // pred_region
          %349 = dma.done [#allocation3], 4096
        $region60: #{_lambda_.7} parent=55 // pred_fallthru
          _
        // Predicated region
        $region61: #{_lambda_.7} parent=55 // pred_check
          %p350 = pneg %p107
        $region62: #{_lambda_.7} parent=55 // pred_check_branch
          %352 = sbr.rel (%p350) target = $region64
        $region63: #{_lambda_.7} parent=55 // pred_region
          %353 = dma.done [#allocation5], 4096
        $region64: #{_lambda_.7} parent=55 // pred_fallthru
          _
        // Predicated region
        $region65: #{_lambda_.7} parent=55 // pred_check
          %p354 = pneg %p128
        $region66: #{_lambda_.7} parent=55 // pred_check_branch
          %356 = sbr.rel (%p354) target = $region68
        $region67: #{_lambda_.7} parent=55 // pred_region
          %357 = dma.done [#allocation5], 4096
        $region68: #{_lambda_.7} parent=55 // pred_fallthru
          _
        // Predicated region
        $region69: #{_lambda_.7} parent=55 // pred_check
          %p358 = pneg %p149
        $region70: #{_lambda_.7} parent=55 // pred_check_branch
          %360 = sbr.rel (%p358) target = $region72
        $region71: #{_lambda_.7} parent=55 // pred_region
          %361 = dma.done [#allocation8], 1024
        $region72: #{_lambda_.7} parent=55 // pred_fallthru
          _
        // Predicated region
        $region73: #{_lambda_.7} parent=55 // pred_check
          %p362 = pneg %p170
        $region74: #{_lambda_.7} parent=55 // pred_check_branch
          %364 = sbr.rel (%p362) target = $region76
        $region75: #{_lambda_.7} parent=55 // pred_region
          %365 = dma.done [#allocation8], 1024
        $region76: #{_lambda_.7} parent=55 // pred_fallthru
          _
        %p366 = scmp.lt.s32.totalorder %s23, 1
        %s367 = scalar_select %p366, %s23, 1
        %s368 = smul.addr %s367, 4
        %s369 = smul.addr %s368, 8
        %s370 = scalar_lea.vmem %s0, %s369
        %p371 = pneg %p44
        %p372 = pneg %p41
        %p373 = pneg %p65
        %p374 = pneg %p62
        %p375 = pneg %p86
        %p376 = pneg %p83
        %p377 = pneg %p107
        %p378 = pneg %p104
        %p379 = pneg %p128
        %p380 = pneg %p125
        %p381 = pneg %p149
        %p382 = pneg %p146
        %p383 = pneg %p170
        %p384 = pneg %p167
        %p385 = pneg %p191
        %p386 = pneg %p188
        %p387 = pneg %p212
        %p388 = pneg %p209
        %p389 = pneg %p238
        %p390 = pneg %p235
        %p391 = scmp.lt.s32.totalorder %s23, 1
        %s392 = scalar_select %p391, %s23, 1
        %s393 = smul.addr %s392, 4
        %s394 = smul.addr %s393, 8
        %s395 = scalar_lea.vmem %s9, %s394
        %p396 = scmp.lt.s32.totalorder %s23, 1
        %s397 = scalar_select %p396, %s23, 1
        %s398 = smul.addr %s397, 4
        %s399 = smul.addr %s398, 8
        %s400 = scalar_lea.vmem %s0, %s399
        %p401 = scmp.lt.s32.totalorder %s23, 1
        %s402 = scalar_select %p401, %s23, 1
        %s403 = smul.addr %s402, 4
        %s404 = smul.addr %s403, 8
        %s405 = scalar_lea.vmem %s9, %s404
        %v406 = vld [vmem:[%s400] sm:$0xff]
        %v407 = vld [vmem:[%s400 + $0x8] sm:$0xff]
        %v408 = vld [vmem:[%s400 + $0x10] sm:$0xff]
        %v409 = vld [vmem:[%s400 + $0x18] sm:$0xff]
        %v410 = vld [vmem:[%s1] sm:$0xff]
        %v411 = vld [vmem:[%s1 + $0x8] sm:$0xff]
        %v412 = vld [vmem:[%s1 + $0x10] sm:$0xff]
        %v413 = vld [vmem:[%s1 + $0x18] sm:$0xff]
        %v414 = vld [vmem:[%s1 + $0x20] sm:$0xff]
        %v415 = vld [vmem:[%s1 + $0x28] sm:$0xff]
        %v416 = vld [vmem:[%s1 + $0x30] sm:$0xff]
        %v417 = vld [vmem:[%s1 + $0x38] sm:$0xff]
        %v418 = vld [vmem:[%s1 + $0x40] sm:$0xff]
        %v419 = vld [vmem:[%s1 + $0x48] sm:$0xff]
        %v420 = vld [vmem:[%s1 + $0x50] sm:$0xff]
        %v421 = vld [vmem:[%s1 + $0x58] sm:$0xff]
        %v422 = vld [vmem:[%s1 + $0x60] sm:$0xff]
        %v423 = vld [vmem:[%s1 + $0x68] sm:$0xff]
        %v424 = vld [vmem:[%s1 + $0x70] sm:$0xff]
        %v425 = vld [vmem:[%s1 + $0x78] sm:$0xff]
        %v426 = vld [vmem:[%s1 + $0x80] sm:$0xff]
        %v427 = vld [vmem:[%s1 + $0x88] sm:$0xff]
        %v428 = vld [vmem:[%s1 + $0x90] sm:$0xff]
        %v429 = vld [vmem:[%s1 + $0x98] sm:$0xff]
        %v430 = vld [vmem:[%s1 + $0xa0] sm:$0xff]
        %v431 = vld [vmem:[%s1 + $0xa8] sm:$0xff]
        %v432 = vld [vmem:[%s1 + $0xb0] sm:$0xff]
        %v433 = vld [vmem:[%s1 + $0xb8] sm:$0xff]
        %v434 = vld [vmem:[%s1 + $0xc0] sm:$0xff]
        %v435 = vld [vmem:[%s1 + $0xc8] sm:$0xff]
        %v436 = vld [vmem:[%s1 + $0xd0] sm:$0xff]
        %v437 = vld [vmem:[%s1 + $0xd8] sm:$0xff]
        %v438 = vld [vmem:[%s1 + $0xe0] sm:$0xff]
        %v439 = vld [vmem:[%s1 + $0xe8] sm:$0xff]
        %v440 = vld [vmem:[%s1 + $0xf0] sm:$0xff]
        %v441 = vld [vmem:[%s1 + $0xf8] sm:$0xff]
        %442 = vmatprep.subr.mxu0 0.0
        %443 = vmatpush1.msra.mxu0 %v410
        %444 = vmatprep.subr.mxu0 0.0
        %445 = vmatpush1.msra.mxu0 %v411
        %446 = vmatprep.subr.mxu0 0.0
        %447 = vmatpush1.msra.mxu0 %v412
        %448 = vmatprep.subr.mxu0 0.0
        %449 = vmatpush1.msra.mxu0 %v413
        %450 = vmatprep.subr.mxu0 0.0
        %451 = vmatpush1.msra.mxu0 %v414
        %452 = vmatprep.subr.mxu0 0.0
        %453 = vmatpush1.msra.mxu0 %v415
        %454 = vmatprep.subr.mxu0 0.0
        %455 = vmatpush1.msra.mxu0 %v416
        %456 = vmatprep.subr.mxu0 0.0
        %457 = vmatpush1.msra.mxu0 %v417
        %458 = vmatprep.subr.mxu0 0.0
        %459 = vmatpush1.msra.mxu0 %v418
        %460 = vmatprep.subr.mxu0 0.0
        %461 = vmatpush1.msra.mxu0 %v419
        %462 = vmatprep.subr.mxu0 0.0
        %463 = vmatpush1.msra.mxu0 %v420
        %464 = vmatprep.subr.mxu0 0.0
        %465 = vmatpush1.msra.mxu0 %v421
        %466 = vmatprep.subr.mxu0 0.0
        %467 = vmatpush1.msra.mxu0 %v422
        %468 = vmatprep.subr.mxu0 0.0
        %469 = vmatpush1.msra.mxu0 %v423
        %470 = vmatprep.subr.mxu0 0.0
        %471 = vmatpush1.msra.mxu0 %v424
        %472 = vmatprep.subr.mxu0 0.0
        %473 = vmatpush1.msra.mxu0 %v425
        %474 = vmatprep.subr.mxu0 0.0
        %475 = vmatpush1.msra.mxu0 %v426
        %476 = vmatprep.subr.mxu0 0.0
        %477 = vmatpush1.msra.mxu0 %v427
        %478 = vmatprep.subr.mxu0 0.0
        %479 = vmatpush1.msra.mxu0 %v428
        %480 = vmatprep.subr.mxu0 0.0
        %481 = vmatpush1.msra.mxu0 %v429
        %482 = vmatprep.subr.mxu0 0.0
        %483 = vmatpush1.msra.mxu0 %v430
        %484 = vmatprep.subr.mxu0 0.0
        %485 = vmatpush1.msra.mxu0 %v431
        %486 = vmatprep.subr.mxu0 0.0
        %487 = vmatpush1.msra.mxu0 %v432
        %488 = vmatprep.subr.mxu0 0.0
        %489 = vmatpush1.msra.mxu0 %v433
        %490 = vmatprep.subr.mxu0 0.0
        %491 = vmatpush1.msra.mxu0 %v434
        %492 = vmatprep.subr.mxu0 0.0
        %493 = vmatpush1.msra.mxu0 %v435
        %494 = vmatprep.subr.mxu0 0.0
        %495 = vmatpush1.msra.mxu0 %v436
        %496 = vmatprep.subr.mxu0 0.0
        %497 = vmatpush1.msra.mxu0 %v437
        %498 = vmatprep.subr.mxu0 0.0
        %499 = vmatpush1.msra.mxu0 %v438
        %500 = vmatprep.subr.mxu0 0.0
        %501 = vmatpush1.msra.mxu0 %v439
        %502 = vmatprep.subr.mxu0 0.0
        %503 = vmatpush1.msra.mxu0 %v440
        %504 = vmatprep.subr.mxu0 0.0
        %505 = vmatpush1.msra.mxu0 %v441
        %506 = vmatprep.mubr.f32.mxu0 %v407
        %507 = vmatmul.mubr.f32.gmra.mrb[0].mxu0 %v406
        %v508 = vpop.f32.mrb[0].mxu0
        %v509 = vadd.f32 0.0, %v508
        %v510 = vpop.f32.mrb[0].mxu0
        %511 = vmatprep.mubr.f32.mxu0 %v409
        %512 = vmatmul.mubr.f32.gmra.mrb[0].mxu0 %v408
        %v513 = vpop.f32.mrb[0].mxu0
        %v514 = vadd.f32 0.0, %v513
        %v515 = vpop.f32.mrb[0].mxu0
        %516 = vdwg.mxu0
        %v517 = vld [vmem:[#allocation2] sm:$0xff]
        %v518 = vld [vmem:[#allocation2 + $0x8] sm:$0xff]
        %v519 = vld [vmem:[#allocation2 + $0x10] sm:$0xff]
        %v520 = vld [vmem:[#allocation2 + $0x18] sm:$0xff]
        %v521 = vld [vmem:[#allocation2 + $0x20] sm:$0xff]
        %v522 = vld [vmem:[#allocation2 + $0x28] sm:$0xff]
        %v523 = vld [vmem:[#allocation2 + $0x30] sm:$0xff]
        %v524 = vld [vmem:[#allocation2 + $0x38] sm:$0xff]
        %v525 = vld [vmem:[#allocation2 + $0x40] sm:$0xff]
        %v526 = vld [vmem:[#allocation2 + $0x48] sm:$0xff]
        %v527 = vld [vmem:[#allocation2 + $0x50] sm:$0xff]
        %v528 = vld [vmem:[#allocation2 + $0x58] sm:$0xff]
        %v529 = vld [vmem:[#allocation2 + $0x60] sm:$0xff]
        %v530 = vld [vmem:[#allocation2 + $0x68] sm:$0xff]
        %v531 = vld [vmem:[#allocation2 + $0x70] sm:$0xff]
        %v532 = vld [vmem:[#allocation2 + $0x78] sm:$0xff]
        %v533 = vld [vmem:[#allocation2 + $0x80] sm:$0xff]
        %v534 = vld [vmem:[#allocation2 + $0x88] sm:$0xff]
        %v535 = vld [vmem:[#allocation2 + $0x90] sm:$0xff]
        %v536 = vld [vmem:[#allocation2 + $0x98] sm:$0xff]
        %v537 = vld [vmem:[#allocation2 + $0xa0] sm:$0xff]
        %v538 = vld [vmem:[#allocation2 + $0xa8] sm:$0xff]
        %v539 = vld [vmem:[#allocation2 + $0xb0] sm:$0xff]
        %v540 = vld [vmem:[#allocation2 + $0xb8] sm:$0xff]
        %v541 = vld [vmem:[#allocation2 + $0xc0] sm:$0xff]
        %v542 = vld [vmem:[#allocation2 + $0xc8] sm:$0xff]
        %v543 = vld [vmem:[#allocation2 + $0xd0] sm:$0xff]
        %v544 = vld [vmem:[#allocation2 + $0xd8] sm:$0xff]
        %v545 = vld [vmem:[#allocation2 + $0xe0] sm:$0xff]
        %v546 = vld [vmem:[#allocation2 + $0xe8] sm:$0xff]
        %v547 = vld [vmem:[#allocation2 + $0xf0] sm:$0xff]
        %v548 = vld [vmem:[#allocation2 + $0xf8] sm:$0xff]
        %549 = vmatprep.subr.mxu0 0.0
        %550 = vmatpush1.msra.mxu0 %v517
        %551 = vmatprep.subr.mxu0 0.0
        %552 = vmatpush1.msra.mxu0 %v518
        %553 = vmatprep.subr.mxu0 0.0
        %554 = vmatpush1.msra.mxu0 %v519
        %555 = vmatprep.subr.mxu0 0.0
        %556 = vmatpush1.msra.mxu0 %v520
        %557 = vmatprep.subr.mxu0 0.0
        %558 = vmatpush1.msra.mxu0 %v521
        %559 = vmatprep.subr.mxu0 0.0
        %560 = vmatpush1.msra.mxu0 %v522
        %561 = vmatprep.subr.mxu0 0.0
        %562 = vmatpush1.msra.mxu0 %v523
        %563 = vmatprep.subr.mxu0 0.0
        %564 = vmatpush1.msra.mxu0 %v524
        %565 = vmatprep.subr.mxu0 0.0
        %566 = vmatpush1.msra.mxu0 %v525
        %567 = vmatprep.subr.mxu0 0.0
        %568 = vmatpush1.msra.mxu0 %v526
        %569 = vmatprep.subr.mxu0 0.0
        %570 = vmatpush1.msra.mxu0 %v527
        %571 = vmatprep.subr.mxu0 0.0
        %572 = vmatpush1.msra.mxu0 %v528
        %573 = vmatprep.subr.mxu0 0.0
        %574 = vmatpush1.msra.mxu0 %v529
        %575 = vmatprep.subr.mxu0 0.0
        %576 = vmatpush1.msra.mxu0 %v530
        %577 = vmatprep.subr.mxu0 0.0
        %578 = vmatpush1.msra.mxu0 %v531
        %579 = vmatprep.subr.mxu0 0.0
        %580 = vmatpush1.msra.mxu0 %v532
        %581 = vmatprep.subr.mxu0 0.0
        %582 = vmatpush1.msra.mxu0 %v533
        %583 = vmatprep.subr.mxu0 0.0
        %584 = vmatpush1.msra.mxu0 %v534
        %585 = vmatprep.subr.mxu0 0.0
        %586 = vmatpush1.msra.mxu0 %v535
        %587 = vmatprep.subr.mxu0 0.0
        %588 = vmatpush1.msra.mxu0 %v536
        %589 = vmatprep.subr.mxu0 0.0
        %590 = vmatpush1.msra.mxu0 %v537
        %591 = vmatprep.subr.mxu0 0.0
        %592 = vmatpush1.msra.mxu0 %v538
        %593 = vmatprep.subr.mxu0 0.0
        %594 = vmatpush1.msra.mxu0 %v539
        %595 = vmatprep.subr.mxu0 0.0
        %596 = vmatpush1.msra.mxu0 %v540
        %597 = vmatprep.subr.mxu0 0.0
        %598 = vmatpush1.msra.mxu0 %v541
        %599 = vmatprep.subr.mxu0 0.0
        %600 = vmatpush1.msra.mxu0 %v542
        %601 = vmatprep.subr.mxu0 0.0
        %602 = vmatpush1.msra.mxu0 %v543
        %603 = vmatprep.subr.mxu0 0.0
        %604 = vmatpush1.msra.mxu0 %v544
        %605 = vmatprep.subr.mxu0 0.0
        %606 = vmatpush1.msra.mxu0 %v545
        %607 = vmatprep.subr.mxu0 0.0
        %608 = vmatpush1.msra.mxu0 %v546
        %609 = vmatprep.subr.mxu0 0.0
        %610 = vmatpush1.msra.mxu0 %v547
        %611 = vmatprep.subr.mxu0 0.0
        %612 = vmatpush1.msra.mxu0 %v548
        %613 = vmatprep.mubr.f32.mxu0 %v407
        %614 = vmatmul.mubr.f32.gmra.mrb[0].mxu0 %v406
        %v615 = vpop.f32.mrb[0].mxu0
        %v616 = vadd.f32 0.0, %v615
        %v617 = vpop.f32.mrb[0].mxu0
        %618 = vmatprep.mubr.f32.mxu0 %v409
        %619 = vmatmul.mubr.f32.gmra.mrb[0].mxu0 %v408
        %v620 = vpop.f32.mrb[0].mxu0
        %v621 = vadd.f32 0.0, %v620
        %v622 = vpop.f32.mrb[0].mxu0
        %623 = vdwg.mxu0
        %v624 = vld [vmem:[#allocation4] sm:$0xff]
        %v625 = vld [vmem:[#allocation4 + $0x8] sm:$0xff]
        %v626 = vld [vmem:[#allocation6] sm:$0xff]
        %v627 = vld [vmem:[#allocation6 + $0x8] sm:$0xff]
        %v628 = vlaneseq
        %v629 = vshrl.u32 %v628, 7
        %v630 = vsub.s32 0, %v629
        %v631 = vrot.slane %v509, %v630
        %v632 = vmul.f32 %v631, %v624
        %v633 = vmul.f32 %v631, %v625
        %v634 = vadd.f32 %v632, 0.0
        %v635 = vadd.f32 %v633, 0.0
        %v636 = vlaneseq
        %v637 = vshrl.u32 %v636, 7
        %v638 = vsub.s32 0, %v637
        %v639 = vrot.slane %v616, %v638
        %v640 = vmul.f32 %v639, %v626
        %v641 = vmul.f32 %v639, %v627
        %v642 = vsub.f32 %v634, %v640
        %v643 = vsub.f32 %v635, %v641
        %v644 = vmul.f32 %v631, %v626
        %v645 = vmul.f32 %v631, %v627
        %v646 = vadd.f32 %v644, 0.0
        %v647 = vadd.f32 %v645, 0.0
        %v648 = vmul.f32 %v639, %v624
        %v649 = vmul.f32 %v639, %v625
        %v650 = vadd.f32 %v646, %v648
        %v651 = vadd.f32 %v647, %v649
        %s652 = scalar_lea.vmem [#allocation4], 16
        %v653 = vld [vmem:[%s652] sm:$0xff]
        %v654 = vld [vmem:[%s652 + $0x8] sm:$0xff]
        %s655 = scalar_lea.vmem [#allocation6], 16
        %v656 = vld [vmem:[%s655] sm:$0xff]
        %v657 = vld [vmem:[%s655 + $0x8] sm:$0xff]
        %v658 = vlaneseq
        %v659 = vshrl.u32 %v658, 7
        %v660 = vsub.s32 1, %v659
        %v661 = vrot.slane %v509, %v660
        %v662 = vmul.f32 %v661, %v653
        %v663 = vmul.f32 %v661, %v654
        %v664 = vadd.f32 %v642, %v662
        %v665 = vadd.f32 %v643, %v663
        %v666 = vlaneseq
        %v667 = vshrl.u32 %v666, 7
        %v668 = vsub.s32 1, %v667
        %v669 = vrot.slane %v616, %v668
        %v670 = vmul.f32 %v669, %v656
        %v671 = vmul.f32 %v669, %v657
        %v672 = vsub.f32 %v664, %v670
        %v673 = vsub.f32 %v665, %v671
        %v674 = vmul.f32 %v661, %v656
        %v675 = vmul.f32 %v661, %v657
        %v676 = vadd.f32 %v650, %v674
        %v677 = vadd.f32 %v651, %v675
        %v678 = vmul.f32 %v669, %v653
        %v679 = vmul.f32 %v669, %v654
        %v680 = vadd.f32 %v676, %v678
        %v681 = vadd.f32 %v677, %v679
        %s682 = scalar_lea.vmem [#allocation4], 32
        %v683 = vld [vmem:[%s682] sm:$0xff]
        %v684 = vld [vmem:[%s682 + $0x8] sm:$0xff]
        %s685 = scalar_lea.vmem [#allocation6], 32
        %v686 = vld [vmem:[%s685] sm:$0xff]
        %v687 = vld [vmem:[%s685 + $0x8] sm:$0xff]
        %v688 = vlaneseq
        %v689 = vshrl.u32 %v688, 7
        %v690 = vsub.s32 2, %v689
        %v691 = vrot.slane %v509, %v690
        %v692 = vmul.f32 %v691, %v683
        %v693 = vmul.f32 %v691, %v684
        %v694 = vadd.f32 %v672, %v692
        %v695 = vadd.f32 %v673, %v693
        %v696 = vlaneseq
        %v697 = vshrl.u32 %v696, 7
        %v698 = vsub.s32 2, %v697
        %v699 = vrot.slane %v616, %v698
        %v700 = vmul.f32 %v699, %v686
        %v701 = vmul.f32 %v699, %v687
        %v702 = vsub.f32 %v694, %v700
        %v703 = vsub.f32 %v695, %v701
        %v704 = vmul.f32 %v691, %v686
        %v705 = vmul.f32 %v691, %v687
        %v706 = vadd.f32 %v680, %v704
        %v707 = vadd.f32 %v681, %v705
        %v708 = vmul.f32 %v699, %v683
        %v709 = vmul.f32 %v699, %v684
        %v710 = vadd.f32 %v706, %v708
        %v711 = vadd.f32 %v707, %v709
        %s712 = scalar_lea.vmem [#allocation4], 48
        %v713 = vld [vmem:[%s712] sm:$0xff]
        %v714 = vld [vmem:[%s712 + $0x8] sm:$0xff]
        %s715 = scalar_lea.vmem [#allocation6], 48
        %v716 = vld [vmem:[%s715] sm:$0xff]
        %v717 = vld [vmem:[%s715 + $0x8] sm:$0xff]
        %v718 = vlaneseq
        %v719 = vshrl.u32 %v718, 7
        %v720 = vsub.s32 3, %v719
        %v721 = vrot.slane %v509, %v720
        %v722 = vmul.f32 %v721, %v713
        %v723 = vmul.f32 %v721, %v714
        %v724 = vadd.f32 %v702, %v722
        %v725 = vadd.f32 %v703, %v723
        %v726 = vlaneseq
        %v727 = vshrl.u32 %v726, 7
        %v728 = vsub.s32 3, %v727
        %v729 = vrot.slane %v616, %v728
        %v730 = vmul.f32 %v729, %v716
        %v731 = vmul.f32 %v729, %v717
        %v732 = vsub.f32 %v724, %v730
        %v733 = vsub.f32 %v725, %v731
        %v734 = vmul.f32 %v721, %v716
        %v735 = vmul.f32 %v721, %v717
        %v736 = vadd.f32 %v710, %v734
        %v737 = vadd.f32 %v711, %v735
        %v738 = vmul.f32 %v729, %v713
        %v739 = vmul.f32 %v729, %v714
        %v740 = vadd.f32 %v736, %v738
        %v741 = vadd.f32 %v737, %v739
        %s742 = scalar_lea.vmem [#allocation4], 64
        %v743 = vld [vmem:[%s742] sm:$0xff]
        %v744 = vld [vmem:[%s742 + $0x8] sm:$0xff]
        %s745 = scalar_lea.vmem [#allocation6], 64
        %v746 = vld [vmem:[%s745] sm:$0xff]
        %v747 = vld [vmem:[%s745 + $0x8] sm:$0xff]
        %v748 = vlaneseq
        %v749 = vshrl.u32 %v748, 7
        %v750 = vsub.s32 4, %v749
        %v751 = vrot.slane %v509, %v750
        %v752 = vmul.f32 %v751, %v743
        %v753 = vmul.f32 %v751, %v744
        %v754 = vadd.f32 %v732, %v752
        %v755 = vadd.f32 %v733, %v753
        %v756 = vlaneseq
        %v757 = vshrl.u32 %v756, 7
        %v758 = vsub.s32 4, %v757
        %v759 = vrot.slane %v616, %v758
        %v760 = vmul.f32 %v759, %v746
        %v761 = vmul.f32 %v759, %v747
        %v762 = vsub.f32 %v754, %v760
        %v763 = vsub.f32 %v755, %v761
        %v764 = vmul.f32 %v751, %v746
        %v765 = vmul.f32 %v751, %v747
        %v766 = vadd.f32 %v740, %v764
        %v767 = vadd.f32 %v741, %v765
        %v768 = vmul.f32 %v759, %v743
        %v769 = vmul.f32 %v759, %v744
        %v770 = vadd.f32 %v766, %v768
        %v771 = vadd.f32 %v767, %v769
        %s772 = scalar_lea.vmem [#allocation4], 80
        %v773 = vld [vmem:[%s772] sm:$0xff]
        %v774 = vld [vmem:[%s772 + $0x8] sm:$0xff]
        %s775 = scalar_lea.vmem [#allocation6], 80
        %v776 = vld [vmem:[%s775] sm:$0xff]
        %v777 = vld [vmem:[%s775 + $0x8] sm:$0xff]
        %v778 = vlaneseq
        %v779 = vshrl.u32 %v778, 7
        %v780 = vsub.s32 5, %v779
        %v781 = vrot.slane %v509, %v780
        %v782 = vmul.f32 %v781, %v773
        %v783 = vmul.f32 %v781, %v774
        %v784 = vadd.f32 %v762, %v782
        %v785 = vadd.f32 %v763, %v783
        %v786 = vlaneseq
        %v787 = vshrl.u32 %v786, 7
        %v788 = vsub.s32 5, %v787
        %v789 = vrot.slane %v616, %v788
        %v790 = vmul.f32 %v789, %v776
        %v791 = vmul.f32 %v789, %v777
        %v792 = vsub.f32 %v784, %v790
        %v793 = vsub.f32 %v785, %v791
        %v794 = vmul.f32 %v781, %v776
        %v795 = vmul.f32 %v781, %v777
        %v796 = vadd.f32 %v770, %v794
        %v797 = vadd.f32 %v771, %v795
        %v798 = vmul.f32 %v789, %v773
        %v799 = vmul.f32 %v789, %v774
        %v800 = vadd.f32 %v796, %v798
        %v801 = vadd.f32 %v797, %v799
        %s802 = scalar_lea.vmem [#allocation4], 96
        %v803 = vld [vmem:[%s802] sm:$0xff]
        %v804 = vld [vmem:[%s802 + $0x8] sm:$0xff]
        %s805 = scalar_lea.vmem [#allocation6], 96
        %v806 = vld [vmem:[%s805] sm:$0xff]
        %v807 = vld [vmem:[%s805 + $0x8] sm:$0xff]
        %v808 = vlaneseq
        %v809 = vshrl.u32 %v808, 7
        %v810 = vsub.s32 6, %v809
        %v811 = vrot.slane %v509, %v810
        %v812 = vmul.f32 %v811, %v803
        %v813 = vmul.f32 %v811, %v804
        %v814 = vadd.f32 %v792, %v812
        %v815 = vadd.f32 %v793, %v813
        %v816 = vlaneseq
        %v817 = vshrl.u32 %v816, 7
        %v818 = vsub.s32 6, %v817
        %v819 = vrot.slane %v616, %v818
        %v820 = vmul.f32 %v819, %v806
        %v821 = vmul.f32 %v819, %v807
        %v822 = vsub.f32 %v814, %v820
        %v823 = vsub.f32 %v815, %v821
        %v824 = vmul.f32 %v811, %v806
        %v825 = vmul.f32 %v811, %v807
        %v826 = vadd.f32 %v800, %v824
        %v827 = vadd.f32 %v801, %v825
        %v828 = vmul.f32 %v819, %v803
        %v829 = vmul.f32 %v819, %v804
        %v830 = vadd.f32 %v826, %v828
        %v831 = vadd.f32 %v827, %v829
        %s832 = scalar_lea.vmem [#allocation4], 112
        %v833 = vld [vmem:[%s832] sm:$0xff]
        %v834 = vld [vmem:[%s832 + $0x8] sm:$0xff]
        %s835 = scalar_lea.vmem [#allocation6], 112
        %v836 = vld [vmem:[%s835] sm:$0xff]
        %v837 = vld [vmem:[%s835 + $0x8] sm:$0xff]
        %v838 = vlaneseq
        %v839 = vshrl.u32 %v838, 7
        %v840 = vsub.s32 7, %v839
        %v841 = vrot.slane %v509, %v840
        %v842 = vmul.f32 %v841, %v833
        %v843 = vmul.f32 %v841, %v834
        %v844 = vadd.f32 %v822, %v842
        %v845 = vadd.f32 %v823, %v843
        %v846 = vlaneseq
        %v847 = vshrl.u32 %v846, 7
        %v848 = vsub.s32 7, %v847
        %v849 = vrot.slane %v616, %v848
        %v850 = vmul.f32 %v849, %v836
        %v851 = vmul.f32 %v849, %v837
        %v852 = vsub.f32 %v844, %v850
        %v853 = vsub.f32 %v845, %v851
        %v854 = vmul.f32 %v841, %v836
        %v855 = vmul.f32 %v841, %v837
        %v856 = vadd.f32 %v830, %v854
        %v857 = vadd.f32 %v831, %v855
        %v858 = vmul.f32 %v849, %v833
        %v859 = vmul.f32 %v849, %v834
        %v860 = vadd.f32 %v856, %v858
        %v861 = vadd.f32 %v857, %v859
        %s862 = scalar_lea.vmem [#allocation4], 128
        %v863 = vld [vmem:[%s862] sm:$0xff]
        %v864 = vld [vmem:[%s862 + $0x8] sm:$0xff]
        %s865 = scalar_lea.vmem [#allocation6], 128
        %v866 = vld [vmem:[%s865] sm:$0xff]
        %v867 = vld [vmem:[%s865 + $0x8] sm:$0xff]
        %v868 = vlaneseq
        %v869 = vshrl.u32 %v868, 7
        %v870 = vsub.s32 0, %v869
        %v871 = vrot.slane %v514, %v870
        %v872 = vmul.f32 %v871, %v863
        %v873 = vmul.f32 %v871, %v864
        %v874 = vadd.f32 %v852, %v872
        %v875 = vadd.f32 %v853, %v873
        %v876 = vlaneseq
        %v877 = vshrl.u32 %v876, 7
        %v878 = vsub.s32 0, %v877
        %v879 = vrot.slane %v621, %v878
        %v880 = vmul.f32 %v879, %v866
        %v881 = vmul.f32 %v879, %v867
        %v882 = vsub.f32 %v874, %v880
        %v883 = vsub.f32 %v875, %v881
        %v884 = vmul.f32 %v871, %v866
        %v885 = vmul.f32 %v871, %v867
        %v886 = vadd.f32 %v860, %v884
        %v887 = vadd.f32 %v861, %v885
        %v888 = vmul.f32 %v879, %v863
        %v889 = vmul.f32 %v879, %v864
        %v890 = vadd.f32 %v886, %v888
        %v891 = vadd.f32 %v887, %v889
        %s892 = scalar_lea.vmem [#allocation4], 144
        %v893 = vld [vmem:[%s892] sm:$0xff]
        %v894 = vld [vmem:[%s892 + $0x8] sm:$0xff]
        %s895 = scalar_lea.vmem [#allocation6], 144
        %v896 = vld [vmem:[%s895] sm:$0xff]
        %v897 = vld [vmem:[%s895 + $0x8] sm:$0xff]
        %v898 = vlaneseq
        %v899 = vshrl.u32 %v898, 7
        %v900 = vsub.s32 1, %v899
        %v901 = vrot.slane %v514, %v900
        %v902 = vmul.f32 %v901, %v893
        %v903 = vmul.f32 %v901, %v894
        %v904 = vadd.f32 %v882, %v902
        %v905 = vadd.f32 %v883, %v903
        %v906 = vlaneseq
        %v907 = vshrl.u32 %v906, 7
        %v908 = vsub.s32 1, %v907
        %v909 = vrot.slane %v621, %v908
        %v910 = vmul.f32 %v909, %v896
        %v911 = vmul.f32 %v909, %v897
        %v912 = vsub.f32 %v904, %v910
        %v913 = vsub.f32 %v905, %v911
        %v914 = vmul.f32 %v901, %v896
        %v915 = vmul.f32 %v901, %v897
        %v916 = vadd.f32 %v890, %v914
        %v917 = vadd.f32 %v891, %v915
        %v918 = vmul.f32 %v909, %v893
        %v919 = vmul.f32 %v909, %v894
        %v920 = vadd.f32 %v916, %v918
        %v921 = vadd.f32 %v917, %v919
        %s922 = scalar_lea.vmem [#allocation4], 160
        %v923 = vld [vmem:[%s922] sm:$0xff]
        %v924 = vld [vmem:[%s922 + $0x8] sm:$0xff]
        %s925 = scalar_lea.vmem [#allocation6], 160
        %v926 = vld [vmem:[%s925] sm:$0xff]
        %v927 = vld [vmem:[%s925 + $0x8] sm:$0xff]
        %v928 = vlaneseq
        %v929 = vshrl.u32 %v928, 7
        %v930 = vsub.s32 2, %v929
        %v931 = vrot.slane %v514, %v930
        %v932 = vmul.f32 %v931, %v923
        %v933 = vmul.f32 %v931, %v924
        %v934 = vadd.f32 %v912, %v932
        %v935 = vadd.f32 %v913, %v933
        %v936 = vlaneseq
        %v937 = vshrl.u32 %v936, 7
        %v938 = vsub.s32 2, %v937
        %v939 = vrot.slane %v621, %v938
        %v940 = vmul.f32 %v939, %v926
        %v941 = vmul.f32 %v939, %v927
        %v942 = vsub.f32 %v934, %v940
        %v943 = vsub.f32 %v935, %v941
        %v944 = vmul.f32 %v931, %v926
        %v945 = vmul.f32 %v931, %v927
        %v946 = vadd.f32 %v920, %v944
        %v947 = vadd.f32 %v921, %v945
        %v948 = vmul.f32 %v939, %v923
        %v949 = vmul.f32 %v939, %v924
        %v950 = vadd.f32 %v946, %v948
        %v951 = vadd.f32 %v947, %v949
        %s952 = scalar_lea.vmem [#allocation4], 176
        %v953 = vld [vmem:[%s952] sm:$0xff]
        %v954 = vld [vmem:[%s952 + $0x8] sm:$0xff]
        %s955 = scalar_lea.vmem [#allocation6], 176
        %v956 = vld [vmem:[%s955] sm:$0xff]
        %v957 = vld [vmem:[%s955 + $0x8] sm:$0xff]
        %v958 = vlaneseq
        %v959 = vshrl.u32 %v958, 7
        %v960 = vsub.s32 3, %v959
        %v961 = vrot.slane %v514, %v960
        %v962 = vmul.f32 %v961, %v953
        %v963 = vmul.f32 %v961, %v954
        %v964 = vadd.f32 %v942, %v962
        %v965 = vadd.f32 %v943, %v963
        %v966 = vlaneseq
        %v967 = vshrl.u32 %v966, 7
        %v968 = vsub.s32 3, %v967
        %v969 = vrot.slane %v621, %v968
        %v970 = vmul.f32 %v969, %v956
        %v971 = vmul.f32 %v969, %v957
        %v972 = vsub.f32 %v964, %v970
        %v973 = vsub.f32 %v965, %v971
        %v974 = vmul.f32 %v961, %v956
        %v975 = vmul.f32 %v961, %v957
        %v976 = vadd.f32 %v950, %v974
        %v977 = vadd.f32 %v951, %v975
        %v978 = vmul.f32 %v969, %v953
        %v979 = vmul.f32 %v969, %v954
        %v980 = vadd.f32 %v976, %v978
        %v981 = vadd.f32 %v977, %v979
        %s982 = scalar_lea.vmem [#allocation4], 192
        %v983 = vld [vmem:[%s982] sm:$0xff]
        %v984 = vld [vmem:[%s982 + $0x8] sm:$0xff]
        %s985 = scalar_lea.vmem [#allocation6], 192
        %v986 = vld [vmem:[%s985] sm:$0xff]
        %v987 = vld [vmem:[%s985 + $0x8] sm:$0xff]
        %v988 = vlaneseq
        %v989 = vshrl.u32 %v988, 7
        %v990 = vsub.s32 4, %v989
        %v991 = vrot.slane %v514, %v990
        %v992 = vmul.f32 %v991, %v983
        %v993 = vmul.f32 %v991, %v984
        %v994 = vadd.f32 %v972, %v992
        %v995 = vadd.f32 %v973, %v993
        %v996 = vlaneseq
        %v997 = vshrl.u32 %v996, 7
        %v998 = vsub.s32 4, %v997
        %v999 = vrot.slane %v621, %v998
        %v1000 = vmul.f32 %v999, %v986
        %v1001 = vmul.f32 %v999, %v987
        %v1002 = vsub.f32 %v994, %v1000
        %v1003 = vsub.f32 %v995, %v1001
        %v1004 = vmul.f32 %v991, %v986
        %v1005 = vmul.f32 %v991, %v987
        %v1006 = vadd.f32 %v980, %v1004
        %v1007 = vadd.f32 %v981, %v1005
        %v1008 = vmul.f32 %v999, %v983
        %v1009 = vmul.f32 %v999, %v984
        %v1010 = vadd.f32 %v1006, %v1008
        %v1011 = vadd.f32 %v1007, %v1009
        %s1012 = scalar_lea.vmem [#allocation4], 208
        %v1013 = vld [vmem:[%s1012] sm:$0xff]
        %v1014 = vld [vmem:[%s1012 + $0x8] sm:$0xff]
        %s1015 = scalar_lea.vmem [#allocation6], 208
        %v1016 = vld [vmem:[%s1015] sm:$0xff]
        %v1017 = vld [vmem:[%s1015 + $0x8] sm:$0xff]
        %v1018 = vlaneseq
        %v1019 = vshrl.u32 %v1018, 7
        %v1020 = vsub.s32 5, %v1019
        %v1021 = vrot.slane %v514, %v1020
        %v1022 = vmul.f32 %v1021, %v1013
        %v1023 = vmul.f32 %v1021, %v1014
        %v1024 = vadd.f32 %v1002, %v1022
        %v1025 = vadd.f32 %v1003, %v1023
        %v1026 = vlaneseq
        %v1027 = vshrl.u32 %v1026, 7
        %v1028 = vsub.s32 5, %v1027
        %v1029 = vrot.slane %v621, %v1028
        %v1030 = vmul.f32 %v1029, %v1016
        %v1031 = vmul.f32 %v1029, %v1017
        %v1032 = vsub.f32 %v1024, %v1030
        %v1033 = vsub.f32 %v1025, %v1031
        %v1034 = vmul.f32 %v1021, %v1016
        %v1035 = vmul.f32 %v1021, %v1017
        %v1036 = vadd.f32 %v1010, %v1034
        %v1037 = vadd.f32 %v1011, %v1035
        %v1038 = vmul.f32 %v1029, %v1013
        %v1039 = vmul.f32 %v1029, %v1014
        %v1040 = vadd.f32 %v1036, %v1038
        %v1041 = vadd.f32 %v1037, %v1039
        %s1042 = scalar_lea.vmem [#allocation4], 224
        %v1043 = vld [vmem:[%s1042] sm:$0xff]
        %v1044 = vld [vmem:[%s1042 + $0x8] sm:$0xff]
        %s1045 = scalar_lea.vmem [#allocation6], 224
        %v1046 = vld [vmem:[%s1045] sm:$0xff]
        %v1047 = vld [vmem:[%s1045 + $0x8] sm:$0xff]
        %v1048 = vlaneseq
        %v1049 = vshrl.u32 %v1048, 7
        %v1050 = vsub.s32 6, %v1049
        %v1051 = vrot.slane %v514, %v1050
        %v1052 = vmul.f32 %v1051, %v1043
        %v1053 = vmul.f32 %v1051, %v1044
        %v1054 = vadd.f32 %v1032, %v1052
        %v1055 = vadd.f32 %v1033, %v1053
        %v1056 = vlaneseq
        %v1057 = vshrl.u32 %v1056, 7
        %v1058 = vsub.s32 6, %v1057
        %v1059 = vrot.slane %v621, %v1058
        %v1060 = vmul.f32 %v1059, %v1046
        %v1061 = vmul.f32 %v1059, %v1047
        %v1062 = vsub.f32 %v1054, %v1060
        %v1063 = vsub.f32 %v1055, %v1061
        %v1064 = vmul.f32 %v1051, %v1046
        %v1065 = vmul.f32 %v1051, %v1047
        %v1066 = vadd.f32 %v1040, %v1064
        %v1067 = vadd.f32 %v1041, %v1065
        %v1068 = vmul.f32 %v1059, %v1043
        %v1069 = vmul.f32 %v1059, %v1044
        %v1070 = vadd.f32 %v1066, %v1068
        %v1071 = vadd.f32 %v1067, %v1069
        %s1072 = scalar_lea.vmem [#allocation4], 240
        %v1073 = vld [vmem:[%s1072] sm:$0xff]
        %v1074 = vld [vmem:[%s1072 + $0x8] sm:$0xff]
        %s1075 = scalar_lea.vmem [#allocation6], 240
        %v1076 = vld [vmem:[%s1075] sm:$0xff]
        %v1077 = vld [vmem:[%s1075 + $0x8] sm:$0xff]
        %v1078 = vlaneseq
        %v1079 = vshrl.u32 %v1078, 7
        %v1080 = vsub.s32 7, %v1079
        %v1081 = vrot.slane %v514, %v1080
        %v1082 = vmul.f32 %v1081, %v1073
        %v1083 = vmul.f32 %v1081, %v1074
        %v1084 = vadd.f32 %v1062, %v1082
        %v1085 = vadd.f32 %v1063, %v1083
        %v1086 = vlaneseq
        %v1087 = vshrl.u32 %v1086, 7
        %v1088 = vsub.s32 7, %v1087
        %v1089 = vrot.slane %v621, %v1088
        %v1090 = vmul.f32 %v1089, %v1076
        %v1091 = vmul.f32 %v1089, %v1077
        %v1092 = vsub.f32 %v1084, %v1090
        %v1093 = vsub.f32 %v1085, %v1091
        %v1094 = vmul.f32 %v1081, %v1076
        %v1095 = vmul.f32 %v1081, %v1077
        %v1096 = vadd.f32 %v1070, %v1094
        %v1097 = vadd.f32 %v1071, %v1095
        %v1098 = vmul.f32 %v1089, %v1073
        %v1099 = vmul.f32 %v1089, %v1074
        %v1100 = vadd.f32 %v1096, %v1098
        %v1101 = vadd.f32 %v1097, %v1099
        %v1102 = vld [vmem:[#allocation7] sm:$0xff]
        %v1103 = vld [vmem:[#allocation7 + $0x8] sm:$0xff]
        %v1104 = vld [vmem:[#allocation7 + $0x10] sm:$0xff]
        %v1105 = vld [vmem:[#allocation7 + $0x18] sm:$0xff]
        %v1106 = vld [vmem:[#allocation7 + $0x20] sm:$0xff]
        %v1107 = vld [vmem:[#allocation7 + $0x28] sm:$0xff]
        %v1108 = vld [vmem:[#allocation7 + $0x30] sm:$0xff]
        %v1109 = vld [vmem:[#allocation7 + $0x38] sm:$0xff]
        %vm1110 = vcmask 261120
        %v1112 = vsel %vm1110, %v1092, 0
        %v1115 = vsel %vm1110, %v1093, 0
        %1117 = vmatprep.subr.mxu0 %v1103
        %1118 = vmatpush1.msra.mxu0 %v1102
        %1119 = vmatprep.subr.mxu0 %v1105
        %1120 = vmatpush1.msra.mxu0 %v1104
        %1121 = vmatprep.subr.mxu0 %v1107
        %1122 = vmatpush1.msra.mxu0 %v1106
        %1123 = vmatprep.subr.mxu0 %v1109
        %1124 = vmatpush1.msra.mxu0 %v1108
        %1125 = vmatprep.subr.mxu0 0.0
        %1126 = vmatpush1.msra.mxu0 0.0
        %1127 = vmatprep.subr.mxu0 0.0
        %1128 = vmatpush1.msra.mxu0 0.0
        %1129 = vmatprep.subr.mxu0 0.0
        %1130 = vmatpush1.msra.mxu0 0.0
        %1131 = vmatprep.subr.mxu0 0.0
        %1132 = vmatpush1.msra.mxu0 0.0
        %1133 = vmatprep.subr.mxu0 0.0
        %1134 = vmatpush1.msra.mxu0 0.0
        %1135 = vmatprep.subr.mxu0 0.0
        %1136 = vmatpush1.msra.mxu0 0.0
        %1137 = vmatprep.subr.mxu0 0.0
        %1138 = vmatpush1.msra.mxu0 0.0
        %1139 = vmatprep.subr.mxu0 0.0
        %1140 = vmatpush1.msra.mxu0 0.0
        %1141 = vmatprep.subr.mxu0 0.0
        %1142 = vmatpush1.msra.mxu0 0.0
        %1143 = vmatprep.subr.mxu0 0.0
        %1144 = vmatpush1.msra.mxu0 0.0
        %1145 = vmatprep.subr.mxu0 0.0
        %1146 = vmatpush1.msra.mxu0 0.0
        %1147 = vmatprep.subr.mxu0 0.0
        %1148 = vmatpush1.msra.mxu0 0.0
        %1149 = vmatprep.subr.mxu0 0.0
        %1150 = vmatpush1.msra.mxu0 0.0
        %1151 = vmatprep.subr.mxu0 0.0
        %1152 = vmatpush1.msra.mxu0 0.0
        %1153 = vmatprep.subr.mxu0 0.0
        %1154 = vmatpush1.msra.mxu0 0.0
        %1155 = vmatprep.subr.mxu0 0.0
        %1156 = vmatpush1.msra.mxu0 0.0
        %1157 = vmatprep.subr.mxu0 0.0
        %1158 = vmatpush1.msra.mxu0 0.0
        %1159 = vmatprep.subr.mxu0 0.0
        %1160 = vmatpush1.msra.mxu0 0.0
        %1161 = vmatprep.subr.mxu0 0.0
        %1162 = vmatpush1.msra.mxu0 0.0
        %1163 = vmatprep.subr.mxu0 0.0
        %1164 = vmatpush1.msra.mxu0 0.0
        %1165 = vmatprep.subr.mxu0 0.0
        %1166 = vmatpush1.msra.mxu0 0.0
        %1167 = vmatprep.subr.mxu0 0.0
        %1168 = vmatpush1.msra.mxu0 0.0
        %1169 = vmatprep.subr.mxu0 0.0
        %1170 = vmatpush1.msra.mxu0 0.0
        %1171 = vmatprep.subr.mxu0 0.0
        %1172 = vmatpush1.msra.mxu0 0.0
        %1173 = vmatprep.subr.mxu0 0.0
        %1174 = vmatpush1.msra.mxu0 0.0
        %1175 = vmatprep.subr.mxu0 0.0
        %1176 = vmatpush1.msra.mxu0 0.0
        %1177 = vmatprep.subr.mxu0 0.0
        %1178 = vmatpush1.msra.mxu0 0.0
        %1179 = vmatprep.subr.mxu0 0.0
        %1180 = vmatpush1.msra.mxu0 0.0
        %1181 = vmatprep.mubr.f32.mxu0 0.0
        %1182 = vmatmul.mubr.f32.gmra.mrb[0].mxu0 %v1112
        %v1183 = vpop.f32.mrb[0].mxu0
        %v1184 = vadd.f32 0.0, %v1183
        %v1185 = vpop.f32.mrb[0].mxu0
        %v1186 = vadd.f32 0.0, %v1185
        %1187 = vmatprep.mubr.f32.mxu0 0.0
        %1188 = vmatmul.mubr.f32.gmra.mrb[0].mxu0 %v1115
        %v1189 = vpop.f32.mrb[0].mxu0
        %v1190 = vadd.f32 0.0, %v1189
        %v1191 = vpop.f32.mrb[0].mxu0
        %v1192 = vadd.f32 0.0, %v1191
        %1193 = vdwg.mxu0
        %v1194 = vld [vmem:[#allocation9] sm:$0xff]
        %v1195 = vld [vmem:[#allocation9 + $0x8] sm:$0xff]
        %v1196 = vld [vmem:[#allocation9 + $0x10] sm:$0xff]
        %v1197 = vld [vmem:[#allocation9 + $0x18] sm:$0xff]
        %v1198 = vld [vmem:[#allocation9 + $0x20] sm:$0xff]
        %v1199 = vld [vmem:[#allocation9 + $0x28] sm:$0xff]
        %v1200 = vld [vmem:[#allocation9 + $0x30] sm:$0xff]
        %v1201 = vld [vmem:[#allocation9 + $0x38] sm:$0xff]
        %v1203 = vsel %vm1110, %v1100, 0
        %v1206 = vsel %vm1110, %v1101, 0
        %1208 = vmatprep.subr.mxu0 %v1195
        %1209 = vmatpush1.msra.mxu0 %v1194
        %1210 = vmatprep.subr.mxu0 %v1197
        %1211 = vmatpush1.msra.mxu0 %v1196
        %1212 = vmatprep.subr.mxu0 %v1199
        %1213 = vmatpush1.msra.mxu0 %v1198
        %1214 = vmatprep.subr.mxu0 %v1201
        %1215 = vmatpush1.msra.mxu0 %v1200
        %1216 = vmatprep.subr.mxu0 0.0
        %1217 = vmatpush1.msra.mxu0 0.0
        %1218 = vmatprep.subr.mxu0 0.0
        %1219 = vmatpush1.msra.mxu0 0.0
        %1220 = vmatprep.subr.mxu0 0.0
        %1221 = vmatpush1.msra.mxu0 0.0
        %1222 = vmatprep.subr.mxu0 0.0
        %1223 = vmatpush1.msra.mxu0 0.0
        %1224 = vmatprep.subr.mxu0 0.0
        %1225 = vmatpush1.msra.mxu0 0.0
        %1226 = vmatprep.subr.mxu0 0.0
        %1227 = vmatpush1.msra.mxu0 0.0
        %1228 = vmatprep.subr.mxu0 0.0
        %1229 = vmatpush1.msra.mxu0 0.0
        %1230 = vmatprep.subr.mxu0 0.0
        %1231 = vmatpush1.msra.mxu0 0.0
        %1232 = vmatprep.subr.mxu0 0.0
        %1233 = vmatpush1.msra.mxu0 0.0
        %1234 = vmatprep.subr.mxu0 0.0
        %1235 = vmatpush1.msra.mxu0 0.0
        %1236 = vmatprep.subr.mxu0 0.0
        %1237 = vmatpush1.msra.mxu0 0.0
        %1238 = vmatprep.subr.mxu0 0.0
        %1239 = vmatpush1.msra.mxu0 0.0
        %1240 = vmatprep.subr.mxu0 0.0
        %1241 = vmatpush1.msra.mxu0 0.0
        %1242 = vmatprep.subr.mxu0 0.0
        %1243 = vmatpush1.msra.mxu0 0.0
        %1244 = vmatprep.subr.mxu0 0.0
        %1245 = vmatpush1.msra.mxu0 0.0
        %1246 = vmatprep.subr.mxu0 0.0
        %1247 = vmatpush1.msra.mxu0 0.0
        %1248 = vmatprep.subr.mxu0 0.0
        %1249 = vmatpush1.msra.mxu0 0.0
        %1250 = vmatprep.subr.mxu0 0.0
        %1251 = vmatpush1.msra.mxu0 0.0
        %1252 = vmatprep.subr.mxu0 0.0
        %1253 = vmatpush1.msra.mxu0 0.0
        %1254 = vmatprep.subr.mxu0 0.0
        %1255 = vmatpush1.msra.mxu0 0.0
        %1256 = vmatprep.subr.mxu0 0.0
        %1257 = vmatpush1.msra.mxu0 0.0
        %1258 = vmatprep.subr.mxu0 0.0
        %1259 = vmatpush1.msra.mxu0 0.0
        %1260 = vmatprep.subr.mxu0 0.0
        %1261 = vmatpush1.msra.mxu0 0.0
        %1262 = vmatprep.subr.mxu0 0.0
        %1263 = vmatpush1.msra.mxu0 0.0
        %1264 = vmatprep.subr.mxu0 0.0
        %1265 = vmatpush1.msra.mxu0 0.0
        %1266 = vmatprep.subr.mxu0 0.0
        %1267 = vmatpush1.msra.mxu0 0.0
        %1268 = vmatprep.subr.mxu0 0.0
        %1269 = vmatpush1.msra.mxu0 0.0
        %1270 = vmatprep.subr.mxu0 0.0
        %1271 = vmatpush1.msra.mxu0 0.0
        %1272 = vmatprep.mubr.f32.mxu0 0.0
        %1273 = vmatmul.mubr.f32.gmra.mrb[0].mxu0 %v1203
        %v1274 = vpop.f32.mrb[0].mxu0
        %v1275 = vadd.f32 0.0, %v1274
        %v1276 = vpop.f32.mrb[0].mxu0
        %v1277 = vadd.f32 0.0, %v1276
        %1278 = vmatprep.mubr.f32.mxu0 0.0
        %1279 = vmatmul.mubr.f32.gmra.mrb[0].mxu0 %v1206
        %v1280 = vpop.f32.mrb[0].mxu0
        %v1281 = vadd.f32 0.0, %v1280
        %v1282 = vpop.f32.mrb[0].mxu0
        %v1283 = vadd.f32 0.0, %v1282
        %1284 = vdwg.mxu0
        %v1285 = vsub.f32 %v1184, %v1275
        %v1286 = vsub.f32 %v1186, %v1277
        %v1287 = vsub.f32 %v1190, %v1281
        %v1288 = vsub.f32 %v1192, %v1283
        %v1289 = vld [vmem:[%s7] sm:$0xff]
        %v1290 = vld [vmem:[%s7 + $0x8] sm:$0xff]
        %vm1291 = vcmask 130048
        %v1293 = vsel %vm1291, %v1289, 0
        %v1296 = vsel %vm1291, %v1290, 0
        %1298 = vmatprep.subr.mxu0 %v407
        %1299 = vmatpush1.msra.mxu0 %v406
        %1300 = vmatprep.subr.mxu0 %v409
        %1301 = vmatpush1.msra.mxu0 %v408
        %1302 = vmatprep.subr.mxu0 0.0
        %1303 = vmatpush1.msra.mxu0 0.0
        %1304 = vmatprep.subr.mxu0 0.0
        %1305 = vmatpush1.msra.mxu0 0.0
        %1306 = vmatprep.subr.mxu0 0.0
        %1307 = vmatpush1.msra.mxu0 0.0
        %1308 = vmatprep.subr.mxu0 0.0
        %1309 = vmatpush1.msra.mxu0 0.0
        %1310 = vmatprep.subr.mxu0 0.0
        %1311 = vmatpush1.msra.mxu0 0.0
        %1312 = vmatprep.subr.mxu0 0.0
        %1313 = vmatpush1.msra.mxu0 0.0
        %1314 = vmatprep.subr.mxu0 0.0
        %1315 = vmatpush1.msra.mxu0 0.0
        %1316 = vmatprep.subr.mxu0 0.0
        %1317 = vmatpush1.msra.mxu0 0.0
        %1318 = vmatprep.subr.mxu0 0.0
        %1319 = vmatpush1.msra.mxu0 0.0
        %1320 = vmatprep.subr.mxu0 0.0
        %1321 = vmatpush1.msra.mxu0 0.0
        %1322 = vmatprep.subr.mxu0 0.0
        %1323 = vmatpush1.msra.mxu0 0.0
        %1324 = vmatprep.subr.mxu0 0.0
        %1325 = vmatpush1.msra.mxu0 0.0
        %1326 = vmatprep.subr.mxu0 0.0
        %1327 = vmatpush1.msra.mxu0 0.0
        %1328 = vmatprep.subr.mxu0 0.0
        %1329 = vmatpush1.msra.mxu0 0.0
        %1330 = vmatprep.subr.mxu0 0.0
        %1331 = vmatpush1.msra.mxu0 0.0
        %1332 = vmatprep.subr.mxu0 0.0
        %1333 = vmatpush1.msra.mxu0 0.0
        %1334 = vmatprep.subr.mxu0 0.0
        %1335 = vmatpush1.msra.mxu0 0.0
        %1336 = vmatprep.subr.mxu0 0.0
        %1337 = vmatpush1.msra.mxu0 0.0
        %1338 = vmatprep.subr.mxu0 0.0
        %1339 = vmatpush1.msra.mxu0 0.0
        %1340 = vmatprep.subr.mxu0 0.0
        %1341 = vmatpush1.msra.mxu0 0.0
        %1342 = vmatprep.subr.mxu0 0.0
        %1343 = vmatpush1.msra.mxu0 0.0
        %1344 = vmatprep.subr.mxu0 0.0
        %1345 = vmatpush1.msra.mxu0 0.0
        %1346 = vmatprep.subr.mxu0 0.0
        %1347 = vmatpush1.msra.mxu0 0.0
        %1348 = vmatprep.subr.mxu0 0.0
        %1349 = vmatpush1.msra.mxu0 0.0
        %1350 = vmatprep.subr.mxu0 0.0
        %1351 = vmatpush1.msra.mxu0 0.0
        %1352 = vmatprep.subr.mxu0 0.0
        %1353 = vmatpush1.msra.mxu0 0.0
        %1354 = vmatprep.subr.mxu0 0.0
        %1355 = vmatpush1.msra.mxu0 0.0
        %1356 = vmatprep.subr.mxu0 0.0
        %1357 = vmatpush1.msra.mxu0 0.0
        %1358 = vmatprep.subr.mxu0 0.0
        %1359 = vmatpush1.msra.mxu0 0.0
        %1360 = vmatprep.subr.mxu0 0.0
        %1361 = vmatpush1.msra.mxu0 0.0
        %1362 = vmatprep.mubr.f32.mxu0 0.0
        %1363 = vmatmul.mubr.f32.gmra.mrb[0].mxu0 %v1293
        %v1364 = vpop.f32.mrb[0].mxu0
        %v1365 = vadd.f32 0.0, %v1364
        %v1366 = vpop.f32.mrb[0].mxu0
        %v1367 = vadd.f32 0.0, %v1366
        %1368 = vmatprep.mubr.f32.mxu0 0.0
        %1369 = vmatmul.mubr.f32.gmra.mrb[0].mxu0 %v1296
        %v1370 = vpop.f32.mrb[0].mxu0
        %v1371 = vadd.f32 0.0, %v1370
        %v1372 = vpop.f32.mrb[0].mxu0
        %v1373 = vadd.f32 0.0, %v1372
        %1374 = vdwg.mxu0
        %v1375 = vadd.f32 %v1285, %v1365
        %v1376 = vadd.f32 %v1286, %v1367
        %v1377 = vadd.f32 %v1287, %v1371
        %v1378 = vadd.f32 %v1288, %v1373
        %v1379 = vld [vmem:[%s8] sm:$0xff]
        %v1380 = vld [vmem:[%s8 + $0x8] sm:$0xff]
        %1382 = vset.pattern.permute.xlu0 0
        %1383 = vperm.xlu0 %1382, %v1379
        %v1384 = vpop.permute.xlu0 %1383
        %1387 = vset.pattern.permute.xlu0 0
        %1388 = vperm.xlu0 %1387, %v1380
        %v1389 = vpop.permute.xlu0 %1388
        %v1391 = vadd.f32 %v1375, %v1384
        %v1392 = vadd.f32 %v1376, %v1384
        %v1393 = vadd.f32 %v1377, %v1389
        %v1394 = vadd.f32 %v1378, %v1389
        %v1395 = vmul.f32 %v1391, %v1391
        %v1396 = vmul.f32 %v1392, %v1392
        %v1397 = vmul.f32 %v1393, %v1393
        %v1398 = vmul.f32 %v1394, %v1394
        %v1399 = vmul.f32 %v1391, %v1395
        %v1400 = vmul.f32 %v1392, %v1396
        %v1401 = vmul.f32 %v1393, %v1397
        %v1402 = vmul.f32 %v1394, %v1398
        %v1403 = vmul.f32 %v1399, 0.044715
        %v1404 = vmul.f32 %v1400, 0.044715
        %v1405 = vmul.f32 %v1401, 0.044715
        %v1406 = vmul.f32 %v1402, 0.044715
        %v1407 = vadd.f32 %v1391, %v1403
        %v1408 = vadd.f32 %v1392, %v1404
        %v1409 = vadd.f32 %v1393, %v1405
        %v1410 = vadd.f32 %v1394, %v1406
        %v1411 = vmul.f32 %v1407, 0.7978846
        %v1412 = vmul.f32 %v1408, 0.7978846
        %v1413 = vmul.f32 %v1409, 0.7978846
        %v1414 = vmul.f32 %v1410, 0.7978846
        %v1415 = vtanh.pop %v1411
        %v1416 = vtanh.pop %v1412
        %v1417 = vtanh.pop %v1413
        %v1418 = vtanh.pop %v1414
        %v1419 = vadd.f32 %v1415, 1.0
        %v1420 = vadd.f32 %v1416, 1.0
        %v1421 = vadd.f32 %v1417, 1.0
        %v1422 = vadd.f32 %v1418, 1.0
        %v1423 = vmul.f32 %v1419, 0.5
        %v1424 = vmul.f32 %v1420, 0.5
        %v1425 = vmul.f32 %v1421, 0.5
        %v1426 = vmul.f32 %v1422, 0.5
        %v1427 = vmul.f32 %v1391, %v1423
        %v1428 = vmul.f32 %v1392, %v1424
        %v1429 = vmul.f32 %v1393, %v1425
        %v1430 = vmul.f32 %v1394, %v1426
        %1431 = vst [vmem:[%s405] sm:$0xff] %v1427
        %1432 = vst [vmem:[%s405 + $0x8] sm:$0xff] %v1428
        %1433 = vst [vmem:[%s405 + $0x10] sm:$0xff] %v1429
        %1434 = vst [vmem:[%s405 + $0x18] sm:$0xff] %v1430
        %p1435 = scmp.lt.s32.totalorder %s23, 1
        %s1436 = scalar_select %p1435, %s23, 1
        %s1437 = smul.addr %s1436, 4
        %s1438 = smul.addr %s1437, 8
        %s1439 = scalar_lea.vmem %s9, %s1438
        // Predicated region
        $region77: #{_lambda_.7} parent=55 // pred_check
          %p1440 = pneg %p235
        $region78: #{_lambda_.7} parent=55 // pred_check_branch
          %1442 = sbr.rel (%p1440) target = $region80
        $region79: #{_lambda_.7} parent=55 // pred_region
          _
        $region80: #{_lambda_.7} parent=55 // pred_fallthru
          _
      $region56: #{_lambda_.7} parent=5 // pred_fallthru
        _
      %p1443 = scmp.le.s32.totalorder 2, %s18
      // Predicated region
      $region81: #{_lambda_.7} parent=5 // pred_check
        %p1444 = pneg %p1443
      $region82: #{_lambda_.7} parent=5 // pred_check_branch
        %1446 = sbr.rel (%p1444) target = $region84
      $region83: #{_lambda_.7} parent=5 // pred_region
        %s1447 = ssub.s32 %s18, 2
        // Predicated region
        $region85: #{_lambda_.7} parent=83 // pred_check
          %p1448 = pneg %p241
        $region86: #{_lambda_.7} parent=83 // pred_check_branch
          %1450 = sbr.rel (%p1448) target = $region88
        $region87: #{_lambda_.7} parent=83 // pred_region
          %p1451 = scmp.lt.s32.totalorder %s24, 1
          %s1452 = scalar_select %p1451, %s24, 1
          %s1453 = smul.addr %s1452, 4
          %s1454 = smul.addr %s1453, 8
          %s1455 = scalar_lea.vmem %s9, %s1454
        $region88: #{_lambda_.7} parent=83 // pred_fallthru
          _
      $region84: #{_lambda_.7} parent=5 // pred_fallthru
        _
    $region6: #{_lambda_.7} parent=1 // loop_footer
      %s22 = sadd.s32 1, %s18
    $region7: #{_lambda_.7} parent=1 // loop_footer_branch
      %17 = sbr.rel target = $region3
    $region8: #{_lambda_.7} parent=1 // loop_exit
      _
    %1456 = vsyncpa [#allocation3], 1
    %s1457 = scalar_lea.sflag [#allocation3], 1
    %1458 = vsyncpa %s1457, 1
    %1459 = vsyncpa [#allocation5], 1
    %1460 = vsyncpa [#allocation8], 1

// kernel: _lambda_.8
$region0: #{_lambda_.8}
  #allocation0 [shape = 'u32[]', space=smem, size = 0x4, offset = 0x4, fixed_abs, tag = 'smem constant byte address 0x4 - core index']
  #allocation1 [shape = 'u32[144,128]{1,0:T(1,128)}', space=vmem, size = 0x12000, scoped, tag = 'internal scratch']
  %s0 = inlined_call_operand.vmem [shape: f32[2,16,256], index: 0, kind: input, shape index: {}]
  %s1 = inlined_call_operand.vmem [shape: f32[256,32], index: 1, kind: input, shape index: {}]
  %s2 = inlined_call_operand.vmem [shape: f32[256,32], index: 2, kind: input, shape index: {}]
  %s3 = inlined_call_operand.vmem [shape: f32[16,16,32], index: 3, kind: input, shape index: {}]
  %s4 = inlined_call_operand.vmem [shape: f32[16,16,32], index: 4, kind: input, shape index: {}]
  %s5 = inlined_call_operand.vmem [shape: f32[32,256], index: 5, kind: input, shape index: {}]
  %s6 = inlined_call_operand.vmem [shape: f32[32,256], index: 6, kind: input, shape index: {}]
  %s7 = inlined_call_operand.vmem [shape: f32[16,16], index: 7, kind: input, shape index: {}]
  %s8 = inlined_call_operand.vmem [shape: f32[16,1], index: 8, kind: input, shape index: {}]
  %s9 = inlined_call_operand.vmem [shape: f32[2,16,256], index: 9, kind: output, shape index: {}]
  %s10 = sld [smem:[#allocation0]]
  $region69: #{_lambda_.8} parent=0
    _
  %s12 = ssub.s32 1, %s10
  %s13 = scalar_select 0, %s12, %s10
  loop: start=0, step=1, limit=4
  $region2: #{_lambda_.8} parent=0 // loop_pre_header
    _
  $region3: #{_lambda_.8} parent=0 // loop_header
    %s15 = sphi 0, %s19
    %p16 = scmp.ge.s32.totalorder %s15, 4
    %s25 = sphi 0, %s27
    %s28 = sphi 0, %s25
    %s29 = sphi 0, %s28
    %s45 = sphi 0, %s29
    %s49 = sphi 0, %s49
    %s51 = sphi 0, %s49
    %s52 = sphi 0, %s51
    %s66 = sphi 0, %s52
    %s70 = sphi 0, %s70
    %s72 = sphi 0, %s70
    %s73 = sphi 0, %s72
    %s87 = sphi 0, %s73
    %s91 = sphi 0, %s91
    %s93 = sphi 0, %s91
    %s94 = sphi 0, %s93
    %s108 = sphi 0, %s94
    %s112 = sphi 0, %s112
    %s114 = sphi 0, %s112
    %s115 = sphi 0, %s114
    %s129 = sphi 0, %s115
    %s133 = sphi 0, %s133
    %s135 = sphi 0, %s133
    %s136 = sphi 0, %s135
    %s150 = sphi 0, %s136
    %s154 = sphi 0, %s154
    %s156 = sphi 0, %s154
    %s157 = sphi 0, %s156
    %s171 = sphi 0, %s157
    %s175 = sphi 0, %s175
    %s177 = sphi 0, %s175
    %s178 = sphi 0, %s177
    %s192 = sphi 0, %s178
    %s196 = sphi 0, %s196
    %s198 = sphi 0, %s196
    %s199 = sphi 0, %s198
    %s213 = sphi 0, %s199
    %s219 = sphi 0, %s221
    %s222 = sphi 0, %s219
    %s223 = sphi 0, %s222
    %s239 = sphi 0, %s223
  $region4: #{_lambda_.8} parent=0 // loop_header_branch
    %18 = sbr.rel (%p16) target = $region8
  $region5: #{_lambda_.8} parent=0 // loop_body
    %s20 = ssub.s32 %s15, 1
    %s21 = ssub.s32 %s15, 2
    %s22 = sadd.s32 %s15, 1
    %s23 = ssub.s32 %s15, %s22
    %p24 = scmp.eq.s32.totalorder %s23, 0
    %s26 = sadd.s32 %s25, 1
    %s27 = scalar_select %p24, %s25, %s26
    %p30 = pneg %p24
    %p31 = scmp.eq.s32.totalorder %s15, 1
    %p32 = por %p30, %p31
    %p33 = scmp.ne.s32.totalorder %s25, %s28
    %p34 = scmp.eq.s32.totalorder %s15, 0
    %p35 = por %p33, %p34
    %p36 = scmp.ne.s32.totalorder %s25, %s28
    %p37 = scmp.eq.s32.totalorder %s20, 1
    %p38 = por %p36, %p37
    %p39 = scmp.ne.s32.totalorder %s28, %s29
    %p40 = scmp.eq.s32.totalorder %s20, 0
    %p41 = por %p39, %p40
    %p42 = scmp.ne.s32.totalorder %s28, %s29
    %p43 = scmp.eq.s32.totalorder %s21, 1
    %p44 = por %p42, %p43
    %p46 = scmp.ne.s32.totalorder %s29, %s45
    %p47 = scmp.eq.s32.totalorder %s21, 0
    %p48 = por %p46, %p47
    %s50 = sadd.s32 %s49, 1
    %p53 = scmp.eq.s32.totalorder %s15, 1
    %p54 = scmp.ne.s32.totalorder %s49, %s51
    %p55 = scmp.eq.s32.totalorder %s15, 0
    %p56 = por %p54, %p55
    %p57 = scmp.ne.s32.totalorder %s49, %s51
    %p58 = scmp.eq.s32.totalorder %s20, 1
    %p59 = por %p57, %p58
    %p60 = scmp.ne.s32.totalorder %s51, %s52
    %p61 = scmp.eq.s32.totalorder %s20, 0
    %p62 = por %p60, %p61
    %p63 = scmp.ne.s32.totalorder %s51, %s52
    %p64 = scmp.eq.s32.totalorder %s21, 1
    %p65 = por %p63, %p64
    %p67 = scmp.ne.s32.totalorder %s52, %s66
    %p68 = scmp.eq.s32.totalorder %s21, 0
    %p69 = por %p67, %p68
    %s71 = sadd.s32 %s70, 1
    %p74 = scmp.eq.s32.totalorder %s15, 1
    %p75 = scmp.ne.s32.totalorder %s70, %s72
    %p76 = scmp.eq.s32.totalorder %s15, 0
    %p77 = por %p75, %p76
    %p78 = scmp.ne.s32.totalorder %s70, %s72
    %p79 = scmp.eq.s32.totalorder %s20, 1
    %p80 = por %p78, %p79
    %p81 = scmp.ne.s32.totalorder %s72, %s73
    %p82 = scmp.eq.s32.totalorder %s20, 0
    %p83 = por %p81, %p82
    %p84 = scmp.ne.s32.totalorder %s72, %s73
    %p85 = scmp.eq.s32.totalorder %s21, 1
    %p86 = por %p84, %p85
    %p88 = scmp.ne.s32.totalorder %s73, %s87
    %p89 = scmp.eq.s32.totalorder %s21, 0
    %p90 = por %p88, %p89
    %s92 = sadd.s32 %s91, 1
    %p95 = scmp.eq.s32.totalorder %s15, 1
    %p96 = scmp.ne.s32.totalorder %s91, %s93
    %p97 = scmp.eq.s32.totalorder %s15, 0
    %p98 = por %p96, %p97
    %p99 = scmp.ne.s32.totalorder %s91, %s93
    %p100 = scmp.eq.s32.totalorder %s20, 1
    %p101 = por %p99, %p100
    %p102 = scmp.ne.s32.totalorder %s93, %s94
    %p103 = scmp.eq.s32.totalorder %s20, 0
    %p104 = por %p102, %p103
    %p105 = scmp.ne.s32.totalorder %s93, %s94
    %p106 = scmp.eq.s32.totalorder %s21, 1
    %p107 = por %p105, %p106
    %p109 = scmp.ne.s32.totalorder %s94, %s108
    %p110 = scmp.eq.s32.totalorder %s21, 0
    %p111 = por %p109, %p110
    %s113 = sadd.s32 %s112, 1
    %p116 = scmp.eq.s32.totalorder %s15, 1
    %p117 = scmp.ne.s32.totalorder %s112, %s114
    %p118 = scmp.eq.s32.totalorder %s15, 0
    %p119 = por %p117, %p118
    %p120 = scmp.ne.s32.totalorder %s112, %s114
    %p121 = scmp.eq.s32.totalorder %s20, 1
    %p122 = por %p120, %p121
    %p123 = scmp.ne.s32.totalorder %s114, %s115
    %p124 = scmp.eq.s32.totalorder %s20, 0
    %p125 = por %p123, %p124
    %p126 = scmp.ne.s32.totalorder %s114, %s115
    %p127 = scmp.eq.s32.totalorder %s21, 1
    %p128 = por %p126, %p127
    %p130 = scmp.ne.s32.totalorder %s115, %s129
    %p131 = scmp.eq.s32.totalorder %s21, 0
    %p132 = por %p130, %p131
    %s134 = sadd.s32 %s133, 1
    %p137 = scmp.eq.s32.totalorder %s15, 1
    %p138 = scmp.ne.s32.totalorder %s133, %s135
    %p139 = scmp.eq.s32.totalorder %s15, 0
    %p140 = por %p138, %p139
    %p141 = scmp.ne.s32.totalorder %s133, %s135
    %p142 = scmp.eq.s32.totalorder %s20, 1
    %p143 = por %p141, %p142
    %p144 = scmp.ne.s32.totalorder %s135, %s136
    %p145 = scmp.eq.s32.totalorder %s20, 0
    %p146 = por %p144, %p145
    %p147 = scmp.ne.s32.totalorder %s135, %s136
    %p148 = scmp.eq.s32.totalorder %s21, 1
    %p149 = por %p147, %p148
    %p151 = scmp.ne.s32.totalorder %s136, %s150
    %p152 = scmp.eq.s32.totalorder %s21, 0
    %p153 = por %p151, %p152
    %s155 = sadd.s32 %s154, 1
    %p158 = scmp.eq.s32.totalorder %s15, 1
    %p159 = scmp.ne.s32.totalorder %s154, %s156
    %p160 = scmp.eq.s32.totalorder %s15, 0
    %p161 = por %p159, %p160
    %p162 = scmp.ne.s32.totalorder %s154, %s156
    %p163 = scmp.eq.s32.totalorder %s20, 1
    %p164 = por %p162, %p163
    %p165 = scmp.ne.s32.totalorder %s156, %s157
    %p166 = scmp.eq.s32.totalorder %s20, 0
    %p167 = por %p165, %p166
    %p168 = scmp.ne.s32.totalorder %s156, %s157
    %p169 = scmp.eq.s32.totalorder %s21, 1
    %p170 = por %p168, %p169
    %p172 = scmp.ne.s32.totalorder %s157, %s171
    %p173 = scmp.eq.s32.totalorder %s21, 0
    %p174 = por %p172, %p173
    %s176 = sadd.s32 %s175, 1
    %p179 = scmp.eq.s32.totalorder %s15, 1
    %p180 = scmp.ne.s32.totalorder %s175, %s177
    %p181 = scmp.eq.s32.totalorder %s15, 0
    %p182 = por %p180, %p181
    %p183 = scmp.ne.s32.totalorder %s175, %s177
    %p184 = scmp.eq.s32.totalorder %s20, 1
    %p185 = por %p183, %p184
    %p186 = scmp.ne.s32.totalorder %s177, %s178
    %p187 = scmp.eq.s32.totalorder %s20, 0
    %p188 = por %p186, %p187
    %p189 = scmp.ne.s32.totalorder %s177, %s178
    %p190 = scmp.eq.s32.totalorder %s21, 1
    %p191 = por %p189, %p190
    %p193 = scmp.ne.s32.totalorder %s178, %s192
    %p194 = scmp.eq.s32.totalorder %s21, 0
    %p195 = por %p193, %p194
    %s197 = sadd.s32 %s196, 1
    %p200 = scmp.eq.s32.totalorder %s15, 1
    %p201 = scmp.ne.s32.totalorder %s196, %s198
    %p202 = scmp.eq.s32.totalorder %s15, 0
    %p203 = por %p201, %p202
    %p204 = scmp.ne.s32.totalorder %s196, %s198
    %p205 = scmp.eq.s32.totalorder %s20, 1
    %p206 = por %p204, %p205
    %p207 = scmp.ne.s32.totalorder %s198, %s199
    %p208 = scmp.eq.s32.totalorder %s20, 0
    %p209 = por %p207, %p208
    %p210 = scmp.ne.s32.totalorder %s198, %s199
    %p211 = scmp.eq.s32.totalorder %s21, 1
    %p212 = por %p210, %p211
    %p214 = scmp.ne.s32.totalorder %s199, %s213
    %p215 = scmp.eq.s32.totalorder %s21, 0
    %p216 = por %p214, %p215
    %s217 = ssub.s32 %s15, %s22
    %p218 = scmp.eq.s32.totalorder %s217, 0
    %s220 = sadd.s32 %s219, 1
    %s221 = scalar_select %p218, %s219, %s220
    %p224 = pneg %p218
    %p225 = scmp.eq.s32.totalorder %s15, 1
    %p226 = por %p224, %p225
    %p227 = scmp.ne.s32.totalorder %s219, %s222
    %p228 = scmp.eq.s32.totalorder %s15, 0
    %p229 = por %p227, %p228
    %p230 = scmp.ne.s32.totalorder %s219, %s222
    %p231 = scmp.eq.s32.totalorder %s20, 1
    %p232 = por %p230, %p231
    %p233 = scmp.ne.s32.totalorder %s222, %s223
    %p234 = scmp.eq.s32.totalorder %s20, 0
    %p235 = por %p233, %p234
    %p236 = scmp.ne.s32.totalorder %s222, %s223
    %p237 = scmp.eq.s32.totalorder %s21, 1
    %p238 = por %p236, %p237
    %p240 = scmp.ne.s32.totalorder %s223, %s239
    %p241 = scmp.eq.s32.totalorder %s21, 0
    %p242 = por %p240, %p241
    %p243 = scmp.le.s32.totalorder 1, %s15
    %p244 = scmp.lt.s32.totalorder %s15, 3
    %p245 = pnand %p243, %p244
    %p246 = pneg %p245
    // Predicated region
    $region9: #{_lambda_.8} parent=5 // pred_check
      _
    $region10: #{_lambda_.8} parent=5 // pred_check_branch
      %248 = sbr.rel (%p245) target = $region12
    $region11: #{_lambda_.8} parent=5 // pred_region
      %s249 = ssub.s32 %s15, 1
      // Predicated region
      $region13: #{_lambda_.8} parent=11 // pred_check
        %p250 = pneg %p62
      $region14: #{_lambda_.8} parent=11 // pred_check_branch
        %252 = sbr.rel (%p250) target = $region16
      $region15: #{_lambda_.8} parent=11 // pred_region
        _
      $region16: #{_lambda_.8} parent=11 // pred_fallthru
        _
      // Predicated region
      $region17: #{_lambda_.8} parent=11 // pred_check
        %p253 = pneg %p83
      $region18: #{_lambda_.8} parent=11 // pred_check_branch
        %255 = sbr.rel (%p253) target = $region20
      $region19: #{_lambda_.8} parent=11 // pred_region
        _
      $region20: #{_lambda_.8} parent=11 // pred_fallthru
        _
      // Predicated region
      $region21: #{_lambda_.8} parent=11 // pred_check
        %p256 = pneg %p104
      $region22: #{_lambda_.8} parent=11 // pred_check_branch
        %258 = sbr.rel (%p256) target = $region24
      $region23: #{_lambda_.8} parent=11 // pred_region
        _
      $region24: #{_lambda_.8} parent=11 // pred_fallthru
        _
      // Predicated region
      $region25: #{_lambda_.8} parent=11 // pred_check
        %p259 = pneg %p125
      $region26: #{_lambda_.8} parent=11 // pred_check_branch
        %261 = sbr.rel (%p259) target = $region28
      $region27: #{_lambda_.8} parent=11 // pred_region
        _
      $region28: #{_lambda_.8} parent=11 // pred_fallthru
        _
      // Predicated region
      $region29: #{_lambda_.8} parent=11 // pred_check
        %p262 = pneg %p146
      $region30: #{_lambda_.8} parent=11 // pred_check_branch
        %264 = sbr.rel (%p262) target = $region32
      $region31: #{_lambda_.8} parent=11 // pred_region
        _
      $region32: #{_lambda_.8} parent=11 // pred_fallthru
        _
      // Predicated region
      $region33: #{_lambda_.8} parent=11 // pred_check
        %p265 = pneg %p167
      $region34: #{_lambda_.8} parent=11 // pred_check_branch
        %267 = sbr.rel (%p265) target = $region36
      $region35: #{_lambda_.8} parent=11 // pred_region
        _
      $region36: #{_lambda_.8} parent=11 // pred_fallthru
        _
      // Predicated region
      $region37: #{_lambda_.8} parent=11 // pred_check
        %p268 = pneg %p188
      $region38: #{_lambda_.8} parent=11 // pred_check_branch
        %270 = sbr.rel (%p268) target = $region40
      $region39: #{_lambda_.8} parent=11 // pred_region
        _
      $region40: #{_lambda_.8} parent=11 // pred_fallthru
        _
      // Predicated region
      $region41: #{_lambda_.8} parent=11 // pred_check
        %p271 = pneg %p209
      $region42: #{_lambda_.8} parent=11 // pred_check_branch
        %273 = sbr.rel (%p271) target = $region44
      $region43: #{_lambda_.8} parent=11 // pred_region
        _
      $region44: #{_lambda_.8} parent=11 // pred_fallthru
        _
    $region12: #{_lambda_.8} parent=5 // pred_fallthru
      _
    %p274 = scmp.lt.s32.totalorder %s15, 2
    // Predicated region
    $region45: #{_lambda_.8} parent=5 // pred_check
      %p275 = pneg %p274
    $region46: #{_lambda_.8} parent=5 // pred_check_branch
      %277 = sbr.rel (%p275) target = $region48
    $region47: #{_lambda_.8} parent=5 // pred_region
      // Predicated region
      $region49: #{_lambda_.8} parent=47 // pred_check
        %p278 = pneg %p35
      $region50: #{_lambda_.8} parent=47 // pred_check_branch
        %280 = sbr.rel (%p278) target = $region52
      $region51: #{_lambda_.8} parent=47 // pred_region
        %p281 = scmp.lt.s32.totalorder %s15, 1
        %s282 = scalar_select %p281, %s15, 1
        %s283 = smul.addr %s282, 4
        %s284 = smul.addr %s283, 8
        %s285 = scalar_lea.vmem %s0, %s284
      $region52: #{_lambda_.8} parent=47 // pred_fallthru
        _
    $region48: #{_lambda_.8} parent=5 // pred_fallthru
      _
    %p286 = scmp.le.s32.totalorder 1, %s15
    %p287 = scmp.lt.s32.totalorder %s15, 3
    %p288 = pnand %p286, %p287
    %p289 = pneg %p288
    // Predicated region
    $region53: #{_lambda_.8} parent=5 // pred_check
      _
    $region54: #{_lambda_.8} parent=5 // pred_check_branch
      %291 = sbr.rel (%p288) target = $region56
    $region55: #{_lambda_.8} parent=5 // pred_region
      %s292 = ssub.s32 %s15, 1
      %p293 = scmp.lt.s32.totalorder %s20, 1
      %s294 = scalar_select %p293, %s20, 1
      %s295 = smul.addr %s294, 4
      %s296 = smul.addr %s295, 8
      %s297 = scalar_lea.vmem %s0, %s296
      %p298 = pneg %p41
      %p299 = pneg %p38
      %p300 = pneg %p62
      %p301 = pneg %p59
      %p302 = pneg %p83
      %p303 = pneg %p80
      %p304 = pneg %p104
      %p305 = pneg %p101
      %p306 = pneg %p125
      %p307 = pneg %p122
      %p308 = pneg %p146
      %p309 = pneg %p143
      %p310 = pneg %p167
      %p311 = pneg %p164
      %p312 = pneg %p188
      %p313 = pneg %p185
      %p314 = pneg %p209
      %p315 = pneg %p206
      %p316 = pneg %p235
      %p317 = pneg %p232
      %p318 = scmp.lt.s32.totalorder %s20, 1
      %s319 = scalar_select %p318, %s20, 1
      %s320 = smul.addr %s319, 4
      %s321 = smul.addr %s320, 8
      %s322 = scalar_lea.vmem %s9, %s321
      %p323 = scmp.lt.s32.totalorder %s20, 1
      %s324 = scalar_select %p323, %s20, 1
      %s325 = smul.addr %s324, 4
      %s326 = smul.addr %s325, 8
      %s327 = scalar_lea.vmem %s0, %s326
      %p328 = scmp.lt.s32.totalorder %s20, 1
      %s329 = scalar_select %p328, %s20, 1
      %s330 = smul.addr %s329, 4
      %s331 = smul.addr %s330, 8
      %s332 = scalar_lea.vmem %s9, %s331
      %v333 = vld [vmem:[%s327] sm:$0xff]
      %v334 = vld [vmem:[%s327 + $0x8] sm:$0xff]
      %v335 = vld [vmem:[%s327 + $0x10] sm:$0xff]
      %v336 = vld [vmem:[%s327 + $0x18] sm:$0xff]
      %v337 = vld [vmem:[%s1] sm:$0xff]
      %v338 = vld [vmem:[%s1 + $0x8] sm:$0xff]
      %v339 = vld [vmem:[%s1 + $0x10] sm:$0xff]
      %v340 = vld [vmem:[%s1 + $0x18] sm:$0xff]
      %v341 = vld [vmem:[%s1 + $0x20] sm:$0xff]
      %v342 = vld [vmem:[%s1 + $0x28] sm:$0xff]
      %v343 = vld [vmem:[%s1 + $0x30] sm:$0xff]
      %v344 = vld [vmem:[%s1 + $0x38] sm:$0xff]
      %v345 = vld [vmem:[%s1 + $0x40] sm:$0xff]
      %v346 = vld [vmem:[%s1 + $0x48] sm:$0xff]
      %v347 = vld [vmem:[%s1 + $0x50] sm:$0xff]
      %v348 = vld [vmem:[%s1 + $0x58] sm:$0xff]
      %v349 = vld [vmem:[%s1 + $0x60] sm:$0xff]
      %v350 = vld [vmem:[%s1 + $0x68] sm:$0xff]
      %v351 = vld [vmem:[%s1 + $0x70] sm:$0xff]
      %v352 = vld [vmem:[%s1 + $0x78] sm:$0xff]
      %v353 = vld [vmem:[%s1 + $0x80] sm:$0xff]
      %v354 = vld [vmem:[%s1 + $0x88] sm:$0xff]
      %v355 = vld [vmem:[%s1 + $0x90] sm:$0xff]
      %v356 = vld [vmem:[%s1 + $0x98] sm:$0xff]
      %v357 = vld [vmem:[%s1 + $0xa0] sm:$0xff]
      %v358 = vld [vmem:[%s1 + $0xa8] sm:$0xff]
      %v359 = vld [vmem:[%s1 + $0xb0] sm:$0xff]
      %v360 = vld [vmem:[%s1 + $0xb8] sm:$0xff]
      %v361 = vld [vmem:[%s1 + $0xc0] sm:$0xff]
      %v362 = vld [vmem:[%s1 + $0xc8] sm:$0xff]
      %v363 = vld [vmem:[%s1 + $0xd0] sm:$0xff]
      %v364 = vld [vmem:[%s1 + $0xd8] sm:$0xff]
      %v365 = vld [vmem:[%s1 + $0xe0] sm:$0xff]
      %v366 = vld [vmem:[%s1 + $0xe8] sm:$0xff]
      %v367 = vld [vmem:[%s1 + $0xf0] sm:$0xff]
      %v368 = vld [vmem:[%s1 + $0xf8] sm:$0xff]
      %369 = vmatprep.subr.mxu0 0.0
      %370 = vmatpush1.msra.mxu0 %v337
      %371 = vmatprep.subr.mxu0 0.0
      %372 = vmatpush1.msra.mxu0 %v338
      %373 = vmatprep.subr.mxu0 0.0
      %374 = vmatpush1.msra.mxu0 %v339
      %375 = vmatprep.subr.mxu0 0.0
      %376 = vmatpush1.msra.mxu0 %v340
      %377 = vmatprep.subr.mxu0 0.0
      %378 = vmatpush1.msra.mxu0 %v341
      %379 = vmatprep.subr.mxu0 0.0
      %380 = vmatpush1.msra.mxu0 %v342
      %381 = vmatprep.subr.mxu0 0.0
      %382 = vmatpush1.msra.mxu0 %v343
      %383 = vmatprep.subr.mxu0 0.0
      %384 = vmatpush1.msra.mxu0 %v344
      %385 = vmatprep.subr.mxu0 0.0
      %386 = vmatpush1.msra.mxu0 %v345
      %387 = vmatprep.subr.mxu0 0.0
      %388 = vmatpush1.msra.mxu0 %v346
      %389 = vmatprep.subr.mxu0 0.0
      %390 = vmatpush1.msra.mxu0 %v347
      %391 = vmatprep.subr.mxu0 0.0
      %392 = vmatpush1.msra.mxu0 %v348
      %393 = vmatprep.subr.mxu0 0.0
      %394 = vmatpush1.msra.mxu0 %v349
      %395 = vmatprep.subr.mxu0 0.0
      %396 = vmatpush1.msra.mxu0 %v350
      %397 = vmatprep.subr.mxu0 0.0
      %398 = vmatpush1.msra.mxu0 %v351
      %399 = vmatprep.subr.mxu0 0.0
      %400 = vmatpush1.msra.mxu0 %v352
      %401 = vmatprep.subr.mxu0 0.0
      %402 = vmatpush1.msra.mxu0 %v353
      %403 = vmatprep.subr.mxu0 0.0
      %404 = vmatpush1.msra.mxu0 %v354
      %405 = vmatprep.subr.mxu0 0.0
      %406 = vmatpush1.msra.mxu0 %v355
      %407 = vmatprep.subr.mxu0 0.0
      %408 = vmatpush1.msra.mxu0 %v356
      %409 = vmatprep.subr.mxu0 0.0
      %410 = vmatpush1.msra.mxu0 %v357
      %411 = vmatprep.subr.mxu0 0.0
      %412 = vmatpush1.msra.mxu0 %v358
      %413 = vmatprep.subr.mxu0 0.0
      %414 = vmatpush1.msra.mxu0 %v359
      %415 = vmatprep.subr.mxu0 0.0
      %416 = vmatpush1.msra.mxu0 %v360
      %417 = vmatprep.subr.mxu0 0.0
      %418 = vmatpush1.msra.mxu0 %v361
      %419 = vmatprep.subr.mxu0 0.0
      %420 = vmatpush1.msra.mxu0 %v362
      %421 = vmatprep.subr.mxu0 0.0
      %422 = vmatpush1.msra.mxu0 %v363
      %423 = vmatprep.subr.mxu0 0.0
      %424 = vmatpush1.msra.mxu0 %v364
      %425 = vmatprep.subr.mxu0 0.0
      %426 = vmatpush1.msra.mxu0 %v365
      %427 = vmatprep.subr.mxu0 0.0
      %428 = vmatpush1.msra.mxu0 %v366
      %429 = vmatprep.subr.mxu0 0.0
      %430 = vmatpush1.msra.mxu0 %v367
      %431 = vmatprep.subr.mxu0 0.0
      %432 = vmatpush1.msra.mxu0 %v368
      %433 = vmatprep.mubr.f32.mxu0 %v334
      %434 = vmatmul.mubr.f32.gmra.mrb[0].mxu0 %v333
      %v435 = vpop.f32.mrb[0].mxu0
      %v436 = vadd.f32 0.0, %v435
      %v437 = vpop.f32.mrb[0].mxu0
      %438 = vmatprep.mubr.f32.mxu0 %v336
      %439 = vmatmul.mubr.f32.gmra.mrb[0].mxu0 %v335
      %v440 = vpop.f32.mrb[0].mxu0
      %v441 = vadd.f32 0.0, %v440
      %v442 = vpop.f32.mrb[0].mxu0
      %443 = vdwg.mxu0
      %v444 = vld [vmem:[%s2] sm:$0xff]
      %v445 = vld [vmem:[%s2 + $0x8] sm:$0xff]
      %v446 = vld [vmem:[%s2 + $0x10] sm:$0xff]
      %v447 = vld [vmem:[%s2 + $0x18] sm:$0xff]
      %v448 = vld [vmem:[%s2 + $0x20] sm:$0xff]
      %v449 = vld [vmem:[%s2 + $0x28] sm:$0xff]
      %v450 = vld [vmem:[%s2 + $0x30] sm:$0xff]
      %v451 = vld [vmem:[%s2 + $0x38] sm:$0xff]
      %v452 = vld [vmem:[%s2 + $0x40] sm:$0xff]
      %v453 = vld [vmem:[%s2 + $0x48] sm:$0xff]
      %v454 = vld [vmem:[%s2 + $0x50] sm:$0xff]
      %v455 = vld [vmem:[%s2 + $0x58] sm:$0xff]
      %v456 = vld [vmem:[%s2 + $0x60] sm:$0xff]
      %v457 = vld [vmem:[%s2 + $0x68] sm:$0xff]
      %v458 = vld [vmem:[%s2 + $0x70] sm:$0xff]
      %v459 = vld [vmem:[%s2 + $0x78] sm:$0xff]
      %v460 = vld [vmem:[%s2 + $0x80] sm:$0xff]
      %v461 = vld [vmem:[%s2 + $0x88] sm:$0xff]
      %v462 = vld [vmem:[%s2 + $0x90] sm:$0xff]
      %v463 = vld [vmem:[%s2 + $0x98] sm:$0xff]
      %v464 = vld [vmem:[%s2 + $0xa0] sm:$0xff]
      %v465 = vld [vmem:[%s2 + $0xa8] sm:$0xff]
      %v466 = vld [vmem:[%s2 + $0xb0] sm:$0xff]
      %v467 = vld [vmem:[%s2 + $0xb8] sm:$0xff]
      %v468 = vld [vmem:[%s2 + $0xc0] sm:$0xff]
      %v469 = vld [vmem:[%s2 + $0xc8] sm:$0xff]
      %v470 = vld [vmem:[%s2 + $0xd0] sm:$0xff]
      %v471 = vld [vmem:[%s2 + $0xd8] sm:$0xff]
      %v472 = vld [vmem:[%s2 + $0xe0] sm:$0xff]
      %v473 = vld [vmem:[%s2 + $0xe8] sm:$0xff]
      %v474 = vld [vmem:[%s2 + $0xf0] sm:$0xff]
      %v475 = vld [vmem:[%s2 + $0xf8] sm:$0xff]
      %476 = vmatprep.subr.mxu0 0.0
      %477 = vmatpush1.msra.mxu0 %v444
      %478 = vmatprep.subr.mxu0 0.0
      %479 = vmatpush1.msra.mxu0 %v445
      %480 = vmatprep.subr.mxu0 0.0
      %481 = vmatpush1.msra.mxu0 %v446
      %482 = vmatprep.subr.mxu0 0.0
      %483 = vmatpush1.msra.mxu0 %v447
      %484 = vmatprep.subr.mxu0 0.0
      %485 = vmatpush1.msra.mxu0 %v448
      %486 = vmatprep.subr.mxu0 0.0
      %487 = vmatpush1.msra.mxu0 %v449
      %488 = vmatprep.subr.mxu0 0.0
      %489 = vmatpush1.msra.mxu0 %v450
      %490 = vmatprep.subr.mxu0 0.0
      %491 = vmatpush1.msra.mxu0 %v451
      %492 = vmatprep.subr.mxu0 0.0
      %493 = vmatpush1.msra.mxu0 %v452
      %494 = vmatprep.subr.mxu0 0.0
      %495 = vmatpush1.msra.mxu0 %v453
      %496 = vmatprep.subr.mxu0 0.0
      %497 = vmatpush1.msra.mxu0 %v454
      %498 = vmatprep.subr.mxu0 0.0
      %499 = vmatpush1.msra.mxu0 %v455
      %500 = vmatprep.subr.mxu0 0.0
      %501 = vmatpush1.msra.mxu0 %v456
      %502 = vmatprep.subr.mxu0 0.0
      %503 = vmatpush1.msra.mxu0 %v457
      %504 = vmatprep.subr.mxu0 0.0
      %505 = vmatpush1.msra.mxu0 %v458
      %506 = vmatprep.subr.mxu0 0.0
      %507 = vmatpush1.msra.mxu0 %v459
      %508 = vmatprep.subr.mxu0 0.0
      %509 = vmatpush1.msra.mxu0 %v460
      %510 = vmatprep.subr.mxu0 0.0
      %511 = vmatpush1.msra.mxu0 %v461
      %512 = vmatprep.subr.mxu0 0.0
      %513 = vmatpush1.msra.mxu0 %v462
      %514 = vmatprep.subr.mxu0 0.0
      %515 = vmatpush1.msra.mxu0 %v463
      %516 = vmatprep.subr.mxu0 0.0
      %517 = vmatpush1.msra.mxu0 %v464
      %518 = vmatprep.subr.mxu0 0.0
      %519 = vmatpush1.msra.mxu0 %v465
      %520 = vmatprep.subr.mxu0 0.0
      %521 = vmatpush1.msra.mxu0 %v466
      %522 = vmatprep.subr.mxu0 0.0
      %523 = vmatpush1.msra.mxu0 %v467
      %524 = vmatprep.subr.mxu0 0.0
      %525 = vmatpush1.msra.mxu0 %v468
      %526 = vmatprep.subr.mxu0 0.0
      %527 = vmatpush1.msra.mxu0 %v469
      %528 = vmatprep.subr.mxu0 0.0
      %529 = vmatpush1.msra.mxu0 %v470
      %530 = vmatprep.subr.mxu0 0.0
      %531 = vmatpush1.msra.mxu0 %v471
      %532 = vmatprep.subr.mxu0 0.0
      %533 = vmatpush1.msra.mxu0 %v472
      %534 = vmatprep.subr.mxu0 0.0
      %535 = vmatpush1.msra.mxu0 %v473
      %536 = vmatprep.subr.mxu0 0.0
      %537 = vmatpush1.msra.mxu0 %v474
      %538 = vmatprep.subr.mxu0 0.0
      %539 = vmatpush1.msra.mxu0 %v475
      %540 = vmatprep.mubr.f32.mxu0 %v334
      %541 = vmatmul.mubr.f32.gmra.mrb[0].mxu0 %v333
      %v542 = vpop.f32.mrb[0].mxu0
      %v543 = vadd.f32 0.0, %v542
      %v544 = vpop.f32.mrb[0].mxu0
      %545 = vmatprep.mubr.f32.mxu0 %v336
      %546 = vmatmul.mubr.f32.gmra.mrb[0].mxu0 %v335
      %v547 = vpop.f32.mrb[0].mxu0
      %v548 = vadd.f32 0.0, %v547
      %v549 = vpop.f32.mrb[0].mxu0
      %550 = vdwg.mxu0
      %v551 = vld [vmem:[%s3] sm:$0xff]
      %v552 = vld [vmem:[%s3 + $0x8] sm:$0xff]
      %v553 = vld [vmem:[%s4] sm:$0xff]
      %v554 = vld [vmem:[%s4 + $0x8] sm:$0xff]
      %v555 = vlaneseq
      %v556 = vshrl.u32 %v555, 7
      %v557 = vsub.s32 0, %v556
      %v558 = vrot.slane %v436, %v557
      %v559 = vmul.f32 %v558, %v551
      %v560 = vmul.f32 %v558, %v552
      %v561 = vadd.f32 %v559, 0.0
      %v562 = vadd.f32 %v560, 0.0
      %v563 = vlaneseq
      %v564 = vshrl.u32 %v563, 7
      %v565 = vsub.s32 0, %v564
      %v566 = vrot.slane %v543, %v565
      %v567 = vmul.f32 %v566, %v553
      %v568 = vmul.f32 %v566, %v554
      %v569 = vsub.f32 %v561, %v567
      %v570 = vsub.f32 %v562, %v568
      %v571 = vmul.f32 %v558, %v553
      %v572 = vmul.f32 %v558, %v554
      %v573 = vadd.f32 %v571, 0.0
      %v574 = vadd.f32 %v572, 0.0
      %v575 = vmul.f32 %v566, %v551
      %v576 = vmul.f32 %v566, %v552
      %v577 = vadd.f32 %v573, %v575
      %v578 = vadd.f32 %v574, %v576
      %s579 = scalar_lea.vmem %s3, 16
      %v580 = vld [vmem:[%s579] sm:$0xff]
      %v581 = vld [vmem:[%s579 + $0x8] sm:$0xff]
      %s582 = scalar_lea.vmem %s4, 16
      %v583 = vld [vmem:[%s582] sm:$0xff]
      %v584 = vld [vmem:[%s582 + $0x8] sm:$0xff]
      %v585 = vlaneseq
      %v586 = vshrl.u32 %v585, 7
      %v587 = vsub.s32 1, %v586
      %v588 = vrot.slane %v436, %v587
      %v589 = vmul.f32 %v588, %v580
      %v590 = vmul.f32 %v588, %v581
      %v591 = vadd.f32 %v569, %v589
      %v592 = vadd.f32 %v570, %v590
      %v593 = vlaneseq
      %v594 = vshrl.u32 %v593, 7
      %v595 = vsub.s32 1, %v594
      %v596 = vrot.slane %v543, %v595
      %v597 = vmul.f32 %v596, %v583
      %v598 = vmul.f32 %v596, %v584
      %v599 = vsub.f32 %v591, %v597
      %v600 = vsub.f32 %v592, %v598
      %v601 = vmul.f32 %v588, %v583
      %v602 = vmul.f32 %v588, %v584
      %v603 = vadd.f32 %v577, %v601
      %v604 = vadd.f32 %v578, %v602
      %v605 = vmul.f32 %v596, %v580
      %v606 = vmul.f32 %v596, %v581
      %v607 = vadd.f32 %v603, %v605
      %v608 = vadd.f32 %v604, %v606
      %s609 = scalar_lea.vmem %s3, 32
      %v610 = vld [vmem:[%s609] sm:$0xff]
      %v611 = vld [vmem:[%s609 + $0x8] sm:$0xff]
      %s612 = scalar_lea.vmem %s4, 32
      %v613 = vld [vmem:[%s612] sm:$0xff]
      %v614 = vld [vmem:[%s612 + $0x8] sm:$0xff]
      %v615 = vlaneseq
      %v616 = vshrl.u32 %v615, 7
      %v617 = vsub.s32 2, %v616
      %v618 = vrot.slane %v436, %v617
      %v619 = vmul.f32 %v618, %v610
      %v620 = vmul.f32 %v618, %v611
      %v621 = vadd.f32 %v599, %v619
      %v622 = vadd.f32 %v600, %v620
      %v623 = vlaneseq
      %v624 = vshrl.u32 %v623, 7
      %v625 = vsub.s32 2, %v624
      %v626 = vrot.slane %v543, %v625
      %v627 = vmul.f32 %v626, %v613
      %v628 = vmul.f32 %v626, %v614
      %v629 = vsub.f32 %v621, %v627
      %v630 = vsub.f32 %v622, %v628
      %v631 = vmul.f32 %v618, %v613
      %v632 = vmul.f32 %v618, %v614
      %v633 = vadd.f32 %v607, %v631
      %v634 = vadd.f32 %v608, %v632
      %v635 = vmul.f32 %v626, %v610
      %v636 = vmul.f32 %v626, %v611
      %v637 = vadd.f32 %v633, %v635
      %v638 = vadd.f32 %v634, %v636
      %s639 = scalar_lea.vmem %s3, 48
      %v640 = vld [vmem:[%s639] sm:$0xff]
      %v641 = vld [vmem:[%s639 + $0x8] sm:$0xff]
      %s642 = scalar_lea.vmem %s4, 48
      %v643 = vld [vmem:[%s642] sm:$0xff]
      %v644 = vld [vmem:[%s642 + $0x8] sm:$0xff]
      %v645 = vlaneseq
      %v646 = vshrl.u32 %v645, 7
      %v647 = vsub.s32 3, %v646
      %v648 = vrot.slane %v436, %v647
      %v649 = vmul.f32 %v648, %v640
      %v650 = vmul.f32 %v648, %v641
      %v651 = vadd.f32 %v629, %v649
      %v652 = vadd.f32 %v630, %v650
      %v653 = vlaneseq
      %v654 = vshrl.u32 %v653, 7
      %v655 = vsub.s32 3, %v654
      %v656 = vrot.slane %v543, %v655
      %v657 = vmul.f32 %v656, %v643
      %v658 = vmul.f32 %v656, %v644
      %v659 = vsub.f32 %v651, %v657
      %v660 = vsub.f32 %v652, %v658
      %v661 = vmul.f32 %v648, %v643
      %v662 = vmul.f32 %v648, %v644
      %v663 = vadd.f32 %v637, %v661
      %v664 = vadd.f32 %v638, %v662
      %v665 = vmul.f32 %v656, %v640
      %v666 = vmul.f32 %v656, %v641
      %v667 = vadd.f32 %v663, %v665
      %v668 = vadd.f32 %v664, %v666
      %s669 = scalar_lea.vmem %s3, 64
      %v670 = vld [vmem:[%s669] sm:$0xff]
      %v671 = vld [vmem:[%s669 + $0x8] sm:$0xff]
      %s672 = scalar_lea.vmem %s4, 64
      %v673 = vld [vmem:[%s672] sm:$0xff]
      %v674 = vld [vmem:[%s672 + $0x8] sm:$0xff]
      %v675 = vlaneseq
      %v676 = vshrl.u32 %v675, 7
      %v677 = vsub.s32 4, %v676
      %v678 = vrot.slane %v436, %v677
      %v679 = vmul.f32 %v678, %v670
      %v680 = vmul.f32 %v678, %v671
      %v681 = vadd.f32 %v659, %v679
      %v682 = vadd.f32 %v660, %v680
      %v683 = vlaneseq
      %v684 = vshrl.u32 %v683, 7
      %v685 = vsub.s32 4, %v684
      %v686 = vrot.slane %v543, %v685
      %v687 = vmul.f32 %v686, %v673
      %v688 = vmul.f32 %v686, %v674
      %v689 = vsub.f32 %v681, %v687
      %v690 = vsub.f32 %v682, %v688
      %v691 = vmul.f32 %v678, %v673
      %v692 = vmul.f32 %v678, %v674
      %v693 = vadd.f32 %v667, %v691
      %v694 = vadd.f32 %v668, %v692
      %v695 = vmul.f32 %v686, %v670
      %v696 = vmul.f32 %v686, %v671
      %v697 = vadd.f32 %v693, %v695
      %v698 = vadd.f32 %v694, %v696
      %s699 = scalar_lea.vmem %s3, 80
      %v700 = vld [vmem:[%s699] sm:$0xff]
      %v701 = vld [vmem:[%s699 + $0x8] sm:$0xff]
      %s702 = scalar_lea.vmem %s4, 80
      %v703 = vld [vmem:[%s702] sm:$0xff]
      %v704 = vld [vmem:[%s702 + $0x8] sm:$0xff]
      %v705 = vlaneseq
      %v706 = vshrl.u32 %v705, 7
      %v707 = vsub.s32 5, %v706
      %v708 = vrot.slane %v436, %v707
      %v709 = vmul.f32 %v708, %v700
      %v710 = vmul.f32 %v708, %v701
      %v711 = vadd.f32 %v689, %v709
      %v712 = vadd.f32 %v690, %v710
      %v713 = vlaneseq
      %v714 = vshrl.u32 %v713, 7
      %v715 = vsub.s32 5, %v714
      %v716 = vrot.slane %v543, %v715
      %v717 = vmul.f32 %v716, %v703
      %v718 = vmul.f32 %v716, %v704
      %v719 = vsub.f32 %v711, %v717
      %v720 = vsub.f32 %v712, %v718
      %v721 = vmul.f32 %v708, %v703
      %v722 = vmul.f32 %v708, %v704
      %v723 = vadd.f32 %v697, %v721
      %v724 = vadd.f32 %v698, %v722
      %v725 = vmul.f32 %v716, %v700
      %v726 = vmul.f32 %v716, %v701
      %v727 = vadd.f32 %v723, %v725
      %v728 = vadd.f32 %v724, %v726
      %s729 = scalar_lea.vmem %s3, 96
      %v730 = vld [vmem:[%s729] sm:$0xff]
      %v731 = vld [vmem:[%s729 + $0x8] sm:$0xff]
      %s732 = scalar_lea.vmem %s4, 96
      %v733 = vld [vmem:[%s732] sm:$0xff]
      %v734 = vld [vmem:[%s732 + $0x8] sm:$0xff]
      %v735 = vlaneseq
      %v736 = vshrl.u32 %v735, 7
      %v737 = vsub.s32 6, %v736
      %v738 = vrot.slane %v436, %v737
      %v739 = vmul.f32 %v738, %v730
      %v740 = vmul.f32 %v738, %v731
      %v741 = vadd.f32 %v719, %v739
      %v742 = vadd.f32 %v720, %v740
      %v743 = vlaneseq
      %v744 = vshrl.u32 %v743, 7
      %v745 = vsub.s32 6, %v744
      %v746 = vrot.slane %v543, %v745
      %v747 = vmul.f32 %v746, %v733
      %v748 = vmul.f32 %v746, %v734
      %v749 = vsub.f32 %v741, %v747
      %v750 = vsub.f32 %v742, %v748
      %v751 = vmul.f32 %v738, %v733
      %v752 = vmul.f32 %v738, %v734
      %v753 = vadd.f32 %v727, %v751
      %v754 = vadd.f32 %v728, %v752
      %v755 = vmul.f32 %v746, %v730
      %v756 = vmul.f32 %v746, %v731
      %v757 = vadd.f32 %v753, %v755
      %v758 = vadd.f32 %v754, %v756
      %s759 = scalar_lea.vmem %s3, 112
      %v760 = vld [vmem:[%s759] sm:$0xff]
      %v761 = vld [vmem:[%s759 + $0x8] sm:$0xff]
      %s762 = scalar_lea.vmem %s4, 112
      %v763 = vld [vmem:[%s762] sm:$0xff]
      %v764 = vld [vmem:[%s762 + $0x8] sm:$0xff]
      %v765 = vlaneseq
      %v766 = vshrl.u32 %v765, 7
      %v767 = vsub.s32 7, %v766
      %v768 = vrot.slane %v436, %v767
      %v769 = vmul.f32 %v768, %v760
      %v770 = vmul.f32 %v768, %v761
      %v771 = vadd.f32 %v749, %v769
      %v772 = vadd.f32 %v750, %v770
      %v773 = vlaneseq
      %v774 = vshrl.u32 %v773, 7
      %v775 = vsub.s32 7, %v774
      %v776 = vrot.slane %v543, %v775
      %v777 = vmul.f32 %v776, %v763
      %v778 = vmul.f32 %v776, %v764
      %v779 = vsub.f32 %v771, %v777
      %v780 = vsub.f32 %v772, %v778
      %v781 = vmul.f32 %v768, %v763
      %v782 = vmul.f32 %v768, %v764
      %v783 = vadd.f32 %v757, %v781
      %v784 = vadd.f32 %v758, %v782
      %v785 = vmul.f32 %v776, %v760
      %v786 = vmul.f32 %v776, %v761
      %v787 = vadd.f32 %v783, %v785
      %v788 = vadd.f32 %v784, %v786
      %s789 = scalar_lea.vmem %s3, 128
      %v790 = vld [vmem:[%s789] sm:$0xff]
      %v791 = vld [vmem:[%s789 + $0x8] sm:$0xff]
      %s792 = scalar_lea.vmem %s4, 128
      %v793 = vld [vmem:[%s792] sm:$0xff]
      %v794 = vld [vmem:[%s792 + $0x8] sm:$0xff]
      %v795 = vlaneseq
      %v796 = vshrl.u32 %v795, 7
      %v797 = vsub.s32 0, %v796
      %v798 = vrot.slane %v441, %v797
      %v799 = vmul.f32 %v798, %v790
      %v800 = vmul.f32 %v798, %v791
      %v801 = vadd.f32 %v779, %v799
      %v802 = vadd.f32 %v780, %v800
      %v803 = vlaneseq
      %v804 = vshrl.u32 %v803, 7
      %v805 = vsub.s32 0, %v804
      %v806 = vrot.slane %v548, %v805
      %v807 = vmul.f32 %v806, %v793
      %v808 = vmul.f32 %v806, %v794
      %v809 = vsub.f32 %v801, %v807
      %v810 = vsub.f32 %v802, %v808
      %v811 = vmul.f32 %v798, %v793
      %v812 = vmul.f32 %v798, %v794
      %v813 = vadd.f32 %v787, %v811
      %v814 = vadd.f32 %v788, %v812
      %v815 = vmul.f32 %v806, %v790
      %v816 = vmul.f32 %v806, %v791
      %v817 = vadd.f32 %v813, %v815
      %v818 = vadd.f32 %v814, %v816
      %s819 = scalar_lea.vmem %s3, 144
      %v820 = vld [vmem:[%s819] sm:$0xff]
      %v821 = vld [vmem:[%s819 + $0x8] sm:$0xff]
      %s822 = scalar_lea.vmem %s4, 144
      %v823 = vld [vmem:[%s822] sm:$0xff]
      %v824 = vld [vmem:[%s822 + $0x8] sm:$0xff]
      %v825 = vlaneseq
      %v826 = vshrl.u32 %v825, 7
      %v827 = vsub.s32 1, %v826
      %v828 = vrot.slane %v441, %v827
      %v829 = vmul.f32 %v828, %v820
      %v830 = vmul.f32 %v828, %v821
      %v831 = vadd.f32 %v809, %v829
      %v832 = vadd.f32 %v810, %v830
      %v833 = vlaneseq
      %v834 = vshrl.u32 %v833, 7
      %v835 = vsub.s32 1, %v834
      %v836 = vrot.slane %v548, %v835
      %v837 = vmul.f32 %v836, %v823
      %v838 = vmul.f32 %v836, %v824
      %v839 = vsub.f32 %v831, %v837
      %v840 = vsub.f32 %v832, %v838
      %v841 = vmul.f32 %v828, %v823
      %v842 = vmul.f32 %v828, %v824
      %v843 = vadd.f32 %v817, %v841
      %v844 = vadd.f32 %v818, %v842
      %v845 = vmul.f32 %v836, %v820
      %v846 = vmul.f32 %v836, %v821
      %v847 = vadd.f32 %v843, %v845
      %v848 = vadd.f32 %v844, %v846
      %s849 = scalar_lea.vmem %s3, 160
      %v850 = vld [vmem:[%s849] sm:$0xff]
      %v851 = vld [vmem:[%s849 + $0x8] sm:$0xff]
      %s852 = scalar_lea.vmem %s4, 160
      %v853 = vld [vmem:[%s852] sm:$0xff]
      %v854 = vld [vmem:[%s852 + $0x8] sm:$0xff]
      %v855 = vlaneseq
      %v856 = vshrl.u32 %v855, 7
      %v857 = vsub.s32 2, %v856
      %v858 = vrot.slane %v441, %v857
      %v859 = vmul.f32 %v858, %v850
      %v860 = vmul.f32 %v858, %v851
      %v861 = vadd.f32 %v839, %v859
      %v862 = vadd.f32 %v840, %v860
      %v863 = vlaneseq
      %v864 = vshrl.u32 %v863, 7
      %v865 = vsub.s32 2, %v864
      %v866 = vrot.slane %v548, %v865
      %v867 = vmul.f32 %v866, %v853
      %v868 = vmul.f32 %v866, %v854
      %v869 = vsub.f32 %v861, %v867
      %v870 = vsub.f32 %v862, %v868
      %v871 = vmul.f32 %v858, %v853
      %v872 = vmul.f32 %v858, %v854
      %v873 = vadd.f32 %v847, %v871
      %v874 = vadd.f32 %v848, %v872
      %v875 = vmul.f32 %v866, %v850
      %v876 = vmul.f32 %v866, %v851
      %v877 = vadd.f32 %v873, %v875
      %v878 = vadd.f32 %v874, %v876
      %s879 = scalar_lea.vmem %s3, 176
      %v880 = vld [vmem:[%s879] sm:$0xff]
      %v881 = vld [vmem:[%s879 + $0x8] sm:$0xff]
      %s882 = scalar_lea.vmem %s4, 176
      %v883 = vld [vmem:[%s882] sm:$0xff]
      %v884 = vld [vmem:[%s882 + $0x8] sm:$0xff]
      %v885 = vlaneseq
      %v886 = vshrl.u32 %v885, 7
      %v887 = vsub.s32 3, %v886
      %v888 = vrot.slane %v441, %v887
      %v889 = vmul.f32 %v888, %v880
      %v890 = vmul.f32 %v888, %v881
      %v891 = vadd.f32 %v869, %v889
      %v892 = vadd.f32 %v870, %v890
      %v893 = vlaneseq
      %v894 = vshrl.u32 %v893, 7
      %v895 = vsub.s32 3, %v894
      %v896 = vrot.slane %v548, %v895
      %v897 = vmul.f32 %v896, %v883
      %v898 = vmul.f32 %v896, %v884
      %v899 = vsub.f32 %v891, %v897
      %v900 = vsub.f32 %v892, %v898
      %v901 = vmul.f32 %v888, %v883
      %v902 = vmul.f32 %v888, %v884
      %v903 = vadd.f32 %v877, %v901
      %v904 = vadd.f32 %v878, %v902
      %v905 = vmul.f32 %v896, %v880
      %v906 = vmul.f32 %v896, %v881
      %v907 = vadd.f32 %v903, %v905
      %v908 = vadd.f32 %v904, %v906
      %s909 = scalar_lea.vmem %s3, 192
      %v910 = vld [vmem:[%s909] sm:$0xff]
      %v911 = vld [vmem:[%s909 + $0x8] sm:$0xff]
      %s912 = scalar_lea.vmem %s4, 192
      %v913 = vld [vmem:[%s912] sm:$0xff]
      %v914 = vld [vmem:[%s912 + $0x8] sm:$0xff]
      %v915 = vlaneseq
      %v916 = vshrl.u32 %v915, 7
      %v917 = vsub.s32 4, %v916
      %v918 = vrot.slane %v441, %v917
      %v919 = vmul.f32 %v918, %v910
      %v920 = vmul.f32 %v918, %v911
      %v921 = vadd.f32 %v899, %v919
      %v922 = vadd.f32 %v900, %v920
      %v923 = vlaneseq
      %v924 = vshrl.u32 %v923, 7
      %v925 = vsub.s32 4, %v924
      %v926 = vrot.slane %v548, %v925
      %v927 = vmul.f32 %v926, %v913
      %v928 = vmul.f32 %v926, %v914
      %v929 = vsub.f32 %v921, %v927
      %v930 = vsub.f32 %v922, %v928
      %v931 = vmul.f32 %v918, %v913
      %v932 = vmul.f32 %v918, %v914
      %v933 = vadd.f32 %v907, %v931
      %v934 = vadd.f32 %v908, %v932
      %v935 = vmul.f32 %v926, %v910
      %v936 = vmul.f32 %v926, %v911
      %v937 = vadd.f32 %v933, %v935
      %v938 = vadd.f32 %v934, %v936
      %s939 = scalar_lea.vmem %s3, 208
      %v940 = vld [vmem:[%s939] sm:$0xff]
      %v941 = vld [vmem:[%s939 + $0x8] sm:$0xff]
      %s942 = scalar_lea.vmem %s4, 208
      %v943 = vld [vmem:[%s942] sm:$0xff]
      %v944 = vld [vmem:[%s942 + $0x8] sm:$0xff]
      %v945 = vlaneseq
      %v946 = vshrl.u32 %v945, 7
      %v947 = vsub.s32 5, %v946
      %v948 = vrot.slane %v441, %v947
      %v949 = vmul.f32 %v948, %v940
      %v950 = vmul.f32 %v948, %v941
      %v951 = vadd.f32 %v929, %v949
      %v952 = vadd.f32 %v930, %v950
      %v953 = vlaneseq
      %v954 = vshrl.u32 %v953, 7
      %v955 = vsub.s32 5, %v954
      %v956 = vrot.slane %v548, %v955
      %v957 = vmul.f32 %v956, %v943
      %v958 = vmul.f32 %v956, %v944
      %v959 = vsub.f32 %v951, %v957
      %v960 = vsub.f32 %v952, %v958
      %v961 = vmul.f32 %v948, %v943
      %v962 = vmul.f32 %v948, %v944
      %v963 = vadd.f32 %v937, %v961
      %v964 = vadd.f32 %v938, %v962
      %v965 = vmul.f32 %v956, %v940
      %v966 = vmul.f32 %v956, %v941
      %v967 = vadd.f32 %v963, %v965
      %v968 = vadd.f32 %v964, %v966
      %s969 = scalar_lea.vmem %s3, 224
      %v970 = vld [vmem:[%s969] sm:$0xff]
      %v971 = vld [vmem:[%s969 + $0x8] sm:$0xff]
      %s972 = scalar_lea.vmem %s4, 224
      %v973 = vld [vmem:[%s972] sm:$0xff]
      %v974 = vld [vmem:[%s972 + $0x8] sm:$0xff]
      %v975 = vlaneseq
      %v976 = vshrl.u32 %v975, 7
      %v977 = vsub.s32 6, %v976
      %v978 = vrot.slane %v441, %v977
      %v979 = vmul.f32 %v978, %v970
      %v980 = vmul.f32 %v978, %v971
      %v981 = vadd.f32 %v959, %v979
      %v982 = vadd.f32 %v960, %v980
      %v983 = vlaneseq
      %v984 = vshrl.u32 %v983, 7
      %v985 = vsub.s32 6, %v984
      %v986 = vrot.slane %v548, %v985
      %v987 = vmul.f32 %v986, %v973
      %v988 = vmul.f32 %v986, %v974
      %v989 = vsub.f32 %v981, %v987
      %v990 = vsub.f32 %v982, %v988
      %v991 = vmul.f32 %v978, %v973
      %v992 = vmul.f32 %v978, %v974
      %v993 = vadd.f32 %v967, %v991
      %v994 = vadd.f32 %v968, %v992
      %v995 = vmul.f32 %v986, %v970
      %v996 = vmul.f32 %v986, %v971
      %v997 = vadd.f32 %v993, %v995
      %v998 = vadd.f32 %v994, %v996
      %s999 = scalar_lea.vmem %s3, 240
      %v1000 = vld [vmem:[%s999] sm:$0xff]
      %v1001 = vld [vmem:[%s999 + $0x8] sm:$0xff]
      %s1002 = scalar_lea.vmem %s4, 240
      %v1003 = vld [vmem:[%s1002] sm:$0xff]
      %v1004 = vld [vmem:[%s1002 + $0x8] sm:$0xff]
      %v1005 = vlaneseq
      %v1006 = vshrl.u32 %v1005, 7
      %v1007 = vsub.s32 7, %v1006
      %v1008 = vrot.slane %v441, %v1007
      %v1009 = vmul.f32 %v1008, %v1000
      %v1010 = vmul.f32 %v1008, %v1001
      %v1011 = vadd.f32 %v989, %v1009
      %v1012 = vadd.f32 %v990, %v1010
      %v1013 = vlaneseq
      %v1014 = vshrl.u32 %v1013, 7
      %v1015 = vsub.s32 7, %v1014
      %v1016 = vrot.slane %v548, %v1015
      %v1017 = vmul.f32 %v1016, %v1003
      %v1018 = vmul.f32 %v1016, %v1004
      %v1019 = vsub.f32 %v1011, %v1017
      %v1020 = vsub.f32 %v1012, %v1018
      %v1021 = vmul.f32 %v1008, %v1003
      %v1022 = vmul.f32 %v1008, %v1004
      %v1023 = vadd.f32 %v997, %v1021
      %v1024 = vadd.f32 %v998, %v1022
      %v1025 = vmul.f32 %v1016, %v1000
      %v1026 = vmul.f32 %v1016, %v1001
      %v1027 = vadd.f32 %v1023, %v1025
      %v1028 = vadd.f32 %v1024, %v1026
      %v1029 = vld [vmem:[%s5] sm:$0xff]
      %v1030 = vld [vmem:[%s5 + $0x8] sm:$0xff]
      %v1031 = vld [vmem:[%s5 + $0x10] sm:$0xff]
      %v1032 = vld [vmem:[%s5 + $0x18] sm:$0xff]
      %v1033 = vld [vmem:[%s5 + $0x20] sm:$0xff]
      %v1034 = vld [vmem:[%s5 + $0x28] sm:$0xff]
      %v1035 = vld [vmem:[%s5 + $0x30] sm:$0xff]
      %v1036 = vld [vmem:[%s5 + $0x38] sm:$0xff]
      %vm1037 = vcmask 261120
      %v1039 = vsel %vm1037, %v1019, 0
      %v1042 = vsel %vm1037, %v1020, 0
      %1044 = vmatprep.subr.mxu0 %v1030
      %1045 = vmatpush1.msra.mxu0 %v1029
      %1046 = vmatprep.subr.mxu0 %v1032
      %1047 = vmatpush1.msra.mxu0 %v1031
      %1048 = vmatprep.subr.mxu0 %v1034
      %1049 = vmatpush1.msra.mxu0 %v1033
      %1050 = vmatprep.subr.mxu0 %v1036
      %1051 = vmatpush1.msra.mxu0 %v1035
      %1052 = vmatprep.subr.mxu0 0.0
      %1053 = vmatpush1.msra.mxu0 0.0
      %1054 = vmatprep.subr.mxu0 0.0
      %1055 = vmatpush1.msra.mxu0 0.0
      %1056 = vmatprep.subr.mxu0 0.0
      %1057 = vmatpush1.msra.mxu0 0.0
      %1058 = vmatprep.subr.mxu0 0.0
      %1059 = vmatpush1.msra.mxu0 0.0
      %1060 = vmatprep.subr.mxu0 0.0
      %1061 = vmatpush1.msra.mxu0 0.0
      %1062 = vmatprep.subr.mxu0 0.0
      %1063 = vmatpush1.msra.mxu0 0.0
      %1064 = vmatprep.subr.mxu0 0.0
      %1065 = vmatpush1.msra.mxu0 0.0
      %1066 = vmatprep.subr.mxu0 0.0
      %1067 = vmatpush1.msra.mxu0 0.0
      %1068 = vmatprep.subr.mxu0 0.0
      %1069 = vmatpush1.msra.mxu0 0.0
      %1070 = vmatprep.subr.mxu0 0.0
      %1071 = vmatpush1.msra.mxu0 0.0
      %1072 = vmatprep.subr.mxu0 0.0
      %1073 = vmatpush1.msra.mxu0 0.0
      %1074 = vmatprep.subr.mxu0 0.0
      %1075 = vmatpush1.msra.mxu0 0.0
      %1076 = vmatprep.subr.mxu0 0.0
      %1077 = vmatpush1.msra.mxu0 0.0
      %1078 = vmatprep.subr.mxu0 0.0
      %1079 = vmatpush1.msra.mxu0 0.0
      %1080 = vmatprep.subr.mxu0 0.0
      %1081 = vmatpush1.msra.mxu0 0.0
      %1082 = vmatprep.subr.mxu0 0.0
      %1083 = vmatpush1.msra.mxu0 0.0
      %1084 = vmatprep.subr.mxu0 0.0
      %1085 = vmatpush1.msra.mxu0 0.0
      %1086 = vmatprep.subr.mxu0 0.0
      %1087 = vmatpush1.msra.mxu0 0.0
      %1088 = vmatprep.subr.mxu0 0.0
      %1089 = vmatpush1.msra.mxu0 0.0
      %1090 = vmatprep.subr.mxu0 0.0
      %1091 = vmatpush1.msra.mxu0 0.0
      %1092 = vmatprep.subr.mxu0 0.0
      %1093 = vmatpush1.msra.mxu0 0.0
      %1094 = vmatprep.subr.mxu0 0.0
      %1095 = vmatpush1.msra.mxu0 0.0
      %1096 = vmatprep.subr.mxu0 0.0
      %1097 = vmatpush1.msra.mxu0 0.0
      %1098 = vmatprep.subr.mxu0 0.0
      %1099 = vmatpush1.msra.mxu0 0.0
      %1100 = vmatprep.subr.mxu0 0.0
      %1101 = vmatpush1.msra.mxu0 0.0
      %1102 = vmatprep.subr.mxu0 0.0
      %1103 = vmatpush1.msra.mxu0 0.0
      %1104 = vmatprep.subr.mxu0 0.0
      %1105 = vmatpush1.msra.mxu0 0.0
      %1106 = vmatprep.subr.mxu0 0.0
      %1107 = vmatpush1.msra.mxu0 0.0
      %1108 = vmatprep.mubr.f32.mxu0 0.0
      %1109 = vmatmul.mubr.f32.gmra.mrb[0].mxu0 %v1039
      %v1110 = vpop.f32.mrb[0].mxu0
      %v1111 = vadd.f32 0.0, %v1110
      %v1112 = vpop.f32.mrb[0].mxu0
      %v1113 = vadd.f32 0.0, %v1112
      %1114 = vmatprep.mubr.f32.mxu0 0.0
      %1115 = vmatmul.mubr.f32.gmra.mrb[0].mxu0 %v1042
      %v1116 = vpop.f32.mrb[0].mxu0
      %v1117 = vadd.f32 0.0, %v1116
      %v1118 = vpop.f32.mrb[0].mxu0
      %v1119 = vadd.f32 0.0, %v1118
      %1120 = vdwg.mxu0
      %v1121 = vld [vmem:[%s6] sm:$0xff]
      %v1122 = vld [vmem:[%s6 + $0x8] sm:$0xff]
      %v1123 = vld [vmem:[%s6 + $0x10] sm:$0xff]
      %v1124 = vld [vmem:[%s6 + $0x18] sm:$0xff]
      %v1125 = vld [vmem:[%s6 + $0x20] sm:$0xff]
      %v1126 = vld [vmem:[%s6 + $0x28] sm:$0xff]
      %v1127 = vld [vmem:[%s6 + $0x30] sm:$0xff]
      %v1128 = vld [vmem:[%s6 + $0x38] sm:$0xff]
      %v1130 = vsel %vm1037, %v1027, 0
      %v1133 = vsel %vm1037, %v1028, 0
      %1135 = vmatprep.subr.mxu0 %v1122
      %1136 = vmatpush1.msra.mxu0 %v1121
      %1137 = vmatprep.subr.mxu0 %v1124
      %1138 = vmatpush1.msra.mxu0 %v1123
      %1139 = vmatprep.subr.mxu0 %v1126
      %1140 = vmatpush1.msra.mxu0 %v1125
      %1141 = vmatprep.subr.mxu0 %v1128
      %1142 = vmatpush1.msra.mxu0 %v1127
      %1143 = vmatprep.subr.mxu0 0.0
      %1144 = vmatpush1.msra.mxu0 0.0
      %1145 = vmatprep.subr.mxu0 0.0
      %1146 = vmatpush1.msra.mxu0 0.0
      %1147 = vmatprep.subr.mxu0 0.0
      %1148 = vmatpush1.msra.mxu0 0.0
      %1149 = vmatprep.subr.mxu0 0.0
      %1150 = vmatpush1.msra.mxu0 0.0
      %1151 = vmatprep.subr.mxu0 0.0
      %1152 = vmatpush1.msra.mxu0 0.0
      %1153 = vmatprep.subr.mxu0 0.0
      %1154 = vmatpush1.msra.mxu0 0.0
      %1155 = vmatprep.subr.mxu0 0.0
      %1156 = vmatpush1.msra.mxu0 0.0
      %1157 = vmatprep.subr.mxu0 0.0
      %1158 = vmatpush1.msra.mxu0 0.0
      %1159 = vmatprep.subr.mxu0 0.0
      %1160 = vmatpush1.msra.mxu0 0.0
      %1161 = vmatprep.subr.mxu0 0.0
      %1162 = vmatpush1.msra.mxu0 0.0
      %1163 = vmatprep.subr.mxu0 0.0
      %1164 = vmatpush1.msra.mxu0 0.0
      %1165 = vmatprep.subr.mxu0 0.0
      %1166 = vmatpush1.msra.mxu0 0.0
      %1167 = vmatprep.subr.mxu0 0.0
      %1168 = vmatpush1.msra.mxu0 0.0
      %1169 = vmatprep.subr.mxu0 0.0
      %1170 = vmatpush1.msra.mxu0 0.0
      %1171 = vmatprep.subr.mxu0 0.0
      %1172 = vmatpush1.msra.mxu0 0.0
      %1173 = vmatprep.subr.mxu0 0.0
      %1174 = vmatpush1.msra.mxu0 0.0
      %1175 = vmatprep.subr.mxu0 0.0
      %1176 = vmatpush1.msra.mxu0 0.0
      %1177 = vmatprep.subr.mxu0 0.0
      %1178 = vmatpush1.msra.mxu0 0.0
      %1179 = vmatprep.subr.mxu0 0.0
      %1180 = vmatpush1.msra.mxu0 0.0
      %1181 = vmatprep.subr.mxu0 0.0
      %1182 = vmatpush1.msra.mxu0 0.0
      %1183 = vmatprep.subr.mxu0 0.0
      %1184 = vmatpush1.msra.mxu0 0.0
      %1185 = vmatprep.subr.mxu0 0.0
      %1186 = vmatpush1.msra.mxu0 0.0
      %1187 = vmatprep.subr.mxu0 0.0
      %1188 = vmatpush1.msra.mxu0 0.0
      %1189 = vmatprep.subr.mxu0 0.0
      %1190 = vmatpush1.msra.mxu0 0.0
      %1191 = vmatprep.subr.mxu0 0.0
      %1192 = vmatpush1.msra.mxu0 0.0
      %1193 = vmatprep.subr.mxu0 0.0
      %1194 = vmatpush1.msra.mxu0 0.0
      %1195 = vmatprep.subr.mxu0 0.0
      %1196 = vmatpush1.msra.mxu0 0.0
      %1197 = vmatprep.subr.mxu0 0.0
      %1198 = vmatpush1.msra.mxu0 0.0
      %1199 = vmatprep.mubr.f32.mxu0 0.0
      %1200 = vmatmul.mubr.f32.gmra.mrb[0].mxu0 %v1130
      %v1201 = vpop.f32.mrb[0].mxu0
      %v1202 = vadd.f32 0.0, %v1201
      %v1203 = vpop.f32.mrb[0].mxu0
      %v1204 = vadd.f32 0.0, %v1203
      %1205 = vmatprep.mubr.f32.mxu0 0.0
      %1206 = vmatmul.mubr.f32.gmra.mrb[0].mxu0 %v1133
      %v1207 = vpop.f32.mrb[0].mxu0
      %v1208 = vadd.f32 0.0, %v1207
      %v1209 = vpop.f32.mrb[0].mxu0
      %v1210 = vadd.f32 0.0, %v1209
      %1211 = vdwg.mxu0
      %v1212 = vsub.f32 %v1111, %v1202
      %v1213 = vsub.f32 %v1113, %v1204
      %v1214 = vsub.f32 %v1117, %v1208
      %v1215 = vsub.f32 %v1119, %v1210
      %v1216 = vld [vmem:[%s7] sm:$0xff]
      %v1217 = vld [vmem:[%s7 + $0x8] sm:$0xff]
      %vm1218 = vcmask 130048
      %v1220 = vsel %vm1218, %v1216, 0
      %v1223 = vsel %vm1218, %v1217, 0
      %1225 = vmatprep.subr.mxu0 %v334
      %1226 = vmatpush1.msra.mxu0 %v333
      %1227 = vmatprep.subr.mxu0 %v336
      %1228 = vmatpush1.msra.mxu0 %v335
      %1229 = vmatprep.subr.mxu0 0.0
      %1230 = vmatpush1.msra.mxu0 0.0
      %1231 = vmatprep.subr.mxu0 0.0
      %1232 = vmatpush1.msra.mxu0 0.0
      %1233 = vmatprep.subr.mxu0 0.0
      %1234 = vmatpush1.msra.mxu0 0.0
      %1235 = vmatprep.subr.mxu0 0.0
      %1236 = vmatpush1.msra.mxu0 0.0
      %1237 = vmatprep.subr.mxu0 0.0
      %1238 = vmatpush1.msra.mxu0 0.0
      %1239 = vmatprep.subr.mxu0 0.0
      %1240 = vmatpush1.msra.mxu0 0.0
      %1241 = vmatprep.subr.mxu0 0.0
      %1242 = vmatpush1.msra.mxu0 0.0
      %1243 = vmatprep.subr.mxu0 0.0
      %1244 = vmatpush1.msra.mxu0 0.0
      %1245 = vmatprep.subr.mxu0 0.0
      %1246 = vmatpush1.msra.mxu0 0.0
      %1247 = vmatprep.subr.mxu0 0.0
      %1248 = vmatpush1.msra.mxu0 0.0
      %1249 = vmatprep.subr.mxu0 0.0
      %1250 = vmatpush1.msra.mxu0 0.0
      %1251 = vmatprep.subr.mxu0 0.0
      %1252 = vmatpush1.msra.mxu0 0.0
      %1253 = vmatprep.subr.mxu0 0.0
      %1254 = vmatpush1.msra.mxu0 0.0
      %1255 = vmatprep.subr.mxu0 0.0
      %1256 = vmatpush1.msra.mxu0 0.0
      %1257 = vmatprep.subr.mxu0 0.0
      %1258 = vmatpush1.msra.mxu0 0.0
      %1259 = vmatprep.subr.mxu0 0.0
      %1260 = vmatpush1.msra.mxu0 0.0
      %1261 = vmatprep.subr.mxu0 0.0
      %1262 = vmatpush1.msra.mxu0 0.0
      %1263 = vmatprep.subr.mxu0 0.0
      %1264 = vmatpush1.msra.mxu0 0.0
      %1265 = vmatprep.subr.mxu0 0.0
      %1266 = vmatpush1.msra.mxu0 0.0
      %1267 = vmatprep.subr.mxu0 0.0
      %1268 = vmatpush1.msra.mxu0 0.0
      %1269 = vmatprep.subr.mxu0 0.0
      %1270 = vmatpush1.msra.mxu0 0.0
      %1271 = vmatprep.subr.mxu0 0.0
      %1272 = vmatpush1.msra.mxu0 0.0
      %1273 = vmatprep.subr.mxu0 0.0
      %1274 = vmatpush1.msra.mxu0 0.0
      %1275 = vmatprep.subr.mxu0 0.0
      %1276 = vmatpush1.msra.mxu0 0.0
      %1277 = vmatprep.subr.mxu0 0.0
      %1278 = vmatpush1.msra.mxu0 0.0
      %1279 = vmatprep.subr.mxu0 0.0
      %1280 = vmatpush1.msra.mxu0 0.0
      %1281 = vmatprep.subr.mxu0 0.0
      %1282 = vmatpush1.msra.mxu0 0.0
      %1283 = vmatprep.subr.mxu0 0.0
      %1284 = vmatpush1.msra.mxu0 0.0
      %1285 = vmatprep.subr.mxu0 0.0
      %1286 = vmatpush1.msra.mxu0 0.0
      %1287 = vmatprep.subr.mxu0 0.0
      %1288 = vmatpush1.msra.mxu0 0.0
      %1289 = vmatprep.mubr.f32.mxu0 0.0
      %1290 = vmatmul.mubr.f32.gmra.mrb[0].mxu0 %v1220
      %v1291 = vpop.f32.mrb[0].mxu0
      %v1292 = vadd.f32 0.0, %v1291
      %v1293 = vpop.f32.mrb[0].mxu0
      %v1294 = vadd.f32 0.0, %v1293
      %1295 = vmatprep.mubr.f32.mxu0 0.0
      %1296 = vmatmul.mubr.f32.gmra.mrb[0].mxu0 %v1223
      %v1297 = vpop.f32.mrb[0].mxu0
      %v1298 = vadd.f32 0.0, %v1297
      %v1299 = vpop.f32.mrb[0].mxu0
      %v1300 = vadd.f32 0.0, %v1299
      %1301 = vdwg.mxu0
      %v1302 = vadd.f32 %v1212, %v1292
      %v1303 = vadd.f32 %v1213, %v1294
      %v1304 = vadd.f32 %v1214, %v1298
      %v1305 = vadd.f32 %v1215, %v1300
      %v1306 = vld [vmem:[%s8] sm:$0xff]
      %v1307 = vld [vmem:[%s8 + $0x8] sm:$0xff]
      %1309 = vset.pattern.permute.xlu0 0
      %1310 = vperm.xlu0 %1309, %v1306
      %v1311 = vpop.permute.xlu0 %1310
      %1314 = vset.pattern.permute.xlu0 0
      %1315 = vperm.xlu0 %1314, %v1307
      %v1316 = vpop.permute.xlu0 %1315
      %v1318 = vadd.f32 %v1302, %v1311
      %v1319 = vadd.f32 %v1303, %v1311
      %v1320 = vadd.f32 %v1304, %v1316
      %v1321 = vadd.f32 %v1305, %v1316
      %v1322 = vmul.f32 %v1318, %v1318
      %v1323 = vmul.f32 %v1319, %v1319
      %v1324 = vmul.f32 %v1320, %v1320
      %v1325 = vmul.f32 %v1321, %v1321
      %v1326 = vmul.f32 %v1318, %v1322
      %v1327 = vmul.f32 %v1319, %v1323
      %v1328 = vmul.f32 %v1320, %v1324
      %v1329 = vmul.f32 %v1321, %v1325
      %v1330 = vmul.f32 %v1326, 0.044715
      %v1331 = vmul.f32 %v1327, 0.044715
      %v1332 = vmul.f32 %v1328, 0.044715
      %v1333 = vmul.f32 %v1329, 0.044715
      %v1334 = vadd.f32 %v1318, %v1330
      %v1335 = vadd.f32 %v1319, %v1331
      %v1336 = vadd.f32 %v1320, %v1332
      %v1337 = vadd.f32 %v1321, %v1333
      %v1338 = vmul.f32 %v1334, 0.7978846
      %v1339 = vmul.f32 %v1335, 0.7978846
      %v1340 = vmul.f32 %v1336, 0.7978846
      %v1341 = vmul.f32 %v1337, 0.7978846
      %v1342 = vtanh.pop %v1338
      %v1343 = vtanh.pop %v1339
      %v1344 = vtanh.pop %v1340
      %v1345 = vtanh.pop %v1341
      %v1346 = vadd.f32 %v1342, 1.0
      %v1347 = vadd.f32 %v1343, 1.0
      %v1348 = vadd.f32 %v1344, 1.0
      %v1349 = vadd.f32 %v1345, 1.0
      %v1350 = vmul.f32 %v1346, 0.5
      %v1351 = vmul.f32 %v1347, 0.5
      %v1352 = vmul.f32 %v1348, 0.5
      %v1353 = vmul.f32 %v1349, 0.5
      %v1354 = vmul.f32 %v1318, %v1350
      %v1355 = vmul.f32 %v1319, %v1351
      %v1356 = vmul.f32 %v1320, %v1352
      %v1357 = vmul.f32 %v1321, %v1353
      %1358 = vst [vmem:[%s332] sm:$0xff] %v1354
      %1359 = vst [vmem:[%s332 + $0x8] sm:$0xff] %v1355
      %1360 = vst [vmem:[%s332 + $0x10] sm:$0xff] %v1356
      %1361 = vst [vmem:[%s332 + $0x18] sm:$0xff] %v1357
      %p1362 = scmp.lt.s32.totalorder %s20, 1
      %s1363 = scalar_select %p1362, %s20, 1
      %s1364 = smul.addr %s1363, 4
      %s1365 = smul.addr %s1364, 8
      %s1366 = scalar_lea.vmem %s9, %s1365
      // Predicated region
      $region57: #{_lambda_.8} parent=55 // pred_check
        %p1367 = pneg %p232
      $region58: #{_lambda_.8} parent=55 // pred_check_branch
        %1369 = sbr.rel (%p1367) target = $region60
      $region59: #{_lambda_.8} parent=55 // pred_region
        _
      $region60: #{_lambda_.8} parent=55 // pred_fallthru
        _
    $region56: #{_lambda_.8} parent=5 // pred_fallthru
      _
    %p1370 = scmp.le.s32.totalorder 2, %s15
    // Predicated region
    $region61: #{_lambda_.8} parent=5 // pred_check
      %p1371 = pneg %p1370
    $region62: #{_lambda_.8} parent=5 // pred_check_branch
      %1373 = sbr.rel (%p1371) target = $region64
    $region63: #{_lambda_.8} parent=5 // pred_region
      %s1374 = ssub.s32 %s15, 2
      // Predicated region
      $region65: #{_lambda_.8} parent=63 // pred_check
        %p1375 = pneg %p238
      $region66: #{_lambda_.8} parent=63 // pred_check_branch
        %1377 = sbr.rel (%p1375) target = $region68
      $region67: #{_lambda_.8} parent=63 // pred_region
        %p1378 = scmp.lt.s32.totalorder %s21, 1
        %s1379 = scalar_select %p1378, %s21, 1
        %s1380 = smul.addr %s1379, 4
        %s1381 = smul.addr %s1380, 8
        %s1382 = scalar_lea.vmem %s9, %s1381
      $region68: #{_lambda_.8} parent=63 // pred_fallthru
        _
    $region64: #{_lambda_.8} parent=5 // pred_fallthru
      _
  $region6: #{_lambda_.8} parent=0 // loop_footer
    %s19 = sadd.s32 1, %s15
  $region7: #{_lambda_.8} parent=0 // loop_footer_branch
    %14 = sbr.rel target = $region3
  $region8: #{_lambda_.8} parent=0 // loop_exit
    _

// kernel: _lambda_.10
$region0: #{_lambda_.10}
  #allocation0 [shape = 'u32[]', space=smem, size = 0x4, offset = 0x4, fixed_abs, tag = 'smem constant byte address 0x4 - core index']
  #allocation1 [shape = 'u32[144,128]{1,0:T(1,128)}', space=vmem, size = 0x12000, scoped, tag = 'internal scratch']
  %s0 = inlined_call_operand.vmem [shape: f32[2,16,256], index: 0, kind: input, shape index: {}]
  %s1 = inlined_call_operand.vmem [shape: f32[256,32], index: 1, kind: input, shape index: {}]
  %s2 = inlined_call_operand.vmem [shape: f32[256,32], index: 2, kind: input, shape index: {}]
  %s3 = inlined_call_operand.vmem [shape: f32[16,16,32], index: 3, kind: input, shape index: {}]
  %s4 = inlined_call_operand.vmem [shape: f32[16,16,32], index: 4, kind: input, shape index: {}]
  %s5 = inlined_call_operand.vmem [shape: f32[32,256], index: 5, kind: input, shape index: {}]
  %s6 = inlined_call_operand.vmem [shape: f32[32,256], index: 6, kind: input, shape index: {}]
  %s7 = inlined_call_operand.vmem [shape: f32[16,16], index: 7, kind: input, shape index: {}]
  %s8 = inlined_call_operand.vmem [shape: f32[16,1], index: 8, kind: input, shape index: {}]
  %s9 = inlined_call_operand.vmem [shape: f32[2,16,256], index: 9, kind: output, shape index: {}]
  %s10 = sld [smem:[#allocation0]]
  $region69: #{_lambda_.10} parent=0
    _
  %s12 = ssub.s32 1, %s10
  %s13 = scalar_select 0, %s12, %s10
  loop: start=0, step=1, limit=4
  $region2: #{_lambda_.10} parent=0 // loop_pre_header
    _
  $region3: #{_lambda_.10} parent=0 // loop_header
    %s15 = sphi 0, %s19
    %p16 = scmp.ge.s32.totalorder %s15, 4
    %s25 = sphi 0, %s27
    %s28 = sphi 0, %s25
    %s29 = sphi 0, %s28
    %s45 = sphi 0, %s29
    %s49 = sphi 0, %s49
    %s51 = sphi 0, %s49
    %s52 = sphi 0, %s51
    %s66 = sphi 0, %s52
    %s70 = sphi 0, %s70
    %s72 = sphi 0, %s70
    %s73 = sphi 0, %s72
    %s87 = sphi 0, %s73
    %s91 = sphi 0, %s91
    %s93 = sphi 0, %s91
    %s94 = sphi 0, %s93
    %s108 = sphi 0, %s94
    %s112 = sphi 0, %s112
    %s114 = sphi 0, %s112
    %s115 = sphi 0, %s114
    %s129 = sphi 0, %s115
    %s133 = sphi 0, %s133
    %s135 = sphi 0, %s133
    %s136 = sphi 0, %s135
    %s150 = sphi 0, %s136
    %s154 = sphi 0, %s154
    %s156 = sphi 0, %s154
    %s157 = sphi 0, %s156
    %s171 = sphi 0, %s157
    %s175 = sphi 0, %s175
    %s177 = sphi 0, %s175
    %s178 = sphi 0, %s177
    %s192 = sphi 0, %s178
    %s196 = sphi 0, %s196
    %s198 = sphi 0, %s196
    %s199 = sphi 0, %s198
    %s213 = sphi 0, %s199
    %s219 = sphi 0, %s221
    %s222 = sphi 0, %s219
    %s223 = sphi 0, %s222
    %s239 = sphi 0, %s223
  $region4: #{_lambda_.10} parent=0 // loop_header_branch
    %18 = sbr.rel (%p16) target = $region8
  $region5: #{_lambda_.10} parent=0 // loop_body
    %s20 = ssub.s32 %s15, 1
    %s21 = ssub.s32 %s15, 2
    %s22 = sadd.s32 %s15, 1
    %s23 = ssub.s32 %s15, %s22
    %p24 = scmp.eq.s32.totalorder %s23, 0
    %s26 = sadd.s32 %s25, 1
    %s27 = scalar_select %p24, %s25, %s26
    %p30 = pneg %p24
    %p31 = scmp.eq.s32.totalorder %s15, 1
    %p32 = por %p30, %p31
    %p33 = scmp.ne.s32.totalorder %s25, %s28
    %p34 = scmp.eq.s32.totalorder %s15, 0
    %p35 = por %p33, %p34
    %p36 = scmp.ne.s32.totalorder %s25, %s28
    %p37 = scmp.eq.s32.totalorder %s20, 1
    %p38 = por %p36, %p37
    %p39 = scmp.ne.s32.totalorder %s28, %s29
    %p40 = scmp.eq.s32.totalorder %s20, 0
    %p41 = por %p39, %p40
    %p42 = scmp.ne.s32.totalorder %s28, %s29
    %p43 = scmp.eq.s32.totalorder %s21, 1
    %p44 = por %p42, %p43
    %p46 = scmp.ne.s32.totalorder %s29, %s45
    %p47 = scmp.eq.s32.totalorder %s21, 0
    %p48 = por %p46, %p47
    %s50 = sadd.s32 %s49, 1
    %p53 = scmp.eq.s32.totalorder %s15, 1
    %p54 = scmp.ne.s32.totalorder %s49, %s51
    %p55 = scmp.eq.s32.totalorder %s15, 0
    %p56 = por %p54, %p55
    %p57 = scmp.ne.s32.totalorder %s49, %s51
    %p58 = scmp.eq.s32.totalorder %s20, 1
    %p59 = por %p57, %p58
    %p60 = scmp.ne.s32.totalorder %s51, %s52
    %p61 = scmp.eq.s32.totalorder %s20, 0
    %p62 = por %p60, %p61
    %p63 = scmp.ne.s32.totalorder %s51, %s52
    %p64 = scmp.eq.s32.totalorder %s21, 1
    %p65 = por %p63, %p64
    %p67 = scmp.ne.s32.totalorder %s52, %s66
    %p68 = scmp.eq.s32.totalorder %s21, 0
    %p69 = por %p67, %p68
    %s71 = sadd.s32 %s70, 1
    %p74 = scmp.eq.s32.totalorder %s15, 1
    %p75 = scmp.ne.s32.totalorder %s70, %s72
    %p76 = scmp.eq.s32.totalorder %s15, 0
    %p77 = por %p75, %p76
    %p78 = scmp.ne.s32.totalorder %s70, %s72
    %p79 = scmp.eq.s32.totalorder %s20, 1
    %p80 = por %p78, %p79
    %p81 = scmp.ne.s32.totalorder %s72, %s73
    %p82 = scmp.eq.s32.totalorder %s20, 0
    %p83 = por %p81, %p82
    %p84 = scmp.ne.s32.totalorder %s72, %s73
    %p85 = scmp.eq.s32.totalorder %s21, 1
    %p86 = por %p84, %p85
    %p88 = scmp.ne.s32.totalorder %s73, %s87
    %p89 = scmp.eq.s32.totalorder %s21, 0
    %p90 = por %p88, %p89
    %s92 = sadd.s32 %s91, 1
    %p95 = scmp.eq.s32.totalorder %s15, 1
    %p96 = scmp.ne.s32.totalorder %s91, %s93
    %p97 = scmp.eq.s32.totalorder %s15, 0
    %p98 = por %p96, %p97
    %p99 = scmp.ne.s32.totalorder %s91, %s93
    %p100 = scmp.eq.s32.totalorder %s20, 1
    %p101 = por %p99, %p100
    %p102 = scmp.ne.s32.totalorder %s93, %s94
    %p103 = scmp.eq.s32.totalorder %s20, 0
    %p104 = por %p102, %p103
    %p105 = scmp.ne.s32.totalorder %s93, %s94
    %p106 = scmp.eq.s32.totalorder %s21, 1
    %p107 = por %p105, %p106
    %p109 = scmp.ne.s32.totalorder %s94, %s108
    %p110 = scmp.eq.s32.totalorder %s21, 0
    %p111 = por %p109, %p110
    %s113 = sadd.s32 %s112, 1
    %p116 = scmp.eq.s32.totalorder %s15, 1
    %p117 = scmp.ne.s32.totalorder %s112, %s114
    %p118 = scmp.eq.s32.totalorder %s15, 0
    %p119 = por %p117, %p118
    %p120 = scmp.ne.s32.totalorder %s112, %s114
    %p121 = scmp.eq.s32.totalorder %s20, 1
    %p122 = por %p120, %p121
    %p123 = scmp.ne.s32.totalorder %s114, %s115
    %p124 = scmp.eq.s32.totalorder %s20, 0
    %p125 = por %p123, %p124
    %p126 = scmp.ne.s32.totalorder %s114, %s115
    %p127 = scmp.eq.s32.totalorder %s21, 1
    %p128 = por %p126, %p127
    %p130 = scmp.ne.s32.totalorder %s115, %s129
    %p131 = scmp.eq.s32.totalorder %s21, 0
    %p132 = por %p130, %p131
    %s134 = sadd.s32 %s133, 1
    %p137 = scmp.eq.s32.totalorder %s15, 1
    %p138 = scmp.ne.s32.totalorder %s133, %s135
    %p139 = scmp.eq.s32.totalorder %s15, 0
    %p140 = por %p138, %p139
    %p141 = scmp.ne.s32.totalorder %s133, %s135
    %p142 = scmp.eq.s32.totalorder %s20, 1
    %p143 = por %p141, %p142
    %p144 = scmp.ne.s32.totalorder %s135, %s136
    %p145 = scmp.eq.s32.totalorder %s20, 0
    %p146 = por %p144, %p145
    %p147 = scmp.ne.s32.totalorder %s135, %s136
    %p148 = scmp.eq.s32.totalorder %s21, 1
    %p149 = por %p147, %p148
    %p151 = scmp.ne.s32.totalorder %s136, %s150
    %p152 = scmp.eq.s32.totalorder %s21, 0
    %p153 = por %p151, %p152
    %s155 = sadd.s32 %s154, 1
    %p158 = scmp.eq.s32.totalorder %s15, 1
    %p159 = scmp.ne.s32.totalorder %s154, %s156
    %p160 = scmp.eq.s32.totalorder %s15, 0
    %p161 = por %p159, %p160
    %p162 = scmp.ne.s32.totalorder %s154, %s156
    %p163 = scmp.eq.s32.totalorder %s20, 1
    %p164 = por %p162, %p163
    %p165 = scmp.ne.s32.totalorder %s156, %s157
    %p166 = scmp.eq.s32.totalorder %s20, 0
    %p167 = por %p165, %p166
    %p168 = scmp.ne.s32.totalorder %s156, %s157
    %p169 = scmp.eq.s32.totalorder %s21, 1
    %p170 = por %p168, %p169
    %p172 = scmp.ne.s32.totalorder %s157, %s171
    %p173 = scmp.eq.s32.totalorder %s21, 0
    %p174 = por %p172, %p173
    %s176 = sadd.s32 %s175, 1
    %p179 = scmp.eq.s32.totalorder %s15, 1
    %p180 = scmp.ne.s32.totalorder %s175, %s177
    %p181 = scmp.eq.s32.totalorder %s15, 0
    %p182 = por %p180, %p181
    %p183 = scmp.ne.s32.totalorder %s175, %s177
    %p184 = scmp.eq.s32.totalorder %s20, 1
    %p185 = por %p183, %p184
    %p186 = scmp.ne.s32.totalorder %s177, %s178
    %p187 = scmp.eq.s32.totalorder %s20, 0
    %p188 = por %p186, %p187
    %p189 = scmp.ne.s32.totalorder %s177, %s178
    %p190 = scmp.eq.s32.totalorder %s21, 1
    %p191 = por %p189, %p190
    %p193 = scmp.ne.s32.totalorder %s178, %s192
    %p194 = scmp.eq.s32.totalorder %s21, 0
    %p195 = por %p193, %p194
    %s197 = sadd.s32 %s196, 1
    %p200 = scmp.eq.s32.totalorder %s15, 1
    %p201 = scmp.ne.s32.totalorder %s196, %s198
    %p202 = scmp.eq.s32.totalorder %s15, 0
    %p203 = por %p201, %p202
    %p204 = scmp.ne.s32.totalorder %s196, %s198
    %p205 = scmp.eq.s32.totalorder %s20, 1
    %p206 = por %p204, %p205
    %p207 = scmp.ne.s32.totalorder %s198, %s199
    %p208 = scmp.eq.s32.totalorder %s20, 0
    %p209 = por %p207, %p208
    %p210 = scmp.ne.s32.totalorder %s198, %s199
    %p211 = scmp.eq.s32.totalorder %s21, 1
    %p212 = por %p210, %p211
    %p214 = scmp.ne.s32.totalorder %s199, %s213
    %p215 = scmp.eq.s32.totalorder %s21, 0
    %p216 = por %p214, %p215
    %s217 = ssub.s32 %s15, %s22
    %p218 = scmp.eq.s32.totalorder %s217, 0
    %s220 = sadd.s32 %s219, 1
    %s221 = scalar_select %p218, %s219, %s220
    %p224 = pneg %p218
    %p225 = scmp.eq.s32.totalorder %s15, 1
    %p226 = por %p224, %p225
    %p227 = scmp.ne.s32.totalorder %s219, %s222
    %p228 = scmp.eq.s32.totalorder %s15, 0
    %p229 = por %p227, %p228
    %p230 = scmp.ne.s32.totalorder %s219, %s222
    %p231 = scmp.eq.s32.totalorder %s20, 1
    %p232 = por %p230, %p231
    %p233 = scmp.ne.s32.totalorder %s222, %s223
    %p234 = scmp.eq.s32.totalorder %s20, 0
    %p235 = por %p233, %p234
    %p236 = scmp.ne.s32.totalorder %s222, %s223
    %p237 = scmp.eq.s32.totalorder %s21, 1
    %p238 = por %p236, %p237
    %p240 = scmp.ne.s32.totalorder %s223, %s239
    %p241 = scmp.eq.s32.totalorder %s21, 0
    %p242 = por %p240, %p241
    %p243 = scmp.le.s32.totalorder 1, %s15
    %p244 = scmp.lt.s32.totalorder %s15, 3
    %p245 = pnand %p243, %p244
    %p246 = pneg %p245
    // Predicated region
    $region9: #{_lambda_.10} parent=5 // pred_check
      _
    $region10: #{_lambda_.10} parent=5 // pred_check_branch
      %248 = sbr.rel (%p245) target = $region12
    $region11: #{_lambda_.10} parent=5 // pred_region
      %s249 = ssub.s32 %s15, 1
      // Predicated region
      $region13: #{_lambda_.10} parent=11 // pred_check
        %p250 = pneg %p62
      $region14: #{_lambda_.10} parent=11 // pred_check_branch
        %252 = sbr.rel (%p250) target = $region16
      $region15: #{_lambda_.10} parent=11 // pred_region
        _
      $region16: #{_lambda_.10} parent=11 // pred_fallthru
        _
      // Predicated region
      $region17: #{_lambda_.10} parent=11 // pred_check
        %p253 = pneg %p83
      $region18: #{_lambda_.10} parent=11 // pred_check_branch
        %255 = sbr.rel (%p253) target = $region20
      $region19: #{_lambda_.10} parent=11 // pred_region
        _
      $region20: #{_lambda_.10} parent=11 // pred_fallthru
        _
      // Predicated region
      $region21: #{_lambda_.10} parent=11 // pred_check
        %p256 = pneg %p104
      $region22: #{_lambda_.10} parent=11 // pred_check_branch
        %258 = sbr.rel (%p256) target = $region24
      $region23: #{_lambda_.10} parent=11 // pred_region
        _
      $region24: #{_lambda_.10} parent=11 // pred_fallthru
        _
      // Predicated region
      $region25: #{_lambda_.10} parent=11 // pred_check
        %p259 = pneg %p125
      $region26: #{_lambda_.10} parent=11 // pred_check_branch
        %261 = sbr.rel (%p259) target = $region28
      $region27: #{_lambda_.10} parent=11 // pred_region
        _
      $region28: #{_lambda_.10} parent=11 // pred_fallthru
        _
      // Predicated region
      $region29: #{_lambda_.10} parent=11 // pred_check
        %p262 = pneg %p146
      $region30: #{_lambda_.10} parent=11 // pred_check_branch
        %264 = sbr.rel (%p262) target = $region32
      $region31: #{_lambda_.10} parent=11 // pred_region
        _
      $region32: #{_lambda_.10} parent=11 // pred_fallthru
        _
      // Predicated region
      $region33: #{_lambda_.10} parent=11 // pred_check
        %p265 = pneg %p167
      $region34: #{_lambda_.10} parent=11 // pred_check_branch
        %267 = sbr.rel (%p265) target = $region36
      $region35: #{_lambda_.10} parent=11 // pred_region
        _
      $region36: #{_lambda_.10} parent=11 // pred_fallthru
        _
      // Predicated region
      $region37: #{_lambda_.10} parent=11 // pred_check
        %p268 = pneg %p188
      $region38: #{_lambda_.10} parent=11 // pred_check_branch
        %270 = sbr.rel (%p268) target = $region40
      $region39: #{_lambda_.10} parent=11 // pred_region
        _
      $region40: #{_lambda_.10} parent=11 // pred_fallthru
        _
      // Predicated region
      $region41: #{_lambda_.10} parent=11 // pred_check
        %p271 = pneg %p209
      $region42: #{_lambda_.10} parent=11 // pred_check_branch
        %273 = sbr.rel (%p271) target = $region44
      $region43: #{_lambda_.10} parent=11 // pred_region
        _
      $region44: #{_lambda_.10} parent=11 // pred_fallthru
        _
    $region12: #{_lambda_.10} parent=5 // pred_fallthru
      _
    %p274 = scmp.lt.s32.totalorder %s15, 2
    // Predicated region
    $region45: #{_lambda_.10} parent=5 // pred_check
      %p275 = pneg %p274
    $region46: #{_lambda_.10} parent=5 // pred_check_branch
      %277 = sbr.rel (%p275) target = $region48
    $region47: #{_lambda_.10} parent=5 // pred_region
      // Predicated region
      $region49: #{_lambda_.10} parent=47 // pred_check
        %p278 = pneg %p35
      $region50: #{_lambda_.10} parent=47 // pred_check_branch
        %280 = sbr.rel (%p278) target = $region52
      $region51: #{_lambda_.10} parent=47 // pred_region
        %p281 = scmp.lt.s32.totalorder %s15, 1
        %s282 = scalar_select %p281, %s15, 1
        %s283 = smul.addr %s282, 4
        %s284 = smul.addr %s283, 8
        %s285 = scalar_lea.vmem %s0, %s284
      $region52: #{_lambda_.10} parent=47 // pred_fallthru
        _
    $region48: #{_lambda_.10} parent=5 // pred_fallthru
      _
    %p286 = scmp.le.s32.totalorder 1, %s15
    %p287 = scmp.lt.s32.totalorder %s15, 3
    %p288 = pnand %p286, %p287
    %p289 = pneg %p288
    // Predicated region
    $region53: #{_lambda_.10} parent=5 // pred_check
      _
    $region54: #{_lambda_.10} parent=5 // pred_check_branch
      %291 = sbr.rel (%p288) target = $region56
    $region55: #{_lambda_.10} parent=5 // pred_region
      %s292 = ssub.s32 %s15, 1
      %p293 = scmp.lt.s32.totalorder %s20, 1
      %s294 = scalar_select %p293, %s20, 1
      %s295 = smul.addr %s294, 4
      %s296 = smul.addr %s295, 8
      %s297 = scalar_lea.vmem %s0, %s296
      %p298 = pneg %p41
      %p299 = pneg %p38
      %p300 = pneg %p62
      %p301 = pneg %p59
      %p302 = pneg %p83
      %p303 = pneg %p80
      %p304 = pneg %p104
      %p305 = pneg %p101
      %p306 = pneg %p125
      %p307 = pneg %p122
      %p308 = pneg %p146
      %p309 = pneg %p143
      %p310 = pneg %p167
      %p311 = pneg %p164
      %p312 = pneg %p188
      %p313 = pneg %p185
      %p314 = pneg %p209
      %p315 = pneg %p206
      %p316 = pneg %p235
      %p317 = pneg %p232
      %p318 = scmp.lt.s32.totalorder %s20, 1
      %s319 = scalar_select %p318, %s20, 1
      %s320 = smul.addr %s319, 4
      %s321 = smul.addr %s320, 8
      %s322 = scalar_lea.vmem %s9, %s321
      %p323 = scmp.lt.s32.totalorder %s20, 1
      %s324 = scalar_select %p323, %s20, 1
      %s325 = smul.addr %s324, 4
      %s326 = smul.addr %s325, 8
      %s327 = scalar_lea.vmem %s0, %s326
      %p328 = scmp.lt.s32.totalorder %s20, 1
      %s329 = scalar_select %p328, %s20, 1
      %s330 = smul.addr %s329, 4
      %s331 = smul.addr %s330, 8
      %s332 = scalar_lea.vmem %s9, %s331
      %v333 = vld [vmem:[%s327] sm:$0xff]
      %v334 = vld [vmem:[%s327 + $0x8] sm:$0xff]
      %v335 = vld [vmem:[%s327 + $0x10] sm:$0xff]
      %v336 = vld [vmem:[%s327 + $0x18] sm:$0xff]
      %v337 = vld [vmem:[%s1] sm:$0xff]
      %v338 = vld [vmem:[%s1 + $0x8] sm:$0xff]
      %v339 = vld [vmem:[%s1 + $0x10] sm:$0xff]
      %v340 = vld [vmem:[%s1 + $0x18] sm:$0xff]
      %v341 = vld [vmem:[%s1 + $0x20] sm:$0xff]
      %v342 = vld [vmem:[%s1 + $0x28] sm:$0xff]
      %v343 = vld [vmem:[%s1 + $0x30] sm:$0xff]
      %v344 = vld [vmem:[%s1 + $0x38] sm:$0xff]
      %v345 = vld [vmem:[%s1 + $0x40] sm:$0xff]
      %v346 = vld [vmem:[%s1 + $0x48] sm:$0xff]
      %v347 = vld [vmem:[%s1 + $0x50] sm:$0xff]
      %v348 = vld [vmem:[%s1 + $0x58] sm:$0xff]
      %v349 = vld [vmem:[%s1 + $0x60] sm:$0xff]
      %v350 = vld [vmem:[%s1 + $0x68] sm:$0xff]
      %v351 = vld [vmem:[%s1 + $0x70] sm:$0xff]
      %v352 = vld [vmem:[%s1 + $0x78] sm:$0xff]
      %v353 = vld [vmem:[%s1 + $0x80] sm:$0xff]
      %v354 = vld [vmem:[%s1 + $0x88] sm:$0xff]
      %v355 = vld [vmem:[%s1 + $0x90] sm:$0xff]
      %v356 = vld [vmem:[%s1 + $0x98] sm:$0xff]
      %v357 = vld [vmem:[%s1 + $0xa0] sm:$0xff]
      %v358 = vld [vmem:[%s1 + $0xa8] sm:$0xff]
      %v359 = vld [vmem:[%s1 + $0xb0] sm:$0xff]
      %v360 = vld [vmem:[%s1 + $0xb8] sm:$0xff]
      %v361 = vld [vmem:[%s1 + $0xc0] sm:$0xff]
      %v362 = vld [vmem:[%s1 + $0xc8] sm:$0xff]
      %v363 = vld [vmem:[%s1 + $0xd0] sm:$0xff]
      %v364 = vld [vmem:[%s1 + $0xd8] sm:$0xff]
      %v365 = vld [vmem:[%s1 + $0xe0] sm:$0xff]
      %v366 = vld [vmem:[%s1 + $0xe8] sm:$0xff]
      %v367 = vld [vmem:[%s1 + $0xf0] sm:$0xff]
      %v368 = vld [vmem:[%s1 + $0xf8] sm:$0xff]
      %369 = vmatprep.subr.mxu0 0.0
      %370 = vmatpush1.msra.mxu0 %v337
      %371 = vmatprep.subr.mxu0 0.0
      %372 = vmatpush1.msra.mxu0 %v338
      %373 = vmatprep.subr.mxu0 0.0
      %374 = vmatpush1.msra.mxu0 %v339
      %375 = vmatprep.subr.mxu0 0.0
      %376 = vmatpush1.msra.mxu0 %v340
      %377 = vmatprep.subr.mxu0 0.0
      %378 = vmatpush1.msra.mxu0 %v341
      %379 = vmatprep.subr.mxu0 0.0
      %380 = vmatpush1.msra.mxu0 %v342
      %381 = vmatprep.subr.mxu0 0.0
      %382 = vmatpush1.msra.mxu0 %v343
      %383 = vmatprep.subr.mxu0 0.0
      %384 = vmatpush1.msra.mxu0 %v344
      %385 = vmatprep.subr.mxu0 0.0
      %386 = vmatpush1.msra.mxu0 %v345
      %387 = vmatprep.subr.mxu0 0.0
      %388 = vmatpush1.msra.mxu0 %v346
      %389 = vmatprep.subr.mxu0 0.0
      %390 = vmatpush1.msra.mxu0 %v347
      %391 = vmatprep.subr.mxu0 0.0
      %392 = vmatpush1.msra.mxu0 %v348
      %393 = vmatprep.subr.mxu0 0.0
      %394 = vmatpush1.msra.mxu0 %v349
      %395 = vmatprep.subr.mxu0 0.0
      %396 = vmatpush1.msra.mxu0 %v350
      %397 = vmatprep.subr.mxu0 0.0
      %398 = vmatpush1.msra.mxu0 %v351
      %399 = vmatprep.subr.mxu0 0.0
      %400 = vmatpush1.msra.mxu0 %v352
      %401 = vmatprep.subr.mxu0 0.0
      %402 = vmatpush1.msra.mxu0 %v353
      %403 = vmatprep.subr.mxu0 0.0
      %404 = vmatpush1.msra.mxu0 %v354
      %405 = vmatprep.subr.mxu0 0.0
      %406 = vmatpush1.msra.mxu0 %v355
      %407 = vmatprep.subr.mxu0 0.0
      %408 = vmatpush1.msra.mxu0 %v356
      %409 = vmatprep.subr.mxu0 0.0
      %410 = vmatpush1.msra.mxu0 %v357
      %411 = vmatprep.subr.mxu0 0.0
      %412 = vmatpush1.msra.mxu0 %v358
      %413 = vmatprep.subr.mxu0 0.0
      %414 = vmatpush1.msra.mxu0 %v359
      %415 = vmatprep.subr.mxu0 0.0
      %416 = vmatpush1.msra.mxu0 %v360
      %417 = vmatprep.subr.mxu0 0.0
      %418 = vmatpush1.msra.mxu0 %v361
      %419 = vmatprep.subr.mxu0 0.0
      %420 = vmatpush1.msra.mxu0 %v362
      %421 = vmatprep.subr.mxu0 0.0
      %422 = vmatpush1.msra.mxu0 %v363
      %423 = vmatprep.subr.mxu0 0.0
      %424 = vmatpush1.msra.mxu0 %v364
      %425 = vmatprep.subr.mxu0 0.0
      %426 = vmatpush1.msra.mxu0 %v365
      %427 = vmatprep.subr.mxu0 0.0
      %428 = vmatpush1.msra.mxu0 %v366
      %429 = vmatprep.subr.mxu0 0.0
      %430 = vmatpush1.msra.mxu0 %v367
      %431 = vmatprep.subr.mxu0 0.0
      %432 = vmatpush1.msra.mxu0 %v368
      %433 = vmatprep.mubr.f32.mxu0 %v334
      %434 = vmatmul.mubr.f32.gmra.mrb[0].mxu0 %v333
      %v435 = vpop.f32.mrb[0].mxu0
      %v436 = vadd.f32 0.0, %v435
      %v437 = vpop.f32.mrb[0].mxu0
      %438 = vmatprep.mubr.f32.mxu0 %v336
      %439 = vmatmul.mubr.f32.gmra.mrb[0].mxu0 %v335
      %v440 = vpop.f32.mrb[0].mxu0
      %v441 = vadd.f32 0.0, %v440
      %v442 = vpop.f32.mrb[0].mxu0
      %443 = vdwg.mxu0
      %v444 = vld [vmem:[%s2] sm:$0xff]
      %v445 = vld [vmem:[%s2 + $0x8] sm:$0xff]
      %v446 = vld [vmem:[%s2 + $0x10] sm:$0xff]
      %v447 = vld [vmem:[%s2 + $0x18] sm:$0xff]
      %v448 = vld [vmem:[%s2 + $0x20] sm:$0xff]
      %v449 = vld [vmem:[%s2 + $0x28] sm:$0xff]
      %v450 = vld [vmem:[%s2 + $0x30] sm:$0xff]
      %v451 = vld [vmem:[%s2 + $0x38] sm:$0xff]
      %v452 = vld [vmem:[%s2 + $0x40] sm:$0xff]
      %v453 = vld [vmem:[%s2 + $0x48] sm:$0xff]
      %v454 = vld [vmem:[%s2 + $0x50] sm:$0xff]
      %v455 = vld [vmem:[%s2 + $0x58] sm:$0xff]
      %v456 = vld [vmem:[%s2 + $0x60] sm:$0xff]
      %v457 = vld [vmem:[%s2 + $0x68] sm:$0xff]
      %v458 = vld [vmem:[%s2 + $0x70] sm:$0xff]
      %v459 = vld [vmem:[%s2 + $0x78] sm:$0xff]
      %v460 = vld [vmem:[%s2 + $0x80] sm:$0xff]
      %v461 = vld [vmem:[%s2 + $0x88] sm:$0xff]
      %v462 = vld [vmem:[%s2 + $0x90] sm:$0xff]
      %v463 = vld [vmem:[%s2 + $0x98] sm:$0xff]
      %v464 = vld [vmem:[%s2 + $0xa0] sm:$0xff]
      %v465 = vld [vmem:[%s2 + $0xa8] sm:$0xff]
      %v466 = vld [vmem:[%s2 + $0xb0] sm:$0xff]
      %v467 = vld [vmem:[%s2 + $0xb8] sm:$0xff]
      %v468 = vld [vmem:[%s2 + $0xc0] sm:$0xff]
      %v469 = vld [vmem:[%s2 + $0xc8] sm:$0xff]
      %v470 = vld [vmem:[%s2 + $0xd0] sm:$0xff]
      %v471 = vld [vmem:[%s2 + $0xd8] sm:$0xff]
      %v472 = vld [vmem:[%s2 + $0xe0] sm:$0xff]
      %v473 = vld [vmem:[%s2 + $0xe8] sm:$0xff]
      %v474 = vld [vmem:[%s2 + $0xf0] sm:$0xff]
      %v475 = vld [vmem:[%s2 + $0xf8] sm:$0xff]
      %476 = vmatprep.subr.mxu0 0.0
      %477 = vmatpush1.msra.mxu0 %v444
      %478 = vmatprep.subr.mxu0 0.0
      %479 = vmatpush1.msra.mxu0 %v445
      %480 = vmatprep.subr.mxu0 0.0
      %481 = vmatpush1.msra.mxu0 %v446
      %482 = vmatprep.subr.mxu0 0.0
      %483 = vmatpush1.msra.mxu0 %v447
      %484 = vmatprep.subr.mxu0 0.0
      %485 = vmatpush1.msra.mxu0 %v448
      %486 = vmatprep.subr.mxu0 0.0
      %487 = vmatpush1.msra.mxu0 %v449
      %488 = vmatprep.subr.mxu0 0.0
      %489 = vmatpush1.msra.mxu0 %v450
      %490 = vmatprep.subr.mxu0 0.0
      %491 = vmatpush1.msra.mxu0 %v451
      %492 = vmatprep.subr.mxu0 0.0
      %493 = vmatpush1.msra.mxu0 %v452
      %494 = vmatprep.subr.mxu0 0.0
      %495 = vmatpush1.msra.mxu0 %v453
      %496 = vmatprep.subr.mxu0 0.0
      %497 = vmatpush1.msra.mxu0 %v454
      %498 = vmatprep.subr.mxu0 0.0
      %499 = vmatpush1.msra.mxu0 %v455
      %500 = vmatprep.subr.mxu0 0.0
      %501 = vmatpush1.msra.mxu0 %v456
      %502 = vmatprep.subr.mxu0 0.0
      %503 = vmatpush1.msra.mxu0 %v457
      %504 = vmatprep.subr.mxu0 0.0
      %505 = vmatpush1.msra.mxu0 %v458
      %506 = vmatprep.subr.mxu0 0.0
      %507 = vmatpush1.msra.mxu0 %v459
      %508 = vmatprep.subr.mxu0 0.0
      %509 = vmatpush1.msra.mxu0 %v460
      %510 = vmatprep.subr.mxu0 0.0
      %511 = vmatpush1.msra.mxu0 %v461
      %512 = vmatprep.subr.mxu0 0.0
      %513 = vmatpush1.msra.mxu0 %v462
      %514 = vmatprep.subr.mxu0 0.0
      %515 = vmatpush1.msra.mxu0 %v463
      %516 = vmatprep.subr.mxu0 0.0
      %517 = vmatpush1.msra.mxu0 %v464
      %518 = vmatprep.subr.mxu0 0.0
      %519 = vmatpush1.msra.mxu0 %v465
      %520 = vmatprep.subr.mxu0 0.0
      %521 = vmatpush1.msra.mxu0 %v466
      %522 = vmatprep.subr.mxu0 0.0
      %523 = vmatpush1.msra.mxu0 %v467
      %524 = vmatprep.subr.mxu0 0.0
      %525 = vmatpush1.msra.mxu0 %v468
      %526 = vmatprep.subr.mxu0 0.0
      %527 = vmatpush1.msra.mxu0 %v469
      %528 = vmatprep.subr.mxu0 0.0
      %529 = vmatpush1.msra.mxu0 %v470
      %530 = vmatprep.subr.mxu0 0.0
      %531 = vmatpush1.msra.mxu0 %v471
      %532 = vmatprep.subr.mxu0 0.0
      %533 = vmatpush1.msra.mxu0 %v472
      %534 = vmatprep.subr.mxu0 0.0
      %535 = vmatpush1.msra.mxu0 %v473
      %536 = vmatprep.subr.mxu0 0.0
      %537 = vmatpush1.msra.mxu0 %v474
      %538 = vmatprep.subr.mxu0 0.0
      %539 = vmatpush1.msra.mxu0 %v475
      %540 = vmatprep.mubr.f32.mxu0 %v334
      %541 = vmatmul.mubr.f32.gmra.mrb[0].mxu0 %v333
      %v542 = vpop.f32.mrb[0].mxu0
      %v543 = vadd.f32 0.0, %v542
      %v544 = vpop.f32.mrb[0].mxu0
      %545 = vmatprep.mubr.f32.mxu0 %v336
      %546 = vmatmul.mubr.f32.gmra.mrb[0].mxu0 %v335
      %v547 = vpop.f32.mrb[0].mxu0
      %v548 = vadd.f32 0.0, %v547
      %v549 = vpop.f32.mrb[0].mxu0
      %550 = vdwg.mxu0
      %v551 = vld [vmem:[%s3] sm:$0xff]
      %v552 = vld [vmem:[%s3 + $0x8] sm:$0xff]
      %v553 = vld [vmem:[%s4] sm:$0xff]
      %v554 = vld [vmem:[%s4 + $0x8] sm:$0xff]
      %v555 = vlaneseq
      %v556 = vshrl.u32 %v555, 7
      %v557 = vsub.s32 0, %v556
      %v558 = vrot.slane %v436, %v557
      %v559 = vmul.f32 %v558, %v551
      %v560 = vmul.f32 %v558, %v552
      %v561 = vadd.f32 %v559, 0.0
      %v562 = vadd.f32 %v560, 0.0
      %v563 = vlaneseq
      %v564 = vshrl.u32 %v563, 7
      %v565 = vsub.s32 0, %v564
      %v566 = vrot.slane %v543, %v565
      %v567 = vmul.f32 %v566, %v553
      %v568 = vmul.f32 %v566, %v554
      %v569 = vsub.f32 %v561, %v567
      %v570 = vsub.f32 %v562, %v568
      %v571 = vmul.f32 %v558, %v553
      %v572 = vmul.f32 %v558, %v554
      %v573 = vadd.f32 %v571, 0.0
      %v574 = vadd.f32 %v572, 0.0
      %v575 = vmul.f32 %v566, %v551
      %v576 = vmul.f32 %v566, %v552
      %v577 = vadd.f32 %v573, %v575
      %v578 = vadd.f32 %v574, %v576
      %s579 = scalar_lea.vmem %s3, 16
      %v580 = vld [vmem:[%s579] sm:$0xff]
      %v581 = vld [vmem:[%s579 + $0x8] sm:$0xff]
      %s582 = scalar_lea.vmem %s4, 16
      %v583 = vld [vmem:[%s582] sm:$0xff]
      %v584 = vld [vmem:[%s582 + $0x8] sm:$0xff]
      %v585 = vlaneseq
      %v586 = vshrl.u32 %v585, 7
      %v587 = vsub.s32 1, %v586
      %v588 = vrot.slane %v436, %v587
      %v589 = vmul.f32 %v588, %v580
      %v590 = vmul.f32 %v588, %v581
      %v591 = vadd.f32 %v569, %v589
      %v592 = vadd.f32 %v570, %v590
      %v593 = vlaneseq
      %v594 = vshrl.u32 %v593, 7
      %v595 = vsub.s32 1, %v594
      %v596 = vrot.slane %v543, %v595
      %v597 = vmul.f32 %v596, %v583
      %v598 = vmul.f32 %v596, %v584
      %v599 = vsub.f32 %v591, %v597
      %v600 = vsub.f32 %v592, %v598
      %v601 = vmul.f32 %v588, %v583
      %v602 = vmul.f32 %v588, %v584
      %v603 = vadd.f32 %v577, %v601
      %v604 = vadd.f32 %v578, %v602
      %v605 = vmul.f32 %v596, %v580
      %v606 = vmul.f32 %v596, %v581
      %v607 = vadd.f32 %v603, %v605
      %v608 = vadd.f32 %v604, %v606
      %s609 = scalar_lea.vmem %s3, 32
      %v610 = vld [vmem:[%s609] sm:$0xff]
      %v611 = vld [vmem:[%s609 + $0x8] sm:$0xff]
      %s612 = scalar_lea.vmem %s4, 32
      %v613 = vld [vmem:[%s612] sm:$0xff]
      %v614 = vld [vmem:[%s612 + $0x8] sm:$0xff]
      %v615 = vlaneseq
      %v616 = vshrl.u32 %v615, 7
      %v617 = vsub.s32 2, %v616
      %v618 = vrot.slane %v436, %v617
      %v619 = vmul.f32 %v618, %v610
      %v620 = vmul.f32 %v618, %v611
      %v621 = vadd.f32 %v599, %v619
      %v622 = vadd.f32 %v600, %v620
      %v623 = vlaneseq
      %v624 = vshrl.u32 %v623, 7
      %v625 = vsub.s32 2, %v624
      %v626 = vrot.slane %v543, %v625
      %v627 = vmul.f32 %v626, %v613
      %v628 = vmul.f32 %v626, %v614
      %v629 = vsub.f32 %v621, %v627
      %v630 = vsub.f32 %v622, %v628
      %v631 = vmul.f32 %v618, %v613
      %v632 = vmul.f32 %v618, %v614
      %v633 = vadd.f32 %v607, %v631
      %v634 = vadd.f32 %v608, %v632
      %v635 = vmul.f32 %v626, %v610
      %v636 = vmul.f32 %v626, %v611
      %v637 = vadd.f32 %v633, %v635
      %v638 = vadd.f32 %v634, %v636
      %s639 = scalar_lea.vmem %s3, 48
      %v640 = vld [vmem:[%s639] sm:$0xff]
      %v641 = vld [vmem:[%s639 + $0x8] sm:$0xff]
      %s642 = scalar_lea.vmem %s4, 48
      %v643 = vld [vmem:[%s642] sm:$0xff]
      %v644 = vld [vmem:[%s642 + $0x8] sm:$0xff]
      %v645 = vlaneseq
      %v646 = vshrl.u32 %v645, 7
      %v647 = vsub.s32 3, %v646
      %v648 = vrot.slane %v436, %v647
      %v649 = vmul.f32 %v648, %v640
      %v650 = vmul.f32 %v648, %v641
      %v651 = vadd.f32 %v629, %v649
      %v652 = vadd.f32 %v630, %v650
      %v653 = vlaneseq
      %v654 = vshrl.u32 %v653, 7
      %v655 = vsub.s32 3, %v654
      %v656 = vrot.slane %v543, %v655
      %v657 = vmul.f32 %v656, %v643
      %v658 = vmul.f32 %v656, %v644
      %v659 = vsub.f32 %v651, %v657
      %v660 = vsub.f32 %v652, %v658
      %v661 = vmul.f32 %v648, %v643
      %v662 = vmul.f32 %v648, %v644
      %v663 = vadd.f32 %v637, %v661
      %v664 = vadd.f32 %v638, %v662
      %v665 = vmul.f32 %v656, %v640
      %v666 = vmul.f32 %v656, %v641
      %v667 = vadd.f32 %v663, %v665
      %v668 = vadd.f32 %v664, %v666
      %s669 = scalar_lea.vmem %s3, 64
      %v670 = vld [vmem:[%s669] sm:$0xff]
      %v671 = vld [vmem:[%s669 + $0x8] sm:$0xff]
      %s672 = scalar_lea.vmem %s4, 64
      %v673 = vld [vmem:[%s672] sm:$0xff]
      %v674 = vld [vmem:[%s672 + $0x8] sm:$0xff]
      %v675 = vlaneseq
      %v676 = vshrl.u32 %v675, 7
      %v677 = vsub.s32 4, %v676
      %v678 = vrot.slane %v436, %v677
      %v679 = vmul.f32 %v678, %v670
      %v680 = vmul.f32 %v678, %v671
      %v681 = vadd.f32 %v659, %v679
      %v682 = vadd.f32 %v660, %v680
      %v683 = vlaneseq
      %v684 = vshrl.u32 %v683, 7
      %v685 = vsub.s32 4, %v684
      %v686 = vrot.slane %v543, %v685
      %v687 = vmul.f32 %v686, %v673
      %v688 = vmul.f32 %v686, %v674
      %v689 = vsub.f32 %v681, %v687
      %v690 = vsub.f32 %v682, %v688
      %v691 = vmul.f32 %v678, %v673
      %v692 = vmul.f32 %v678, %v674
      %v693 = vadd.f32 %v667, %v691
      %v694 = vadd.f32 %v668, %v692
      %v695 = vmul.f32 %v686, %v670
      %v696 = vmul.f32 %v686, %v671
      %v697 = vadd.f32 %v693, %v695
      %v698 = vadd.f32 %v694, %v696
      %s699 = scalar_lea.vmem %s3, 80
      %v700 = vld [vmem:[%s699] sm:$0xff]
      %v701 = vld [vmem:[%s699 + $0x8] sm:$0xff]
      %s702 = scalar_lea.vmem %s4, 80
      %v703 = vld [vmem:[%s702] sm:$0xff]
      %v704 = vld [vmem:[%s702 + $0x8] sm:$0xff]
      %v705 = vlaneseq
      %v706 = vshrl.u32 %v705, 7
      %v707 = vsub.s32 5, %v706
      %v708 = vrot.slane %v436, %v707
      %v709 = vmul.f32 %v708, %v700
      %v710 = vmul.f32 %v708, %v701
      %v711 = vadd.f32 %v689, %v709
      %v712 = vadd.f32 %v690, %v710
      %v713 = vlaneseq
      %v714 = vshrl.u32 %v713, 7
      %v715 = vsub.s32 5, %v714
      %v716 = vrot.slane %v543, %v715
      %v717 = vmul.f32 %v716, %v703
      %v718 = vmul.f32 %v716, %v704
      %v719 = vsub.f32 %v711, %v717
      %v720 = vsub.f32 %v712, %v718
      %v721 = vmul.f32 %v708, %v703
      %v722 = vmul.f32 %v708, %v704
      %v723 = vadd.f32 %v697, %v721
      %v724 = vadd.f32 %v698, %v722
      %v725 = vmul.f32 %v716, %v700
      %v726 = vmul.f32 %v716, %v701
      %v727 = vadd.f32 %v723, %v725
      %v728 = vadd.f32 %v724, %v726
      %s729 = scalar_lea.vmem %s3, 96
      %v730 = vld [vmem:[%s729] sm:$0xff]
      %v731 = vld [vmem:[%s729 + $0x8] sm:$0xff]
      %s732 = scalar_lea.vmem %s4, 96
      %v733 = vld [vmem:[%s732] sm:$0xff]
      %v734 = vld [vmem:[%s732 + $0x8] sm:$0xff]
      %v735 = vlaneseq
      %v736 = vshrl.u32 %v735, 7
      %v737 = vsub.s32 6, %v736
      %v738 = vrot.slane %v436, %v737
      %v739 = vmul.f32 %v738, %v730
      %v740 = vmul.f32 %v738, %v731
      %v741 = vadd.f32 %v719, %v739
      %v742 = vadd.f32 %v720, %v740
      %v743 = vlaneseq
      %v744 = vshrl.u32 %v743, 7
      %v745 = vsub.s32 6, %v744
      %v746 = vrot.slane %v543, %v745
      %v747 = vmul.f32 %v746, %v733
      %v748 = vmul.f32 %v746, %v734
      %v749 = vsub.f32 %v741, %v747
      %v750 = vsub.f32 %v742, %v748
      %v751 = vmul.f32 %v738, %v733
      %v752 = vmul.f32 %v738, %v734
      %v753 = vadd.f32 %v727, %v751
      %v754 = vadd.f32 %v728, %v752
      %v755 = vmul.f32 %v746, %v730
      %v756 = vmul.f32 %v746, %v731
      %v757 = vadd.f32 %v753, %v755
      %v758 = vadd.f32 %v754, %v756
      %s759 = scalar_lea.vmem %s3, 112
      %v760 = vld [vmem:[%s759] sm:$0xff]
      %v761 = vld [vmem:[%s759 + $0x8] sm:$0xff]
      %s762 = scalar_lea.vmem %s4, 112
      %v763 = vld [vmem:[%s762] sm:$0xff]
      %v764 = vld [vmem:[%s762 + $0x8] sm:$0xff]
      %v765 = vlaneseq
      %v766 = vshrl.u32 %v765, 7
      %v767 = vsub.s32 7, %v766
      %v768 = vrot.slane %v436, %v767
      %v769 = vmul.f32 %v768, %v760
      %v770 = vmul.f32 %v768, %v761
      %v771 = vadd.f32 %v749, %v769
      %v772 = vadd.f32 %v750, %v770
      %v773 = vlaneseq
      %v774 = vshrl.u32 %v773, 7
      %v775 = vsub.s32 7, %v774
      %v776 = vrot.slane %v543, %v775
      %v777 = vmul.f32 %v776, %v763
      %v778 = vmul.f32 %v776, %v764
      %v779 = vsub.f32 %v771, %v777
      %v780 = vsub.f32 %v772, %v778
      %v781 = vmul.f32 %v768, %v763
      %v782 = vmul.f32 %v768, %v764
      %v783 = vadd.f32 %v757, %v781
      %v784 = vadd.f32 %v758, %v782
      %v785 = vmul.f32 %v776, %v760
      %v786 = vmul.f32 %v776, %v761
      %v787 = vadd.f32 %v783, %v785
      %v788 = vadd.f32 %v784, %v786
      %s789 = scalar_lea.vmem %s3, 128
      %v790 = vld [vmem:[%s789] sm:$0xff]
      %v791 = vld [vmem:[%s789 + $0x8] sm:$0xff]
      %s792 = scalar_lea.vmem %s4, 128
      %v793 = vld [vmem:[%s792] sm:$0xff]
      %v794 = vld [vmem:[%s792 + $0x8] sm:$0xff]
      %v795 = vlaneseq
      %v796 = vshrl.u32 %v795, 7
      %v797 = vsub.s32 0, %v796
      %v798 = vrot.slane %v441, %v797
      %v799 = vmul.f32 %v798, %v790
      %v800 = vmul.f32 %v798, %v791
      %v801 = vadd.f32 %v779, %v799
      %v802 = vadd.f32 %v780, %v800
      %v803 = vlaneseq
      %v804 = vshrl.u32 %v803, 7
      %v805 = vsub.s32 0, %v804
      %v806 = vrot.slane %v548, %v805
      %v807 = vmul.f32 %v806, %v793
      %v808 = vmul.f32 %v806, %v794
      %v809 = vsub.f32 %v801, %v807
      %v810 = vsub.f32 %v802, %v808
      %v811 = vmul.f32 %v798, %v793
      %v812 = vmul.f32 %v798, %v794
      %v813 = vadd.f32 %v787, %v811
      %v814 = vadd.f32 %v788, %v812
      %v815 = vmul.f32 %v806, %v790
      %v816 = vmul.f32 %v806, %v791
      %v817 = vadd.f32 %v813, %v815
      %v818 = vadd.f32 %v814, %v816
      %s819 = scalar_lea.vmem %s3, 144
      %v820 = vld [vmem:[%s819] sm:$0xff]
      %v821 = vld [vmem:[%s819 + $0x8] sm:$0xff]
      %s822 = scalar_lea.vmem %s4, 144
      %v823 = vld [vmem:[%s822] sm:$0xff]
      %v824 = vld [vmem:[%s822 + $0x8] sm:$0xff]
      %v825 = vlaneseq
      %v826 = vshrl.u32 %v825, 7
      %v827 = vsub.s32 1, %v826
      %v828 = vrot.slane %v441, %v827
      %v829 = vmul.f32 %v828, %v820
      %v830 = vmul.f32 %v828, %v821
      %v831 = vadd.f32 %v809, %v829
      %v832 = vadd.f32 %v810, %v830
      %v833 = vlaneseq
      %v834 = vshrl.u32 %v833, 7
      %v835 = vsub.s32 1, %v834
      %v836 = vrot.slane %v548, %v835
      %v837 = vmul.f32 %v836, %v823
      %v838 = vmul.f32 %v836, %v824
      %v839 = vsub.f32 %v831, %v837
      %v840 = vsub.f32 %v832, %v838
      %v841 = vmul.f32 %v828, %v823
      %v842 = vmul.f32 %v828, %v824
      %v843 = vadd.f32 %v817, %v841
      %v844 = vadd.f32 %v818, %v842
      %v845 = vmul.f32 %v836, %v820
      %v846 = vmul.f32 %v836, %v821
      %v847 = vadd.f32 %v843, %v845
      %v848 = vadd.f32 %v844, %v846
      %s849 = scalar_lea.vmem %s3, 160
      %v850 = vld [vmem:[%s849] sm:$0xff]
      %v851 = vld [vmem:[%s849 + $0x8] sm:$0xff]
      %s852 = scalar_lea.vmem %s4, 160
      %v853 = vld [vmem:[%s852] sm:$0xff]
      %v854 = vld [vmem:[%s852 + $0x8] sm:$0xff]
      %v855 = vlaneseq
      %v856 = vshrl.u32 %v855, 7
      %v857 = vsub.s32 2, %v856
      %v858 = vrot.slane %v441, %v857
      %v859 = vmul.f32 %v858, %v850
      %v860 = vmul.f32 %v858, %v851
      %v861 = vadd.f32 %v839, %v859
      %v862 = vadd.f32 %v840, %v860
      %v863 = vlaneseq
      %v864 = vshrl.u32 %v863, 7
      %v865 = vsub.s32 2, %v864
      %v866 = vrot.slane %v548, %v865
      %v867 = vmul.f32 %v866, %v853
      %v868 = vmul.f32 %v866, %v854
      %v869 = vsub.f32 %v861, %v867
      %v870 = vsub.f32 %v862, %v868
      %v871 = vmul.f32 %v858, %v853
      %v872 = vmul.f32 %v858, %v854
      %v873 = vadd.f32 %v847, %v871
      %v874 = vadd.f32 %v848, %v872
      %v875 = vmul.f32 %v866, %v850
      %v876 = vmul.f32 %v866, %v851
      %v877 = vadd.f32 %v873, %v875
      %v878 = vadd.f32 %v874, %v876
      %s879 = scalar_lea.vmem %s3, 176
      %v880 = vld [vmem:[%s879] sm:$0xff]
      %v881 = vld [vmem:[%s879 + $0x8] sm:$0xff]
      %s882 = scalar_lea.vmem %s4, 176
      %v883 = vld [vmem:[%s882] sm:$0xff]
      %v884 = vld [vmem:[%s882 + $0x8] sm:$0xff]
      %v885 = vlaneseq
      %v886 = vshrl.u32 %v885, 7
      %v887 = vsub.s32 3, %v886
      %v888 = vrot.slane %v441, %v887
      %v889 = vmul.f32 %v888, %v880
      %v890 = vmul.f32 %v888, %v881
      %v891 = vadd.f32 %v869, %v889
      %v892 = vadd.f32 %v870, %v890
      %v893 = vlaneseq
      %v894 = vshrl.u32 %v893, 7
      %v895 = vsub.s32 3, %v894
      %v896 = vrot.slane %v548, %v895
      %v897 = vmul.f32 %v896, %v883
      %v898 = vmul.f32 %v896, %v884
      %v899 = vsub.f32 %v891, %v897
      %v900 = vsub.f32 %v892, %v898
      %v901 = vmul.f32 %v888, %v883
      %v902 = vmul.f32 %v888, %v884
      %v903 = vadd.f32 %v877, %v901
      %v904 = vadd.f32 %v878, %v902
      %v905 = vmul.f32 %v896, %v880
      %v906 = vmul.f32 %v896, %v881
      %v907 = vadd.f32 %v903, %v905
      %v908 = vadd.f32 %v904, %v906
      %s909 = scalar_lea.vmem %s3, 192
      %v910 = vld [vmem:[%s909] sm:$0xff]
      %v911 = vld [vmem:[%s909 + $0x8] sm:$0xff]
      %s912 = scalar_lea.vmem %s4, 192
      %v913 = vld [vmem:[%s912] sm:$0xff]
      %v914 = vld [vmem:[%s912 + $0x8] sm:$0xff]
      %v915 = vlaneseq
      %v916 = vshrl.u32 %v915, 7
      %v917 = vsub.s32 4, %v916
      %v918 = vrot.slane %v441, %v917
      %v919 = vmul.f32 %v918, %v910
      %v920 = vmul.f32 %v918, %v911
      %v921 = vadd.f32 %v899, %v919
      %v922 = vadd.f32 %v900, %v920
      %v923 = vlaneseq
      %v924 = vshrl.u32 %v923, 7
      %v925 = vsub.s32 4, %v924
      %v926 = vrot.slane %v548, %v925
      %v927 = vmul.f32 %v926, %v913
      %v928 = vmul.f32 %v926, %v914
      %v929 = vsub.f32 %v921, %v927
      %v930 = vsub.f32 %v922, %v928
      %v931 = vmul.f32 %v918, %v913
      %v932 = vmul.f32 %v918, %v914
      %v933 = vadd.f32 %v907, %v931
      %v934 = vadd.f32 %v908, %v932
      %v935 = vmul.f32 %v926, %v910
      %v936 = vmul.f32 %v926, %v911
      %v937 = vadd.f32 %v933, %v935
      %v938 = vadd.f32 %v934, %v936
      %s939 = scalar_lea.vmem %s3, 208
      %v940 = vld [vmem:[%s939] sm:$0xff]
      %v941 = vld [vmem:[%s939 + $0x8] sm:$0xff]
      %s942 = scalar_lea.vmem %s4, 208
      %v943 = vld [vmem:[%s942] sm:$0xff]
      %v944 = vld [vmem:[%s942 + $0x8] sm:$0xff]
      %v945 = vlaneseq
      %v946 = vshrl.u32 %v945, 7
      %v947 = vsub.s32 5, %v946
      %v948 = vrot.slane %v441, %v947
      %v949 = vmul.f32 %v948, %v940
      %v950 = vmul.f32 %v948, %v941
      %v951 = vadd.f32 %v929, %v949
      %v952 = vadd.f32 %v930, %v950
      %v953 = vlaneseq
      %v954 = vshrl.u32 %v953, 7
      %v955 = vsub.s32 5, %v954
      %v956 = vrot.slane %v548, %v955
      %v957 = vmul.f32 %v956, %v943
      %v958 = vmul.f32 %v956, %v944
      %v959 = vsub.f32 %v951, %v957
      %v960 = vsub.f32 %v952, %v958
      %v961 = vmul.f32 %v948, %v943
      %v962 = vmul.f32 %v948, %v944
      %v963 = vadd.f32 %v937, %v961
      %v964 = vadd.f32 %v938, %v962
      %v965 = vmul.f32 %v956, %v940
      %v966 = vmul.f32 %v956, %v941
      %v967 = vadd.f32 %v963, %v965
      %v968 = vadd.f32 %v964, %v966
      %s969 = scalar_lea.vmem %s3, 224
      %v970 = vld [vmem:[%s969] sm:$0xff]
      %v971 = vld [vmem:[%s969 + $0x8] sm:$0xff]
      %s972 = scalar_lea.vmem %s4, 224
      %v973 = vld [vmem:[%s972] sm:$0xff]
      %v974 = vld [vmem:[%s972 + $0x8] sm:$0xff]
      %v975 = vlaneseq
      %v976 = vshrl.u32 %v975, 7
      %v977 = vsub.s32 6, %v976
      %v978 = vrot.slane %v441, %v977
      %v979 = vmul.f32 %v978, %v970
      %v980 = vmul.f32 %v978, %v971
      %v981 = vadd.f32 %v959, %v979
      %v982 = vadd.f32 %v960, %v980
      %v983 = vlaneseq
      %v984 = vshrl.u32 %v983, 7
      %v985 = vsub.s32 6, %v984
      %v986 = vrot.slane %v548, %v985
      %v987 = vmul.f32 %v986, %v973
      %v988 = vmul.f32 %v986, %v974
      %v989 = vsub.f32 %v981, %v987
      %v990 = vsub.f32 %v982, %v988
      %v991 = vmul.f32 %v978, %v973
      %v992 = vmul.f32 %v978, %v974
      %v993 = vadd.f32 %v967, %v991
      %v994 = vadd.f32 %v968, %v992
      %v995 = vmul.f32 %v986, %v970
      %v996 = vmul.f32 %v986, %v971
      %v997 = vadd.f32 %v993, %v995
      %v998 = vadd.f32 %v994, %v996
      %s999 = scalar_lea.vmem %s3, 240
      %v1000 = vld [vmem:[%s999] sm:$0xff]
      %v1001 = vld [vmem:[%s999 + $0x8] sm:$0xff]
      %s1002 = scalar_lea.vmem %s4, 240
      %v1003 = vld [vmem:[%s1002] sm:$0xff]
      %v1004 = vld [vmem:[%s1002 + $0x8] sm:$0xff]
      %v1005 = vlaneseq
      %v1006 = vshrl.u32 %v1005, 7
      %v1007 = vsub.s32 7, %v1006
      %v1008 = vrot.slane %v441, %v1007
      %v1009 = vmul.f32 %v1008, %v1000
      %v1010 = vmul.f32 %v1008, %v1001
      %v1011 = vadd.f32 %v989, %v1009
      %v1012 = vadd.f32 %v990, %v1010
      %v1013 = vlaneseq
      %v1014 = vshrl.u32 %v1013, 7
      %v1015 = vsub.s32 7, %v1014
      %v1016 = vrot.slane %v548, %v1015
      %v1017 = vmul.f32 %v1016, %v1003
      %v1018 = vmul.f32 %v1016, %v1004
      %v1019 = vsub.f32 %v1011, %v1017
      %v1020 = vsub.f32 %v1012, %v1018
      %v1021 = vmul.f32 %v1008, %v1003
      %v1022 = vmul.f32 %v1008, %v1004
      %v1023 = vadd.f32 %v997, %v1021
      %v1024 = vadd.f32 %v998, %v1022
      %v1025 = vmul.f32 %v1016, %v1000
      %v1026 = vmul.f32 %v1016, %v1001
      %v1027 = vadd.f32 %v1023, %v1025
      %v1028 = vadd.f32 %v1024, %v1026
      %v1029 = vld [vmem:[%s5] sm:$0xff]
      %v1030 = vld [vmem:[%s5 + $0x8] sm:$0xff]
      %v1031 = vld [vmem:[%s5 + $0x10] sm:$0xff]
      %v1032 = vld [vmem:[%s5 + $0x18] sm:$0xff]
      %v1033 = vld [vmem:[%s5 + $0x20] sm:$0xff]
      %v1034 = vld [vmem:[%s5 + $0x28] sm:$0xff]
      %v1035 = vld [vmem:[%s5 + $0x30] sm:$0xff]
      %v1036 = vld [vmem:[%s5 + $0x38] sm:$0xff]
      %vm1037 = vcmask 261120
      %v1039 = vsel %vm1037, %v1019, 0
      %v1042 = vsel %vm1037, %v1020, 0
      %1044 = vmatprep.subr.mxu0 %v1030
      %1045 = vmatpush1.msra.mxu0 %v1029
      %1046 = vmatprep.subr.mxu0 %v1032
      %1047 = vmatpush1.msra.mxu0 %v1031
      %1048 = vmatprep.subr.mxu0 %v1034
      %1049 = vmatpush1.msra.mxu0 %v1033
      %1050 = vmatprep.subr.mxu0 %v1036
      %1051 = vmatpush1.msra.mxu0 %v1035
      %1052 = vmatprep.subr.mxu0 0.0
      %1053 = vmatpush1.msra.mxu0 0.0
      %1054 = vmatprep.subr.mxu0 0.0
      %1055 = vmatpush1.msra.mxu0 0.0
      %1056 = vmatprep.subr.mxu0 0.0
      %1057 = vmatpush1.msra.mxu0 0.0
      %1058 = vmatprep.subr.mxu0 0.0
      %1059 = vmatpush1.msra.mxu0 0.0
      %1060 = vmatprep.subr.mxu0 0.0
      %1061 = vmatpush1.msra.mxu0 0.0
      %1062 = vmatprep.subr.mxu0 0.0
      %1063 = vmatpush1.msra.mxu0 0.0
      %1064 = vmatprep.subr.mxu0 0.0
      %1065 = vmatpush1.msra.mxu0 0.0
      %1066 = vmatprep.subr.mxu0 0.0
      %1067 = vmatpush1.msra.mxu0 0.0
      %1068 = vmatprep.subr.mxu0 0.0
      %1069 = vmatpush1.msra.mxu0 0.0
      %1070 = vmatprep.subr.mxu0 0.0
      %1071 = vmatpush1.msra.mxu0 0.0
      %1072 = vmatprep.subr.mxu0 0.0
      %1073 = vmatpush1.msra.mxu0 0.0
      %1074 = vmatprep.subr.mxu0 0.0
      %1075 = vmatpush1.msra.mxu0 0.0
      %1076 = vmatprep.subr.mxu0 0.0
      %1077 = vmatpush1.msra.mxu0 0.0
      %1078 = vmatprep.subr.mxu0 0.0
      %1079 = vmatpush1.msra.mxu0 0.0
      %1080 = vmatprep.subr.mxu0 0.0
      %1081 = vmatpush1.msra.mxu0 0.0
      %1082 = vmatprep.subr.mxu0 0.0
      %1083 = vmatpush1.msra.mxu0 0.0
      %1084 = vmatprep.subr.mxu0 0.0
      %1085 = vmatpush1.msra.mxu0 0.0
      %1086 = vmatprep.subr.mxu0 0.0
      %1087 = vmatpush1.msra.mxu0 0.0
      %1088 = vmatprep.subr.mxu0 0.0
      %1089 = vmatpush1.msra.mxu0 0.0
      %1090 = vmatprep.subr.mxu0 0.0
      %1091 = vmatpush1.msra.mxu0 0.0
      %1092 = vmatprep.subr.mxu0 0.0
      %1093 = vmatpush1.msra.mxu0 0.0
      %1094 = vmatprep.subr.mxu0 0.0
      %1095 = vmatpush1.msra.mxu0 0.0
      %1096 = vmatprep.subr.mxu0 0.0
      %1097 = vmatpush1.msra.mxu0 0.0
      %1098 = vmatprep.subr.mxu0 0.0
      %1099 = vmatpush1.msra.mxu0 0.0
      %1100 = vmatprep.subr.mxu0 0.0
      %1101 = vmatpush1.msra.mxu0 0.0
      %1102 = vmatprep.subr.mxu0 0.0
      %1103 = vmatpush1.msra.mxu0 0.0
      %1104 = vmatprep.subr.mxu0 0.0
      %1105 = vmatpush1.msra.mxu0 0.0
      %1106 = vmatprep.subr.mxu0 0.0
      %1107 = vmatpush1.msra.mxu0 0.0
      %1108 = vmatprep.mubr.f32.mxu0 0.0
      %1109 = vmatmul.mubr.f32.gmra.mrb[0].mxu0 %v1039
      %v1110 = vpop.f32.mrb[0].mxu0
      %v1111 = vadd.f32 0.0, %v1110
      %v1112 = vpop.f32.mrb[0].mxu0
      %v1113 = vadd.f32 0.0, %v1112
      %1114 = vmatprep.mubr.f32.mxu0 0.0
      %1115 = vmatmul.mubr.f32.gmra.mrb[0].mxu0 %v1042
      %v1116 = vpop.f32.mrb[0].mxu0
      %v1117 = vadd.f32 0.0, %v1116
      %v1118 = vpop.f32.mrb[0].mxu0
      %v1119 = vadd.f32 0.0, %v1118
      %1120 = vdwg.mxu0
      %v1121 = vld [vmem:[%s6] sm:$0xff]
      %v1122 = vld [vmem:[%s6 + $0x8] sm:$0xff]
      %v1123 = vld [vmem:[%s6 + $0x10] sm:$0xff]
      %v1124 = vld [vmem:[%s6 + $0x18] sm:$0xff]
      %v1125 = vld [vmem:[%s6 + $0x20] sm:$0xff]
      %v1126 = vld [vmem:[%s6 + $0x28] sm:$0xff]
      %v1127 = vld [vmem:[%s6 + $0x30] sm:$0xff]
      %v1128 = vld [vmem:[%s6 + $0x38] sm:$0xff]
      %v1130 = vsel %vm1037, %v1027, 0
      %v1133 = vsel %vm1037, %v1028, 0
      %1135 = vmatprep.subr.mxu0 %v1122
      %1136 = vmatpush1.msra.mxu0 %v1121
      %1137 = vmatprep.subr.mxu0 %v1124
      %1138 = vmatpush1.msra.mxu0 %v1123
      %1139 = vmatprep.subr.mxu0 %v1126
      %1140 = vmatpush1.msra.mxu0 %v1125
      %1141 = vmatprep.subr.mxu0 %v1128
      %1142 = vmatpush1.msra.mxu0 %v1127
      %1143 = vmatprep.subr.mxu0 0.0
      %1144 = vmatpush1.msra.mxu0 0.0
      %1145 = vmatprep.subr.mxu0 0.0
      %1146 = vmatpush1.msra.mxu0 0.0
      %1147 = vmatprep.subr.mxu0 0.0
      %1148 = vmatpush1.msra.mxu0 0.0
      %1149 = vmatprep.subr.mxu0 0.0
      %1150 = vmatpush1.msra.mxu0 0.0
      %1151 = vmatprep.subr.mxu0 0.0
      %1152 = vmatpush1.msra.mxu0 0.0
      %1153 = vmatprep.subr.mxu0 0.0
      %1154 = vmatpush1.msra.mxu0 0.0
      %1155 = vmatprep.subr.mxu0 0.0
      %1156 = vmatpush1.msra.mxu0 0.0
      %1157 = vmatprep.subr.mxu0 0.0
      %1158 = vmatpush1.msra.mxu0 0.0
      %1159 = vmatprep.subr.mxu0 0.0
      %1160 = vmatpush1.msra.mxu0 0.0
      %1161 = vmatprep.subr.mxu0 0.0
      %1162 = vmatpush1.msra.mxu0 0.0
      %1163 = vmatprep.subr.mxu0 0.0
      %1164 = vmatpush1.msra.mxu0 0.0
      %1165 = vmatprep.subr.mxu0 0.0
      %1166 = vmatpush1.msra.mxu0 0.0
      %1167 = vmatprep.subr.mxu0 0.0
      %1168 = vmatpush1.msra.mxu0 0.0
      %1169 = vmatprep.subr.mxu0 0.0
      %1170 = vmatpush1.msra.mxu0 0.0
      %1171 = vmatprep.subr.mxu0 0.0
      %1172 = vmatpush1.msra.mxu0 0.0
      %1173 = vmatprep.subr.mxu0 0.0
      %1174 = vmatpush1.msra.mxu0 0.0
      %1175 = vmatprep.subr.mxu0 0.0
      %1176 = vmatpush1.msra.mxu0 0.0
      %1177 = vmatprep.subr.mxu0 0.0
      %1178 = vmatpush1.msra.mxu0 0.0
      %1179 = vmatprep.subr.mxu0 0.0
      %1180 = vmatpush1.msra.mxu0 0.0
      %1181 = vmatprep.subr.mxu0 0.0
      %1182 = vmatpush1.msra.mxu0 0.0
      %1183 = vmatprep.subr.mxu0 0.0
      %1184 = vmatpush1.msra.mxu0 0.0
      %1185 = vmatprep.subr.mxu0 0.0
      %1186 = vmatpush1.msra.mxu0 0.0
      %1187 = vmatprep.subr.mxu0 0.0
      %1188 = vmatpush1.msra.mxu0 0.0
      %1189 = vmatprep.subr.mxu0 0.0
      %1190 = vmatpush1.msra.mxu0 0.0
      %1191 = vmatprep.subr.mxu0 0.0
      %1192 = vmatpush1.msra.mxu0 0.0
      %1193 = vmatprep.subr.mxu0 0.0
      %1194 = vmatpush1.msra.mxu0 0.0
      %1195 = vmatprep.subr.mxu0 0.0
      %1196 = vmatpush1.msra.mxu0 0.0
      %1197 = vmatprep.subr.mxu0 0.0
      %1198 = vmatpush1.msra.mxu0 0.0
      %1199 = vmatprep.mubr.f32.mxu0 0.0
      %1200 = vmatmul.mubr.f32.gmra.mrb[0].mxu0 %v1130
      %v1201 = vpop.f32.mrb[0].mxu0
      %v1202 = vadd.f32 0.0, %v1201
      %v1203 = vpop.f32.mrb[0].mxu0
      %v1204 = vadd.f32 0.0, %v1203
      %1205 = vmatprep.mubr.f32.mxu0 0.0
      %1206 = vmatmul.mubr.f32.gmra.mrb[0].mxu0 %v1133
      %v1207 = vpop.f32.mrb[0].mxu0
      %v1208 = vadd.f32 0.0, %v1207
      %v1209 = vpop.f32.mrb[0].mxu0
      %v1210 = vadd.f32 0.0, %v1209
      %1211 = vdwg.mxu0
      %v1212 = vsub.f32 %v1111, %v1202
      %v1213 = vsub.f32 %v1113, %v1204
      %v1214 = vsub.f32 %v1117, %v1208
      %v1215 = vsub.f32 %v1119, %v1210
      %v1216 = vld [vmem:[%s7] sm:$0xff]
      %v1217 = vld [vmem:[%s7 + $0x8] sm:$0xff]
      %vm1218 = vcmask 130048
      %v1220 = vsel %vm1218, %v1216, 0
      %v1223 = vsel %vm1218, %v1217, 0
      %1225 = vmatprep.subr.mxu0 %v334
      %1226 = vmatpush1.msra.mxu0 %v333
      %1227 = vmatprep.subr.mxu0 %v336
      %1228 = vmatpush1.msra.mxu0 %v335
      %1229 = vmatprep.subr.mxu0 0.0
      %1230 = vmatpush1.msra.mxu0 0.0
      %1231 = vmatprep.subr.mxu0 0.0
      %1232 = vmatpush1.msra.mxu0 0.0
      %1233 = vmatprep.subr.mxu0 0.0
      %1234 = vmatpush1.msra.mxu0 0.0
      %1235 = vmatprep.subr.mxu0 0.0
      %1236 = vmatpush1.msra.mxu0 0.0
      %1237 = vmatprep.subr.mxu0 0.0
      %1238 = vmatpush1.msra.mxu0 0.0
      %1239 = vmatprep.subr.mxu0 0.0
      %1240 = vmatpush1.msra.mxu0 0.0
      %1241 = vmatprep.subr.mxu0 0.0
      %1242 = vmatpush1.msra.mxu0 0.0
      %1243 = vmatprep.subr.mxu0 0.0
      %1244 = vmatpush1.msra.mxu0 0.0
      %1245 = vmatprep.subr.mxu0 0.0
      %1246 = vmatpush1.msra.mxu0 0.0
      %1247 = vmatprep.subr.mxu0 0.0
      %1248 = vmatpush1.msra.mxu0 0.0
      %1249 = vmatprep.subr.mxu0 0.0
      %1250 = vmatpush1.msra.mxu0 0.0
      %1251 = vmatprep.subr.mxu0 0.0
      %1252 = vmatpush1.msra.mxu0 0.0
      %1253 = vmatprep.subr.mxu0 0.0
      %1254 = vmatpush1.msra.mxu0 0.0
      %1255 = vmatprep.subr.mxu0 0.0
      %1256 = vmatpush1.msra.mxu0 0.0
      %1257 = vmatprep.subr.mxu0 0.0
      %1258 = vmatpush1.msra.mxu0 0.0
      %1259 = vmatprep.subr.mxu0 0.0
      %1260 = vmatpush1.msra.mxu0 0.0
      %1261 = vmatprep.subr.mxu0 0.0
      %1262 = vmatpush1.msra.mxu0 0.0
      %1263 = vmatprep.subr.mxu0 0.0
      %1264 = vmatpush1.msra.mxu0 0.0
      %1265 = vmatprep.subr.mxu0 0.0
      %1266 = vmatpush1.msra.mxu0 0.0
      %1267 = vmatprep.subr.mxu0 0.0
      %1268 = vmatpush1.msra.mxu0 0.0
      %1269 = vmatprep.subr.mxu0 0.0
      %1270 = vmatpush1.msra.mxu0 0.0
      %1271 = vmatprep.subr.mxu0 0.0
      %1272 = vmatpush1.msra.mxu0 0.0
      %1273 = vmatprep.subr.mxu0 0.0
      %1274 = vmatpush1.msra.mxu0 0.0
      %1275 = vmatprep.subr.mxu0 0.0
      %1276 = vmatpush1.msra.mxu0 0.0
      %1277 = vmatprep.subr.mxu0 0.0
      %1278 = vmatpush1.msra.mxu0 0.0
      %1279 = vmatprep.subr.mxu0 0.0
      %1280 = vmatpush1.msra.mxu0 0.0
      %1281 = vmatprep.subr.mxu0 0.0
      %1282 = vmatpush1.msra.mxu0 0.0
      %1283 = vmatprep.subr.mxu0 0.0
      %1284 = vmatpush1.msra.mxu0 0.0
      %1285 = vmatprep.subr.mxu0 0.0
      %1286 = vmatpush1.msra.mxu0 0.0
      %1287 = vmatprep.subr.mxu0 0.0
      %1288 = vmatpush1.msra.mxu0 0.0
      %1289 = vmatprep.mubr.f32.mxu0 0.0
      %1290 = vmatmul.mubr.f32.gmra.mrb[0].mxu0 %v1220
      %v1291 = vpop.f32.mrb[0].mxu0
      %v1292 = vadd.f32 0.0, %v1291
      %v1293 = vpop.f32.mrb[0].mxu0
      %v1294 = vadd.f32 0.0, %v1293
      %1295 = vmatprep.mubr.f32.mxu0 0.0
      %1296 = vmatmul.mubr.f32.gmra.mrb[0].mxu0 %v1223
      %v1297 = vpop.f32.mrb[0].mxu0
      %v1298 = vadd.f32 0.0, %v1297
      %v1299 = vpop.f32.mrb[0].mxu0
      %v1300 = vadd.f32 0.0, %v1299
      %1301 = vdwg.mxu0
      %v1302 = vadd.f32 %v1212, %v1292
      %v1303 = vadd.f32 %v1213, %v1294
      %v1304 = vadd.f32 %v1214, %v1298
      %v1305 = vadd.f32 %v1215, %v1300
      %v1306 = vld [vmem:[%s8] sm:$0xff]
      %v1307 = vld [vmem:[%s8 + $0x8] sm:$0xff]
      %1309 = vset.pattern.permute.xlu0 0
      %1310 = vperm.xlu0 %1309, %v1306
      %v1311 = vpop.permute.xlu0 %1310
      %1314 = vset.pattern.permute.xlu0 0
      %1315 = vperm.xlu0 %1314, %v1307
      %v1316 = vpop.permute.xlu0 %1315
      %v1318 = vadd.f32 %v1302, %v1311
      %v1319 = vadd.f32 %v1303, %v1311
      %v1320 = vadd.f32 %v1304, %v1316
      %v1321 = vadd.f32 %v1305, %v1316
      %1322 = vst [vmem:[%s332] sm:$0xff] %v1318
      %1323 = vst [vmem:[%s332 + $0x8] sm:$0xff] %v1319
      %1324 = vst [vmem:[%s332 + $0x10] sm:$0xff] %v1320
      %1325 = vst [vmem:[%s332 + $0x18] sm:$0xff] %v1321
      %p1326 = scmp.lt.s32.totalorder %s20, 1
      %s1327 = scalar_select %p1326, %s20, 1
      %s1328 = smul.addr %s1327, 4
      %s1329 = smul.addr %s1328, 8
      %s1330 = scalar_lea.vmem %s9, %s1329
      // Predicated region
      $region57: #{_lambda_.10} parent=55 // pred_check
        %p1331 = pneg %p232
      $region58: #{_lambda_.10} parent=55 // pred_check_branch
        %1333 = sbr.rel (%p1331) target = $region60
      $region59: #{_lambda_.10} parent=55 // pred_region
        _
      $region60: #{_lambda_.10} parent=55 // pred_fallthru
        _
    $region56: #{_lambda_.10} parent=5 // pred_fallthru
      _
    %p1334 = scmp.le.s32.totalorder 2, %s15
    // Predicated region
    $region61: #{_lambda_.10} parent=5 // pred_check
      %p1335 = pneg %p1334
    $region62: #{_lambda_.10} parent=5 // pred_check_branch
      %1337 = sbr.rel (%p1335) target = $region64
    $region63: #{_lambda_.10} parent=5 // pred_region
      %s1338 = ssub.s32 %s15, 2
      // Predicated region
      $region65: #{_lambda_.10} parent=63 // pred_check
        %p1339 = pneg %p238
      $region66: #{_lambda_.10} parent=63 // pred_check_branch
        %1341 = sbr.rel (%p1339) target = $region68
      $region67: #{_lambda_.10} parent=63 // pred_region
        %p1342 = scmp.lt.s32.totalorder %s21, 1
        %s1343 = scalar_select %p1342, %s21, 1
        %s1344 = smul.addr %s1343, 4
        %s1345 = smul.addr %s1344, 8
        %s1346 = scalar_lea.vmem %s9, %s1345
      $region68: #{_lambda_.10} parent=63 // pred_fallthru
        _
    $region64: #{_lambda_.10} parent=5 // pred_fallthru
      _
  $region6: #{_lambda_.10} parent=0 // loop_footer
    %s19 = sadd.s32 1, %s15
  $region7: #{_lambda_.10} parent=0 // loop_footer_branch
    %14 = sbr.rel target = $region3
  $region8: #{_lambda_.10} parent=0 // loop_exit
    _

// kernel: _lambda_.11
$region0: #{_lambda_.11}
  #allocation0 [shape = 'u32[]', space=smem, size = 0x4, offset = 0x4, fixed_abs, tag = 'smem constant byte address 0x4 - core index']
  #allocation1 [shape = 'u32[144,128]{1,0:T(1,128)}', space=vmem, size = 0x12000, scoped, tag = 'internal scratch']
  %s0 = inlined_call_operand.vmem [shape: f32[2,16,256], index: 0, kind: input, shape index: {}]
  %s1 = inlined_call_operand.vmem [shape: f32[32,16], index: 1, kind: input, shape index: {}]
  %s2 = inlined_call_operand.vmem [shape: f32[32,1], index: 2, kind: input, shape index: {}]
  %s3 = inlined_call_operand.vmem [shape: f32[2,32], index: 3, kind: input, shape index: {}]
  %s4 = inlined_call_operand.vmem [shape: f32[2,1], index: 4, kind: input, shape index: {}]
  %s5 = inlined_call_operand.vmem [shape: f32[2,2,256], index: 5, kind: output, shape index: {}]
  %s6 = sld [smem:[#allocation0]]
  $region53: #{_lambda_.11} parent=0
    _
  %s8 = ssub.s32 1, %s6
  %s9 = scalar_select 0, %s8, %s6
  loop: start=0, step=1, limit=4
  $region2: #{_lambda_.11} parent=0 // loop_pre_header
    _
  $region3: #{_lambda_.11} parent=0 // loop_header
    %s11 = sphi 0, %s15
    %p12 = scmp.ge.s32.totalorder %s11, 4
    %s18 = sphi 0, %s30
    %s19 = sphi 0, %s26
    %s20 = sphi 0, %s18
    %s21 = sphi 0, %s19
    %s22 = sphi 0, %s20
    %s23 = sphi 0, %s21
    %s35 = sphi 0, %s37
    %s38 = sphi 0, %s35
    %s39 = sphi 0, %s38
    %s55 = sphi 0, %s39
    %s59 = sphi 0, %s59
    %s61 = sphi 0, %s59
    %s62 = sphi 0, %s61
    %s76 = sphi 0, %s62
    %s80 = sphi 0, %s80
    %s82 = sphi 0, %s80
    %s83 = sphi 0, %s82
    %s97 = sphi 0, %s83
    %s101 = sphi 0, %s101
    %s103 = sphi 0, %s101
    %s104 = sphi 0, %s103
    %s118 = sphi 0, %s104
    %s122 = sphi 0, %s122
    %s124 = sphi 0, %s122
    %s125 = sphi 0, %s124
    %s139 = sphi 0, %s125
    %s147 = sphi 0, %s149
    %s150 = sphi 0, %s147
    %s151 = sphi 0, %s150
    %s167 = sphi 0, %s151
  $region4: #{_lambda_.11} parent=0 // loop_header_branch
    %14 = sbr.rel (%p12) target = $region8
  $region5: #{_lambda_.11} parent=0 // loop_body
    %s16 = ssub.s32 %s11, 1
    %s17 = ssub.s32 %s11, 2
    %s24 = sadd.s32 1, %s19
    %p25 = scmp.ge.s32.totalorder %s24, 1
    %s26 = scalar_select %p25, 0, %s24
    %s27 = sadd.s32 1, %s18
    %s28 = scalar_select %p25, %s27, %s18
    %p29 = scmp.ge.s32.totalorder %s28, 2
    %s30 = scalar_select %p29, 0, %s28
    %s31 = ssub.s32 %s18, %s30
    %s32 = ssub.s32 %s19, %s26
    %s33 = sor.u32 %s31, %s32
    %p34 = scmp.eq.s32.totalorder %s33, 0
    %s36 = sadd.s32 %s35, 1
    %s37 = scalar_select %p34, %s35, %s36
    %p40 = pneg %p34
    %p41 = scmp.eq.s32.totalorder %s11, 1
    %p42 = por %p40, %p41
    %p43 = scmp.ne.s32.totalorder %s35, %s38
    %p44 = scmp.eq.s32.totalorder %s11, 0
    %p45 = por %p43, %p44
    %p46 = scmp.ne.s32.totalorder %s35, %s38
    %p47 = scmp.eq.s32.totalorder %s16, 1
    %p48 = por %p46, %p47
    %p49 = scmp.ne.s32.totalorder %s38, %s39
    %p50 = scmp.eq.s32.totalorder %s16, 0
    %p51 = por %p49, %p50
    %p52 = scmp.ne.s32.totalorder %s38, %s39
    %p53 = scmp.eq.s32.totalorder %s17, 1
    %p54 = por %p52, %p53
    %p56 = scmp.ne.s32.totalorder %s39, %s55
    %p57 = scmp.eq.s32.totalorder %s17, 0
    %p58 = por %p56, %p57
    %s60 = sadd.s32 %s59, 1
    %p63 = scmp.eq.s32.totalorder %s11, 1
    %p64 = scmp.ne.s32.totalorder %s59, %s61
    %p65 = scmp.eq.s32.totalorder %s11, 0
    %p66 = por %p64, %p65
    %p67 = scmp.ne.s32.totalorder %s59, %s61
    %p68 = scmp.eq.s32.totalorder %s16, 1
    %p69 = por %p67, %p68
    %p70 = scmp.ne.s32.totalorder %s61, %s62
    %p71 = scmp.eq.s32.totalorder %s16, 0
    %p72 = por %p70, %p71
    %p73 = scmp.ne.s32.totalorder %s61, %s62
    %p74 = scmp.eq.s32.totalorder %s17, 1
    %p75 = por %p73, %p74
    %p77 = scmp.ne.s32.totalorder %s62, %s76
    %p78 = scmp.eq.s32.totalorder %s17, 0
    %p79 = por %p77, %p78
    %s81 = sadd.s32 %s80, 1
    %p84 = scmp.eq.s32.totalorder %s11, 1
    %p85 = scmp.ne.s32.totalorder %s80, %s82
    %p86 = scmp.eq.s32.totalorder %s11, 0
    %p87 = por %p85, %p86
    %p88 = scmp.ne.s32.totalorder %s80, %s82
    %p89 = scmp.eq.s32.totalorder %s16, 1
    %p90 = por %p88, %p89
    %p91 = scmp.ne.s32.totalorder %s82, %s83
    %p92 = scmp.eq.s32.totalorder %s16, 0
    %p93 = por %p91, %p92
    %p94 = scmp.ne.s32.totalorder %s82, %s83
    %p95 = scmp.eq.s32.totalorder %s17, 1
    %p96 = por %p94, %p95
    %p98 = scmp.ne.s32.totalorder %s83, %s97
    %p99 = scmp.eq.s32.totalorder %s17, 0
    %p100 = por %p98, %p99
    %s102 = sadd.s32 %s101, 1
    %p105 = scmp.eq.s32.totalorder %s11, 1
    %p106 = scmp.ne.s32.totalorder %s101, %s103
    %p107 = scmp.eq.s32.totalorder %s11, 0
    %p108 = por %p106, %p107
    %p109 = scmp.ne.s32.totalorder %s101, %s103
    %p110 = scmp.eq.s32.totalorder %s16, 1
    %p111 = por %p109, %p110
    %p112 = scmp.ne.s32.totalorder %s103, %s104
    %p113 = scmp.eq.s32.totalorder %s16, 0
    %p114 = por %p112, %p113
    %p115 = scmp.ne.s32.totalorder %s103, %s104
    %p116 = scmp.eq.s32.totalorder %s17, 1
    %p117 = por %p115, %p116
    %p119 = scmp.ne.s32.totalorder %s104, %s118
    %p120 = scmp.eq.s32.totalorder %s17, 0
    %p121 = por %p119, %p120
    %s123 = sadd.s32 %s122, 1
    %p126 = scmp.eq.s32.totalorder %s11, 1
    %p127 = scmp.ne.s32.totalorder %s122, %s124
    %p128 = scmp.eq.s32.totalorder %s11, 0
    %p129 = por %p127, %p128
    %p130 = scmp.ne.s32.totalorder %s122, %s124
    %p131 = scmp.eq.s32.totalorder %s16, 1
    %p132 = por %p130, %p131
    %p133 = scmp.ne.s32.totalorder %s124, %s125
    %p134 = scmp.eq.s32.totalorder %s16, 0
    %p135 = por %p133, %p134
    %p136 = scmp.ne.s32.totalorder %s124, %s125
    %p137 = scmp.eq.s32.totalorder %s17, 1
    %p138 = por %p136, %p137
    %p140 = scmp.ne.s32.totalorder %s125, %s139
    %p141 = scmp.eq.s32.totalorder %s17, 0
    %p142 = por %p140, %p141
    %s143 = ssub.s32 %s18, %s30
    %s144 = ssub.s32 %s19, %s26
    %s145 = sor.u32 %s143, %s144
    %p146 = scmp.eq.s32.totalorder %s145, 0
    %s148 = sadd.s32 %s147, 1
    %s149 = scalar_select %p146, %s147, %s148
    %p152 = pneg %p146
    %p153 = scmp.eq.s32.totalorder %s11, 1
    %p154 = por %p152, %p153
    %p155 = scmp.ne.s32.totalorder %s147, %s150
    %p156 = scmp.eq.s32.totalorder %s11, 0
    %p157 = por %p155, %p156
    %p158 = scmp.ne.s32.totalorder %s147, %s150
    %p159 = scmp.eq.s32.totalorder %s16, 1
    %p160 = por %p158, %p159
    %p161 = scmp.ne.s32.totalorder %s150, %s151
    %p162 = scmp.eq.s32.totalorder %s16, 0
    %p163 = por %p161, %p162
    %p164 = scmp.ne.s32.totalorder %s150, %s151
    %p165 = scmp.eq.s32.totalorder %s17, 1
    %p166 = por %p164, %p165
    %p168 = scmp.ne.s32.totalorder %s151, %s167
    %p169 = scmp.eq.s32.totalorder %s17, 0
    %p170 = por %p168, %p169
    %p171 = scmp.le.s32.totalorder 1, %s11
    %p172 = scmp.lt.s32.totalorder %s11, 3
    %p173 = pnand %p171, %p172
    %p174 = pneg %p173
    // Predicated region
    $region9: #{_lambda_.11} parent=5 // pred_check
      _
    $region10: #{_lambda_.11} parent=5 // pred_check_branch
      %176 = sbr.rel (%p173) target = $region12
    $region11: #{_lambda_.11} parent=5 // pred_region
      %s177 = ssub.s32 %s11, 1
      // Predicated region
      $region13: #{_lambda_.11} parent=11 // pred_check
        %p178 = pneg %p72
      $region14: #{_lambda_.11} parent=11 // pred_check_branch
        %180 = sbr.rel (%p178) target = $region16
      $region15: #{_lambda_.11} parent=11 // pred_region
        _
      $region16: #{_lambda_.11} parent=11 // pred_fallthru
        _
      // Predicated region
      $region17: #{_lambda_.11} parent=11 // pred_check
        %p181 = pneg %p93
      $region18: #{_lambda_.11} parent=11 // pred_check_branch
        %183 = sbr.rel (%p181) target = $region20
      $region19: #{_lambda_.11} parent=11 // pred_region
        _
      $region20: #{_lambda_.11} parent=11 // pred_fallthru
        _
      // Predicated region
      $region21: #{_lambda_.11} parent=11 // pred_check
        %p184 = pneg %p114
      $region22: #{_lambda_.11} parent=11 // pred_check_branch
        %186 = sbr.rel (%p184) target = $region24
      $region23: #{_lambda_.11} parent=11 // pred_region
        _
      $region24: #{_lambda_.11} parent=11 // pred_fallthru
        _
      // Predicated region
      $region25: #{_lambda_.11} parent=11 // pred_check
        %p187 = pneg %p135
      $region26: #{_lambda_.11} parent=11 // pred_check_branch
        %189 = sbr.rel (%p187) target = $region28
      $region27: #{_lambda_.11} parent=11 // pred_region
        _
      $region28: #{_lambda_.11} parent=11 // pred_fallthru
        _
    $region12: #{_lambda_.11} parent=5 // pred_fallthru
      _
    %p190 = scmp.lt.s32.totalorder %s11, 2
    // Predicated region
    $region29: #{_lambda_.11} parent=5 // pred_check
      %p191 = pneg %p190
    $region30: #{_lambda_.11} parent=5 // pred_check_branch
      %193 = sbr.rel (%p191) target = $region32
    $region31: #{_lambda_.11} parent=5 // pred_region
      // Predicated region
      $region33: #{_lambda_.11} parent=31 // pred_check
        %p194 = pneg %p45
      $region34: #{_lambda_.11} parent=31 // pred_check_branch
        %196 = sbr.rel (%p194) target = $region36
      $region35: #{_lambda_.11} parent=31 // pred_region
        %s197 = smul.u32 2, %s19
        %p198 = scmp.lt.s32.totalorder %s18, 1
        %s199 = scalar_select %p198, %s18, 1
        %p200 = scmp.lt.s32.totalorder %s197, 1
        %s201 = scalar_select %p200, %s197, 1
        %s202 = smul.addr %s199, 4
        %s203 = sadd.s32 %s201, %s202
        %s204 = smul.addr %s203, 8
        %s205 = scalar_lea.vmem %s0, %s204
        %s206 = smul.u32 2, %s19
      $region36: #{_lambda_.11} parent=31 // pred_fallthru
        _
    $region32: #{_lambda_.11} parent=5 // pred_fallthru
      _
    %p207 = scmp.le.s32.totalorder 1, %s11
    %p208 = scmp.lt.s32.totalorder %s11, 3
    %p209 = pnand %p207, %p208
    %p210 = pneg %p209
    // Predicated region
    $region37: #{_lambda_.11} parent=5 // pred_check
      _
    $region38: #{_lambda_.11} parent=5 // pred_check_branch
      %212 = sbr.rel (%p209) target = $region40
    $region39: #{_lambda_.11} parent=5 // pred_region
      %s213 = ssub.s32 %s11, 1
      %s214 = smul.u32 2, %s21
      %p215 = scmp.lt.s32.totalorder %s20, 1
      %s216 = scalar_select %p215, %s20, 1
      %p217 = scmp.lt.s32.totalorder %s214, 1
      %s218 = scalar_select %p217, %s214, 1
      %s219 = smul.addr %s216, 4
      %s220 = sadd.s32 %s218, %s219
      %s221 = smul.addr %s220, 8
      %s222 = scalar_lea.vmem %s0, %s221
      %p223 = pneg %p51
      %p224 = pneg %p48
      %p225 = pneg %p72
      %p226 = pneg %p69
      %p227 = pneg %p93
      %p228 = pneg %p90
      %p229 = pneg %p114
      %p230 = pneg %p111
      %p231 = pneg %p135
      %p232 = pneg %p132
      %p233 = pneg %p163
      %p234 = pneg %p160
      %s235 = smul.u32 2, %s21
      %p236 = scmp.lt.s32.totalorder %s20, 1
      %s237 = scalar_select %p236, %s20, 1
      %p238 = scmp.lt.s32.totalorder %s235, 1
      %s239 = scalar_select %p238, %s235, 1
      %s240 = smul.addr %s237, 2
      %s241 = sadd.s32 %s239, %s240
      %s242 = smul.addr %s241, 2
      %s243 = scalar_lea.vmem %s5, %s242
      %s244 = smul.u32 2, %s21
      %p245 = scmp.lt.s32.totalorder %s20, 1
      %s246 = scalar_select %p245, %s20, 1
      %p247 = scmp.lt.s32.totalorder %s244, 1
      %s248 = scalar_select %p247, %s244, 1
      %s249 = smul.addr %s246, 4
      %s250 = sadd.s32 %s248, %s249
      %s251 = smul.addr %s250, 8
      %s252 = scalar_lea.vmem %s0, %s251
      %s253 = smul.u32 2, %s21
      %s254 = smul.u32 2, %s21
      %p255 = scmp.lt.s32.totalorder %s20, 1
      %s256 = scalar_select %p255, %s20, 1
      %p257 = scmp.lt.s32.totalorder %s254, 1
      %s258 = scalar_select %p257, %s254, 1
      %s259 = smul.addr %s256, 2
      %s260 = sadd.s32 %s258, %s259
      %s261 = smul.addr %s260, 2
      %s262 = scalar_lea.vmem %s5, %s261
      %s263 = smul.u32 2, %s21
      %v264 = vld [vmem:[%s1] sm:$0xff]
      %v265 = vld [vmem:[%s1 + $0x8] sm:$0xff]
      %v266 = vld [vmem:[%s1 + $0x10] sm:$0xff]
      %v267 = vld [vmem:[%s1 + $0x18] sm:$0xff]
      %v268 = vld [vmem:[%s252] sm:$0xff]
      %v269 = vld [vmem:[%s252 + $0x8] sm:$0xff]
      %v270 = vld [vmem:[%s252 + $0x10] sm:$0xff]
      %v271 = vld [vmem:[%s252 + $0x18] sm:$0xff]
      %v272 = vld [vmem:[%s2] sm:$0xff]
      %v273 = vld [vmem:[%s2 + $0x8] sm:$0xff]
      %v274 = vld [vmem:[%s2 + $0x10] sm:$0xff]
      %v275 = vld [vmem:[%s2 + $0x18] sm:$0xff]
      %277 = vset.pattern.permute.xlu0 0
      %278 = vperm.xlu0 %277, %v272
      %v279 = vpop.permute.xlu0 %278
      %282 = vset.pattern.permute.xlu0 0
      %283 = vperm.xlu0 %282, %v273
      %v284 = vpop.permute.xlu0 %283
      %287 = vset.pattern.permute.xlu0 0
      %288 = vperm.xlu0 %287, %v274
      %v289 = vpop.permute.xlu0 %288
      %292 = vset.pattern.permute.xlu0 0
      %293 = vperm.xlu0 %292, %v275
      %v294 = vpop.permute.xlu0 %293
      %vm296 = vcmask 130048
      %v298 = vsel %vm296, %v264, 0
      %v301 = vsel %vm296, %v265, 0
      %v304 = vsel %vm296, %v266, 0
      %v307 = vsel %vm296, %v267, 0
      %309 = vmatprep.subr.mxu0 %v269
      %310 = vmatpush1.msra.mxu0 %v268
      %311 = vmatprep.subr.mxu0 %v271
      %312 = vmatpush1.msra.mxu0 %v270
      %313 = vmatprep.subr.mxu0 0.0
      %314 = vmatpush1.msra.mxu0 0.0
      %315 = vmatprep.subr.mxu0 0.0
      %316 = vmatpush1.msra.mxu0 0.0
      %317 = vmatprep.subr.mxu0 0.0
      %318 = vmatpush1.msra.mxu0 0.0
      %319 = vmatprep.subr.mxu0 0.0
      %320 = vmatpush1.msra.mxu0 0.0
      %321 = vmatprep.subr.mxu0 0.0
      %322 = vmatpush1.msra.mxu0 0.0
      %323 = vmatprep.subr.mxu0 0.0
      %324 = vmatpush1.msra.mxu0 0.0
      %325 = vmatprep.subr.mxu0 0.0
      %326 = vmatpush1.msra.mxu0 0.0
      %327 = vmatprep.subr.mxu0 0.0
      %328 = vmatpush1.msra.mxu0 0.0
      %329 = vmatprep.subr.mxu0 0.0
      %330 = vmatpush1.msra.mxu0 0.0
      %331 = vmatprep.subr.mxu0 0.0
      %332 = vmatpush1.msra.mxu0 0.0
      %333 = vmatprep.subr.mxu0 0.0
      %334 = vmatpush1.msra.mxu0 0.0
      %335 = vmatprep.subr.mxu0 0.0
      %336 = vmatpush1.msra.mxu0 0.0
      %337 = vmatprep.subr.mxu0 0.0
      %338 = vmatpush1.msra.mxu0 0.0
      %339 = vmatprep.subr.mxu0 0.0
      %340 = vmatpush1.msra.mxu0 0.0
      %341 = vmatprep.subr.mxu0 0.0
      %342 = vmatpush1.msra.mxu0 0.0
      %343 = vmatprep.subr.mxu0 0.0
      %344 = vmatpush1.msra.mxu0 0.0
      %345 = vmatprep.subr.mxu0 0.0
      %346 = vmatpush1.msra.mxu0 0.0
      %347 = vmatprep.subr.mxu0 0.0
      %348 = vmatpush1.msra.mxu0 0.0
      %349 = vmatprep.subr.mxu0 0.0
      %350 = vmatpush1.msra.mxu0 0.0
      %351 = vmatprep.subr.mxu0 0.0
      %352 = vmatpush1.msra.mxu0 0.0
      %353 = vmatprep.subr.mxu0 0.0
      %354 = vmatpush1.msra.mxu0 0.0
      %355 = vmatprep.subr.mxu0 0.0
      %356 = vmatpush1.msra.mxu0 0.0
      %357 = vmatprep.subr.mxu0 0.0
      %358 = vmatpush1.msra.mxu0 0.0
      %359 = vmatprep.subr.mxu0 0.0
      %360 = vmatpush1.msra.mxu0 0.0
      %361 = vmatprep.subr.mxu0 0.0
      %362 = vmatpush1.msra.mxu0 0.0
      %363 = vmatprep.subr.mxu0 0.0
      %364 = vmatpush1.msra.mxu0 0.0
      %365 = vmatprep.subr.mxu0 0.0
      %366 = vmatpush1.msra.mxu0 0.0
      %367 = vmatprep.subr.mxu0 0.0
      %368 = vmatpush1.msra.mxu0 0.0
      %369 = vmatprep.subr.mxu0 0.0
      %370 = vmatpush1.msra.mxu0 0.0
      %371 = vmatprep.subr.mxu0 0.0
      %372 = vmatpush1.msra.mxu0 0.0
      %373 = vmatprep.mubr.f32.mxu0 0.0
      %374 = vmatmul.mubr.f32.gmra.mrb[0].mxu0 %v298
      %v375 = vpop.f32.mrb[0].mxu0
      %v376 = vadd.f32 %v279, %v375
      %v377 = vpop.f32.mrb[0].mxu0
      %v378 = vadd.f32 %v279, %v377
      %379 = vmatprep.mubr.f32.mxu0 0.0
      %380 = vmatmul.mubr.f32.gmra.mrb[0].mxu0 %v301
      %v381 = vpop.f32.mrb[0].mxu0
      %v382 = vadd.f32 %v284, %v381
      %v383 = vpop.f32.mrb[0].mxu0
      %v384 = vadd.f32 %v284, %v383
      %385 = vmatprep.mubr.f32.mxu0 0.0
      %386 = vmatmul.mubr.f32.gmra.mrb[0].mxu0 %v304
      %v387 = vpop.f32.mrb[0].mxu0
      %v388 = vadd.f32 %v289, %v387
      %v389 = vpop.f32.mrb[0].mxu0
      %v390 = vadd.f32 %v289, %v389
      %391 = vmatprep.mubr.f32.mxu0 0.0
      %392 = vmatmul.mubr.f32.gmra.mrb[0].mxu0 %v307
      %v393 = vpop.f32.mrb[0].mxu0
      %v394 = vadd.f32 %v294, %v393
      %v395 = vpop.f32.mrb[0].mxu0
      %v396 = vadd.f32 %v294, %v395
      %397 = vdwg.mxu0
      %v398 = vmul.f32 %v376, %v376
      %v399 = vmul.f32 %v378, %v378
      %v400 = vmul.f32 %v382, %v382
      %v401 = vmul.f32 %v384, %v384
      %v402 = vmul.f32 %v388, %v388
      %v403 = vmul.f32 %v390, %v390
      %v404 = vmul.f32 %v394, %v394
      %v405 = vmul.f32 %v396, %v396
      %v406 = vmul.f32 %v376, %v398
      %v407 = vmul.f32 %v378, %v399
      %v408 = vmul.f32 %v382, %v400
      %v409 = vmul.f32 %v384, %v401
      %v410 = vmul.f32 %v388, %v402
      %v411 = vmul.f32 %v390, %v403
      %v412 = vmul.f32 %v394, %v404
      %v413 = vmul.f32 %v396, %v405
      %v414 = vmul.f32 %v406, 0.044715
      %v415 = vmul.f32 %v407, 0.044715
      %v416 = vmul.f32 %v408, 0.044715
      %v417 = vmul.f32 %v409, 0.044715
      %v418 = vmul.f32 %v410, 0.044715
      %v419 = vmul.f32 %v411, 0.044715
      %v420 = vmul.f32 %v412, 0.044715
      %v421 = vmul.f32 %v413, 0.044715
      %v422 = vadd.f32 %v376, %v414
      %v423 = vadd.f32 %v378, %v415
      %v424 = vadd.f32 %v382, %v416
      %v425 = vadd.f32 %v384, %v417
      %v426 = vadd.f32 %v388, %v418
      %v427 = vadd.f32 %v390, %v419
      %v428 = vadd.f32 %v394, %v420
      %v429 = vadd.f32 %v396, %v421
      %v430 = vmul.f32 %v422, 0.7978846
      %v431 = vmul.f32 %v423, 0.7978846
      %v432 = vmul.f32 %v424, 0.7978846
      %v433 = vmul.f32 %v425, 0.7978846
      %v434 = vmul.f32 %v426, 0.7978846
      %v435 = vmul.f32 %v427, 0.7978846
      %v436 = vmul.f32 %v428, 0.7978846
      %v437 = vmul.f32 %v429, 0.7978846
      %v438 = vtanh.pop %v430
      %v439 = vtanh.pop %v431
      %v440 = vtanh.pop %v432
      %v441 = vtanh.pop %v433
      %v442 = vtanh.pop %v434
      %v443 = vtanh.pop %v435
      %v444 = vtanh.pop %v436
      %v445 = vtanh.pop %v437
      %v446 = vadd.f32 %v438, 1.0
      %v447 = vadd.f32 %v439, 1.0
      %v448 = vadd.f32 %v440, 1.0
      %v449 = vadd.f32 %v441, 1.0
      %v450 = vadd.f32 %v442, 1.0
      %v451 = vadd.f32 %v443, 1.0
      %v452 = vadd.f32 %v444, 1.0
      %v453 = vadd.f32 %v445, 1.0
      %v454 = vmul.f32 %v446, 0.5
      %v455 = vmul.f32 %v447, 0.5
      %v456 = vmul.f32 %v448, 0.5
      %v457 = vmul.f32 %v449, 0.5
      %v458 = vmul.f32 %v450, 0.5
      %v459 = vmul.f32 %v451, 0.5
      %v460 = vmul.f32 %v452, 0.5
      %v461 = vmul.f32 %v453, 0.5
      %v462 = vmul.f32 %v376, %v454
      %v463 = vmul.f32 %v378, %v455
      %v464 = vmul.f32 %v382, %v456
      %v465 = vmul.f32 %v384, %v457
      %v466 = vmul.f32 %v388, %v458
      %v467 = vmul.f32 %v390, %v459
      %v468 = vmul.f32 %v394, %v460
      %v469 = vmul.f32 %v396, %v461
      %v470 = vld [vmem:[%s3] sm:$0x3]
      %v471 = vld [vmem:[%s4] sm:$0x3]
      %473 = vset.pattern.permute.xlu0 0
      %474 = vperm.xlu0 %473, %v471
      %v475 = vpop.permute.xlu0 %474
      %vm477 = vcmask 261120
      %v479 = vsel %vm477, %v470, 0
      %481 = vmatprep.subr.mxu0 %v463
      %482 = vmatpush1.msra.mxu0 %v462
      %483 = vmatprep.subr.mxu0 %v465
      %484 = vmatpush1.msra.mxu0 %v464
      %485 = vmatprep.subr.mxu0 %v467
      %486 = vmatpush1.msra.mxu0 %v466
      %487 = vmatprep.subr.mxu0 %v469
      %488 = vmatpush1.msra.mxu0 %v468
      %489 = vmatprep.subr.mxu0 0.0
      %490 = vmatpush1.msra.mxu0 0.0
      %491 = vmatprep.subr.mxu0 0.0
      %492 = vmatpush1.msra.mxu0 0.0
      %493 = vmatprep.subr.mxu0 0.0
      %494 = vmatpush1.msra.mxu0 0.0
      %495 = vmatprep.subr.mxu0 0.0
      %496 = vmatpush1.msra.mxu0 0.0
      %497 = vmatprep.subr.mxu0 0.0
      %498 = vmatpush1.msra.mxu0 0.0
      %499 = vmatprep.subr.mxu0 0.0
      %500 = vmatpush1.msra.mxu0 0.0
      %501 = vmatprep.subr.mxu0 0.0
      %502 = vmatpush1.msra.mxu0 0.0
      %503 = vmatprep.subr.mxu0 0.0
      %504 = vmatpush1.msra.mxu0 0.0
      %505 = vmatprep.subr.mxu0 0.0
      %506 = vmatpush1.msra.mxu0 0.0
      %507 = vmatprep.subr.mxu0 0.0
      %508 = vmatpush1.msra.mxu0 0.0
      %509 = vmatprep.subr.mxu0 0.0
      %510 = vmatpush1.msra.mxu0 0.0
      %511 = vmatprep.subr.mxu0 0.0
      %512 = vmatpush1.msra.mxu0 0.0
      %513 = vmatprep.subr.mxu0 0.0
      %514 = vmatpush1.msra.mxu0 0.0
      %515 = vmatprep.subr.mxu0 0.0
      %516 = vmatpush1.msra.mxu0 0.0
      %517 = vmatprep.subr.mxu0 0.0
      %518 = vmatpush1.msra.mxu0 0.0
      %519 = vmatprep.subr.mxu0 0.0
      %520 = vmatpush1.msra.mxu0 0.0
      %521 = vmatprep.subr.mxu0 0.0
      %522 = vmatpush1.msra.mxu0 0.0
      %523 = vmatprep.subr.mxu0 0.0
      %524 = vmatpush1.msra.mxu0 0.0
      %525 = vmatprep.subr.mxu0 0.0
      %526 = vmatpush1.msra.mxu0 0.0
      %527 = vmatprep.subr.mxu0 0.0
      %528 = vmatpush1.msra.mxu0 0.0
      %529 = vmatprep.subr.mxu0 0.0
      %530 = vmatpush1.msra.mxu0 0.0
      %531 = vmatprep.subr.mxu0 0.0
      %532 = vmatpush1.msra.mxu0 0.0
      %533 = vmatprep.subr.mxu0 0.0
      %534 = vmatpush1.msra.mxu0 0.0
      %535 = vmatprep.subr.mxu0 0.0
      %536 = vmatpush1.msra.mxu0 0.0
      %537 = vmatprep.subr.mxu0 0.0
      %538 = vmatpush1.msra.mxu0 0.0
      %539 = vmatprep.subr.mxu0 0.0
      %540 = vmatpush1.msra.mxu0 0.0
      %541 = vmatprep.subr.mxu0 0.0
      %542 = vmatpush1.msra.mxu0 0.0
      %543 = vmatprep.subr.mxu0 0.0
      %544 = vmatpush1.msra.mxu0 0.0
      %545 = vmatprep.mubr.f32.mxu0 0.0
      %546 = vmatmul.mubr.f32.gmra.mrb[0].mxu0 %v479
      %v547 = vpop.f32.mrb[0].mxu0
      %v548 = vadd.f32 %v475, %v547
      %v549 = vpop.f32.mrb[0].mxu0
      %v550 = vadd.f32 %v475, %v549
      %551 = vdwg.mxu0
      %v554 = vcombine.low %v548, %v550
      %v556 = vunpack.c.l.s4 1983009808
      %v557 = vunpack.c.0.s8 %v556
      %v558 = vlaneseq
      %v559 = vshrl.u32 %v558, 7
      %v560 = vsub.s32 %v557, %v559
      %v561 = vrot.slane %v554, %v560
      %563 = vst [vmem:[%s262] sm:$0xf] %v561
      %s564 = smul.u32 2, %s21
      %p565 = scmp.lt.s32.totalorder %s20, 1
      %s566 = scalar_select %p565, %s20, 1
      %p567 = scmp.lt.s32.totalorder %s564, 1
      %s568 = scalar_select %p567, %s564, 1
      %s569 = smul.addr %s566, 2
      %s570 = sadd.s32 %s568, %s569
      %s571 = smul.addr %s570, 2
      %s572 = scalar_lea.vmem %s5, %s571
      // Predicated region
      $region41: #{_lambda_.11} parent=39 // pred_check
        %p573 = pneg %p160
      $region42: #{_lambda_.11} parent=39 // pred_check_branch
        %575 = sbr.rel (%p573) target = $region44
      $region43: #{_lambda_.11} parent=39 // pred_region
        %s576 = smul.u32 2, %s21
      $region44: #{_lambda_.11} parent=39 // pred_fallthru
        _
    $region40: #{_lambda_.11} parent=5 // pred_fallthru
      _
    %p577 = scmp.le.s32.totalorder 2, %s11
    // Predicated region
    $region45: #{_lambda_.11} parent=5 // pred_check
      %p578 = pneg %p577
    $region46: #{_lambda_.11} parent=5 // pred_check_branch
      %580 = sbr.rel (%p578) target = $region48
    $region47: #{_lambda_.11} parent=5 // pred_region
      %s581 = ssub.s32 %s11, 2
      // Predicated region
      $region49: #{_lambda_.11} parent=47 // pred_check
        %p582 = pneg %p166
      $region50: #{_lambda_.11} parent=47 // pred_check_branch
        %584 = sbr.rel (%p582) target = $region52
      $region51: #{_lambda_.11} parent=47 // pred_region
        %s585 = smul.u32 2, %s23
        %p586 = scmp.lt.s32.totalorder %s22, 1
        %s587 = scalar_select %p586, %s22, 1
        %p588 = scmp.lt.s32.totalorder %s585, 1
        %s589 = scalar_select %p588, %s585, 1
        %s590 = smul.addr %s587, 2
        %s591 = sadd.s32 %s589, %s590
        %s592 = smul.addr %s591, 2
        %s593 = scalar_lea.vmem %s5, %s592
      $region52: #{_lambda_.11} parent=47 // pred_fallthru
        _
    $region48: #{_lambda_.11} parent=5 // pred_fallthru
      _
  $region6: #{_lambda_.11} parent=0 // loop_footer
    %s15 = sadd.s32 1, %s11
  $region7: #{_lambda_.11} parent=0 // loop_footer_branch
    %10 = sbr.rel target = $region3
  $region8: #{_lambda_.11} parent=0 // loop_exit
    _

</llo_original>
